<compile_context>
chip_gen: v6e
topology: v6e:2x2x1
jax: 0.10.0
libtpu: 0.0.40
codegen_flags: <defaults>
</compile_context>

<pallas_src>
import functools

import jax
import jax.numpy as jnp
from jax import lax
from jax.experimental import pallas as pl
from jax.experimental.pallas import tpu as pltpu

LANE = 128
BN_EPS = 1e-5


def _round_up(x, m):
    return (x + m - 1) // m * m


def _conv3x3_sum(pad_ref, act, w_ref):
    """3x3 'same' conv of act (H, W, Cin) with w_ref (9, Cin, Cout) -> (H, W, Cout) f32."""
    H, W, Cin = act.shape
    Cout = w_ref.shape[-1]
    pad_ref[...] = jnp.zeros_like(pad_ref)          # zeroed spatial border
    pad_ref[1:H + 1, 1:W + 1, :] = act              # interior = activation
    acc = jnp.zeros((H * W, Cout), jnp.float32)
    for k in range(9):                              # 9 taps, unrolled
        dy, dx = k // 3, k % 3
        win = pad_ref[dy:dy + H, dx:dx + W, :]      # (H, W, Cin)
        acc = acc + jnp.dot(win.reshape(H * W, Cin), w_ref[k],
                            preferred_element_type=jnp.float32)
    return acc.reshape(H, W, Cout)


def _preact_block_kernel(has_shortcut,
                         x_ref, s1_ref, b1_ref, w1_ref, s2_ref, b2_ref, w2_ref,
                         *rest):
    if has_shortcut:
        wsc_ref, o_ref, pad1_ref, pad2_ref = rest
    else:
        o_ref, pad1_ref, pad2_ref = rest

    x = x_ref[0]                                     # (H, W, Cp_in) f32
    H, W, Cp_in = x.shape
    Cp_out = o_ref.shape[-1]

    # pre-activation: relu(bn1(x))   (BN folded to scale/bias)
    t1 = jnp.maximum(x * s1_ref[...] + b1_ref[...], 0.0)
    # conv1 (3x3, pad 1, no bias)
    h1 = _conv3x3_sum(pad1_ref, t1, w1_ref)          # (H, W, Cp_out)
    # relu(bn2(.))
    t2 = jnp.maximum(h1 * s2_ref[...] + b2_ref[...], 0.0)
    # conv2 (3x3, pad 1, no bias)
    h2 = _conv3x3_sum(pad2_ref, t2, w2_ref)          # (H, W, Cp_out)

    if has_shortcut:                                 # 1x1 conv on t1
        sc = jnp.dot(t1.reshape(H * W, Cp_in), wsc_ref[...],
                     preferred_element_type=jnp.float32).reshape(H, W, Cp_out)
    else:                                            # identity shortcut (raw x)
        sc = x
    o_ref[0] = (h2 + sc).astype(o_ref.dtype)


def preact_block_forward(x_nchw, params, stride=1):
    assert stride == 1, "TODO(synk): stride > 1 not implemented"
    g1, be1, m1, v1 = params["bn1"]
    w1 = params["conv1"]                 # (planes, in_planes, 3, 3)
    g2, be2, m2, v2 = params["bn2"]
    w2 = params["conv2"]                 # (planes, planes, 3, 3)
    wsc = params.get("shortcut")         # (planes, in_planes, 1, 1) or None

    B, C_in, H, W = x_nchw.shape
    planes = w1.shape[0]
    has_shortcut = wsc is not None
    if not has_shortcut:
        assert C_in == planes

    Cp_in = _round_up(C_in, LANE)
    Cp_out = _round_up(planes, LANE)
    f32 = jnp.float32

    # NCHW -> NHWC, zero-pad channels to the 128-lane width (lane-dense stores / MXU feed).
    x_nhwc = jnp.transpose(x_nchw, (0, 2, 3, 1)).astype(f32)
    x_p = jnp.zeros((B, H, W, Cp_in), f32).at[..., :C_in].set(x_nhwc)

    # Fold inference-mode BatchNorm into per-channel scale / bias (padded lanes stay 0).
    def fold_bn(g, b, m, v, cp):
        s = g / jnp.sqrt(v + BN_EPS)
        o = b - m * s
        sp = jnp.zeros((1, 1, cp), f32).at[0, 0, :g.shape[0]].set(s.astype(f32))
        op = jnp.zeros((1, 1, cp), f32).at[0, 0, :g.shape[0]].set(o.astype(f32))
        return sp, op

    s1, o1 = fold_bn(g1, be1, m1, v1, Cp_in)
    s2, o2 = fold_bn(g2, be2, m2, v2, Cp_out)

    # conv weights: (O, I, 3, 3) -> (9, Ip, Op), tap k = 3*dy + dx.
    def fold_conv3x3(w, cin_p, cout_p):
        o, i = w.shape[0], w.shape[1]
        w_t = jnp.transpose(w, (2, 3, 1, 0)).reshape(9, i, o).astype(f32)
        return jnp.zeros((9, cin_p, cout_p), f32).at[:, :i, :o].set(w_t)

    w1_p = fold_conv3x3(w1, Cp_in, Cp_out)
    w2_p = fold_conv3x3(w2, Cp_out, Cp_out)

    inputs = [x_p, s1, o1, w1_p, s2, o2, w2_p]
    in_specs = [
        pl.BlockSpec((1, H, W, Cp_in), lambda b: (b, 0, 0, 0)),      # x: streamed per image
        pl.BlockSpec((1, 1, Cp_in), lambda b: (0, 0, 0)),            # bn1 scale (resident)
        pl.BlockSpec((1, 1, Cp_in), lambda b: (0, 0, 0)),            # bn1 bias
        pl.BlockSpec((9, Cp_in, Cp_out), lambda b: (0, 0, 0)),       # conv1 weights
        pl.BlockSpec((1, 1, Cp_out), lambda b: (0, 0, 0)),           # bn2 scale
        pl.BlockSpec((1, 1, Cp_out), lambda b: (0, 0, 0)),           # bn2 bias
        pl.BlockSpec((9, Cp_out, Cp_out), lambda b: (0, 0, 0)),      # conv2 weights
    ]
    if has_shortcut:
        wsc_p = jnp.zeros((Cp_in, Cp_out), f32).at[:C_in, :planes].set(
            jnp.transpose(wsc[:, :, 0, 0], (1, 0)).astype(f32))
        inputs.append(wsc_p)
        in_specs.append(pl.BlockSpec((Cp_in, Cp_out), lambda b: (0, 0)))

    flops_per_img = 2 * H * W * 9 * (Cp_in * Cp_out + Cp_out * Cp_out)
    if has_shortcut:
        flops_per_img += 2 * H * W * Cp_in * Cp_out
    bytes_accessed = (x_p.size + B * H * W * Cp_out) * 4 + sum(a.size for a in inputs[1:]) * 4

    out_p = pl.pallas_call(
        functools.partial(_preact_block_kernel, has_shortcut),
        out_shape=jax.ShapeDtypeStruct((B, H, W, Cp_out), f32),
        grid_spec=pltpu.PrefetchScalarGridSpec(
            num_scalar_prefetch=0,
            grid=(B,),
            in_specs=in_specs,
            out_specs=pl.BlockSpec((1, H, W, Cp_out), lambda b: (b, 0, 0, 0)),
            scratch_shapes=[
                pltpu.VMEM((H + 2, W + 2, Cp_in), f32),   # zero-padded activation, conv1
                pltpu.VMEM((H + 2, W + 2, Cp_out), f32),  # zero-padded activation, conv2
            ],
        ),
        compiler_params=pltpu.CompilerParams(dimension_semantics=("parallel",)),
        cost_estimate=pl.CostEstimate(flops=int(B * flops_per_img),
                                      transcendentals=0,
                                      bytes_accessed=int(bytes_accessed)),
    )(*inputs)

    # Drop channel padding, back to NCHW.
    return jnp.transpose(out_p[..., :planes], (0, 3, 1, 2))


# -------------------- pure-JAX reference (PyTorch semantics, eval-mode BN) ------------
def preact_block_reference(x, params, stride=1):
    def bn(y, g, b, m, v):
        inv = 1.0 / jnp.sqrt(v + BN_EPS)
        return ((y - m[None, :, None, None]) * inv[None, :, None, None]
                * g[None, :, None, None] + b[None, :, None, None])

    dn = lax.conv_dimension_numbers(x.shape, params["conv1"].shape,
                                    ("NCHW", "OIHW", "NCHW"))
    t1 = jax.nn.relu(bn(x, *params["bn1"]))
    if params.get("shortcut") is not None:
        shortcut = lax.conv_general_dilated(t1, params["shortcut"], (stride, stride),
                                            ((0, 0), (0, 0)), dimension_numbers=dn)
    else:
        shortcut = x
    h = lax.conv_general_dilated(t1, params["conv1"], (stride, stride),
                                 ((1, 1), (1, 1)), dimension_numbers=dn)
    h = jax.nn.relu(bn(h, *params["bn2"]))
    h = lax.conv_general_dilated(h, params["conv2"], (1, 1),
                                 ((1, 1), (1, 1)), dimension_numbers=dn)
    return h + shortcut


def init_params(key, in_planes, planes, stride=1):
    ks = jax.random.split(key, 5)

    def bn_params(k, c):
        k1, k2, k3, k4 = jax.random.split(k, 4)
        gamma = 1.0 + 0.1 * jax.random.normal(k1, (c,), jnp.float32)
        beta = 0.1 * jax.random.normal(k2, (c,), jnp.float32)
        mean = 0.1 * jax.random.normal(k3, (c,), jnp.float32)
        var = jax.random.uniform(k4, (c,), jnp.float32, 0.5, 1.5)
        return (gamma, beta, mean, var)

    p = {
        "bn1": bn_params(ks[0], in_planes),
        "conv1": 0.1 * jax.random.normal(ks[1], (planes, in_planes, 3, 3), jnp.float32),
        "bn2": bn_params(ks[2], planes),
        "conv2": 0.1 * jax.random.normal(ks[3], (planes, planes, 3, 3), jnp.float32),
    }
    if stride != 1 or in_planes != planes:
        p["shortcut"] = 0.1 * jax.random.normal(ks[4], (planes, in_planes, 1, 1), jnp.float32)
    return p


if __name__ == "__main__":
    key = jax.random.PRNGKey(0)
    kx, kp1, kp2 = jax.random.split(key, 3)

    B, H, W = 2, 16, 16

    # Config A: in_planes != planes -> 1x1-conv shortcut path.
    in_planes, planes = 4, 8
    x = jax.random.normal(kx, (B, in_planes, H, W), jnp.float32)
    params = init_params(kp1, in_planes, planes)
    out = preact_block_forward(x, params)
    jax.block_until_ready(out)
    ref = preact_block_reference(x, params)
    assert out.shape == (B, planes, H, W)
    assert jnp.allclose(out, ref, atol=1e-4, rtol=1e-4), float(jnp.max(jnp.abs(out - ref)))

    # Config B: in_planes == planes -> identity shortcut path.
    xb = jax.random.normal(kx, (B, 8, H, W), jnp.float32)
    params_b = init_params(kp2, 8, 8)
    out_b = preact_block_forward(xb, params_b)
    jax.block_until_ready(out_b)
    ref_b = preact_block_reference(xb, params_b)
    assert jnp.allclose(out_b, ref_b, atol=1e-4, rtol=1e-4), float(jnp.max(jnp.abs(out_b - ref_b)))

    print("KERNEL_OK")
</pallas_src>

<mosaic_0001>
module attributes {stable_mosaic.version = 11 : i64} {
  func.func @_preact_block_kernel(%arg0: i32, %arg1: memref<1x16x16x128xf32, #tpu.memory_space<vmem>>, %arg2: memref<1x1x128xf32, #tpu.memory_space<vmem>>, %arg3: memref<1x1x128xf32, #tpu.memory_space<vmem>>, %arg4: memref<9x128x128xf32, #tpu.memory_space<vmem>>, %arg5: memref<1x1x128xf32, #tpu.memory_space<vmem>>, %arg6: memref<1x1x128xf32, #tpu.memory_space<vmem>>, %arg7: memref<9x128x128xf32, #tpu.memory_space<vmem>>, %arg8: memref<128x128xf32, #tpu.memory_space<vmem>>, %arg9: memref<1x16x16x128xf32, #tpu.memory_space<vmem>>, %arg10: memref<18x18x128xf32, #tpu.memory_space<vmem>>, %arg11: memref<18x18x128xf32, #tpu.memory_space<vmem>>) attributes {dimension_semantics = [#tpu.dimension_semantics<parallel>], iteration_bounds = array<i64: 2>, scalar_prefetch = 0 : i64, scratch_operands = 2 : i64, tpu.core_type = #tpu.core_type<tc>, window_params = [{transform_indices = @transform_0, window_bounds = array<i64: 1, 16, 16, 128>}, {pipeline_mode = #tpu.pipeline_mode<synchronous>, transform_indices = @transform_1, window_bounds = array<i64: 1, 1, 128>}, {pipeline_mode = #tpu.pipeline_mode<synchronous>, transform_indices = @transform_2, window_bounds = array<i64: 1, 1, 128>}, {pipeline_mode = #tpu.pipeline_mode<synchronous>, transform_indices = @transform_3, window_bounds = array<i64: 9, 128, 128>}, {pipeline_mode = #tpu.pipeline_mode<synchronous>, transform_indices = @transform_4, window_bounds = array<i64: 1, 1, 128>}, {pipeline_mode = #tpu.pipeline_mode<synchronous>, transform_indices = @transform_5, window_bounds = array<i64: 1, 1, 128>}, {pipeline_mode = #tpu.pipeline_mode<synchronous>, transform_indices = @transform_6, window_bounds = array<i64: 9, 128, 128>}, {pipeline_mode = #tpu.pipeline_mode<synchronous>, transform_indices = @transform_7, window_bounds = array<i64: 128, 128>}, {transform_indices = @transform_8, window_bounds = array<i64: 1, 16, 16, 128>}]} {
    %c0 = arith.constant 0 : index
    %c0_0 = arith.constant 0 : index
    %c0_1 = arith.constant 0 : index
    %c0_2 = arith.constant 0 : index
    %0 = vector.load %arg1[%c0, %c0_0, %c0_1, %c0_2] : memref<1x16x16x128xf32, #tpu.memory_space<vmem>>, vector<1x16x16x128xf32>
    %1 = vector.shape_cast %0 : vector<1x16x16x128xf32> to vector<16x16x128xf32>
    %c0_3 = arith.constant 0 : index
    %c0_4 = arith.constant 0 : index
    %c0_5 = arith.constant 0 : index
    %2 = vector.load %arg2[%c0_3, %c0_4, %c0_5] : memref<1x1x128xf32, #tpu.memory_space<vmem>>, vector<1x1x128xf32>
    %3 = vector.broadcast %2 : vector<1x1x128xf32> to vector<16x16x128xf32>
    %4 = arith.mulf %1, %3 : vector<16x16x128xf32>
    %c0_6 = arith.constant 0 : index
    %c0_7 = arith.constant 0 : index
    %c0_8 = arith.constant 0 : index
    %5 = vector.load %arg3[%c0_6, %c0_7, %c0_8] : memref<1x1x128xf32, #tpu.memory_space<vmem>>, vector<1x1x128xf32>
    %6 = vector.broadcast %5 : vector<1x1x128xf32> to vector<16x16x128xf32>
    %7 = arith.addf %4, %6 : vector<16x16x128xf32>
    %cst = arith.constant 0.000000e+00 : f32
    %8 = vector.broadcast %cst : f32 to vector<16x16x128xf32>
    %9 = arith.maximumf %7, %8 : vector<16x16x128xf32>
    %cst_9 = arith.constant 0.000000e+00 : f32
    %10 = vector.broadcast %cst_9 : f32 to vector<18x18x128xf32>
    %c0_10 = arith.constant 0 : index
    %c0_11 = arith.constant 0 : index
    %c0_12 = arith.constant 0 : index
    %11 = vector.load %arg10[%c0_10, %c0_11, %c0_12] : memref<18x18x128xf32, #tpu.memory_space<vmem>>, vector<18x18x128xf32>
    tpu.vector_store %arg10[%c0_10, %c0_11, %c0_12], %10 {strides = array<i32>} : memref<18x18x128xf32, #tpu.memory_space<vmem>>, vector<18x18x128xf32>,
    %c1 = arith.constant 1 : index
    %c1_13 = arith.constant 1 : index
    %c0_14 = arith.constant 0 : index
    %12 = vector.load %arg10[%c1, %c1_13, %c0_14] : memref<18x18x128xf32, #tpu.memory_space<vmem>>, vector<16x16x128xf32>
    tpu.vector_store %arg10[%c1, %c1_13, %c0_14], %9 {strides = array<i32>} : memref<18x18x128xf32, #tpu.memory_space<vmem>>, vector<16x16x128xf32>,
    %cst_15 = arith.constant 0.000000e+00 : f32
    %13 = vector.broadcast %cst_15 : f32 to vector<256x128xf32>
    %c0_16 = arith.constant 0 : index
    %c0_17 = arith.constant 0 : index
    %c0_18 = arith.constant 0 : index
    %14 = vector.load %arg10[%c0_16, %c0_17, %c0_18] : memref<18x18x128xf32, #tpu.memory_space<vmem>>, vector<16x16x128xf32>
    %15 = vector.shape_cast %14 : vector<16x16x128xf32> to vector<256x128xf32>
    %c0_19 = arith.constant 0 : index
    %c0_20 = arith.constant 0 : index
    %c0_21 = arith.constant 0 : index
    %16 = vector.load %arg4[%c0_19, %c0_20, %c0_21] : memref<9x128x128xf32, #tpu.memory_space<vmem>>, vector<1x128x128xf32>
    %17 = vector.shape_cast %16 : vector<1x128x128xf32> to vector<128x128xf32>
    %cst_22 = arith.constant dense<0.000000e+00> : vector<256x128xf32>
    %18 = tpu.matmul %15, %17, %cst_22 {dimension_numbers = #tpu.dot_dimension_numbers<[1], [0], [0], [1], [0, 0, 1, 1], [], []>} : vector<256x128xf32>, vector<128x128xf32>, vector<256x128xf32> -> vector<256x128xf32>
    %19 = arith.addf %13, %18 : vector<256x128xf32>
    %c0_23 = arith.constant 0 : index
    %c1_24 = arith.constant 1 : index
    %c0_25 = arith.constant 0 : index
    %20 = vector.load %arg10[%c0_23, %c1_24, %c0_25] : memref<18x18x128xf32, #tpu.memory_space<vmem>>, vector<16x16x128xf32>
    %21 = vector.shape_cast %20 : vector<16x16x128xf32> to vector<256x128xf32>
    %c1_26 = arith.constant 1 : index
    %c0_27 = arith.constant 0 : index
    %c0_28 = arith.constant 0 : index
    %22 = vector.load %arg4[%c1_26, %c0_27, %c0_28] : memref<9x128x128xf32, #tpu.memory_space<vmem>>, vector<1x128x128xf32>
    %23 = vector.shape_cast %22 : vector<1x128x128xf32> to vector<128x128xf32>
    %cst_29 = arith.constant dense<0.000000e+00> : vector<256x128xf32>
    %24 = tpu.matmul %21, %23, %cst_29 {dimension_numbers = #tpu.dot_dimension_numbers<[1], [0], [0], [1], [0, 0, 1, 1], [], []>} : vector<256x128xf32>, vector<128x128xf32>, vector<256x128xf32> -> vector<256x128xf32>
    %25 = arith.addf %19, %24 : vector<256x128xf32>
    %c0_30 = arith.constant 0 : index
    %c2 = arith.constant 2 : index
    %c0_31 = arith.constant 0 : index
    %26 = vector.load %arg10[%c0_30, %c2, %c0_31] : memref<18x18x128xf32, #tpu.memory_space<vmem>>, vector<16x16x128xf32>
    %27 = vector.shape_cast %26 : vector<16x16x128xf32> to vector<256x128xf32>
    %c2_32 = arith.constant 2 : index
    %c0_33 = arith.constant 0 : index
    %c0_34 = arith.constant 0 : index
    %28 = vector.load %arg4[%c2_32, %c0_33, %c0_34] : memref<9x128x128xf32, #tpu.memory_space<vmem>>, vector<1x128x128xf32>
    %29 = vector.shape_cast %28 : vector<1x128x128xf32> to vector<128x128xf32>
    %cst_35 = arith.constant dense<0.000000e+00> : vector<256x128xf32>
    %30 = tpu.matmul %27, %29, %cst_35 {dimension_numbers = #tpu.dot_dimension_numbers<[1], [0], [0], [1], [0, 0, 1, 1], [], []>} : vector<256x128xf32>, vector<128x128xf32>, vector<256x128xf32> -> vector<256x128xf32>
    %31 = arith.addf %25, %30 : vector<256x128xf32>
    %c1_36 = arith.constant 1 : index
    %c0_37 = arith.constant 0 : index
    %c0_38 = arith.constant 0 : index
    %32 = vector.load %arg10[%c1_36, %c0_37, %c0_38] : memref<18x18x128xf32, #tpu.memory_space<vmem>>, vector<16x16x128xf32>
    %33 = vector.shape_cast %32 : vector<16x16x128xf32> to vector<256x128xf32>
    %c3 = arith.constant 3 : index
    %c0_39 = arith.constant 0 : index
    %c0_40 = arith.constant 0 : index
    %34 = vector.load %arg4[%c3, %c0_39, %c0_40] : memref<9x128x128xf32, #tpu.memory_space<vmem>>, vector<1x128x128xf32>
    %35 = vector.shape_cast %34 : vector<1x128x128xf32> to vector<128x128xf32>
    %cst_41 = arith.constant dense<0.000000e+00> : vector<256x128xf32>
    %36 = tpu.matmul %33, %35, %cst_41 {dimension_numbers = #tpu.dot_dimension_numbers<[1], [0], [0], [1], [0, 0, 1, 1], [], []>} : vector<256x128xf32>, vector<128x128xf32>, vector<256x128xf32> -> vector<256x128xf32>
    %37 = arith.addf %31, %36 : vector<256x128xf32>
    %c1_42 = arith.constant 1 : index
    %c1_43 = arith.constant 1 : index
    %c0_44 = arith.constant 0 : index
    %38 = vector.load %arg10[%c1_42, %c1_43, %c0_44] : memref<18x18x128xf32, #tpu.memory_space<vmem>>, vector<16x16x128xf32>
    %39 = vector.shape_cast %38 : vector<16x16x128xf32> to vector<256x128xf32>
    %c4 = arith.constant 4 : index
    %c0_45 = arith.constant 0 : index
    %c0_46 = arith.constant 0 : index
    %40 = vector.load %arg4[%c4, %c0_45, %c0_46] : memref<9x128x128xf32, #tpu.memory_space<vmem>>, vector<1x128x128xf32>
    %41 = vector.shape_cast %40 : vector<1x128x128xf32> to vector<128x128xf32>
    %cst_47 = arith.constant dense<0.000000e+00> : vector<256x128xf32>
    %42 = tpu.matmul %39, %41, %cst_47 {dimension_numbers = #tpu.dot_dimension_numbers<[1], [0], [0], [1], [0, 0, 1, 1], [], []>} : vector<256x128xf32>, vector<128x128xf32>, vector<256x128xf32> -> vector<256x128xf32>
    %43 = arith.addf %37, %42 : vector<256x128xf32>
    %c1_48 = arith.constant 1 : index
    %c2_49 = arith.constant 2 : index
    %c0_50 = arith.constant 0 : index
    %44 = vector.load %arg10[%c1_48, %c2_49, %c0_50] : memref<18x18x128xf32, #tpu.memory_space<vmem>>, vector<16x16x128xf32>
    %45 = vector.shape_cast %44 : vector<16x16x128xf32> to vector<256x128xf32>
    %c5 = arith.constant 5 : index
    %c0_51 = arith.constant 0 : index
    %c0_52 = arith.constant 0 : index
    %46 = vector.load %arg4[%c5, %c0_51, %c0_52] : memref<9x128x128xf32, #tpu.memory_space<vmem>>, vector<1x128x128xf32>
    %47 = vector.shape_cast %46 : vector<1x128x128xf32> to vector<128x128xf32>
    %cst_53 = arith.constant dense<0.000000e+00> : vector<256x128xf32>
    %48 = tpu.matmul %45, %47, %cst_53 {dimension_numbers = #tpu.dot_dimension_numbers<[1], [0], [0], [1], [0, 0, 1, 1], [], []>} : vector<256x128xf32>, vector<128x128xf32>, vector<256x128xf32> -> vector<256x128xf32>
    %49 = arith.addf %43, %48 : vector<256x128xf32>
    %c2_54 = arith.constant 2 : index
    %c0_55 = arith.constant 0 : index
    %c0_56 = arith.constant 0 : index
    %50 = vector.load %arg10[%c2_54, %c0_55, %c0_56] : memref<18x18x128xf32, #tpu.memory_space<vmem>>, vector<16x16x128xf32>
    %51 = vector.shape_cast %50 : vector<16x16x128xf32> to vector<256x128xf32>
    %c6 = arith.constant 6 : index
    %c0_57 = arith.constant 0 : index
    %c0_58 = arith.constant 0 : index
    %52 = vector.load %arg4[%c6, %c0_57, %c0_58] : memref<9x128x128xf32, #tpu.memory_space<vmem>>, vector<1x128x128xf32>
    %53 = vector.shape_cast %52 : vector<1x128x128xf32> to vector<128x128xf32>
    %cst_59 = arith.constant dense<0.000000e+00> : vector<256x128xf32>
    %54 = tpu.matmul %51, %53, %cst_59 {dimension_numbers = #tpu.dot_dimension_numbers<[1], [0], [0], [1], [0, 0, 1, 1], [], []>} : vector<256x128xf32>, vector<128x128xf32>, vector<256x128xf32> -> vector<256x128xf32>
    %55 = arith.addf %49, %54 : vector<256x128xf32>
    %c2_60 = arith.constant 2 : index
    %c1_61 = arith.constant 1 : index
    %c0_62 = arith.constant 0 : index
    %56 = vector.load %arg10[%c2_60, %c1_61, %c0_62] : memref<18x18x128xf32, #tpu.memory_space<vmem>>, vector<16x16x128xf32>
    %57 = vector.shape_cast %56 : vector<16x16x128xf32> to vector<256x128xf32>
    %c7 = arith.constant 7 : index
    %c0_63 = arith.constant 0 : index
    %c0_64 = arith.constant 0 : index
    %58 = vector.load %arg4[%c7, %c0_63, %c0_64] : memref<9x128x128xf32, #tpu.memory_space<vmem>>, vector<1x128x128xf32>
    %59 = vector.shape_cast %58 : vector<1x128x128xf32> to vector<128x128xf32>
    %cst_65 = arith.constant dense<0.000000e+00> : vector<256x128xf32>
    %60 = tpu.matmul %57, %59, %cst_65 {dimension_numbers = #tpu.dot_dimension_numbers<[1], [0], [0], [1], [0, 0, 1, 1], [], []>} : vector<256x128xf32>, vector<128x128xf32>, vector<256x128xf32> -> vector<256x128xf32>
    %61 = arith.addf %55, %60 : vector<256x128xf32>
    %c2_66 = arith.constant 2 : index
    %c2_67 = arith.constant 2 : index
    %c0_68 = arith.constant 0 : index
    %62 = vector.load %arg10[%c2_66, %c2_67, %c0_68] : memref<18x18x128xf32, #tpu.memory_space<vmem>>, vector<16x16x128xf32>
    %63 = vector.shape_cast %62 : vector<16x16x128xf32> to vector<256x128xf32>
    %c8 = arith.constant 8 : index
    %c0_69 = arith.constant 0 : index
    %c0_70 = arith.constant 0 : index
    %64 = vector.load %arg4[%c8, %c0_69, %c0_70] : memref<9x128x128xf32, #tpu.memory_space<vmem>>, vector<1x128x128xf32>
    %65 = vector.shape_cast %64 : vector<1x128x128xf32> to vector<128x128xf32>
    %cst_71 = arith.constant dense<0.000000e+00> : vector<256x128xf32>
    %66 = tpu.matmul %63, %65, %cst_71 {dimension_numbers = #tpu.dot_dimension_numbers<[1], [0], [0], [1], [0, 0, 1, 1], [], []>} : vector<256x128xf32>, vector<128x128xf32>, vector<256x128xf32> -> vector<256x128xf32>
    %67 = arith.addf %61, %66 : vector<256x128xf32>
    %68 = vector.shape_cast %67 : vector<256x128xf32> to vector<16x16x128xf32>
    %c0_72 = arith.constant 0 : index
    %c0_73 = arith.constant 0 : index
    %c0_74 = arith.constant 0 : index
    %69 = vector.load %arg5[%c0_72, %c0_73, %c0_74] : memref<1x1x128xf32, #tpu.memory_space<vmem>>, vector<1x1x128xf32>
    %70 = vector.broadcast %69 : vector<1x1x128xf32> to vector<16x16x128xf32>
    %71 = arith.mulf %68, %70 : vector<16x16x128xf32>
    %c0_75 = arith.constant 0 : index
    %c0_76 = arith.constant 0 : index
    %c0_77 = arith.constant 0 : index
    %72 = vector.load %arg6[%c0_75, %c0_76, %c0_77] : memref<1x1x128xf32, #tpu.memory_space<vmem>>, vector<1x1x128xf32>
    %73 = vector.broadcast %72 : vector<1x1x128xf32> to vector<16x16x128xf32>
    %74 = arith.addf %71, %73 : vector<16x16x128xf32>
    %cst_78 = arith.constant 0.000000e+00 : f32
    %75 = vector.broadcast %cst_78 : f32 to vector<16x16x128xf32>
    %76 = arith.maximumf %74, %75 : vector<16x16x128xf32>
    %cst_79 = arith.constant 0.000000e+00 : f32
    %77 = vector.broadcast %cst_79 : f32 to vector<18x18x128xf32>
    %c0_80 = arith.constant 0 : index
    %c0_81 = arith.constant 0 : index
    %c0_82 = arith.constant 0 : index
    %78 = vector.load %arg11[%c0_80, %c0_81, %c0_82] : memref<18x18x128xf32, #tpu.memory_space<vmem>>, vector<18x18x128xf32>
    tpu.vector_store %arg11[%c0_80, %c0_81, %c0_82], %77 {strides = array<i32>} : memref<18x18x128xf32, #tpu.memory_space<vmem>>, vector<18x18x128xf32>,
    %c1_83 = arith.constant 1 : index
    %c1_84 = arith.constant 1 : index
    %c0_85 = arith.constant 0 : index
    %79 = vector.load %arg11[%c1_83, %c1_84, %c0_85] : memref<18x18x128xf32, #tpu.memory_space<vmem>>, vector<16x16x128xf32>
    tpu.vector_store %arg11[%c1_83, %c1_84, %c0_85], %76 {strides = array<i32>} : memref<18x18x128xf32, #tpu.memory_space<vmem>>, vector<16x16x128xf32>,
    %cst_86 = arith.constant 0.000000e+00 : f32
    %80 = vector.broadcast %cst_86 : f32 to vector<256x128xf32>
    %c0_87 = arith.constant 0 : index
    %c0_88 = arith.constant 0 : index
    %c0_89 = arith.constant 0 : index
    %81 = vector.load %arg11[%c0_87, %c0_88, %c0_89] : memref<18x18x128xf32, #tpu.memory_space<vmem>>, vector<16x16x128xf32>
    %82 = vector.shape_cast %81 : vector<16x16x128xf32> to vector<256x128xf32>
    %c0_90 = arith.constant 0 : index
    %c0_91 = arith.constant 0 : index
    %c0_92 = arith.constant 0 : index
    %83 = vector.load %arg7[%c0_90, %c0_91, %c0_92] : memref<9x128x128xf32, #tpu.memory_space<vmem>>, vector<1x128x128xf32>
    %84 = vector.shape_cast %83 : vector<1x128x128xf32> to vector<128x128xf32>
    %cst_93 = arith.constant dense<0.000000e+00> : vector<256x128xf32>
    %85 = tpu.matmul %82, %84, %cst_93 {dimension_numbers = #tpu.dot_dimension_numbers<[1], [0], [0], [1], [0, 0, 1, 1], [], []>} : vector<256x128xf32>, vector<128x128xf32>, vector<256x128xf32> -> vector<256x128xf32>
    %86 = arith.addf %80, %85 : vector<256x128xf32>
    %c0_94 = arith.constant 0 : index
    %c1_95 = arith.constant 1 : index
    %c0_96 = arith.constant 0 : index
    %87 = vector.load %arg11[%c0_94, %c1_95, %c0_96] : memref<18x18x128xf32, #tpu.memory_space<vmem>>, vector<16x16x128xf32>
    %88 = vector.shape_cast %87 : vector<16x16x128xf32> to vector<256x128xf32>
    %c1_97 = arith.constant 1 : index
    %c0_98 = arith.constant 0 : index
    %c0_99 = arith.constant 0 : index
    %89 = vector.load %arg7[%c1_97, %c0_98, %c0_99] : memref<9x128x128xf32, #tpu.memory_space<vmem>>, vector<1x128x128xf32>
    %90 = vector.shape_cast %89 : vector<1x128x128xf32> to vector<128x128xf32>
    %cst_100 = arith.constant dense<0.000000e+00> : vector<256x128xf32>
    %91 = tpu.matmul %88, %90, %cst_100 {dimension_numbers = #tpu.dot_dimension_numbers<[1], [0], [0], [1], [0, 0, 1, 1], [], []>} : vector<256x128xf32>, vector<128x128xf32>, vector<256x128xf32> -> vector<256x128xf32>
    %92 = arith.addf %86, %91 : vector<256x128xf32>
    %c0_101 = arith.constant 0 : index
    %c2_102 = arith.constant 2 : index
    %c0_103 = arith.constant 0 : index
    %93 = vector.load %arg11[%c0_101, %c2_102, %c0_103] : memref<18x18x128xf32, #tpu.memory_space<vmem>>, vector<16x16x128xf32>
    %94 = vector.shape_cast %93 : vector<16x16x128xf32> to vector<256x128xf32>
    %c2_104 = arith.constant 2 : index
    %c0_105 = arith.constant 0 : index
    %c0_106 = arith.constant 0 : index
    %95 = vector.load %arg7[%c2_104, %c0_105, %c0_106] : memref<9x128x128xf32, #tpu.memory_space<vmem>>, vector<1x128x128xf32>
    %96 = vector.shape_cast %95 : vector<1x128x128xf32> to vector<128x128xf32>
    %cst_107 = arith.constant dense<0.000000e+00> : vector<256x128xf32>
    %97 = tpu.matmul %94, %96, %cst_107 {dimension_numbers = #tpu.dot_dimension_numbers<[1], [0], [0], [1], [0, 0, 1, 1], [], []>} : vector<256x128xf32>, vector<128x128xf32>, vector<256x128xf32> -> vector<256x128xf32>
    %98 = arith.addf %92, %97 : vector<256x128xf32>
    %c1_108 = arith.constant 1 : index
    %c0_109 = arith.constant 0 : index
    %c0_110 = arith.constant 0 : index
    %99 = vector.load %arg11[%c1_108, %c0_109, %c0_110] : memref<18x18x128xf32, #tpu.memory_space<vmem>>, vector<16x16x128xf32>
    %100 = vector.shape_cast %99 : vector<16x16x128xf32> to vector<256x128xf32>
    %c3_111 = arith.constant 3 : index
    %c0_112 = arith.constant 0 : index
    %c0_113 = arith.constant 0 : index
    %101 = vector.load %arg7[%c3_111, %c0_112, %c0_113] : memref<9x128x128xf32, #tpu.memory_space<vmem>>, vector<1x128x128xf32>
    %102 = vector.shape_cast %101 : vector<1x128x128xf32> to vector<128x128xf32>
    %cst_114 = arith.constant dense<0.000000e+00> : vector<256x128xf32>
    %103 = tpu.matmul %100, %102, %cst_114 {dimension_numbers = #tpu.dot_dimension_numbers<[1], [0], [0], [1], [0, 0, 1, 1], [], []>} : vector<256x128xf32>, vector<128x128xf32>, vector<256x128xf32> -> vector<256x128xf32>
    %104 = arith.addf %98, %103 : vector<256x128xf32>
    %c1_115 = arith.constant 1 : index
    %c1_116 = arith.constant 1 : index
    %c0_117 = arith.constant 0 : index
    %105 = vector.load %arg11[%c1_115, %c1_116, %c0_117] : memref<18x18x128xf32, #tpu.memory_space<vmem>>, vector<16x16x128xf32>
    %106 = vector.shape_cast %105 : vector<16x16x128xf32> to vector<256x128xf32>
    %c4_118 = arith.constant 4 : index
    %c0_119 = arith.constant 0 : index
    %c0_120 = arith.constant 0 : index
    %107 = vector.load %arg7[%c4_118, %c0_119, %c0_120] : memref<9x128x128xf32, #tpu.memory_space<vmem>>, vector<1x128x128xf32>
    %108 = vector.shape_cast %107 : vector<1x128x128xf32> to vector<128x128xf32>
    %cst_121 = arith.constant dense<0.000000e+00> : vector<256x128xf32>
    %109 = tpu.matmul %106, %108, %cst_121 {dimension_numbers = #tpu.dot_dimension_numbers<[1], [0], [0], [1], [0, 0, 1, 1], [], []>} : vector<256x128xf32>, vector<128x128xf32>, vector<256x128xf32> -> vector<256x128xf32>
    %110 = arith.addf %104, %109 : vector<256x128xf32>
    %c1_122 = arith.constant 1 : index
    %c2_123 = arith.constant 2 : index
    %c0_124 = arith.constant 0 : index
    %111 = vector.load %arg11[%c1_122, %c2_123, %c0_124] : memref<18x18x128xf32, #tpu.memory_space<vmem>>, vector<16x16x128xf32>
    %112 = vector.shape_cast %111 : vector<16x16x128xf32> to vector<256x128xf32>
    %c5_125 = arith.constant 5 : index
    %c0_126 = arith.constant 0 : index
    %c0_127 = arith.constant 0 : index
    %113 = vector.load %arg7[%c5_125, %c0_126, %c0_127] : memref<9x128x128xf32, #tpu.memory_space<vmem>>, vector<1x128x128xf32>
    %114 = vector.shape_cast %113 : vector<1x128x128xf32> to vector<128x128xf32>
    %cst_128 = arith.constant dense<0.000000e+00> : vector<256x128xf32>
    %115 = tpu.matmul %112, %114, %cst_128 {dimension_numbers = #tpu.dot_dimension_numbers<[1], [0], [0], [1], [0, 0, 1, 1], [], []>} : vector<256x128xf32>, vector<128x128xf32>, vector<256x128xf32> -> vector<256x128xf32>
    %116 = arith.addf %110, %115 : vector<256x128xf32>
    %c2_129 = arith.constant 2 : index
    %c0_130 = arith.constant 0 : index
    %c0_131 = arith.constant 0 : index
    %117 = vector.load %arg11[%c2_129, %c0_130, %c0_131] : memref<18x18x128xf32, #tpu.memory_space<vmem>>, vector<16x16x128xf32>
    %118 = vector.shape_cast %117 : vector<16x16x128xf32> to vector<256x128xf32>
    %c6_132 = arith.constant 6 : index
    %c0_133 = arith.constant 0 : index
    %c0_134 = arith.constant 0 : index
    %119 = vector.load %arg7[%c6_132, %c0_133, %c0_134] : memref<9x128x128xf32, #tpu.memory_space<vmem>>, vector<1x128x128xf32>
    %120 = vector.shape_cast %119 : vector<1x128x128xf32> to vector<128x128xf32>
    %cst_135 = arith.constant dense<0.000000e+00> : vector<256x128xf32>
    %121 = tpu.matmul %118, %120, %cst_135 {dimension_numbers = #tpu.dot_dimension_numbers<[1], [0], [0], [1], [0, 0, 1, 1], [], []>} : vector<256x128xf32>, vector<128x128xf32>, vector<256x128xf32> -> vector<256x128xf32>
    %122 = arith.addf %116, %121 : vector<256x128xf32>
    %c2_136 = arith.constant 2 : index
    %c1_137 = arith.constant 1 : index
    %c0_138 = arith.constant 0 : index
    %123 = vector.load %arg11[%c2_136, %c1_137, %c0_138] : memref<18x18x128xf32, #tpu.memory_space<vmem>>, vector<16x16x128xf32>
    %124 = vector.shape_cast %123 : vector<16x16x128xf32> to vector<256x128xf32>
    %c7_139 = arith.constant 7 : index
    %c0_140 = arith.constant 0 : index
    %c0_141 = arith.constant 0 : index
    %125 = vector.load %arg7[%c7_139, %c0_140, %c0_141] : memref<9x128x128xf32, #tpu.memory_space<vmem>>, vector<1x128x128xf32>
    %126 = vector.shape_cast %125 : vector<1x128x128xf32> to vector<128x128xf32>
    %cst_142 = arith.constant dense<0.000000e+00> : vector<256x128xf32>
    %127 = tpu.matmul %124, %126, %cst_142 {dimension_numbers = #tpu.dot_dimension_numbers<[1], [0], [0], [1], [0, 0, 1, 1], [], []>} : vector<256x128xf32>, vector<128x128xf32>, vector<256x128xf32> -> vector<256x128xf32>
    %128 = arith.addf %122, %127 : vector<256x128xf32>
    %c2_143 = arith.constant 2 : index
    %c2_144 = arith.constant 2 : index
    %c0_145 = arith.constant 0 : index
    %129 = vector.load %arg11[%c2_143, %c2_144, %c0_145] : memref<18x18x128xf32, #tpu.memory_space<vmem>>, vector<16x16x128xf32>
    %130 = vector.shape_cast %129 : vector<16x16x128xf32> to vector<256x128xf32>
    %c8_146 = arith.constant 8 : index
    %c0_147 = arith.constant 0 : index
    %c0_148 = arith.constant 0 : index
    %131 = vector.load %arg7[%c8_146, %c0_147, %c0_148] : memref<9x128x128xf32, #tpu.memory_space<vmem>>, vector<1x128x128xf32>
    %132 = vector.shape_cast %131 : vector<1x128x128xf32> to vector<128x128xf32>
    %cst_149 = arith.constant dense<0.000000e+00> : vector<256x128xf32>
    %133 = tpu.matmul %130, %132, %cst_149 {dimension_numbers = #tpu.dot_dimension_numbers<[1], [0], [0], [1], [0, 0, 1, 1], [], []>} : vector<256x128xf32>, vector<128x128xf32>, vector<256x128xf32> -> vector<256x128xf32>
    %134 = arith.addf %128, %133 : vector<256x128xf32>
    %135 = vector.shape_cast %134 : vector<256x128xf32> to vector<16x16x128xf32>
    %136 = vector.shape_cast %9 : vector<16x16x128xf32> to vector<256x128xf32>
    %c0_150 = arith.constant 0 : index
    %c0_151 = arith.constant 0 : index
    %137 = vector.load %arg8[%c0_150, %c0_151] : memref<128x128xf32, #tpu.memory_space<vmem>>, vector<128x128xf32>
    %cst_152 = arith.constant dense<0.000000e+00> : vector<256x128xf32>
    %138 = tpu.matmul %136, %137, %cst_152 {dimension_numbers = #tpu.dot_dimension_numbers<[1], [0], [0], [1], [0, 0, 1, 1], [], []>} : vector<256x128xf32>, vector<128x128xf32>, vector<256x128xf32> -> vector<256x128xf32>
    %139 = vector.shape_cast %138 : vector<256x128xf32> to vector<16x16x128xf32>
    %140 = arith.addf %135, %139 : vector<16x16x128xf32>
    %c0_153 = arith.constant 0 : index
    %c0_154 = arith.constant 0 : index
    %c0_155 = arith.constant 0 : index
    %c0_156 = arith.constant 0 : index
    %141 = vector.load %arg9[%c0_153, %c0_154, %c0_155, %c0_156] : memref<1x16x16x128xf32, #tpu.memory_space<vmem>>, vector<1x16x16x128xf32>
    %142 = vector.shape_cast %141 : vector<1x16x16x128xf32> to vector<16x16x128xf32>
    %143 = vector.shape_cast %140 : vector<16x16x128xf32> to vector<1x16x16x128xf32>
    tpu.vector_store %arg9[%c0_153, %c0_154, %c0_155, %c0_156], %143 {strides = array<i32>} : memref<1x16x16x128xf32, #tpu.memory_space<vmem>>, vector<1x16x16x128xf32>,
    return
  }
  func.func @transform_0(%arg0: i32) -> (i32, i32, i32, i32) {
    %c0_i32 = arith.constant 0 : i32
    %c0_i32_0 = arith.constant 0 : i32
    %c0_i32_1 = arith.constant 0 : i32
    %c0_i32_2 = arith.constant 0 : i32
    return %arg0, %c0_i32, %c0_i32_0, %c0_i32_1 : i32, i32, i32, i32
  }
  func.func @transform_1(%arg0: i32) -> (i32, i32, i32) {
    %c0_i32 = arith.constant 0 : i32
    %c0_i32_0 = arith.constant 0 : i32
    %c0_i32_1 = arith.constant 0 : i32
    %c0_i32_2 = arith.constant 0 : i32
    return %c0_i32, %c0_i32_0, %c0_i32_1 : i32, i32, i32
  }
  func.func @transform_2(%arg0: i32) -> (i32, i32, i32) {
    %c0_i32 = arith.constant 0 : i32
    %c0_i32_0 = arith.constant 0 : i32
    %c0_i32_1 = arith.constant 0 : i32
    %c0_i32_2 = arith.constant 0 : i32
    return %c0_i32, %c0_i32_0, %c0_i32_1 : i32, i32, i32
  }
  func.func @transform_3(%arg0: i32) -> (i32, i32, i32) {
    %c0_i32 = arith.constant 0 : i32
    %c0_i32_0 = arith.constant 0 : i32
    %c0_i32_1 = arith.constant 0 : i32
    %c0_i32_2 = arith.constant 0 : i32
    return %c0_i32, %c0_i32_0, %c0_i32_1 : i32, i32, i32
  }
  func.func @transform_4(%arg0: i32) -> (i32, i32, i32) {
    %c0_i32 = arith.constant 0 : i32
    %c0_i32_0 = arith.constant 0 : i32
    %c0_i32_1 = arith.constant 0 : i32
    %c0_i32_2 = arith.constant 0 : i32
    return %c0_i32, %c0_i32_0, %c0_i32_1 : i32, i32, i32
  }
  func.func @transform_5(%arg0: i32) -> (i32, i32, i32) {
    %c0_i32 = arith.constant 0 : i32
    %c0_i32_0 = arith.constant 0 : i32
    %c0_i32_1 = arith.constant 0 : i32
    %c0_i32_2 = arith.constant 0 : i32
    return %c0_i32, %c0_i32_0, %c0_i32_1 : i32, i32, i32
  }
  func.func @transform_6(%arg0: i32) -> (i32, i32, i32) {
    %c0_i32 = arith.constant 0 : i32
    %c0_i32_0 = arith.constant 0 : i32
    %c0_i32_1 = arith.constant 0 : i32
    %c0_i32_2 = arith.constant 0 : i32
    return %c0_i32, %c0_i32_0, %c0_i32_1 : i32, i32, i32
  }
  func.func @transform_7(%arg0: i32) -> (i32, i32) {
    %c0_i32 = arith.constant 0 : i32
    %c0_i32_0 = arith.constant 0 : i32
    %c0_i32_1 = arith.constant 0 : i32
    return %c0_i32, %c0_i32_0 : i32, i32
  }
  func.func @transform_8(%arg0: i32) -> (i32, i32, i32, i32) {
    %c0_i32 = arith.constant 0 : i32
    %c0_i32_0 = arith.constant 0 : i32
    %c0_i32_1 = arith.constant 0 : i32
    %c0_i32_2 = arith.constant 0 : i32
    return %arg0, %c0_i32, %c0_i32_0, %c0_i32_1 : i32, i32, i32, i32
  }
}

</mosaic_0001>

<llo_original>
// kernel: tpu_custom_call.1
$region0: #{tpu_custom_call.1}
  #allocation0 [shape = 'u32[]', space=smem, size = 0x4, offset = 0x4, fixed_abs, tag = 'smem constant byte address 0x4 - core index']
  #allocation1 [shape = 'u32[144,128]{1,0:T(1,128)}', space=vmem, size = 0x12000, scoped, tag = 'internal scratch']
  #allocation2 [shape = 'f32[18,18,128]{2,1,0:T(8,128)}', space=vmem, size = 0x36000, scoped, tag = 'scratch operand']
  #allocation3 [shape = 'f32[18,18,128]{2,1,0:T(8,128)}', space=vmem, size = 0x36000, scoped, tag = 'scratch operand']
  %s0 = inlined_call_operand.hbm [shape: f32[2,16,16,128], index: 0, kind: input, shape index: {}]
  %s1 = inlined_call_operand.vmem [shape: f32[1,1,128], index: 1, kind: input, shape index: {}]
  %s2 = inlined_call_operand.vmem [shape: f32[1,1,128], index: 2, kind: input, shape index: {}]
  %s3 = inlined_call_operand.hbm [shape: f32[9,128,128], index: 3, kind: input, shape index: {}]
  %s4 = inlined_call_operand.vmem [shape: f32[1,1,128], index: 4, kind: input, shape index: {}]
  %s5 = inlined_call_operand.vmem [shape: f32[1,1,128], index: 5, kind: input, shape index: {}]
  %s6 = inlined_call_operand.hbm [shape: f32[9,128,128], index: 6, kind: input, shape index: {}]
  %s7 = inlined_call_operand.hbm [shape: f32[128,128], index: 7, kind: input, shape index: {}]
  %s8 = inlined_call_operand.hbm [shape: f32[2,16,16,128], index: 8, kind: output, shape index: {}]
  %s9 = sld [smem:[#allocation0]]
  $region81: #{tpu_custom_call.1} parent=0
    _
  %s11 = ssub.s32 1, %s9
  %s12 = scalar_select 0, %s11, %s9
  $region1: #{tpu_custom_call.1} parent=0
    #allocation4 [shape = 'u8[262144]{0}', space=vmem, size = 0x40000, scoped, tag = 'input window, operand 0']
    #allocation5 [shape = 's32[2]{0}', space=sflag, size = 0x8, scoped, tag = 'scoped memory for tpu_custom_call.1']
    #allocation6 [shape = 's32[2]{0}', space=sflag, size = 0x8, scoped, tag = 'scoped memory for tpu_custom_call.1']
    #allocation7 [shape = 'u8[589824]{0}', space=vmem, size = 0x90000, scoped, tag = 'input window, operand 3, single buffered']
    #allocation8 [shape = 's32[1]{0}', space=sflag, size = 0x4, scoped, tag = 'scoped memory for tpu_custom_call.1']
    #allocation9 [shape = 'u8[589824]{0}', space=vmem, size = 0x90000, scoped, tag = 'input window, operand 6, single buffered']
    #allocation10 [shape = 'u8[65536]{0}', space=vmem, size = 0x10000, scoped, tag = 'input window, operand 7, single buffered']
    #allocation11 [shape = 's32[1]{0}', space=sflag, size = 0x4, scoped, tag = 'scoped memory for tpu_custom_call.1']
    #allocation12 [shape = 'u8[262144]{0}', space=vmem, size = 0x40000, scoped, tag = 'output window, operand 0']
    %13 = vsyncpa [#allocation5], 0
    %s14 = scalar_lea.sflag [#allocation5], 1
    %15 = vsyncpa %s14, 0
    %16 = vsyncpa [#allocation8], 0
    %17 = vsyncpa [#allocation11], 0
    %18 = vsyncpa [#allocation6], 0
    %s19 = scalar_lea.sflag [#allocation6], 1
    %20 = vsyncpa %s19, 0
    loop: start=0, step=1, limit=4
    $region2: #{tpu_custom_call.1} parent=1 // loop_pre_header
      _
    $region3: #{tpu_custom_call.1} parent=1 // loop_header
      %s22 = sphi 0, %s26
      %p23 = scmp.ge.s32.totalorder %s22, 4
      %s32 = sphi 0, %s34
      %s35 = sphi 0, %s32
      %s36 = sphi 0, %s35
      %s52 = sphi 0, %s36
      %s56 = sphi 0, %s56
      %s58 = sphi 0, %s56
      %s59 = sphi 0, %s58
      %s73 = sphi 0, %s59
      %s77 = sphi 0, %s77
      %s79 = sphi 0, %s77
      %s80 = sphi 0, %s79
      %s94 = sphi 0, %s80
      %s98 = sphi 0, %s98
      %s100 = sphi 0, %s98
      %s101 = sphi 0, %s100
      %s115 = sphi 0, %s101
      %s119 = sphi 0, %s119
      %s121 = sphi 0, %s119
      %s122 = sphi 0, %s121
      %s136 = sphi 0, %s122
      %s140 = sphi 0, %s140
      %s142 = sphi 0, %s140
      %s143 = sphi 0, %s142
      %s157 = sphi 0, %s143
      %s161 = sphi 0, %s161
      %s163 = sphi 0, %s161
      %s164 = sphi 0, %s163
      %s178 = sphi 0, %s164
      %s182 = sphi 0, %s182
      %s184 = sphi 0, %s182
      %s185 = sphi 0, %s184
      %s199 = sphi 0, %s185
      %s205 = sphi 0, %s207
      %s208 = sphi 0, %s205
      %s209 = sphi 0, %s208
      %s225 = sphi 0, %s209
    $region4: #{tpu_custom_call.1} parent=1 // loop_header_branch
      %25 = sbr.rel (%p23) target = $region8
    $region5: #{tpu_custom_call.1} parent=1 // loop_body
      %s27 = ssub.s32 %s22, 1
      %s28 = ssub.s32 %s22, 2
      %s29 = sadd.s32 %s22, 1
      %s30 = ssub.s32 %s22, %s29
      %p31 = scmp.eq.s32.totalorder %s30, 0
      %s33 = sadd.s32 %s32, 1
      %s34 = scalar_select %p31, %s32, %s33
      %p37 = pneg %p31
      %p38 = scmp.eq.s32.totalorder %s22, 1
      %p39 = por %p37, %p38
      %p40 = scmp.ne.s32.totalorder %s32, %s35
      %p41 = scmp.eq.s32.totalorder %s22, 0
      %p42 = por %p40, %p41
      %p43 = scmp.ne.s32.totalorder %s32, %s35
      %p44 = scmp.eq.s32.totalorder %s27, 1
      %p45 = por %p43, %p44
      %p46 = scmp.ne.s32.totalorder %s35, %s36
      %p47 = scmp.eq.s32.totalorder %s27, 0
      %p48 = por %p46, %p47
      %p49 = scmp.ne.s32.totalorder %s35, %s36
      %p50 = scmp.eq.s32.totalorder %s28, 1
      %p51 = por %p49, %p50
      %p53 = scmp.ne.s32.totalorder %s36, %s52
      %p54 = scmp.eq.s32.totalorder %s28, 0
      %p55 = por %p53, %p54
      %s57 = sadd.s32 %s56, 1
      %p60 = scmp.eq.s32.totalorder %s22, 1
      %p61 = scmp.ne.s32.totalorder %s56, %s58
      %p62 = scmp.eq.s32.totalorder %s22, 0
      %p63 = por %p61, %p62
      %p64 = scmp.ne.s32.totalorder %s56, %s58
      %p65 = scmp.eq.s32.totalorder %s27, 1
      %p66 = por %p64, %p65
      %p67 = scmp.ne.s32.totalorder %s58, %s59
      %p68 = scmp.eq.s32.totalorder %s27, 0
      %p69 = por %p67, %p68
      %p70 = scmp.ne.s32.totalorder %s58, %s59
      %p71 = scmp.eq.s32.totalorder %s28, 1
      %p72 = por %p70, %p71
      %p74 = scmp.ne.s32.totalorder %s59, %s73
      %p75 = scmp.eq.s32.totalorder %s28, 0
      %p76 = por %p74, %p75
      %s78 = sadd.s32 %s77, 1
      %p81 = scmp.eq.s32.totalorder %s22, 1
      %p82 = scmp.ne.s32.totalorder %s77, %s79
      %p83 = scmp.eq.s32.totalorder %s22, 0
      %p84 = por %p82, %p83
      %p85 = scmp.ne.s32.totalorder %s77, %s79
      %p86 = scmp.eq.s32.totalorder %s27, 1
      %p87 = por %p85, %p86
      %p88 = scmp.ne.s32.totalorder %s79, %s80
      %p89 = scmp.eq.s32.totalorder %s27, 0
      %p90 = por %p88, %p89
      %p91 = scmp.ne.s32.totalorder %s79, %s80
      %p92 = scmp.eq.s32.totalorder %s28, 1
      %p93 = por %p91, %p92
      %p95 = scmp.ne.s32.totalorder %s80, %s94
      %p96 = scmp.eq.s32.totalorder %s28, 0
      %p97 = por %p95, %p96
      %s99 = sadd.s32 %s98, 1
      %p102 = scmp.eq.s32.totalorder %s22, 1
      %p103 = scmp.ne.s32.totalorder %s98, %s100
      %p104 = scmp.eq.s32.totalorder %s22, 0
      %p105 = por %p103, %p104
      %p106 = scmp.ne.s32.totalorder %s98, %s100
      %p107 = scmp.eq.s32.totalorder %s27, 1
      %p108 = por %p106, %p107
      %p109 = scmp.ne.s32.totalorder %s100, %s101
      %p110 = scmp.eq.s32.totalorder %s27, 0
      %p111 = por %p109, %p110
      %p112 = scmp.ne.s32.totalorder %s100, %s101
      %p113 = scmp.eq.s32.totalorder %s28, 1
      %p114 = por %p112, %p113
      %p116 = scmp.ne.s32.totalorder %s101, %s115
      %p117 = scmp.eq.s32.totalorder %s28, 0
      %p118 = por %p116, %p117
      %s120 = sadd.s32 %s119, 1
      %p123 = scmp.eq.s32.totalorder %s22, 1
      %p124 = scmp.ne.s32.totalorder %s119, %s121
      %p125 = scmp.eq.s32.totalorder %s22, 0
      %p126 = por %p124, %p125
      %p127 = scmp.ne.s32.totalorder %s119, %s121
      %p128 = scmp.eq.s32.totalorder %s27, 1
      %p129 = por %p127, %p128
      %p130 = scmp.ne.s32.totalorder %s121, %s122
      %p131 = scmp.eq.s32.totalorder %s27, 0
      %p132 = por %p130, %p131
      %p133 = scmp.ne.s32.totalorder %s121, %s122
      %p134 = scmp.eq.s32.totalorder %s28, 1
      %p135 = por %p133, %p134
      %p137 = scmp.ne.s32.totalorder %s122, %s136
      %p138 = scmp.eq.s32.totalorder %s28, 0
      %p139 = por %p137, %p138
      %s141 = sadd.s32 %s140, 1
      %p144 = scmp.eq.s32.totalorder %s22, 1
      %p145 = scmp.ne.s32.totalorder %s140, %s142
      %p146 = scmp.eq.s32.totalorder %s22, 0
      %p147 = por %p145, %p146
      %p148 = scmp.ne.s32.totalorder %s140, %s142
      %p149 = scmp.eq.s32.totalorder %s27, 1
      %p150 = por %p148, %p149
      %p151 = scmp.ne.s32.totalorder %s142, %s143
      %p152 = scmp.eq.s32.totalorder %s27, 0
      %p153 = por %p151, %p152
      %p154 = scmp.ne.s32.totalorder %s142, %s143
      %p155 = scmp.eq.s32.totalorder %s28, 1
      %p156 = por %p154, %p155
      %p158 = scmp.ne.s32.totalorder %s143, %s157
      %p159 = scmp.eq.s32.totalorder %s28, 0
      %p160 = por %p158, %p159
      %s162 = sadd.s32 %s161, 1
      %p165 = scmp.eq.s32.totalorder %s22, 1
      %p166 = scmp.ne.s32.totalorder %s161, %s163
      %p167 = scmp.eq.s32.totalorder %s22, 0
      %p168 = por %p166, %p167
      %p169 = scmp.ne.s32.totalorder %s161, %s163
      %p170 = scmp.eq.s32.totalorder %s27, 1
      %p171 = por %p169, %p170
      %p172 = scmp.ne.s32.totalorder %s163, %s164
      %p173 = scmp.eq.s32.totalorder %s27, 0
      %p174 = por %p172, %p173
      %p175 = scmp.ne.s32.totalorder %s163, %s164
      %p176 = scmp.eq.s32.totalorder %s28, 1
      %p177 = por %p175, %p176
      %p179 = scmp.ne.s32.totalorder %s164, %s178
      %p180 = scmp.eq.s32.totalorder %s28, 0
      %p181 = por %p179, %p180
      %s183 = sadd.s32 %s182, 1
      %p186 = scmp.eq.s32.totalorder %s22, 1
      %p187 = scmp.ne.s32.totalorder %s182, %s184
      %p188 = scmp.eq.s32.totalorder %s22, 0
      %p189 = por %p187, %p188
      %p190 = scmp.ne.s32.totalorder %s182, %s184
      %p191 = scmp.eq.s32.totalorder %s27, 1
      %p192 = por %p190, %p191
      %p193 = scmp.ne.s32.totalorder %s184, %s185
      %p194 = scmp.eq.s32.totalorder %s27, 0
      %p195 = por %p193, %p194
      %p196 = scmp.ne.s32.totalorder %s184, %s185
      %p197 = scmp.eq.s32.totalorder %s28, 1
      %p198 = por %p196, %p197
      %p200 = scmp.ne.s32.totalorder %s185, %s199
      %p201 = scmp.eq.s32.totalorder %s28, 0
      %p202 = por %p200, %p201
      %s203 = ssub.s32 %s22, %s29
      %p204 = scmp.eq.s32.totalorder %s203, 0
      %s206 = sadd.s32 %s205, 1
      %s207 = scalar_select %p204, %s205, %s206
      %p210 = pneg %p204
      %p211 = scmp.eq.s32.totalorder %s22, 1
      %p212 = por %p210, %p211
      %p213 = scmp.ne.s32.totalorder %s205, %s208
      %p214 = scmp.eq.s32.totalorder %s22, 0
      %p215 = por %p213, %p214
      %p216 = scmp.ne.s32.totalorder %s205, %s208
      %p217 = scmp.eq.s32.totalorder %s27, 1
      %p218 = por %p216, %p217
      %p219 = scmp.ne.s32.totalorder %s208, %s209
      %p220 = scmp.eq.s32.totalorder %s27, 0
      %p221 = por %p219, %p220
      %p222 = scmp.ne.s32.totalorder %s208, %s209
      %p223 = scmp.eq.s32.totalorder %s28, 1
      %p224 = por %p222, %p223
      %p226 = scmp.ne.s32.totalorder %s209, %s225
      %p227 = scmp.eq.s32.totalorder %s28, 0
      %p228 = por %p226, %p227
      %p229 = scmp.le.s32.totalorder 1, %s22
      %p230 = scmp.lt.s32.totalorder %s22, 3
      %p231 = pnand %p229, %p230
      %p232 = pneg %p231
      // Predicated region
      $region9: #{tpu_custom_call.1} parent=5 // pred_check
        _
      $region10: #{tpu_custom_call.1} parent=5 // pred_check_branch
        %234 = sbr.rel (%p231) target = $region12
      $region11: #{tpu_custom_call.1} parent=5 // pred_region
        %s235 = ssub.s32 %s22, 1
        // Predicated region
        $region13: #{tpu_custom_call.1} parent=11 // pred_check
          %p236 = pneg %p69
        $region14: #{tpu_custom_call.1} parent=11 // pred_check_branch
          %238 = sbr.rel (%p236) target = $region16
        $region15: #{tpu_custom_call.1} parent=11 // pred_region
          _
        $region16: #{tpu_custom_call.1} parent=11 // pred_fallthru
          _
        // Predicated region
        $region17: #{tpu_custom_call.1} parent=11 // pred_check
          %p239 = pneg %p90
        $region18: #{tpu_custom_call.1} parent=11 // pred_check_branch
          %241 = sbr.rel (%p239) target = $region20
        $region19: #{tpu_custom_call.1} parent=11 // pred_region
          _
        $region20: #{tpu_custom_call.1} parent=11 // pred_fallthru
          _
        // Predicated region
        $region21: #{tpu_custom_call.1} parent=11 // pred_check
          %p242 = pneg %p111
        $region22: #{tpu_custom_call.1} parent=11 // pred_check_branch
          %244 = sbr.rel (%p242) target = $region24
        $region23: #{tpu_custom_call.1} parent=11 // pred_region
          %s246 = ssub.s32 18432, 18432
          %247 = vsyncadd [#allocation8], %s246
          %s248 = sshll.u32 [#allocation7], 4
          %s249 = int_to_ptr.vmem [resolvable:$true] %s248
          %254 = dma.hbm_to_vmem [thread:$0]  %s3, 18432, %s249, [#allocation8], 128, 128, 8
        $region24: #{tpu_custom_call.1} parent=11 // pred_fallthru
          _
        // Predicated region
        $region25: #{tpu_custom_call.1} parent=11 // pred_check
          %p255 = pneg %p132
        $region26: #{tpu_custom_call.1} parent=11 // pred_check_branch
          %257 = sbr.rel (%p255) target = $region28
        $region27: #{tpu_custom_call.1} parent=11 // pred_region
          _
        $region28: #{tpu_custom_call.1} parent=11 // pred_fallthru
          _
        // Predicated region
        $region29: #{tpu_custom_call.1} parent=11 // pred_check
          %p258 = pneg %p153
        $region30: #{tpu_custom_call.1} parent=11 // pred_check_branch
          %260 = sbr.rel (%p258) target = $region32
        $region31: #{tpu_custom_call.1} parent=11 // pred_region
          _
        $region32: #{tpu_custom_call.1} parent=11 // pred_fallthru
          _
        // Predicated region
        $region33: #{tpu_custom_call.1} parent=11 // pred_check
          %p261 = pneg %p174
        $region34: #{tpu_custom_call.1} parent=11 // pred_check_branch
          %263 = sbr.rel (%p261) target = $region36
        $region35: #{tpu_custom_call.1} parent=11 // pred_region
          %s265 = ssub.s32 18432, 18432
          %266 = vsyncadd [#allocation8], %s265
          %s267 = sshll.u32 [#allocation9], 4
          %s268 = int_to_ptr.vmem [resolvable:$true] %s267
          %273 = dma.hbm_to_vmem [thread:$0]  %s6, 18432, %s268, [#allocation8], 128, 128, 8
        $region36: #{tpu_custom_call.1} parent=11 // pred_fallthru
          _
        // Predicated region
        $region37: #{tpu_custom_call.1} parent=11 // pred_check
          %p274 = pneg %p195
        $region38: #{tpu_custom_call.1} parent=11 // pred_check_branch
          %276 = sbr.rel (%p274) target = $region40
        $region39: #{tpu_custom_call.1} parent=11 // pred_region
          %s278 = ssub.s32 2048, 2048
          %279 = vsyncadd [#allocation11], %s278
          %s280 = sshll.u32 [#allocation10], 4
          %s281 = int_to_ptr.vmem [resolvable:$true] %s280
          %286 = dma.hbm_to_vmem [thread:$0]  %s7, 2048, %s281, [#allocation11], 128, 128, 8
        $region40: #{tpu_custom_call.1} parent=11 // pred_fallthru
          _
      $region12: #{tpu_custom_call.1} parent=5 // pred_fallthru
        _
      %p287 = scmp.lt.s32.totalorder %s22, 2
      // Predicated region
      $region41: #{tpu_custom_call.1} parent=5 // pred_check
        %p288 = pneg %p287
      $region42: #{tpu_custom_call.1} parent=5 // pred_check_branch
        %290 = sbr.rel (%p288) target = $region44
      $region43: #{tpu_custom_call.1} parent=5 // pred_region
        // Predicated region
        $region45: #{tpu_custom_call.1} parent=43 // pred_check
          %p291 = pneg %p42
        $region46: #{tpu_custom_call.1} parent=43 // pred_check_branch
          %293 = sbr.rel (%p291) target = $region48
        $region47: #{tpu_custom_call.1} parent=43 // pred_region
          %s294 = sand.u32 %s32, 1
          %s295 = scalar_lea.sflag [#allocation5], %s294
          %s296 = sand.u32 %s32, 1
          %s297 = smul.addr %s296, 256
          %s298 = scalar_lea.vmem [#allocation4], %s297
          %s300 = ssub.s32 4096, 4096
          %301 = vsyncadd %s295, %s300
          %s302 = smul.addr %s22, 32
          %s303 = smul.addr %s302, 128
          %s304 = scalar_lea.hbm %s0, %s303
          %s305 = sshll.u32 %s298, 4
          %s306 = int_to_ptr.vmem [resolvable:$true] %s305
          %311 = dma.hbm_to_vmem [thread:$0]  %s304, 4096, %s306, %s295, 128, 128, 8
        $region48: #{tpu_custom_call.1} parent=43 // pred_fallthru
          _
      $region44: #{tpu_custom_call.1} parent=5 // pred_fallthru
        _
      %p312 = scmp.le.s32.totalorder 1, %s22
      %p313 = scmp.lt.s32.totalorder %s22, 3
      %p314 = pnand %p312, %p313
      %p315 = pneg %p314
      // Predicated region
      $region49: #{tpu_custom_call.1} parent=5 // pred_check
        _
      $region50: #{tpu_custom_call.1} parent=5 // pred_check_branch
        %317 = sbr.rel (%p314) target = $region52
      $region51: #{tpu_custom_call.1} parent=5 // pred_region
        %s318 = ssub.s32 %s22, 1
        %s319 = sand.u32 %s35, 1
        %s320 = scalar_lea.sflag [#allocation5], %s319
        %s321 = sand.u32 %s35, 1
        %s322 = smul.addr %s321, 256
        %s323 = scalar_lea.vmem [#allocation4], %s322
        // Predicated region
        $region53: #{tpu_custom_call.1} parent=51 // pred_check
          %p324 = pneg %p48
        $region54: #{tpu_custom_call.1} parent=51 // pred_check_branch
          %326 = sbr.rel (%p324) target = $region56
        $region55: #{tpu_custom_call.1} parent=51 // pred_region
          %327 = dma.done %s320, 4096
        $region56: #{tpu_custom_call.1} parent=51 // pred_fallthru
          _
        // Predicated region
        $region57: #{tpu_custom_call.1} parent=51 // pred_check
          %p328 = pneg %p111
        $region58: #{tpu_custom_call.1} parent=51 // pred_check_branch
          %330 = sbr.rel (%p328) target = $region60
        $region59: #{tpu_custom_call.1} parent=51 // pred_region
          %331 = dma.done [#allocation8], 18432
        $region60: #{tpu_custom_call.1} parent=51 // pred_fallthru
          _
        // Predicated region
        $region61: #{tpu_custom_call.1} parent=51 // pred_check
          %p332 = pneg %p174
        $region62: #{tpu_custom_call.1} parent=51 // pred_check_branch
          %334 = sbr.rel (%p332) target = $region64
        $region63: #{tpu_custom_call.1} parent=51 // pred_region
          %335 = dma.done [#allocation8], 18432
        $region64: #{tpu_custom_call.1} parent=51 // pred_fallthru
          _
        // Predicated region
        $region65: #{tpu_custom_call.1} parent=51 // pred_check
          %p336 = pneg %p195
        $region66: #{tpu_custom_call.1} parent=51 // pred_check_branch
          %338 = sbr.rel (%p336) target = $region68
        $region67: #{tpu_custom_call.1} parent=51 // pred_region
          %339 = dma.done [#allocation11], 2048
        $region68: #{tpu_custom_call.1} parent=51 // pred_fallthru
          _
        %s340 = sand.u32 %s35, 1
        %s341 = scalar_lea.sflag [#allocation5], %s340
        %s342 = sand.u32 %s35, 1
        %s343 = smul.addr %s342, 256
        %s344 = scalar_lea.vmem [#allocation4], %s343
        %p345 = pneg %p48
        %p346 = pneg %p45
        %p347 = pneg %p69
        %p348 = pneg %p66
        %p349 = pneg %p90
        %p350 = pneg %p87
        %p351 = pneg %p111
        %p352 = pneg %p108
        %p353 = pneg %p132
        %p354 = pneg %p129
        %p355 = pneg %p153
        %p356 = pneg %p150
        %p357 = pneg %p174
        %p358 = pneg %p171
        %p359 = pneg %p195
        %p360 = pneg %p192
        %p361 = pneg %p221
        %p362 = pneg %p218
        %s363 = sand.u32 %s208, 1
        %s364 = scalar_lea.sflag [#allocation6], %s363
        %s365 = sand.u32 %s208, 1
        %s366 = smul.addr %s365, 256
        %s367 = scalar_lea.vmem [#allocation12], %s366
        %v368 = vld [vmem:[%s323] sm:$0xff]
        %v369 = vld [vmem:[%s323 + $0x8] sm:$0xff]
        %v370 = vld [vmem:[%s323 + $0x10] sm:$0xff]
        %v371 = vld [vmem:[%s323 + $0x18] sm:$0xff]
        %v372 = vld [vmem:[%s323 + $0x20] sm:$0xff]
        %v373 = vld [vmem:[%s323 + $0x28] sm:$0xff]
        %v374 = vld [vmem:[%s323 + $0x30] sm:$0xff]
        %v375 = vld [vmem:[%s323 + $0x38] sm:$0xff]
        %v376 = vld [vmem:[%s323 + $0x40] sm:$0xff]
        %v377 = vld [vmem:[%s323 + $0x48] sm:$0xff]
        %v378 = vld [vmem:[%s323 + $0x50] sm:$0xff]
        %v379 = vld [vmem:[%s323 + $0x58] sm:$0xff]
        %v380 = vld [vmem:[%s323 + $0x60] sm:$0xff]
        %v381 = vld [vmem:[%s323 + $0x68] sm:$0xff]
        %v382 = vld [vmem:[%s323 + $0x70] sm:$0xff]
        %v383 = vld [vmem:[%s323 + $0x78] sm:$0xff]
        %v384 = vld [vmem:[%s323 + $0x80] sm:$0xff]
        %v385 = vld [vmem:[%s323 + $0x88] sm:$0xff]
        %v386 = vld [vmem:[%s323 + $0x90] sm:$0xff]
        %v387 = vld [vmem:[%s323 + $0x98] sm:$0xff]
        %v388 = vld [vmem:[%s323 + $0xa0] sm:$0xff]
        %v389 = vld [vmem:[%s323 + $0xa8] sm:$0xff]
        %v390 = vld [vmem:[%s323 + $0xb0] sm:$0xff]
        %v391 = vld [vmem:[%s323 + $0xb8] sm:$0xff]
        %v392 = vld [vmem:[%s323 + $0xc0] sm:$0xff]
        %v393 = vld [vmem:[%s323 + $0xc8] sm:$0xff]
        %v394 = vld [vmem:[%s323 + $0xd0] sm:$0xff]
        %v395 = vld [vmem:[%s323 + $0xd8] sm:$0xff]
        %v396 = vld [vmem:[%s323 + $0xe0] sm:$0xff]
        %v397 = vld [vmem:[%s323 + $0xe8] sm:$0xff]
        %v398 = vld [vmem:[%s323 + $0xf0] sm:$0xff]
        %v399 = vld [vmem:[%s323 + $0xf8] sm:$0xff]
        %v400 = vld [vmem:[%s1] sm:$0x1]
        %v402 = vlaneseq
        %v403 = vshrl.u32 %v402, 7
        %v404 = vsub.s32 0, %v403
        %v405 = vrot.slane %v400, %v404
        %v407 = vmul.f32 %v368, %v405
        %v408 = vmul.f32 %v369, %v405
        %v409 = vmul.f32 %v370, %v405
        %v410 = vmul.f32 %v371, %v405
        %v411 = vmul.f32 %v372, %v405
        %v412 = vmul.f32 %v373, %v405
        %v413 = vmul.f32 %v374, %v405
        %v414 = vmul.f32 %v375, %v405
        %v415 = vmul.f32 %v376, %v405
        %v416 = vmul.f32 %v377, %v405
        %v417 = vmul.f32 %v378, %v405
        %v418 = vmul.f32 %v379, %v405
        %v419 = vmul.f32 %v380, %v405
        %v420 = vmul.f32 %v381, %v405
        %v421 = vmul.f32 %v382, %v405
        %v422 = vmul.f32 %v383, %v405
        %v423 = vmul.f32 %v384, %v405
        %v424 = vmul.f32 %v385, %v405
        %v425 = vmul.f32 %v386, %v405
        %v426 = vmul.f32 %v387, %v405
        %v427 = vmul.f32 %v388, %v405
        %v428 = vmul.f32 %v389, %v405
        %v429 = vmul.f32 %v390, %v405
        %v430 = vmul.f32 %v391, %v405
        %v431 = vmul.f32 %v392, %v405
        %v432 = vmul.f32 %v393, %v405
        %v433 = vmul.f32 %v394, %v405
        %v434 = vmul.f32 %v395, %v405
        %v435 = vmul.f32 %v396, %v405
        %v436 = vmul.f32 %v397, %v405
        %v437 = vmul.f32 %v398, %v405
        %v438 = vmul.f32 %v399, %v405
        %v439 = vld [vmem:[%s2] sm:$0x1]
        %v441 = vlaneseq
        %v442 = vshrl.u32 %v441, 7
        %v443 = vsub.s32 0, %v442
        %v444 = vrot.slane %v439, %v443
        %v446 = vadd.f32 %v407, %v444
        %v447 = vadd.f32 %v408, %v444
        %v448 = vadd.f32 %v409, %v444
        %v449 = vadd.f32 %v410, %v444
        %v450 = vadd.f32 %v411, %v444
        %v451 = vadd.f32 %v412, %v444
        %v452 = vadd.f32 %v413, %v444
        %v453 = vadd.f32 %v414, %v444
        %v454 = vadd.f32 %v415, %v444
        %v455 = vadd.f32 %v416, %v444
        %v456 = vadd.f32 %v417, %v444
        %v457 = vadd.f32 %v418, %v444
        %v458 = vadd.f32 %v419, %v444
        %v459 = vadd.f32 %v420, %v444
        %v460 = vadd.f32 %v421, %v444
        %v461 = vadd.f32 %v422, %v444
        %v462 = vadd.f32 %v423, %v444
        %v463 = vadd.f32 %v424, %v444
        %v464 = vadd.f32 %v425, %v444
        %v465 = vadd.f32 %v426, %v444
        %v466 = vadd.f32 %v427, %v444
        %v467 = vadd.f32 %v428, %v444
        %v468 = vadd.f32 %v429, %v444
        %v469 = vadd.f32 %v430, %v444
        %v470 = vadd.f32 %v431, %v444
        %v471 = vadd.f32 %v432, %v444
        %v472 = vadd.f32 %v433, %v444
        %v473 = vadd.f32 %v434, %v444
        %v474 = vadd.f32 %v435, %v444
        %v475 = vadd.f32 %v436, %v444
        %v476 = vadd.f32 %v437, %v444
        %v477 = vadd.f32 %v438, %v444
        %v478 = vmax.f32 %v446, 0.0
        %v479 = vmax.f32 %v447, 0.0
        %v480 = vmax.f32 %v448, 0.0
        %v481 = vmax.f32 %v449, 0.0
        %v482 = vmax.f32 %v450, 0.0
        %v483 = vmax.f32 %v451, 0.0
        %v484 = vmax.f32 %v452, 0.0
        %v485 = vmax.f32 %v453, 0.0
        %v486 = vmax.f32 %v454, 0.0
        %v487 = vmax.f32 %v455, 0.0
        %v488 = vmax.f32 %v456, 0.0
        %v489 = vmax.f32 %v457, 0.0
        %v490 = vmax.f32 %v458, 0.0
        %v491 = vmax.f32 %v459, 0.0
        %v492 = vmax.f32 %v460, 0.0
        %v493 = vmax.f32 %v461, 0.0
        %v494 = vmax.f32 %v462, 0.0
        %v495 = vmax.f32 %v463, 0.0
        %v496 = vmax.f32 %v464, 0.0
        %v497 = vmax.f32 %v465, 0.0
        %v498 = vmax.f32 %v466, 0.0
        %v499 = vmax.f32 %v467, 0.0
        %v500 = vmax.f32 %v468, 0.0
        %v501 = vmax.f32 %v469, 0.0
        %v502 = vmax.f32 %v470, 0.0
        %v503 = vmax.f32 %v471, 0.0
        %v504 = vmax.f32 %v472, 0.0
        %v505 = vmax.f32 %v473, 0.0
        %v506 = vmax.f32 %v474, 0.0
        %v507 = vmax.f32 %v475, 0.0
        %v508 = vmax.f32 %v476, 0.0
        %v509 = vmax.f32 %v477, 0.0
        %510 = vst [vmem:[#allocation2] sm:$0xff] 0.0
        %511 = vst [vmem:[#allocation2 + $0x8] sm:$0xff] 0.0
        %512 = vst [vmem:[#allocation2 + $0x10] sm:$0x3] 0.0
        %513 = vst [vmem:[#allocation2 + $0x18] sm:$0xff] 0.0
        %514 = vst [vmem:[#allocation2 + $0x20] sm:$0xff] 0.0
        %515 = vst [vmem:[#allocation2 + $0x28] sm:$0x3] 0.0
        %516 = vst [vmem:[#allocation2 + $0x30] sm:$0xff] 0.0
        %517 = vst [vmem:[#allocation2 + $0x38] sm:$0xff] 0.0
        %518 = vst [vmem:[#allocation2 + $0x40] sm:$0x3] 0.0
        %519 = vst [vmem:[#allocation2 + $0x48] sm:$0xff] 0.0
        %520 = vst [vmem:[#allocation2 + $0x50] sm:$0xff] 0.0
        %521 = vst [vmem:[#allocation2 + $0x58] sm:$0x3] 0.0
        %522 = vst [vmem:[#allocation2 + $0x60] sm:$0xff] 0.0
        %523 = vst [vmem:[#allocation2 + $0x68] sm:$0xff] 0.0
        %524 = vst [vmem:[#allocation2 + $0x70] sm:$0x3] 0.0
        %525 = vst [vmem:[#allocation2 + $0x78] sm:$0xff] 0.0
        %526 = vst [vmem:[#allocation2 + $0x80] sm:$0xff] 0.0
        %527 = vst [vmem:[#allocation2 + $0x88] sm:$0x3] 0.0
        %528 = vst [vmem:[#allocation2 + $0x90] sm:$0xff] 0.0
        %529 = vst [vmem:[#allocation2 + $0x98] sm:$0xff] 0.0
        %530 = vst [vmem:[#allocation2 + $0xa0] sm:$0x3] 0.0
        %531 = vst [vmem:[#allocation2 + $0xa8] sm:$0xff] 0.0
        %532 = vst [vmem:[#allocation2 + $0xb0] sm:$0xff] 0.0
        %533 = vst [vmem:[#allocation2 + $0xb8] sm:$0x3] 0.0
        %534 = vst [vmem:[#allocation2 + $0xc0] sm:$0xff] 0.0
        %535 = vst [vmem:[#allocation2 + $0xc8] sm:$0xff] 0.0
        %536 = vst [vmem:[#allocation2 + $0xd0] sm:$0x3] 0.0
        %537 = vst [vmem:[#allocation2 + $0xd8] sm:$0xff] 0.0
        %538 = vst [vmem:[#allocation2 + $0xe0] sm:$0xff] 0.0
        %539 = vst [vmem:[#allocation2 + $0xe8] sm:$0x3] 0.0
        %540 = vst [vmem:[#allocation2 + $0xf0] sm:$0xff] 0.0
        %541 = vst [vmem:[#allocation2 + $0xf8] sm:$0xff] 0.0
        %542 = vst [vmem:[#allocation2 + $0x100] sm:$0x3] 0.0
        %543 = vst [vmem:[#allocation2 + $0x108] sm:$0xff] 0.0
        %544 = vst [vmem:[#allocation2 + $0x110] sm:$0xff] 0.0
        %545 = vst [vmem:[#allocation2 + $0x118] sm:$0x3] 0.0
        %546 = vst [vmem:[#allocation2 + $0x120] sm:$0xff] 0.0
        %547 = vst [vmem:[#allocation2 + $0x128] sm:$0xff] 0.0
        %548 = vst [vmem:[#allocation2 + $0x130] sm:$0x3] 0.0
        %549 = vst [vmem:[#allocation2 + $0x138] sm:$0xff] 0.0
        %550 = vst [vmem:[#allocation2 + $0x140] sm:$0xff] 0.0
        %551 = vst [vmem:[#allocation2 + $0x148] sm:$0x3] 0.0
        %552 = vst [vmem:[#allocation2 + $0x150] sm:$0xff] 0.0
        %553 = vst [vmem:[#allocation2 + $0x158] sm:$0xff] 0.0
        %554 = vst [vmem:[#allocation2 + $0x160] sm:$0x3] 0.0
        %555 = vst [vmem:[#allocation2 + $0x168] sm:$0xff] 0.0
        %556 = vst [vmem:[#allocation2 + $0x170] sm:$0xff] 0.0
        %557 = vst [vmem:[#allocation2 + $0x178] sm:$0x3] 0.0
        %558 = vst [vmem:[#allocation2 + $0x180] sm:$0xff] 0.0
        %559 = vst [vmem:[#allocation2 + $0x188] sm:$0xff] 0.0
        %560 = vst [vmem:[#allocation2 + $0x190] sm:$0x3] 0.0
        %561 = vst [vmem:[#allocation2 + $0x198] sm:$0xff] 0.0
        %562 = vst [vmem:[#allocation2 + $0x1a0] sm:$0xff] 0.0
        %563 = vst [vmem:[#allocation2 + $0x1a8] sm:$0x3] 0.0
        %s564 = scalar_lea.vmem [#allocation2], 24
        %565 = vst [vmem:[%s564 + $0x1] sm:$0xff] %v478
        %566 = vst [vmem:[%s564 + $0x9] sm:$0xff] %v479
        %567 = vst [vmem:[%s564 + $0x19] sm:$0xff] %v480
        %568 = vst [vmem:[%s564 + $0x21] sm:$0xff] %v481
        %569 = vst [vmem:[%s564 + $0x31] sm:$0xff] %v482
        %570 = vst [vmem:[%s564 + $0x39] sm:$0xff] %v483
        %571 = vst [vmem:[%s564 + $0x49] sm:$0xff] %v484
        %572 = vst [vmem:[%s564 + $0x51] sm:$0xff] %v485
        %573 = vst [vmem:[%s564 + $0x61] sm:$0xff] %v486
        %574 = vst [vmem:[%s564 + $0x69] sm:$0xff] %v487
        %575 = vst [vmem:[%s564 + $0x79] sm:$0xff] %v488
        %576 = vst [vmem:[%s564 + $0x81] sm:$0xff] %v489
        %577 = vst [vmem:[%s564 + $0x91] sm:$0xff] %v490
        %578 = vst [vmem:[%s564 + $0x99] sm:$0xff] %v491
        %579 = vst [vmem:[%s564 + $0xa9] sm:$0xff] %v492
        %580 = vst [vmem:[%s564 + $0xb1] sm:$0xff] %v493
        %581 = vst [vmem:[%s564 + $0xc1] sm:$0xff] %v494
        %582 = vst [vmem:[%s564 + $0xc9] sm:$0xff] %v495
        %583 = vst [vmem:[%s564 + $0xd9] sm:$0xff] %v496
        %584 = vst [vmem:[%s564 + $0xe1] sm:$0xff] %v497
        %585 = vst [vmem:[%s564 + $0xf1] sm:$0xff] %v498
        %586 = vst [vmem:[%s564 + $0xf9] sm:$0xff] %v499
        %587 = vst [vmem:[%s564 + $0x109] sm:$0xff] %v500
        %588 = vst [vmem:[%s564 + $0x111] sm:$0xff] %v501
        %589 = vst [vmem:[%s564 + $0x121] sm:$0xff] %v502
        %590 = vst [vmem:[%s564 + $0x129] sm:$0xff] %v503
        %591 = vst [vmem:[%s564 + $0x139] sm:$0xff] %v504
        %592 = vst [vmem:[%s564 + $0x141] sm:$0xff] %v505
        %593 = vst [vmem:[%s564 + $0x151] sm:$0xff] %v506
        %594 = vst [vmem:[%s564 + $0x159] sm:$0xff] %v507
        %595 = vst [vmem:[%s564 + $0x169] sm:$0xff] %v508
        %596 = vst [vmem:[%s564 + $0x171] sm:$0xff] %v509
        %v597 = vld [vmem:[#allocation2] sm:$0xff]
        %v598 = vld [vmem:[#allocation2 + $0x8] sm:$0xff]
        %v599 = vld [vmem:[#allocation2 + $0x18] sm:$0xff]
        %v600 = vld [vmem:[#allocation2 + $0x20] sm:$0xff]
        %v601 = vld [vmem:[#allocation2 + $0x30] sm:$0xff]
        %v602 = vld [vmem:[#allocation2 + $0x38] sm:$0xff]
        %v603 = vld [vmem:[#allocation2 + $0x48] sm:$0xff]
        %v604 = vld [vmem:[#allocation2 + $0x50] sm:$0xff]
        %v605 = vld [vmem:[#allocation2 + $0x60] sm:$0xff]
        %v606 = vld [vmem:[#allocation2 + $0x68] sm:$0xff]
        %v607 = vld [vmem:[#allocation2 + $0x78] sm:$0xff]
        %v608 = vld [vmem:[#allocation2 + $0x80] sm:$0xff]
        %v609 = vld [vmem:[#allocation2 + $0x90] sm:$0xff]
        %v610 = vld [vmem:[#allocation2 + $0x98] sm:$0xff]
        %v611 = vld [vmem:[#allocation2 + $0xa8] sm:$0xff]
        %v612 = vld [vmem:[#allocation2 + $0xb0] sm:$0xff]
        %v613 = vld [vmem:[#allocation2 + $0xc0] sm:$0xff]
        %v614 = vld [vmem:[#allocation2 + $0xc8] sm:$0xff]
        %v615 = vld [vmem:[#allocation2 + $0xd8] sm:$0xff]
        %v616 = vld [vmem:[#allocation2 + $0xe0] sm:$0xff]
        %v617 = vld [vmem:[#allocation2 + $0xf0] sm:$0xff]
        %v618 = vld [vmem:[#allocation2 + $0xf8] sm:$0xff]
        %v619 = vld [vmem:[#allocation2 + $0x108] sm:$0xff]
        %v620 = vld [vmem:[#allocation2 + $0x110] sm:$0xff]
        %v621 = vld [vmem:[#allocation2 + $0x120] sm:$0xff]
        %v622 = vld [vmem:[#allocation2 + $0x128] sm:$0xff]
        %v623 = vld [vmem:[#allocation2 + $0x138] sm:$0xff]
        %v624 = vld [vmem:[#allocation2 + $0x140] sm:$0xff]
        %v625 = vld [vmem:[#allocation2 + $0x150] sm:$0xff]
        %v626 = vld [vmem:[#allocation2 + $0x158] sm:$0xff]
        %v627 = vld [vmem:[#allocation2 + $0x168] sm:$0xff]
        %v628 = vld [vmem:[#allocation2 + $0x170] sm:$0xff]
        %v629 = vld [vmem:[#allocation7] sm:$0xff]
        %v630 = vld [vmem:[#allocation7 + $0x8] sm:$0xff]
        %v631 = vld [vmem:[#allocation7 + $0x10] sm:$0xff]
        %v632 = vld [vmem:[#allocation7 + $0x18] sm:$0xff]
        %v633 = vld [vmem:[#allocation7 + $0x20] sm:$0xff]
        %v634 = vld [vmem:[#allocation7 + $0x28] sm:$0xff]
        %v635 = vld [vmem:[#allocation7 + $0x30] sm:$0xff]
        %v636 = vld [vmem:[#allocation7 + $0x38] sm:$0xff]
        %v637 = vld [vmem:[#allocation7 + $0x40] sm:$0xff]
        %v638 = vld [vmem:[#allocation7 + $0x48] sm:$0xff]
        %v639 = vld [vmem:[#allocation7 + $0x50] sm:$0xff]
        %v640 = vld [vmem:[#allocation7 + $0x58] sm:$0xff]
        %v641 = vld [vmem:[#allocation7 + $0x60] sm:$0xff]
        %v642 = vld [vmem:[#allocation7 + $0x68] sm:$0xff]
        %v643 = vld [vmem:[#allocation7 + $0x70] sm:$0xff]
        %v644 = vld [vmem:[#allocation7 + $0x78] sm:$0xff]
        %v645 = vld [vmem:[#allocation2 + $0x1] sm:$0xff]
        %v646 = vld [vmem:[#allocation2 + $0x9] sm:$0xff]
        %v647 = vld [vmem:[#allocation2 + $0x19] sm:$0xff]
        %v648 = vld [vmem:[#allocation2 + $0x21] sm:$0xff]
        %v649 = vld [vmem:[#allocation2 + $0x31] sm:$0xff]
        %v650 = vld [vmem:[#allocation2 + $0x39] sm:$0xff]
        %v651 = vld [vmem:[#allocation2 + $0x49] sm:$0xff]
        %v652 = vld [vmem:[#allocation2 + $0x51] sm:$0xff]
        %v653 = vld [vmem:[#allocation2 + $0x61] sm:$0xff]
        %v654 = vld [vmem:[#allocation2 + $0x69] sm:$0xff]
        %v655 = vld [vmem:[#allocation2 + $0x79] sm:$0xff]
        %v656 = vld [vmem:[#allocation2 + $0x81] sm:$0xff]
        %v657 = vld [vmem:[#allocation2 + $0x91] sm:$0xff]
        %v658 = vld [vmem:[#allocation2 + $0x99] sm:$0xff]
        %v659 = vld [vmem:[#allocation2 + $0xa9] sm:$0xff]
        %v660 = vld [vmem:[#allocation2 + $0xb1] sm:$0xff]
        %v661 = vld [vmem:[#allocation2 + $0xc1] sm:$0xff]
        %v662 = vld [vmem:[#allocation2 + $0xc9] sm:$0xff]
        %v663 = vld [vmem:[#allocation2 + $0xd9] sm:$0xff]
        %v664 = vld [vmem:[#allocation2 + $0xe1] sm:$0xff]
        %v665 = vld [vmem:[#allocation2 + $0xf1] sm:$0xff]
        %v666 = vld [vmem:[#allocation2 + $0xf9] sm:$0xff]
        %v667 = vld [vmem:[#allocation2 + $0x109] sm:$0xff]
        %v668 = vld [vmem:[#allocation2 + $0x111] sm:$0xff]
        %v669 = vld [vmem:[#allocation2 + $0x121] sm:$0xff]
        %v670 = vld [vmem:[#allocation2 + $0x129] sm:$0xff]
        %v671 = vld [vmem:[#allocation2 + $0x139] sm:$0xff]
        %v672 = vld [vmem:[#allocation2 + $0x141] sm:$0xff]
        %v673 = vld [vmem:[#allocation2 + $0x151] sm:$0xff]
        %v674 = vld [vmem:[#allocation2 + $0x159] sm:$0xff]
        %v675 = vld [vmem:[#allocation2 + $0x169] sm:$0xff]
        %v676 = vld [vmem:[#allocation2 + $0x171] sm:$0xff]
        %s677 = scalar_lea.vmem [#allocation7], 128
        %v678 = vld [vmem:[%s677] sm:$0xff]
        %v679 = vld [vmem:[%s677 + $0x8] sm:$0xff]
        %v680 = vld [vmem:[%s677 + $0x10] sm:$0xff]
        %v681 = vld [vmem:[%s677 + $0x18] sm:$0xff]
        %v682 = vld [vmem:[%s677 + $0x20] sm:$0xff]
        %v683 = vld [vmem:[%s677 + $0x28] sm:$0xff]
        %v684 = vld [vmem:[%s677 + $0x30] sm:$0xff]
        %v685 = vld [vmem:[%s677 + $0x38] sm:$0xff]
        %v686 = vld [vmem:[%s677 + $0x40] sm:$0xff]
        %v687 = vld [vmem:[%s677 + $0x48] sm:$0xff]
        %v688 = vld [vmem:[%s677 + $0x50] sm:$0xff]
        %v689 = vld [vmem:[%s677 + $0x58] sm:$0xff]
        %v690 = vld [vmem:[%s677 + $0x60] sm:$0xff]
        %v691 = vld [vmem:[%s677 + $0x68] sm:$0xff]
        %v692 = vld [vmem:[%s677 + $0x70] sm:$0xff]
        %v693 = vld [vmem:[%s677 + $0x78] sm:$0xff]
        %694 = vmatprep.subr.mxu0 0.0
        %695 = vmatpush1.msra.mxu0 %v693
        %696 = vmatprep.subr.mxu0 0.0
        %697 = vmatpush1.msra.mxu0 %v692
        %698 = vmatprep.subr.mxu0 0.0
        %699 = vmatpush1.msra.mxu0 %v691
        %700 = vmatprep.subr.mxu0 0.0
        %701 = vmatpush1.msra.mxu0 %v690
        %702 = vmatprep.subr.mxu0 0.0
        %703 = vmatpush1.msra.mxu0 %v689
        %704 = vmatprep.subr.mxu0 0.0
        %705 = vmatpush1.msra.mxu0 %v688
        %706 = vmatprep.subr.mxu0 0.0
        %707 = vmatpush1.msra.mxu0 %v687
        %708 = vmatprep.subr.mxu0 0.0
        %709 = vmatpush1.msra.mxu0 %v686
        %710 = vmatprep.subr.mxu0 0.0
        %711 = vmatpush1.msra.mxu0 %v685
        %712 = vmatprep.subr.mxu0 0.0
        %713 = vmatpush1.msra.mxu0 %v684
        %714 = vmatprep.subr.mxu0 0.0
        %715 = vmatpush1.msra.mxu0 %v683
        %716 = vmatprep.subr.mxu0 0.0
        %717 = vmatpush1.msra.mxu0 %v682
        %718 = vmatprep.subr.mxu0 0.0
        %719 = vmatpush1.msra.mxu0 %v681
        %720 = vmatprep.subr.mxu0 0.0
        %721 = vmatpush1.msra.mxu0 %v680
        %722 = vmatprep.subr.mxu0 0.0
        %723 = vmatpush1.msra.mxu0 %v679
        %724 = vmatprep.subr.mxu0 0.0
        %725 = vmatpush1.msra.mxu0 %v678
        %726 = vmatprep.subr.mxu0 0.0
        %727 = vmatpush2.msra.mxu0 0.0
        %728 = vmatprep.subr.mxu0 0.0
        %729 = vmatpush2.msra.mxu0 0.0
        %730 = vmatprep.subr.mxu0 0.0
        %731 = vmatpush2.msra.mxu0 0.0
        %732 = vmatprep.subr.mxu0 0.0
        %733 = vmatpush2.msra.mxu0 0.0
        %734 = vmatprep.subr.mxu0 0.0
        %735 = vmatpush2.msra.mxu0 0.0
        %736 = vmatprep.subr.mxu0 0.0
        %737 = vmatpush2.msra.mxu0 0.0
        %738 = vmatprep.subr.mxu0 0.0
        %739 = vmatpush2.msra.mxu0 0.0
        %740 = vmatprep.subr.mxu0 0.0
        %741 = vmatpush2.msra.mxu0 0.0
        %742 = vmatprep.subr.mxu0 0.0
        %743 = vmatpush2.msra.mxu0 0.0
        %744 = vmatprep.subr.mxu0 0.0
        %745 = vmatpush2.msra.mxu0 0.0
        %746 = vmatprep.subr.mxu0 0.0
        %747 = vmatpush2.msra.mxu0 0.0
        %748 = vmatprep.subr.mxu0 0.0
        %749 = vmatpush2.msra.mxu0 0.0
        %750 = vmatprep.subr.mxu0 0.0
        %751 = vmatpush2.msra.mxu0 0.0
        %752 = vmatprep.subr.mxu0 0.0
        %753 = vmatpush2.msra.mxu0 0.0
        %754 = vmatprep.subr.mxu0 0.0
        %755 = vmatpush2.msra.mxu0 0.0
        %756 = vmatprep.subr.mxu0 0.0
        %757 = vmatpush2.msra.mxu0 0.0
        %758 = vmatprep.mubr.f32.mxu0 0.0
        %759 = vmatmul.mubr.f32.gmra.mxu0 %v645
        %v760 = vpop.f32.mrf.mxu0
        %v761 = vadd.f32 0.0, %v760
        %v762 = vpop.f32.mrf.mxu0
        %763 = vmatprep.mubr.f32.mxu0 0.0
        %764 = vmatmul.mubr.f32.gmra.mxu0 %v646
        %v765 = vpop.f32.mrf.mxu0
        %v766 = vadd.f32 0.0, %v765
        %v767 = vpop.f32.mrf.mxu0
        %768 = vmatprep.mubr.f32.mxu0 0.0
        %769 = vmatmul.mubr.f32.gmra.mxu0 %v647
        %v770 = vpop.f32.mrf.mxu0
        %v771 = vadd.f32 0.0, %v770
        %v772 = vpop.f32.mrf.mxu0
        %773 = vmatprep.mubr.f32.mxu0 0.0
        %774 = vmatmul.mubr.f32.gmra.mxu0 %v648
        %v775 = vpop.f32.mrf.mxu0
        %v776 = vadd.f32 0.0, %v775
        %v777 = vpop.f32.mrf.mxu0
        %778 = vmatprep.mubr.f32.mxu0 0.0
        %779 = vmatmul.mubr.f32.gmra.mxu0 %v649
        %v780 = vpop.f32.mrf.mxu0
        %v781 = vadd.f32 0.0, %v780
        %v782 = vpop.f32.mrf.mxu0
        %783 = vmatprep.mubr.f32.mxu0 0.0
        %784 = vmatmul.mubr.f32.gmra.mxu0 %v650
        %v785 = vpop.f32.mrf.mxu0
        %v786 = vadd.f32 0.0, %v785
        %v787 = vpop.f32.mrf.mxu0
        %788 = vmatprep.mubr.f32.mxu0 0.0
        %789 = vmatmul.mubr.f32.gmra.mxu0 %v651
        %v790 = vpop.f32.mrf.mxu0
        %v791 = vadd.f32 0.0, %v790
        %v792 = vpop.f32.mrf.mxu0
        %793 = vmatprep.mubr.f32.mxu0 0.0
        %794 = vmatmul.mubr.f32.gmra.mxu0 %v652
        %v795 = vpop.f32.mrf.mxu0
        %v796 = vadd.f32 0.0, %v795
        %v797 = vpop.f32.mrf.mxu0
        %798 = vmatprep.mubr.f32.mxu0 0.0
        %799 = vmatmul.mubr.f32.gmra.mxu0 %v653
        %v800 = vpop.f32.mrf.mxu0
        %v801 = vadd.f32 0.0, %v800
        %v802 = vpop.f32.mrf.mxu0
        %803 = vmatprep.mubr.f32.mxu0 0.0
        %804 = vmatmul.mubr.f32.gmra.mxu0 %v654
        %v805 = vpop.f32.mrf.mxu0
        %v806 = vadd.f32 0.0, %v805
        %v807 = vpop.f32.mrf.mxu0
        %808 = vmatprep.mubr.f32.mxu0 0.0
        %809 = vmatmul.mubr.f32.gmra.mxu0 %v655
        %v810 = vpop.f32.mrf.mxu0
        %v811 = vadd.f32 0.0, %v810
        %v812 = vpop.f32.mrf.mxu0
        %813 = vmatprep.mubr.f32.mxu0 0.0
        %814 = vmatmul.mubr.f32.gmra.mxu0 %v656
        %v815 = vpop.f32.mrf.mxu0
        %v816 = vadd.f32 0.0, %v815
        %v817 = vpop.f32.mrf.mxu0
        %818 = vmatprep.mubr.f32.mxu0 0.0
        %819 = vmatmul.mubr.f32.gmra.mxu0 %v657
        %v820 = vpop.f32.mrf.mxu0
        %v821 = vadd.f32 0.0, %v820
        %v822 = vpop.f32.mrf.mxu0
        %823 = vmatprep.mubr.f32.mxu0 0.0
        %824 = vmatmul.mubr.f32.gmra.mxu0 %v658
        %v825 = vpop.f32.mrf.mxu0
        %v826 = vadd.f32 0.0, %v825
        %v827 = vpop.f32.mrf.mxu0
        %828 = vmatprep.mubr.f32.mxu0 0.0
        %829 = vmatmul.mubr.f32.gmra.mxu0 %v659
        %v830 = vpop.f32.mrf.mxu0
        %v831 = vadd.f32 0.0, %v830
        %v832 = vpop.f32.mrf.mxu0
        %833 = vmatprep.mubr.f32.mxu0 0.0
        %834 = vmatmul.mubr.f32.gmra.mxu0 %v660
        %v835 = vpop.f32.mrf.mxu0
        %v836 = vadd.f32 0.0, %v835
        %v837 = vpop.f32.mrf.mxu0
        %838 = vmatprep.mubr.f32.mxu0 0.0
        %839 = vmatmul.mubr.f32.gmra.mxu0 %v661
        %v840 = vpop.f32.mrf.mxu0
        %v841 = vadd.f32 0.0, %v840
        %v842 = vpop.f32.mrf.mxu0
        %843 = vmatprep.mubr.f32.mxu0 0.0
        %844 = vmatmul.mubr.f32.gmra.mxu0 %v662
        %v845 = vpop.f32.mrf.mxu0
        %v846 = vadd.f32 0.0, %v845
        %v847 = vpop.f32.mrf.mxu0
        %848 = vmatprep.mubr.f32.mxu0 0.0
        %849 = vmatmul.mubr.f32.gmra.mxu0 %v663
        %v850 = vpop.f32.mrf.mxu0
        %v851 = vadd.f32 0.0, %v850
        %v852 = vpop.f32.mrf.mxu0
        %853 = vmatprep.mubr.f32.mxu0 0.0
        %854 = vmatmul.mubr.f32.gmra.mxu0 %v664
        %v855 = vpop.f32.mrf.mxu0
        %v856 = vadd.f32 0.0, %v855
        %v857 = vpop.f32.mrf.mxu0
        %858 = vmatprep.mubr.f32.mxu0 0.0
        %859 = vmatmul.mubr.f32.gmra.mxu0 %v665
        %v860 = vpop.f32.mrf.mxu0
        %v861 = vadd.f32 0.0, %v860
        %v862 = vpop.f32.mrf.mxu0
        %863 = vmatprep.mubr.f32.mxu0 0.0
        %864 = vmatmul.mubr.f32.gmra.mxu0 %v666
        %v865 = vpop.f32.mrf.mxu0
        %v866 = vadd.f32 0.0, %v865
        %v867 = vpop.f32.mrf.mxu0
        %868 = vmatprep.mubr.f32.mxu0 0.0
        %869 = vmatmul.mubr.f32.gmra.mxu0 %v667
        %v870 = vpop.f32.mrf.mxu0
        %v871 = vadd.f32 0.0, %v870
        %v872 = vpop.f32.mrf.mxu0
        %873 = vmatprep.mubr.f32.mxu0 0.0
        %874 = vmatmul.mubr.f32.gmra.mxu0 %v668
        %v875 = vpop.f32.mrf.mxu0
        %v876 = vadd.f32 0.0, %v875
        %v877 = vpop.f32.mrf.mxu0
        %878 = vmatprep.mubr.f32.mxu0 0.0
        %879 = vmatmul.mubr.f32.gmra.mxu0 %v669
        %v880 = vpop.f32.mrf.mxu0
        %v881 = vadd.f32 0.0, %v880
        %v882 = vpop.f32.mrf.mxu0
        %883 = vmatprep.mubr.f32.mxu0 0.0
        %884 = vmatmul.mubr.f32.gmra.mxu0 %v670
        %v885 = vpop.f32.mrf.mxu0
        %v886 = vadd.f32 0.0, %v885
        %v887 = vpop.f32.mrf.mxu0
        %888 = vmatprep.mubr.f32.mxu0 0.0
        %889 = vmatmul.mubr.f32.gmra.mxu0 %v671
        %v890 = vpop.f32.mrf.mxu0
        %v891 = vadd.f32 0.0, %v890
        %v892 = vpop.f32.mrf.mxu0
        %893 = vmatprep.mubr.f32.mxu0 0.0
        %894 = vmatmul.mubr.f32.gmra.mxu0 %v672
        %v895 = vpop.f32.mrf.mxu0
        %v896 = vadd.f32 0.0, %v895
        %v897 = vpop.f32.mrf.mxu0
        %898 = vmatprep.mubr.f32.mxu0 0.0
        %899 = vmatmul.mubr.f32.gmra.mxu0 %v673
        %v900 = vpop.f32.mrf.mxu0
        %v901 = vadd.f32 0.0, %v900
        %v902 = vpop.f32.mrf.mxu0
        %903 = vmatprep.mubr.f32.mxu0 0.0
        %904 = vmatmul.mubr.f32.gmra.mxu0 %v674
        %v905 = vpop.f32.mrf.mxu0
        %v906 = vadd.f32 0.0, %v905
        %v907 = vpop.f32.mrf.mxu0
        %908 = vmatprep.mubr.f32.mxu0 0.0
        %909 = vmatmul.mubr.f32.gmra.mxu0 %v675
        %v910 = vpop.f32.mrf.mxu0
        %v911 = vadd.f32 0.0, %v910
        %v912 = vpop.f32.mrf.mxu0
        %913 = vmatprep.mubr.f32.mxu0 0.0
        %914 = vmatmul.mubr.f32.gmra.mxu0 %v676
        %v915 = vpop.f32.mrf.mxu0
        %v916 = vadd.f32 0.0, %v915
        %v917 = vpop.f32.mrf.mxu0
        %918 = vdwg.mxu0
        %919 = vmatprep.subr.mxu0 0.0
        %920 = vmatpush1.msra.mxu0 %v644
        %921 = vmatprep.subr.mxu0 0.0
        %922 = vmatpush1.msra.mxu0 %v643
        %923 = vmatprep.subr.mxu0 0.0
        %924 = vmatpush1.msra.mxu0 %v642
        %925 = vmatprep.subr.mxu0 0.0
        %926 = vmatpush1.msra.mxu0 %v641
        %927 = vmatprep.subr.mxu0 0.0
        %928 = vmatpush1.msra.mxu0 %v640
        %929 = vmatprep.subr.mxu0 0.0
        %930 = vmatpush1.msra.mxu0 %v639
        %931 = vmatprep.subr.mxu0 0.0
        %932 = vmatpush1.msra.mxu0 %v638
        %933 = vmatprep.subr.mxu0 0.0
        %934 = vmatpush1.msra.mxu0 %v637
        %935 = vmatprep.subr.mxu0 0.0
        %936 = vmatpush1.msra.mxu0 %v636
        %937 = vmatprep.subr.mxu0 0.0
        %938 = vmatpush1.msra.mxu0 %v635
        %939 = vmatprep.subr.mxu0 0.0
        %940 = vmatpush1.msra.mxu0 %v634
        %941 = vmatprep.subr.mxu0 0.0
        %942 = vmatpush1.msra.mxu0 %v633
        %943 = vmatprep.subr.mxu0 0.0
        %944 = vmatpush1.msra.mxu0 %v632
        %945 = vmatprep.subr.mxu0 0.0
        %946 = vmatpush1.msra.mxu0 %v631
        %947 = vmatprep.subr.mxu0 0.0
        %948 = vmatpush1.msra.mxu0 %v630
        %949 = vmatprep.subr.mxu0 0.0
        %950 = vmatpush1.msra.mxu0 %v629
        %951 = vmatprep.subr.mxu0 0.0
        %952 = vmatpush2.msra.mxu0 0.0
        %953 = vmatprep.subr.mxu0 0.0
        %954 = vmatpush2.msra.mxu0 0.0
        %955 = vmatprep.subr.mxu0 0.0
        %956 = vmatpush2.msra.mxu0 0.0
        %957 = vmatprep.subr.mxu0 0.0
        %958 = vmatpush2.msra.mxu0 0.0
        %959 = vmatprep.subr.mxu0 0.0
        %960 = vmatpush2.msra.mxu0 0.0
        %961 = vmatprep.subr.mxu0 0.0
        %962 = vmatpush2.msra.mxu0 0.0
        %963 = vmatprep.subr.mxu0 0.0
        %964 = vmatpush2.msra.mxu0 0.0
        %965 = vmatprep.subr.mxu0 0.0
        %966 = vmatpush2.msra.mxu0 0.0
        %967 = vmatprep.subr.mxu0 0.0
        %968 = vmatpush2.msra.mxu0 0.0
        %969 = vmatprep.subr.mxu0 0.0
        %970 = vmatpush2.msra.mxu0 0.0
        %971 = vmatprep.subr.mxu0 0.0
        %972 = vmatpush2.msra.mxu0 0.0
        %973 = vmatprep.subr.mxu0 0.0
        %974 = vmatpush2.msra.mxu0 0.0
        %975 = vmatprep.subr.mxu0 0.0
        %976 = vmatpush2.msra.mxu0 0.0
        %977 = vmatprep.subr.mxu0 0.0
        %978 = vmatpush2.msra.mxu0 0.0
        %979 = vmatprep.subr.mxu0 0.0
        %980 = vmatpush2.msra.mxu0 0.0
        %981 = vmatprep.subr.mxu0 0.0
        %982 = vmatpush2.msra.mxu0 0.0
        %983 = vmatprep.mubr.f32.mxu0 0.0
        %984 = vmatmul.mubr.f32.gmra.mxu0 %v597
        %v985 = vpop.f32.mrf.mxu0
        %v986 = vadd.f32 %v761, %v985
        %v987 = vpop.f32.mrf.mxu0
        %988 = vmatprep.mubr.f32.mxu0 0.0
        %989 = vmatmul.mubr.f32.gmra.mxu0 %v598
        %v990 = vpop.f32.mrf.mxu0
        %v991 = vadd.f32 %v766, %v990
        %v992 = vpop.f32.mrf.mxu0
        %993 = vmatprep.mubr.f32.mxu0 0.0
        %994 = vmatmul.mubr.f32.gmra.mxu0 %v599
        %v995 = vpop.f32.mrf.mxu0
        %v996 = vadd.f32 %v771, %v995
        %v997 = vpop.f32.mrf.mxu0
        %998 = vmatprep.mubr.f32.mxu0 0.0
        %999 = vmatmul.mubr.f32.gmra.mxu0 %v600
        %v1000 = vpop.f32.mrf.mxu0
        %v1001 = vadd.f32 %v776, %v1000
        %v1002 = vpop.f32.mrf.mxu0
        %1003 = vmatprep.mubr.f32.mxu0 0.0
        %1004 = vmatmul.mubr.f32.gmra.mxu0 %v601
        %v1005 = vpop.f32.mrf.mxu0
        %v1006 = vadd.f32 %v781, %v1005
        %v1007 = vpop.f32.mrf.mxu0
        %1008 = vmatprep.mubr.f32.mxu0 0.0
        %1009 = vmatmul.mubr.f32.gmra.mxu0 %v602
        %v1010 = vpop.f32.mrf.mxu0
        %v1011 = vadd.f32 %v786, %v1010
        %v1012 = vpop.f32.mrf.mxu0
        %1013 = vmatprep.mubr.f32.mxu0 0.0
        %1014 = vmatmul.mubr.f32.gmra.mxu0 %v603
        %v1015 = vpop.f32.mrf.mxu0
        %v1016 = vadd.f32 %v791, %v1015
        %v1017 = vpop.f32.mrf.mxu0
        %1018 = vmatprep.mubr.f32.mxu0 0.0
        %1019 = vmatmul.mubr.f32.gmra.mxu0 %v604
        %v1020 = vpop.f32.mrf.mxu0
        %v1021 = vadd.f32 %v796, %v1020
        %v1022 = vpop.f32.mrf.mxu0
        %1023 = vmatprep.mubr.f32.mxu0 0.0
        %1024 = vmatmul.mubr.f32.gmra.mxu0 %v605
        %v1025 = vpop.f32.mrf.mxu0
        %v1026 = vadd.f32 %v801, %v1025
        %v1027 = vpop.f32.mrf.mxu0
        %1028 = vmatprep.mubr.f32.mxu0 0.0
        %1029 = vmatmul.mubr.f32.gmra.mxu0 %v606
        %v1030 = vpop.f32.mrf.mxu0
        %v1031 = vadd.f32 %v806, %v1030
        %v1032 = vpop.f32.mrf.mxu0
        %1033 = vmatprep.mubr.f32.mxu0 0.0
        %1034 = vmatmul.mubr.f32.gmra.mxu0 %v607
        %v1035 = vpop.f32.mrf.mxu0
        %v1036 = vadd.f32 %v811, %v1035
        %v1037 = vpop.f32.mrf.mxu0
        %1038 = vmatprep.mubr.f32.mxu0 0.0
        %1039 = vmatmul.mubr.f32.gmra.mxu0 %v608
        %v1040 = vpop.f32.mrf.mxu0
        %v1041 = vadd.f32 %v816, %v1040
        %v1042 = vpop.f32.mrf.mxu0
        %1043 = vmatprep.mubr.f32.mxu0 0.0
        %1044 = vmatmul.mubr.f32.gmra.mxu0 %v609
        %v1045 = vpop.f32.mrf.mxu0
        %v1046 = vadd.f32 %v821, %v1045
        %v1047 = vpop.f32.mrf.mxu0
        %1048 = vmatprep.mubr.f32.mxu0 0.0
        %1049 = vmatmul.mubr.f32.gmra.mxu0 %v610
        %v1050 = vpop.f32.mrf.mxu0
        %v1051 = vadd.f32 %v826, %v1050
        %v1052 = vpop.f32.mrf.mxu0
        %1053 = vmatprep.mubr.f32.mxu0 0.0
        %1054 = vmatmul.mubr.f32.gmra.mxu0 %v611
        %v1055 = vpop.f32.mrf.mxu0
        %v1056 = vadd.f32 %v831, %v1055
        %v1057 = vpop.f32.mrf.mxu0
        %1058 = vmatprep.mubr.f32.mxu0 0.0
        %1059 = vmatmul.mubr.f32.gmra.mxu0 %v612
        %v1060 = vpop.f32.mrf.mxu0
        %v1061 = vadd.f32 %v836, %v1060
        %v1062 = vpop.f32.mrf.mxu0
        %1063 = vmatprep.mubr.f32.mxu0 0.0
        %1064 = vmatmul.mubr.f32.gmra.mxu0 %v613
        %v1065 = vpop.f32.mrf.mxu0
        %v1066 = vadd.f32 %v841, %v1065
        %v1067 = vpop.f32.mrf.mxu0
        %1068 = vmatprep.mubr.f32.mxu0 0.0
        %1069 = vmatmul.mubr.f32.gmra.mxu0 %v614
        %v1070 = vpop.f32.mrf.mxu0
        %v1071 = vadd.f32 %v846, %v1070
        %v1072 = vpop.f32.mrf.mxu0
        %1073 = vmatprep.mubr.f32.mxu0 0.0
        %1074 = vmatmul.mubr.f32.gmra.mxu0 %v615
        %v1075 = vpop.f32.mrf.mxu0
        %v1076 = vadd.f32 %v851, %v1075
        %v1077 = vpop.f32.mrf.mxu0
        %1078 = vmatprep.mubr.f32.mxu0 0.0
        %1079 = vmatmul.mubr.f32.gmra.mxu0 %v616
        %v1080 = vpop.f32.mrf.mxu0
        %v1081 = vadd.f32 %v856, %v1080
        %v1082 = vpop.f32.mrf.mxu0
        %1083 = vmatprep.mubr.f32.mxu0 0.0
        %1084 = vmatmul.mubr.f32.gmra.mxu0 %v617
        %v1085 = vpop.f32.mrf.mxu0
        %v1086 = vadd.f32 %v861, %v1085
        %v1087 = vpop.f32.mrf.mxu0
        %1088 = vmatprep.mubr.f32.mxu0 0.0
        %1089 = vmatmul.mubr.f32.gmra.mxu0 %v618
        %v1090 = vpop.f32.mrf.mxu0
        %v1091 = vadd.f32 %v866, %v1090
        %v1092 = vpop.f32.mrf.mxu0
        %1093 = vmatprep.mubr.f32.mxu0 0.0
        %1094 = vmatmul.mubr.f32.gmra.mxu0 %v619
        %v1095 = vpop.f32.mrf.mxu0
        %v1096 = vadd.f32 %v871, %v1095
        %v1097 = vpop.f32.mrf.mxu0
        %1098 = vmatprep.mubr.f32.mxu0 0.0
        %1099 = vmatmul.mubr.f32.gmra.mxu0 %v620
        %v1100 = vpop.f32.mrf.mxu0
        %v1101 = vadd.f32 %v876, %v1100
        %v1102 = vpop.f32.mrf.mxu0
        %1103 = vmatprep.mubr.f32.mxu0 0.0
        %1104 = vmatmul.mubr.f32.gmra.mxu0 %v621
        %v1105 = vpop.f32.mrf.mxu0
        %v1106 = vadd.f32 %v881, %v1105
        %v1107 = vpop.f32.mrf.mxu0
        %1108 = vmatprep.mubr.f32.mxu0 0.0
        %1109 = vmatmul.mubr.f32.gmra.mxu0 %v622
        %v1110 = vpop.f32.mrf.mxu0
        %v1111 = vadd.f32 %v886, %v1110
        %v1112 = vpop.f32.mrf.mxu0
        %1113 = vmatprep.mubr.f32.mxu0 0.0
        %1114 = vmatmul.mubr.f32.gmra.mxu0 %v623
        %v1115 = vpop.f32.mrf.mxu0
        %v1116 = vadd.f32 %v891, %v1115
        %v1117 = vpop.f32.mrf.mxu0
        %1118 = vmatprep.mubr.f32.mxu0 0.0
        %1119 = vmatmul.mubr.f32.gmra.mxu0 %v624
        %v1120 = vpop.f32.mrf.mxu0
        %v1121 = vadd.f32 %v896, %v1120
        %v1122 = vpop.f32.mrf.mxu0
        %1123 = vmatprep.mubr.f32.mxu0 0.0
        %1124 = vmatmul.mubr.f32.gmra.mxu0 %v625
        %v1125 = vpop.f32.mrf.mxu0
        %v1126 = vadd.f32 %v901, %v1125
        %v1127 = vpop.f32.mrf.mxu0
        %1128 = vmatprep.mubr.f32.mxu0 0.0
        %1129 = vmatmul.mubr.f32.gmra.mxu0 %v626
        %v1130 = vpop.f32.mrf.mxu0
        %v1131 = vadd.f32 %v906, %v1130
        %v1132 = vpop.f32.mrf.mxu0
        %1133 = vmatprep.mubr.f32.mxu0 0.0
        %1134 = vmatmul.mubr.f32.gmra.mxu0 %v627
        %v1135 = vpop.f32.mrf.mxu0
        %v1136 = vadd.f32 %v911, %v1135
        %v1137 = vpop.f32.mrf.mxu0
        %1138 = vmatprep.mubr.f32.mxu0 0.0
        %1139 = vmatmul.mubr.f32.gmra.mxu0 %v628
        %v1140 = vpop.f32.mrf.mxu0
        %v1141 = vadd.f32 %v916, %v1140
        %v1142 = vpop.f32.mrf.mxu0
        %1143 = vdwg.mxu0
        %v1144 = vld [vmem:[#allocation2 + $0x2] sm:$0xff]
        %v1145 = vld [vmem:[#allocation2 + $0xa] sm:$0xff]
        %v1146 = vld [vmem:[#allocation2 + $0x1a] sm:$0xff]
        %v1147 = vld [vmem:[#allocation2 + $0x22] sm:$0xff]
        %v1148 = vld [vmem:[#allocation2 + $0x32] sm:$0xff]
        %v1149 = vld [vmem:[#allocation2 + $0x3a] sm:$0xff]
        %v1150 = vld [vmem:[#allocation2 + $0x4a] sm:$0xff]
        %v1151 = vld [vmem:[#allocation2 + $0x52] sm:$0xff]
        %v1152 = vld [vmem:[#allocation2 + $0x62] sm:$0xff]
        %v1153 = vld [vmem:[#allocation2 + $0x6a] sm:$0xff]
        %v1154 = vld [vmem:[#allocation2 + $0x7a] sm:$0xff]
        %v1155 = vld [vmem:[#allocation2 + $0x82] sm:$0xff]
        %v1156 = vld [vmem:[#allocation2 + $0x92] sm:$0xff]
        %v1157 = vld [vmem:[#allocation2 + $0x9a] sm:$0xff]
        %v1158 = vld [vmem:[#allocation2 + $0xaa] sm:$0xff]
        %v1159 = vld [vmem:[#allocation2 + $0xb2] sm:$0xff]
        %v1160 = vld [vmem:[#allocation2 + $0xc2] sm:$0xff]
        %v1161 = vld [vmem:[#allocation2 + $0xca] sm:$0xff]
        %v1162 = vld [vmem:[#allocation2 + $0xda] sm:$0xff]
        %v1163 = vld [vmem:[#allocation2 + $0xe2] sm:$0xff]
        %v1164 = vld [vmem:[#allocation2 + $0xf2] sm:$0xff]
        %v1165 = vld [vmem:[#allocation2 + $0xfa] sm:$0xff]
        %v1166 = vld [vmem:[#allocation2 + $0x10a] sm:$0xff]
        %v1167 = vld [vmem:[#allocation2 + $0x112] sm:$0xff]
        %v1168 = vld [vmem:[#allocation2 + $0x122] sm:$0xff]
        %v1169 = vld [vmem:[#allocation2 + $0x12a] sm:$0xff]
        %v1170 = vld [vmem:[#allocation2 + $0x13a] sm:$0xff]
        %v1171 = vld [vmem:[#allocation2 + $0x142] sm:$0xff]
        %v1172 = vld [vmem:[#allocation2 + $0x152] sm:$0xff]
        %v1173 = vld [vmem:[#allocation2 + $0x15a] sm:$0xff]
        %v1174 = vld [vmem:[#allocation2 + $0x16a] sm:$0xff]
        %v1175 = vld [vmem:[#allocation2 + $0x172] sm:$0xff]
        %s1176 = scalar_lea.vmem [#allocation7], 256
        %v1177 = vld [vmem:[%s1176] sm:$0xff]
        %v1178 = vld [vmem:[%s1176 + $0x8] sm:$0xff]
        %v1179 = vld [vmem:[%s1176 + $0x10] sm:$0xff]
        %v1180 = vld [vmem:[%s1176 + $0x18] sm:$0xff]
        %v1181 = vld [vmem:[%s1176 + $0x20] sm:$0xff]
        %v1182 = vld [vmem:[%s1176 + $0x28] sm:$0xff]
        %v1183 = vld [vmem:[%s1176 + $0x30] sm:$0xff]
        %v1184 = vld [vmem:[%s1176 + $0x38] sm:$0xff]
        %v1185 = vld [vmem:[%s1176 + $0x40] sm:$0xff]
        %v1186 = vld [vmem:[%s1176 + $0x48] sm:$0xff]
        %v1187 = vld [vmem:[%s1176 + $0x50] sm:$0xff]
        %v1188 = vld [vmem:[%s1176 + $0x58] sm:$0xff]
        %v1189 = vld [vmem:[%s1176 + $0x60] sm:$0xff]
        %v1190 = vld [vmem:[%s1176 + $0x68] sm:$0xff]
        %v1191 = vld [vmem:[%s1176 + $0x70] sm:$0xff]
        %v1192 = vld [vmem:[%s1176 + $0x78] sm:$0xff]
        %1193 = vmatprep.subr.mxu0 0.0
        %1194 = vmatpush1.msra.mxu0 %v1192
        %1195 = vmatprep.subr.mxu0 0.0
        %1196 = vmatpush1.msra.mxu0 %v1191
        %1197 = vmatprep.subr.mxu0 0.0
        %1198 = vmatpush1.msra.mxu0 %v1190
        %1199 = vmatprep.subr.mxu0 0.0
        %1200 = vmatpush1.msra.mxu0 %v1189
        %1201 = vmatprep.subr.mxu0 0.0
        %1202 = vmatpush1.msra.mxu0 %v1188
        %1203 = vmatprep.subr.mxu0 0.0
        %1204 = vmatpush1.msra.mxu0 %v1187
        %1205 = vmatprep.subr.mxu0 0.0
        %1206 = vmatpush1.msra.mxu0 %v1186
        %1207 = vmatprep.subr.mxu0 0.0
        %1208 = vmatpush1.msra.mxu0 %v1185
        %1209 = vmatprep.subr.mxu0 0.0
        %1210 = vmatpush1.msra.mxu0 %v1184
        %1211 = vmatprep.subr.mxu0 0.0
        %1212 = vmatpush1.msra.mxu0 %v1183
        %1213 = vmatprep.subr.mxu0 0.0
        %1214 = vmatpush1.msra.mxu0 %v1182
        %1215 = vmatprep.subr.mxu0 0.0
        %1216 = vmatpush1.msra.mxu0 %v1181
        %1217 = vmatprep.subr.mxu0 0.0
        %1218 = vmatpush1.msra.mxu0 %v1180
        %1219 = vmatprep.subr.mxu0 0.0
        %1220 = vmatpush1.msra.mxu0 %v1179
        %1221 = vmatprep.subr.mxu0 0.0
        %1222 = vmatpush1.msra.mxu0 %v1178
        %1223 = vmatprep.subr.mxu0 0.0
        %1224 = vmatpush1.msra.mxu0 %v1177
        %1225 = vmatprep.subr.mxu0 0.0
        %1226 = vmatpush2.msra.mxu0 0.0
        %1227 = vmatprep.subr.mxu0 0.0
        %1228 = vmatpush2.msra.mxu0 0.0
        %1229 = vmatprep.subr.mxu0 0.0
        %1230 = vmatpush2.msra.mxu0 0.0
        %1231 = vmatprep.subr.mxu0 0.0
        %1232 = vmatpush2.msra.mxu0 0.0
        %1233 = vmatprep.subr.mxu0 0.0
        %1234 = vmatpush2.msra.mxu0 0.0
        %1235 = vmatprep.subr.mxu0 0.0
        %1236 = vmatpush2.msra.mxu0 0.0
        %1237 = vmatprep.subr.mxu0 0.0
        %1238 = vmatpush2.msra.mxu0 0.0
        %1239 = vmatprep.subr.mxu0 0.0
        %1240 = vmatpush2.msra.mxu0 0.0
        %1241 = vmatprep.subr.mxu0 0.0
        %1242 = vmatpush2.msra.mxu0 0.0
        %1243 = vmatprep.subr.mxu0 0.0
        %1244 = vmatpush2.msra.mxu0 0.0
        %1245 = vmatprep.subr.mxu0 0.0
        %1246 = vmatpush2.msra.mxu0 0.0
        %1247 = vmatprep.subr.mxu0 0.0
        %1248 = vmatpush2.msra.mxu0 0.0
        %1249 = vmatprep.subr.mxu0 0.0
        %1250 = vmatpush2.msra.mxu0 0.0
        %1251 = vmatprep.subr.mxu0 0.0
        %1252 = vmatpush2.msra.mxu0 0.0
        %1253 = vmatprep.subr.mxu0 0.0
        %1254 = vmatpush2.msra.mxu0 0.0
        %1255 = vmatprep.subr.mxu0 0.0
        %1256 = vmatpush2.msra.mxu0 0.0
        %1257 = vmatprep.mubr.f32.mxu0 0.0
        %1258 = vmatmul.mubr.f32.gmra.mxu0 %v1144
        %v1259 = vpop.f32.mrf.mxu0
        %v1260 = vadd.f32 0.0, %v1259
        %v1261 = vpop.f32.mrf.mxu0
        %1262 = vmatprep.mubr.f32.mxu0 0.0
        %1263 = vmatmul.mubr.f32.gmra.mxu0 %v1145
        %v1264 = vpop.f32.mrf.mxu0
        %v1265 = vadd.f32 0.0, %v1264
        %v1266 = vpop.f32.mrf.mxu0
        %1267 = vmatprep.mubr.f32.mxu0 0.0
        %1268 = vmatmul.mubr.f32.gmra.mxu0 %v1146
        %v1269 = vpop.f32.mrf.mxu0
        %v1270 = vadd.f32 0.0, %v1269
        %v1271 = vpop.f32.mrf.mxu0
        %1272 = vmatprep.mubr.f32.mxu0 0.0
        %1273 = vmatmul.mubr.f32.gmra.mxu0 %v1147
        %v1274 = vpop.f32.mrf.mxu0
        %v1275 = vadd.f32 0.0, %v1274
        %v1276 = vpop.f32.mrf.mxu0
        %1277 = vmatprep.mubr.f32.mxu0 0.0
        %1278 = vmatmul.mubr.f32.gmra.mxu0 %v1148
        %v1279 = vpop.f32.mrf.mxu0
        %v1280 = vadd.f32 0.0, %v1279
        %v1281 = vpop.f32.mrf.mxu0
        %1282 = vmatprep.mubr.f32.mxu0 0.0
        %1283 = vmatmul.mubr.f32.gmra.mxu0 %v1149
        %v1284 = vpop.f32.mrf.mxu0
        %v1285 = vadd.f32 0.0, %v1284
        %v1286 = vpop.f32.mrf.mxu0
        %1287 = vmatprep.mubr.f32.mxu0 0.0
        %1288 = vmatmul.mubr.f32.gmra.mxu0 %v1150
        %v1289 = vpop.f32.mrf.mxu0
        %v1290 = vadd.f32 0.0, %v1289
        %v1291 = vpop.f32.mrf.mxu0
        %1292 = vmatprep.mubr.f32.mxu0 0.0
        %1293 = vmatmul.mubr.f32.gmra.mxu0 %v1151
        %v1294 = vpop.f32.mrf.mxu0
        %v1295 = vadd.f32 0.0, %v1294
        %v1296 = vpop.f32.mrf.mxu0
        %1297 = vmatprep.mubr.f32.mxu0 0.0
        %1298 = vmatmul.mubr.f32.gmra.mxu0 %v1152
        %v1299 = vpop.f32.mrf.mxu0
        %v1300 = vadd.f32 0.0, %v1299
        %v1301 = vpop.f32.mrf.mxu0
        %1302 = vmatprep.mubr.f32.mxu0 0.0
        %1303 = vmatmul.mubr.f32.gmra.mxu0 %v1153
        %v1304 = vpop.f32.mrf.mxu0
        %v1305 = vadd.f32 0.0, %v1304
        %v1306 = vpop.f32.mrf.mxu0
        %1307 = vmatprep.mubr.f32.mxu0 0.0
        %1308 = vmatmul.mubr.f32.gmra.mxu0 %v1154
        %v1309 = vpop.f32.mrf.mxu0
        %v1310 = vadd.f32 0.0, %v1309
        %v1311 = vpop.f32.mrf.mxu0
        %1312 = vmatprep.mubr.f32.mxu0 0.0
        %1313 = vmatmul.mubr.f32.gmra.mxu0 %v1155
        %v1314 = vpop.f32.mrf.mxu0
        %v1315 = vadd.f32 0.0, %v1314
        %v1316 = vpop.f32.mrf.mxu0
        %1317 = vmatprep.mubr.f32.mxu0 0.0
        %1318 = vmatmul.mubr.f32.gmra.mxu0 %v1156
        %v1319 = vpop.f32.mrf.mxu0
        %v1320 = vadd.f32 0.0, %v1319
        %v1321 = vpop.f32.mrf.mxu0
        %1322 = vmatprep.mubr.f32.mxu0 0.0
        %1323 = vmatmul.mubr.f32.gmra.mxu0 %v1157
        %v1324 = vpop.f32.mrf.mxu0
        %v1325 = vadd.f32 0.0, %v1324
        %v1326 = vpop.f32.mrf.mxu0
        %1327 = vmatprep.mubr.f32.mxu0 0.0
        %1328 = vmatmul.mubr.f32.gmra.mxu0 %v1158
        %v1329 = vpop.f32.mrf.mxu0
        %v1330 = vadd.f32 0.0, %v1329
        %v1331 = vpop.f32.mrf.mxu0
        %1332 = vmatprep.mubr.f32.mxu0 0.0
        %1333 = vmatmul.mubr.f32.gmra.mxu0 %v1159
        %v1334 = vpop.f32.mrf.mxu0
        %v1335 = vadd.f32 0.0, %v1334
        %v1336 = vpop.f32.mrf.mxu0
        %1337 = vmatprep.mubr.f32.mxu0 0.0
        %1338 = vmatmul.mubr.f32.gmra.mxu0 %v1160
        %v1339 = vpop.f32.mrf.mxu0
        %v1340 = vadd.f32 0.0, %v1339
        %v1341 = vpop.f32.mrf.mxu0
        %1342 = vmatprep.mubr.f32.mxu0 0.0
        %1343 = vmatmul.mubr.f32.gmra.mxu0 %v1161
        %v1344 = vpop.f32.mrf.mxu0
        %v1345 = vadd.f32 0.0, %v1344
        %v1346 = vpop.f32.mrf.mxu0
        %1347 = vmatprep.mubr.f32.mxu0 0.0
        %1348 = vmatmul.mubr.f32.gmra.mxu0 %v1162
        %v1349 = vpop.f32.mrf.mxu0
        %v1350 = vadd.f32 0.0, %v1349
        %v1351 = vpop.f32.mrf.mxu0
        %1352 = vmatprep.mubr.f32.mxu0 0.0
        %1353 = vmatmul.mubr.f32.gmra.mxu0 %v1163
        %v1354 = vpop.f32.mrf.mxu0
        %v1355 = vadd.f32 0.0, %v1354
        %v1356 = vpop.f32.mrf.mxu0
        %1357 = vmatprep.mubr.f32.mxu0 0.0
        %1358 = vmatmul.mubr.f32.gmra.mxu0 %v1164
        %v1359 = vpop.f32.mrf.mxu0
        %v1360 = vadd.f32 0.0, %v1359
        %v1361 = vpop.f32.mrf.mxu0
        %1362 = vmatprep.mubr.f32.mxu0 0.0
        %1363 = vmatmul.mubr.f32.gmra.mxu0 %v1165
        %v1364 = vpop.f32.mrf.mxu0
        %v1365 = vadd.f32 0.0, %v1364
        %v1366 = vpop.f32.mrf.mxu0
        %1367 = vmatprep.mubr.f32.mxu0 0.0
        %1368 = vmatmul.mubr.f32.gmra.mxu0 %v1166
        %v1369 = vpop.f32.mrf.mxu0
        %v1370 = vadd.f32 0.0, %v1369
        %v1371 = vpop.f32.mrf.mxu0
        %1372 = vmatprep.mubr.f32.mxu0 0.0
        %1373 = vmatmul.mubr.f32.gmra.mxu0 %v1167
        %v1374 = vpop.f32.mrf.mxu0
        %v1375 = vadd.f32 0.0, %v1374
        %v1376 = vpop.f32.mrf.mxu0
        %1377 = vmatprep.mubr.f32.mxu0 0.0
        %1378 = vmatmul.mubr.f32.gmra.mxu0 %v1168
        %v1379 = vpop.f32.mrf.mxu0
        %v1380 = vadd.f32 0.0, %v1379
        %v1381 = vpop.f32.mrf.mxu0
        %1382 = vmatprep.mubr.f32.mxu0 0.0
        %1383 = vmatmul.mubr.f32.gmra.mxu0 %v1169
        %v1384 = vpop.f32.mrf.mxu0
        %v1385 = vadd.f32 0.0, %v1384
        %v1386 = vpop.f32.mrf.mxu0
        %1387 = vmatprep.mubr.f32.mxu0 0.0
        %1388 = vmatmul.mubr.f32.gmra.mxu0 %v1170
        %v1389 = vpop.f32.mrf.mxu0
        %v1390 = vadd.f32 0.0, %v1389
        %v1391 = vpop.f32.mrf.mxu0
        %1392 = vmatprep.mubr.f32.mxu0 0.0
        %1393 = vmatmul.mubr.f32.gmra.mxu0 %v1171
        %v1394 = vpop.f32.mrf.mxu0
        %v1395 = vadd.f32 0.0, %v1394
        %v1396 = vpop.f32.mrf.mxu0
        %1397 = vmatprep.mubr.f32.mxu0 0.0
        %1398 = vmatmul.mubr.f32.gmra.mxu0 %v1172
        %v1399 = vpop.f32.mrf.mxu0
        %v1400 = vadd.f32 0.0, %v1399
        %v1401 = vpop.f32.mrf.mxu0
        %1402 = vmatprep.mubr.f32.mxu0 0.0
        %1403 = vmatmul.mubr.f32.gmra.mxu0 %v1173
        %v1404 = vpop.f32.mrf.mxu0
        %v1405 = vadd.f32 0.0, %v1404
        %v1406 = vpop.f32.mrf.mxu0
        %1407 = vmatprep.mubr.f32.mxu0 0.0
        %1408 = vmatmul.mubr.f32.gmra.mxu0 %v1174
        %v1409 = vpop.f32.mrf.mxu0
        %v1410 = vadd.f32 0.0, %v1409
        %v1411 = vpop.f32.mrf.mxu0
        %1412 = vmatprep.mubr.f32.mxu0 0.0
        %1413 = vmatmul.mubr.f32.gmra.mxu0 %v1175
        %v1414 = vpop.f32.mrf.mxu0
        %v1415 = vadd.f32 0.0, %v1414
        %v1416 = vpop.f32.mrf.mxu0
        %1417 = vdwg.mxu0
        %v1418 = vadd.f32 %v986, %v1260
        %v1419 = vadd.f32 %v991, %v1265
        %v1420 = vadd.f32 %v996, %v1270
        %v1421 = vadd.f32 %v1001, %v1275
        %v1422 = vadd.f32 %v1006, %v1280
        %v1423 = vadd.f32 %v1011, %v1285
        %v1424 = vadd.f32 %v1016, %v1290
        %v1425 = vadd.f32 %v1021, %v1295
        %v1426 = vadd.f32 %v1026, %v1300
        %v1427 = vadd.f32 %v1031, %v1305
        %v1428 = vadd.f32 %v1036, %v1310
        %v1429 = vadd.f32 %v1041, %v1315
        %v1430 = vadd.f32 %v1046, %v1320
        %v1431 = vadd.f32 %v1051, %v1325
        %v1432 = vadd.f32 %v1056, %v1330
        %v1433 = vadd.f32 %v1061, %v1335
        %v1434 = vadd.f32 %v1066, %v1340
        %v1435 = vadd.f32 %v1071, %v1345
        %v1436 = vadd.f32 %v1076, %v1350
        %v1437 = vadd.f32 %v1081, %v1355
        %v1438 = vadd.f32 %v1086, %v1360
        %v1439 = vadd.f32 %v1091, %v1365
        %v1440 = vadd.f32 %v1096, %v1370
        %v1441 = vadd.f32 %v1101, %v1375
        %v1442 = vadd.f32 %v1106, %v1380
        %v1443 = vadd.f32 %v1111, %v1385
        %v1444 = vadd.f32 %v1116, %v1390
        %v1445 = vadd.f32 %v1121, %v1395
        %v1446 = vadd.f32 %v1126, %v1400
        %v1447 = vadd.f32 %v1131, %v1405
        %v1448 = vadd.f32 %v1136, %v1410
        %v1449 = vadd.f32 %v1141, %v1415
        %v1450 = vld [vmem:[%s564] sm:$0xff]
        %v1451 = vld [vmem:[%s564 + $0x8] sm:$0xff]
        %v1452 = vld [vmem:[%s564 + $0x18] sm:$0xff]
        %v1453 = vld [vmem:[%s564 + $0x20] sm:$0xff]
        %v1454 = vld [vmem:[%s564 + $0x30] sm:$0xff]
        %v1455 = vld [vmem:[%s564 + $0x38] sm:$0xff]
        %v1456 = vld [vmem:[%s564 + $0x48] sm:$0xff]
        %v1457 = vld [vmem:[%s564 + $0x50] sm:$0xff]
        %v1458 = vld [vmem:[%s564 + $0x60] sm:$0xff]
        %v1459 = vld [vmem:[%s564 + $0x68] sm:$0xff]
        %v1460 = vld [vmem:[%s564 + $0x78] sm:$0xff]
        %v1461 = vld [vmem:[%s564 + $0x80] sm:$0xff]
        %v1462 = vld [vmem:[%s564 + $0x90] sm:$0xff]
        %v1463 = vld [vmem:[%s564 + $0x98] sm:$0xff]
        %v1464 = vld [vmem:[%s564 + $0xa8] sm:$0xff]
        %v1465 = vld [vmem:[%s564 + $0xb0] sm:$0xff]
        %v1466 = vld [vmem:[%s564 + $0xc0] sm:$0xff]
        %v1467 = vld [vmem:[%s564 + $0xc8] sm:$0xff]
        %v1468 = vld [vmem:[%s564 + $0xd8] sm:$0xff]
        %v1469 = vld [vmem:[%s564 + $0xe0] sm:$0xff]
        %v1470 = vld [vmem:[%s564 + $0xf0] sm:$0xff]
        %v1471 = vld [vmem:[%s564 + $0xf8] sm:$0xff]
        %v1472 = vld [vmem:[%s564 + $0x108] sm:$0xff]
        %v1473 = vld [vmem:[%s564 + $0x110] sm:$0xff]
        %v1474 = vld [vmem:[%s564 + $0x120] sm:$0xff]
        %v1475 = vld [vmem:[%s564 + $0x128] sm:$0xff]
        %v1476 = vld [vmem:[%s564 + $0x138] sm:$0xff]
        %v1477 = vld [vmem:[%s564 + $0x140] sm:$0xff]
        %v1478 = vld [vmem:[%s564 + $0x150] sm:$0xff]
        %v1479 = vld [vmem:[%s564 + $0x158] sm:$0xff]
        %v1480 = vld [vmem:[%s564 + $0x168] sm:$0xff]
        %v1481 = vld [vmem:[%s564 + $0x170] sm:$0xff]
        %s1482 = scalar_lea.vmem [#allocation7], 384
        %v1483 = vld [vmem:[%s1482] sm:$0xff]
        %v1484 = vld [vmem:[%s1482 + $0x8] sm:$0xff]
        %v1485 = vld [vmem:[%s1482 + $0x10] sm:$0xff]
        %v1486 = vld [vmem:[%s1482 + $0x18] sm:$0xff]
        %v1487 = vld [vmem:[%s1482 + $0x20] sm:$0xff]
        %v1488 = vld [vmem:[%s1482 + $0x28] sm:$0xff]
        %v1489 = vld [vmem:[%s1482 + $0x30] sm:$0xff]
        %v1490 = vld [vmem:[%s1482 + $0x38] sm:$0xff]
        %v1491 = vld [vmem:[%s1482 + $0x40] sm:$0xff]
        %v1492 = vld [vmem:[%s1482 + $0x48] sm:$0xff]
        %v1493 = vld [vmem:[%s1482 + $0x50] sm:$0xff]
        %v1494 = vld [vmem:[%s1482 + $0x58] sm:$0xff]
        %v1495 = vld [vmem:[%s1482 + $0x60] sm:$0xff]
        %v1496 = vld [vmem:[%s1482 + $0x68] sm:$0xff]
        %v1497 = vld [vmem:[%s1482 + $0x70] sm:$0xff]
        %v1498 = vld [vmem:[%s1482 + $0x78] sm:$0xff]
        %1499 = vmatprep.subr.mxu0 0.0
        %1500 = vmatpush1.msra.mxu0 %v1498
        %1501 = vmatprep.subr.mxu0 0.0
        %1502 = vmatpush1.msra.mxu0 %v1497
        %1503 = vmatprep.subr.mxu0 0.0
        %1504 = vmatpush1.msra.mxu0 %v1496
        %1505 = vmatprep.subr.mxu0 0.0
        %1506 = vmatpush1.msra.mxu0 %v1495
        %1507 = vmatprep.subr.mxu0 0.0
        %1508 = vmatpush1.msra.mxu0 %v1494
        %1509 = vmatprep.subr.mxu0 0.0
        %1510 = vmatpush1.msra.mxu0 %v1493
        %1511 = vmatprep.subr.mxu0 0.0
        %1512 = vmatpush1.msra.mxu0 %v1492
        %1513 = vmatprep.subr.mxu0 0.0
        %1514 = vmatpush1.msra.mxu0 %v1491
        %1515 = vmatprep.subr.mxu0 0.0
        %1516 = vmatpush1.msra.mxu0 %v1490
        %1517 = vmatprep.subr.mxu0 0.0
        %1518 = vmatpush1.msra.mxu0 %v1489
        %1519 = vmatprep.subr.mxu0 0.0
        %1520 = vmatpush1.msra.mxu0 %v1488
        %1521 = vmatprep.subr.mxu0 0.0
        %1522 = vmatpush1.msra.mxu0 %v1487
        %1523 = vmatprep.subr.mxu0 0.0
        %1524 = vmatpush1.msra.mxu0 %v1486
        %1525 = vmatprep.subr.mxu0 0.0
        %1526 = vmatpush1.msra.mxu0 %v1485
        %1527 = vmatprep.subr.mxu0 0.0
        %1528 = vmatpush1.msra.mxu0 %v1484
        %1529 = vmatprep.subr.mxu0 0.0
        %1530 = vmatpush1.msra.mxu0 %v1483
        %1531 = vmatprep.subr.mxu0 0.0
        %1532 = vmatpush2.msra.mxu0 0.0
        %1533 = vmatprep.subr.mxu0 0.0
        %1534 = vmatpush2.msra.mxu0 0.0
        %1535 = vmatprep.subr.mxu0 0.0
        %1536 = vmatpush2.msra.mxu0 0.0
        %1537 = vmatprep.subr.mxu0 0.0
        %1538 = vmatpush2.msra.mxu0 0.0
        %1539 = vmatprep.subr.mxu0 0.0
        %1540 = vmatpush2.msra.mxu0 0.0
        %1541 = vmatprep.subr.mxu0 0.0
        %1542 = vmatpush2.msra.mxu0 0.0
        %1543 = vmatprep.subr.mxu0 0.0
        %1544 = vmatpush2.msra.mxu0 0.0
        %1545 = vmatprep.subr.mxu0 0.0
        %1546 = vmatpush2.msra.mxu0 0.0
        %1547 = vmatprep.subr.mxu0 0.0
        %1548 = vmatpush2.msra.mxu0 0.0
        %1549 = vmatprep.subr.mxu0 0.0
        %1550 = vmatpush2.msra.mxu0 0.0
        %1551 = vmatprep.subr.mxu0 0.0
        %1552 = vmatpush2.msra.mxu0 0.0
        %1553 = vmatprep.subr.mxu0 0.0
        %1554 = vmatpush2.msra.mxu0 0.0
        %1555 = vmatprep.subr.mxu0 0.0
        %1556 = vmatpush2.msra.mxu0 0.0
        %1557 = vmatprep.subr.mxu0 0.0
        %1558 = vmatpush2.msra.mxu0 0.0
        %1559 = vmatprep.subr.mxu0 0.0
        %1560 = vmatpush2.msra.mxu0 0.0
        %1561 = vmatprep.subr.mxu0 0.0
        %1562 = vmatpush2.msra.mxu0 0.0
        %1563 = vmatprep.mubr.f32.mxu0 0.0
        %1564 = vmatmul.mubr.f32.gmra.mxu0 %v1450
        %v1565 = vpop.f32.mrf.mxu0
        %v1566 = vadd.f32 0.0, %v1565
        %v1567 = vpop.f32.mrf.mxu0
        %1568 = vmatprep.mubr.f32.mxu0 0.0
        %1569 = vmatmul.mubr.f32.gmra.mxu0 %v1451
        %v1570 = vpop.f32.mrf.mxu0
        %v1571 = vadd.f32 0.0, %v1570
        %v1572 = vpop.f32.mrf.mxu0
        %1573 = vmatprep.mubr.f32.mxu0 0.0
        %1574 = vmatmul.mubr.f32.gmra.mxu0 %v1452
        %v1575 = vpop.f32.mrf.mxu0
        %v1576 = vadd.f32 0.0, %v1575
        %v1577 = vpop.f32.mrf.mxu0
        %1578 = vmatprep.mubr.f32.mxu0 0.0
        %1579 = vmatmul.mubr.f32.gmra.mxu0 %v1453
        %v1580 = vpop.f32.mrf.mxu0
        %v1581 = vadd.f32 0.0, %v1580
        %v1582 = vpop.f32.mrf.mxu0
        %1583 = vmatprep.mubr.f32.mxu0 0.0
        %1584 = vmatmul.mubr.f32.gmra.mxu0 %v1454
        %v1585 = vpop.f32.mrf.mxu0
        %v1586 = vadd.f32 0.0, %v1585
        %v1587 = vpop.f32.mrf.mxu0
        %1588 = vmatprep.mubr.f32.mxu0 0.0
        %1589 = vmatmul.mubr.f32.gmra.mxu0 %v1455
        %v1590 = vpop.f32.mrf.mxu0
        %v1591 = vadd.f32 0.0, %v1590
        %v1592 = vpop.f32.mrf.mxu0
        %1593 = vmatprep.mubr.f32.mxu0 0.0
        %1594 = vmatmul.mubr.f32.gmra.mxu0 %v1456
        %v1595 = vpop.f32.mrf.mxu0
        %v1596 = vadd.f32 0.0, %v1595
        %v1597 = vpop.f32.mrf.mxu0
        %1598 = vmatprep.mubr.f32.mxu0 0.0
        %1599 = vmatmul.mubr.f32.gmra.mxu0 %v1457
        %v1600 = vpop.f32.mrf.mxu0
        %v1601 = vadd.f32 0.0, %v1600
        %v1602 = vpop.f32.mrf.mxu0
        %1603 = vmatprep.mubr.f32.mxu0 0.0
        %1604 = vmatmul.mubr.f32.gmra.mxu0 %v1458
        %v1605 = vpop.f32.mrf.mxu0
        %v1606 = vadd.f32 0.0, %v1605
        %v1607 = vpop.f32.mrf.mxu0
        %1608 = vmatprep.mubr.f32.mxu0 0.0
        %1609 = vmatmul.mubr.f32.gmra.mxu0 %v1459
        %v1610 = vpop.f32.mrf.mxu0
        %v1611 = vadd.f32 0.0, %v1610
        %v1612 = vpop.f32.mrf.mxu0
        %1613 = vmatprep.mubr.f32.mxu0 0.0
        %1614 = vmatmul.mubr.f32.gmra.mxu0 %v1460
        %v1615 = vpop.f32.mrf.mxu0
        %v1616 = vadd.f32 0.0, %v1615
        %v1617 = vpop.f32.mrf.mxu0
        %1618 = vmatprep.mubr.f32.mxu0 0.0
        %1619 = vmatmul.mubr.f32.gmra.mxu0 %v1461
        %v1620 = vpop.f32.mrf.mxu0
        %v1621 = vadd.f32 0.0, %v1620
        %v1622 = vpop.f32.mrf.mxu0
        %1623 = vmatprep.mubr.f32.mxu0 0.0
        %1624 = vmatmul.mubr.f32.gmra.mxu0 %v1462
        %v1625 = vpop.f32.mrf.mxu0
        %v1626 = vadd.f32 0.0, %v1625
        %v1627 = vpop.f32.mrf.mxu0
        %1628 = vmatprep.mubr.f32.mxu0 0.0
        %1629 = vmatmul.mubr.f32.gmra.mxu0 %v1463
        %v1630 = vpop.f32.mrf.mxu0
        %v1631 = vadd.f32 0.0, %v1630
        %v1632 = vpop.f32.mrf.mxu0
        %1633 = vmatprep.mubr.f32.mxu0 0.0
        %1634 = vmatmul.mubr.f32.gmra.mxu0 %v1464
        %v1635 = vpop.f32.mrf.mxu0
        %v1636 = vadd.f32 0.0, %v1635
        %v1637 = vpop.f32.mrf.mxu0
        %1638 = vmatprep.mubr.f32.mxu0 0.0
        %1639 = vmatmul.mubr.f32.gmra.mxu0 %v1465
        %v1640 = vpop.f32.mrf.mxu0
        %v1641 = vadd.f32 0.0, %v1640
        %v1642 = vpop.f32.mrf.mxu0
        %1643 = vmatprep.mubr.f32.mxu0 0.0
        %1644 = vmatmul.mubr.f32.gmra.mxu0 %v1466
        %v1645 = vpop.f32.mrf.mxu0
        %v1646 = vadd.f32 0.0, %v1645
        %v1647 = vpop.f32.mrf.mxu0
        %1648 = vmatprep.mubr.f32.mxu0 0.0
        %1649 = vmatmul.mubr.f32.gmra.mxu0 %v1467
        %v1650 = vpop.f32.mrf.mxu0
        %v1651 = vadd.f32 0.0, %v1650
        %v1652 = vpop.f32.mrf.mxu0
        %1653 = vmatprep.mubr.f32.mxu0 0.0
        %1654 = vmatmul.mubr.f32.gmra.mxu0 %v1468
        %v1655 = vpop.f32.mrf.mxu0
        %v1656 = vadd.f32 0.0, %v1655
        %v1657 = vpop.f32.mrf.mxu0
        %1658 = vmatprep.mubr.f32.mxu0 0.0
        %1659 = vmatmul.mubr.f32.gmra.mxu0 %v1469
        %v1660 = vpop.f32.mrf.mxu0
        %v1661 = vadd.f32 0.0, %v1660
        %v1662 = vpop.f32.mrf.mxu0
        %1663 = vmatprep.mubr.f32.mxu0 0.0
        %1664 = vmatmul.mubr.f32.gmra.mxu0 %v1470
        %v1665 = vpop.f32.mrf.mxu0
        %v1666 = vadd.f32 0.0, %v1665
        %v1667 = vpop.f32.mrf.mxu0
        %1668 = vmatprep.mubr.f32.mxu0 0.0
        %1669 = vmatmul.mubr.f32.gmra.mxu0 %v1471
        %v1670 = vpop.f32.mrf.mxu0
        %v1671 = vadd.f32 0.0, %v1670
        %v1672 = vpop.f32.mrf.mxu0
        %1673 = vmatprep.mubr.f32.mxu0 0.0
        %1674 = vmatmul.mubr.f32.gmra.mxu0 %v1472
        %v1675 = vpop.f32.mrf.mxu0
        %v1676 = vadd.f32 0.0, %v1675
        %v1677 = vpop.f32.mrf.mxu0
        %1678 = vmatprep.mubr.f32.mxu0 0.0
        %1679 = vmatmul.mubr.f32.gmra.mxu0 %v1473
        %v1680 = vpop.f32.mrf.mxu0
        %v1681 = vadd.f32 0.0, %v1680
        %v1682 = vpop.f32.mrf.mxu0
        %1683 = vmatprep.mubr.f32.mxu0 0.0
        %1684 = vmatmul.mubr.f32.gmra.mxu0 %v1474
        %v1685 = vpop.f32.mrf.mxu0
        %v1686 = vadd.f32 0.0, %v1685
        %v1687 = vpop.f32.mrf.mxu0
        %1688 = vmatprep.mubr.f32.mxu0 0.0
        %1689 = vmatmul.mubr.f32.gmra.mxu0 %v1475
        %v1690 = vpop.f32.mrf.mxu0
        %v1691 = vadd.f32 0.0, %v1690
        %v1692 = vpop.f32.mrf.mxu0
        %1693 = vmatprep.mubr.f32.mxu0 0.0
        %1694 = vmatmul.mubr.f32.gmra.mxu0 %v1476
        %v1695 = vpop.f32.mrf.mxu0
        %v1696 = vadd.f32 0.0, %v1695
        %v1697 = vpop.f32.mrf.mxu0
        %1698 = vmatprep.mubr.f32.mxu0 0.0
        %1699 = vmatmul.mubr.f32.gmra.mxu0 %v1477
        %v1700 = vpop.f32.mrf.mxu0
        %v1701 = vadd.f32 0.0, %v1700
        %v1702 = vpop.f32.mrf.mxu0
        %1703 = vmatprep.mubr.f32.mxu0 0.0
        %1704 = vmatmul.mubr.f32.gmra.mxu0 %v1478
        %v1705 = vpop.f32.mrf.mxu0
        %v1706 = vadd.f32 0.0, %v1705
        %v1707 = vpop.f32.mrf.mxu0
        %1708 = vmatprep.mubr.f32.mxu0 0.0
        %1709 = vmatmul.mubr.f32.gmra.mxu0 %v1479
        %v1710 = vpop.f32.mrf.mxu0
        %v1711 = vadd.f32 0.0, %v1710
        %v1712 = vpop.f32.mrf.mxu0
        %1713 = vmatprep.mubr.f32.mxu0 0.0
        %1714 = vmatmul.mubr.f32.gmra.mxu0 %v1480
        %v1715 = vpop.f32.mrf.mxu0
        %v1716 = vadd.f32 0.0, %v1715
        %v1717 = vpop.f32.mrf.mxu0
        %1718 = vmatprep.mubr.f32.mxu0 0.0
        %1719 = vmatmul.mubr.f32.gmra.mxu0 %v1481
        %v1720 = vpop.f32.mrf.mxu0
        %v1721 = vadd.f32 0.0, %v1720
        %v1722 = vpop.f32.mrf.mxu0
        %1723 = vdwg.mxu0
        %v1724 = vadd.f32 %v1418, %v1566
        %v1725 = vadd.f32 %v1419, %v1571
        %v1726 = vadd.f32 %v1420, %v1576
        %v1727 = vadd.f32 %v1421, %v1581
        %v1728 = vadd.f32 %v1422, %v1586
        %v1729 = vadd.f32 %v1423, %v1591
        %v1730 = vadd.f32 %v1424, %v1596
        %v1731 = vadd.f32 %v1425, %v1601
        %v1732 = vadd.f32 %v1426, %v1606
        %v1733 = vadd.f32 %v1427, %v1611
        %v1734 = vadd.f32 %v1428, %v1616
        %v1735 = vadd.f32 %v1429, %v1621
        %v1736 = vadd.f32 %v1430, %v1626
        %v1737 = vadd.f32 %v1431, %v1631
        %v1738 = vadd.f32 %v1432, %v1636
        %v1739 = vadd.f32 %v1433, %v1641
        %v1740 = vadd.f32 %v1434, %v1646
        %v1741 = vadd.f32 %v1435, %v1651
        %v1742 = vadd.f32 %v1436, %v1656
        %v1743 = vadd.f32 %v1437, %v1661
        %v1744 = vadd.f32 %v1438, %v1666
        %v1745 = vadd.f32 %v1439, %v1671
        %v1746 = vadd.f32 %v1440, %v1676
        %v1747 = vadd.f32 %v1441, %v1681
        %v1748 = vadd.f32 %v1442, %v1686
        %v1749 = vadd.f32 %v1443, %v1691
        %v1750 = vadd.f32 %v1444, %v1696
        %v1751 = vadd.f32 %v1445, %v1701
        %v1752 = vadd.f32 %v1446, %v1706
        %v1753 = vadd.f32 %v1447, %v1711
        %v1754 = vadd.f32 %v1448, %v1716
        %v1755 = vadd.f32 %v1449, %v1721
        %v1756 = vld [vmem:[%s564 + $0x1] sm:$0xff]
        %v1757 = vld [vmem:[%s564 + $0x9] sm:$0xff]
        %v1758 = vld [vmem:[%s564 + $0x19] sm:$0xff]
        %v1759 = vld [vmem:[%s564 + $0x21] sm:$0xff]
        %v1760 = vld [vmem:[%s564 + $0x31] sm:$0xff]
        %v1761 = vld [vmem:[%s564 + $0x39] sm:$0xff]
        %v1762 = vld [vmem:[%s564 + $0x49] sm:$0xff]
        %v1763 = vld [vmem:[%s564 + $0x51] sm:$0xff]
        %v1764 = vld [vmem:[%s564 + $0x61] sm:$0xff]
        %v1765 = vld [vmem:[%s564 + $0x69] sm:$0xff]
        %v1766 = vld [vmem:[%s564 + $0x79] sm:$0xff]
        %v1767 = vld [vmem:[%s564 + $0x81] sm:$0xff]
        %v1768 = vld [vmem:[%s564 + $0x91] sm:$0xff]
        %v1769 = vld [vmem:[%s564 + $0x99] sm:$0xff]
        %v1770 = vld [vmem:[%s564 + $0xa9] sm:$0xff]
        %v1771 = vld [vmem:[%s564 + $0xb1] sm:$0xff]
        %v1772 = vld [vmem:[%s564 + $0xc1] sm:$0xff]
        %v1773 = vld [vmem:[%s564 + $0xc9] sm:$0xff]
        %v1774 = vld [vmem:[%s564 + $0xd9] sm:$0xff]
        %v1775 = vld [vmem:[%s564 + $0xe1] sm:$0xff]
        %v1776 = vld [vmem:[%s564 + $0xf1] sm:$0xff]
        %v1777 = vld [vmem:[%s564 + $0xf9] sm:$0xff]
        %v1778 = vld [vmem:[%s564 + $0x109] sm:$0xff]
        %v1779 = vld [vmem:[%s564 + $0x111] sm:$0xff]
        %v1780 = vld [vmem:[%s564 + $0x121] sm:$0xff]
        %v1781 = vld [vmem:[%s564 + $0x129] sm:$0xff]
        %v1782 = vld [vmem:[%s564 + $0x139] sm:$0xff]
        %v1783 = vld [vmem:[%s564 + $0x141] sm:$0xff]
        %v1784 = vld [vmem:[%s564 + $0x151] sm:$0xff]
        %v1785 = vld [vmem:[%s564 + $0x159] sm:$0xff]
        %v1786 = vld [vmem:[%s564 + $0x169] sm:$0xff]
        %v1787 = vld [vmem:[%s564 + $0x171] sm:$0xff]
        %s1788 = scalar_lea.vmem [#allocation7], 512
        %v1789 = vld [vmem:[%s1788] sm:$0xff]
        %v1790 = vld [vmem:[%s1788 + $0x8] sm:$0xff]
        %v1791 = vld [vmem:[%s1788 + $0x10] sm:$0xff]
        %v1792 = vld [vmem:[%s1788 + $0x18] sm:$0xff]
        %v1793 = vld [vmem:[%s1788 + $0x20] sm:$0xff]
        %v1794 = vld [vmem:[%s1788 + $0x28] sm:$0xff]
        %v1795 = vld [vmem:[%s1788 + $0x30] sm:$0xff]
        %v1796 = vld [vmem:[%s1788 + $0x38] sm:$0xff]
        %v1797 = vld [vmem:[%s1788 + $0x40] sm:$0xff]
        %v1798 = vld [vmem:[%s1788 + $0x48] sm:$0xff]
        %v1799 = vld [vmem:[%s1788 + $0x50] sm:$0xff]
        %v1800 = vld [vmem:[%s1788 + $0x58] sm:$0xff]
        %v1801 = vld [vmem:[%s1788 + $0x60] sm:$0xff]
        %v1802 = vld [vmem:[%s1788 + $0x68] sm:$0xff]
        %v1803 = vld [vmem:[%s1788 + $0x70] sm:$0xff]
        %v1804 = vld [vmem:[%s1788 + $0x78] sm:$0xff]
        %1805 = vmatprep.subr.mxu0 0.0
        %1806 = vmatpush1.msra.mxu0 %v1804
        %1807 = vmatprep.subr.mxu0 0.0
        %1808 = vmatpush1.msra.mxu0 %v1803
        %1809 = vmatprep.subr.mxu0 0.0
        %1810 = vmatpush1.msra.mxu0 %v1802
        %1811 = vmatprep.subr.mxu0 0.0
        %1812 = vmatpush1.msra.mxu0 %v1801
        %1813 = vmatprep.subr.mxu0 0.0
        %1814 = vmatpush1.msra.mxu0 %v1800
        %1815 = vmatprep.subr.mxu0 0.0
        %1816 = vmatpush1.msra.mxu0 %v1799
        %1817 = vmatprep.subr.mxu0 0.0
        %1818 = vmatpush1.msra.mxu0 %v1798
        %1819 = vmatprep.subr.mxu0 0.0
        %1820 = vmatpush1.msra.mxu0 %v1797
        %1821 = vmatprep.subr.mxu0 0.0
        %1822 = vmatpush1.msra.mxu0 %v1796
        %1823 = vmatprep.subr.mxu0 0.0
        %1824 = vmatpush1.msra.mxu0 %v1795
        %1825 = vmatprep.subr.mxu0 0.0
        %1826 = vmatpush1.msra.mxu0 %v1794
        %1827 = vmatprep.subr.mxu0 0.0
        %1828 = vmatpush1.msra.mxu0 %v1793
        %1829 = vmatprep.subr.mxu0 0.0
        %1830 = vmatpush1.msra.mxu0 %v1792
        %1831 = vmatprep.subr.mxu0 0.0
        %1832 = vmatpush1.msra.mxu0 %v1791
        %1833 = vmatprep.subr.mxu0 0.0
        %1834 = vmatpush1.msra.mxu0 %v1790
        %1835 = vmatprep.subr.mxu0 0.0
        %1836 = vmatpush1.msra.mxu0 %v1789
        %1837 = vmatprep.subr.mxu0 0.0
        %1838 = vmatpush2.msra.mxu0 0.0
        %1839 = vmatprep.subr.mxu0 0.0
        %1840 = vmatpush2.msra.mxu0 0.0
        %1841 = vmatprep.subr.mxu0 0.0
        %1842 = vmatpush2.msra.mxu0 0.0
        %1843 = vmatprep.subr.mxu0 0.0
        %1844 = vmatpush2.msra.mxu0 0.0
        %1845 = vmatprep.subr.mxu0 0.0
        %1846 = vmatpush2.msra.mxu0 0.0
        %1847 = vmatprep.subr.mxu0 0.0
        %1848 = vmatpush2.msra.mxu0 0.0
        %1849 = vmatprep.subr.mxu0 0.0
        %1850 = vmatpush2.msra.mxu0 0.0
        %1851 = vmatprep.subr.mxu0 0.0
        %1852 = vmatpush2.msra.mxu0 0.0
        %1853 = vmatprep.subr.mxu0 0.0
        %1854 = vmatpush2.msra.mxu0 0.0
        %1855 = vmatprep.subr.mxu0 0.0
        %1856 = vmatpush2.msra.mxu0 0.0
        %1857 = vmatprep.subr.mxu0 0.0
        %1858 = vmatpush2.msra.mxu0 0.0
        %1859 = vmatprep.subr.mxu0 0.0
        %1860 = vmatpush2.msra.mxu0 0.0
        %1861 = vmatprep.subr.mxu0 0.0
        %1862 = vmatpush2.msra.mxu0 0.0
        %1863 = vmatprep.subr.mxu0 0.0
        %1864 = vmatpush2.msra.mxu0 0.0
        %1865 = vmatprep.subr.mxu0 0.0
        %1866 = vmatpush2.msra.mxu0 0.0
        %1867 = vmatprep.subr.mxu0 0.0
        %1868 = vmatpush2.msra.mxu0 0.0
        %1869 = vmatprep.mubr.f32.mxu0 0.0
        %1870 = vmatmul.mubr.f32.gmra.mxu0 %v1756
        %v1871 = vpop.f32.mrf.mxu0
        %v1872 = vadd.f32 0.0, %v1871
        %v1873 = vpop.f32.mrf.mxu0
        %1874 = vmatprep.mubr.f32.mxu0 0.0
        %1875 = vmatmul.mubr.f32.gmra.mxu0 %v1757
        %v1876 = vpop.f32.mrf.mxu0
        %v1877 = vadd.f32 0.0, %v1876
        %v1878 = vpop.f32.mrf.mxu0
        %1879 = vmatprep.mubr.f32.mxu0 0.0
        %1880 = vmatmul.mubr.f32.gmra.mxu0 %v1758
        %v1881 = vpop.f32.mrf.mxu0
        %v1882 = vadd.f32 0.0, %v1881
        %v1883 = vpop.f32.mrf.mxu0
        %1884 = vmatprep.mubr.f32.mxu0 0.0
        %1885 = vmatmul.mubr.f32.gmra.mxu0 %v1759
        %v1886 = vpop.f32.mrf.mxu0
        %v1887 = vadd.f32 0.0, %v1886
        %v1888 = vpop.f32.mrf.mxu0
        %1889 = vmatprep.mubr.f32.mxu0 0.0
        %1890 = vmatmul.mubr.f32.gmra.mxu0 %v1760
        %v1891 = vpop.f32.mrf.mxu0
        %v1892 = vadd.f32 0.0, %v1891
        %v1893 = vpop.f32.mrf.mxu0
        %1894 = vmatprep.mubr.f32.mxu0 0.0
        %1895 = vmatmul.mubr.f32.gmra.mxu0 %v1761
        %v1896 = vpop.f32.mrf.mxu0
        %v1897 = vadd.f32 0.0, %v1896
        %v1898 = vpop.f32.mrf.mxu0
        %1899 = vmatprep.mubr.f32.mxu0 0.0
        %1900 = vmatmul.mubr.f32.gmra.mxu0 %v1762
        %v1901 = vpop.f32.mrf.mxu0
        %v1902 = vadd.f32 0.0, %v1901
        %v1903 = vpop.f32.mrf.mxu0
        %1904 = vmatprep.mubr.f32.mxu0 0.0
        %1905 = vmatmul.mubr.f32.gmra.mxu0 %v1763
        %v1906 = vpop.f32.mrf.mxu0
        %v1907 = vadd.f32 0.0, %v1906
        %v1908 = vpop.f32.mrf.mxu0
        %1909 = vmatprep.mubr.f32.mxu0 0.0
        %1910 = vmatmul.mubr.f32.gmra.mxu0 %v1764
        %v1911 = vpop.f32.mrf.mxu0
        %v1912 = vadd.f32 0.0, %v1911
        %v1913 = vpop.f32.mrf.mxu0
        %1914 = vmatprep.mubr.f32.mxu0 0.0
        %1915 = vmatmul.mubr.f32.gmra.mxu0 %v1765
        %v1916 = vpop.f32.mrf.mxu0
        %v1917 = vadd.f32 0.0, %v1916
        %v1918 = vpop.f32.mrf.mxu0
        %1919 = vmatprep.mubr.f32.mxu0 0.0
        %1920 = vmatmul.mubr.f32.gmra.mxu0 %v1766
        %v1921 = vpop.f32.mrf.mxu0
        %v1922 = vadd.f32 0.0, %v1921
        %v1923 = vpop.f32.mrf.mxu0
        %1924 = vmatprep.mubr.f32.mxu0 0.0
        %1925 = vmatmul.mubr.f32.gmra.mxu0 %v1767
        %v1926 = vpop.f32.mrf.mxu0
        %v1927 = vadd.f32 0.0, %v1926
        %v1928 = vpop.f32.mrf.mxu0
        %1929 = vmatprep.mubr.f32.mxu0 0.0
        %1930 = vmatmul.mubr.f32.gmra.mxu0 %v1768
        %v1931 = vpop.f32.mrf.mxu0
        %v1932 = vadd.f32 0.0, %v1931
        %v1933 = vpop.f32.mrf.mxu0
        %1934 = vmatprep.mubr.f32.mxu0 0.0
        %1935 = vmatmul.mubr.f32.gmra.mxu0 %v1769
        %v1936 = vpop.f32.mrf.mxu0
        %v1937 = vadd.f32 0.0, %v1936
        %v1938 = vpop.f32.mrf.mxu0
        %1939 = vmatprep.mubr.f32.mxu0 0.0
        %1940 = vmatmul.mubr.f32.gmra.mxu0 %v1770
        %v1941 = vpop.f32.mrf.mxu0
        %v1942 = vadd.f32 0.0, %v1941
        %v1943 = vpop.f32.mrf.mxu0
        %1944 = vmatprep.mubr.f32.mxu0 0.0
        %1945 = vmatmul.mubr.f32.gmra.mxu0 %v1771
        %v1946 = vpop.f32.mrf.mxu0
        %v1947 = vadd.f32 0.0, %v1946
        %v1948 = vpop.f32.mrf.mxu0
        %1949 = vmatprep.mubr.f32.mxu0 0.0
        %1950 = vmatmul.mubr.f32.gmra.mxu0 %v1772
        %v1951 = vpop.f32.mrf.mxu0
        %v1952 = vadd.f32 0.0, %v1951
        %v1953 = vpop.f32.mrf.mxu0
        %1954 = vmatprep.mubr.f32.mxu0 0.0
        %1955 = vmatmul.mubr.f32.gmra.mxu0 %v1773
        %v1956 = vpop.f32.mrf.mxu0
        %v1957 = vadd.f32 0.0, %v1956
        %v1958 = vpop.f32.mrf.mxu0
        %1959 = vmatprep.mubr.f32.mxu0 0.0
        %1960 = vmatmul.mubr.f32.gmra.mxu0 %v1774
        %v1961 = vpop.f32.mrf.mxu0
        %v1962 = vadd.f32 0.0, %v1961
        %v1963 = vpop.f32.mrf.mxu0
        %1964 = vmatprep.mubr.f32.mxu0 0.0
        %1965 = vmatmul.mubr.f32.gmra.mxu0 %v1775
        %v1966 = vpop.f32.mrf.mxu0
        %v1967 = vadd.f32 0.0, %v1966
        %v1968 = vpop.f32.mrf.mxu0
        %1969 = vmatprep.mubr.f32.mxu0 0.0
        %1970 = vmatmul.mubr.f32.gmra.mxu0 %v1776
        %v1971 = vpop.f32.mrf.mxu0
        %v1972 = vadd.f32 0.0, %v1971
        %v1973 = vpop.f32.mrf.mxu0
        %1974 = vmatprep.mubr.f32.mxu0 0.0
        %1975 = vmatmul.mubr.f32.gmra.mxu0 %v1777
        %v1976 = vpop.f32.mrf.mxu0
        %v1977 = vadd.f32 0.0, %v1976
        %v1978 = vpop.f32.mrf.mxu0
        %1979 = vmatprep.mubr.f32.mxu0 0.0
        %1980 = vmatmul.mubr.f32.gmra.mxu0 %v1778
        %v1981 = vpop.f32.mrf.mxu0
        %v1982 = vadd.f32 0.0, %v1981
        %v1983 = vpop.f32.mrf.mxu0
        %1984 = vmatprep.mubr.f32.mxu0 0.0
        %1985 = vmatmul.mubr.f32.gmra.mxu0 %v1779
        %v1986 = vpop.f32.mrf.mxu0
        %v1987 = vadd.f32 0.0, %v1986
        %v1988 = vpop.f32.mrf.mxu0
        %1989 = vmatprep.mubr.f32.mxu0 0.0
        %1990 = vmatmul.mubr.f32.gmra.mxu0 %v1780
        %v1991 = vpop.f32.mrf.mxu0
        %v1992 = vadd.f32 0.0, %v1991
        %v1993 = vpop.f32.mrf.mxu0
        %1994 = vmatprep.mubr.f32.mxu0 0.0
        %1995 = vmatmul.mubr.f32.gmra.mxu0 %v1781
        %v1996 = vpop.f32.mrf.mxu0
        %v1997 = vadd.f32 0.0, %v1996
        %v1998 = vpop.f32.mrf.mxu0
        %1999 = vmatprep.mubr.f32.mxu0 0.0
        %2000 = vmatmul.mubr.f32.gmra.mxu0 %v1782
        %v2001 = vpop.f32.mrf.mxu0
        %v2002 = vadd.f32 0.0, %v2001
        %v2003 = vpop.f32.mrf.mxu0
        %2004 = vmatprep.mubr.f32.mxu0 0.0
        %2005 = vmatmul.mubr.f32.gmra.mxu0 %v1783
        %v2006 = vpop.f32.mrf.mxu0
        %v2007 = vadd.f32 0.0, %v2006
        %v2008 = vpop.f32.mrf.mxu0
        %2009 = vmatprep.mubr.f32.mxu0 0.0
        %2010 = vmatmul.mubr.f32.gmra.mxu0 %v1784
        %v2011 = vpop.f32.mrf.mxu0
        %v2012 = vadd.f32 0.0, %v2011
        %v2013 = vpop.f32.mrf.mxu0
        %2014 = vmatprep.mubr.f32.mxu0 0.0
        %2015 = vmatmul.mubr.f32.gmra.mxu0 %v1785
        %v2016 = vpop.f32.mrf.mxu0
        %v2017 = vadd.f32 0.0, %v2016
        %v2018 = vpop.f32.mrf.mxu0
        %2019 = vmatprep.mubr.f32.mxu0 0.0
        %2020 = vmatmul.mubr.f32.gmra.mxu0 %v1786
        %v2021 = vpop.f32.mrf.mxu0
        %v2022 = vadd.f32 0.0, %v2021
        %v2023 = vpop.f32.mrf.mxu0
        %2024 = vmatprep.mubr.f32.mxu0 0.0
        %2025 = vmatmul.mubr.f32.gmra.mxu0 %v1787
        %v2026 = vpop.f32.mrf.mxu0
        %v2027 = vadd.f32 0.0, %v2026
        %v2028 = vpop.f32.mrf.mxu0
        %2029 = vdwg.mxu0
        %v2030 = vadd.f32 %v1724, %v1872
        %v2031 = vadd.f32 %v1725, %v1877
        %v2032 = vadd.f32 %v1726, %v1882
        %v2033 = vadd.f32 %v1727, %v1887
        %v2034 = vadd.f32 %v1728, %v1892
        %v2035 = vadd.f32 %v1729, %v1897
        %v2036 = vadd.f32 %v1730, %v1902
        %v2037 = vadd.f32 %v1731, %v1907
        %v2038 = vadd.f32 %v1732, %v1912
        %v2039 = vadd.f32 %v1733, %v1917
        %v2040 = vadd.f32 %v1734, %v1922
        %v2041 = vadd.f32 %v1735, %v1927
        %v2042 = vadd.f32 %v1736, %v1932
        %v2043 = vadd.f32 %v1737, %v1937
        %v2044 = vadd.f32 %v1738, %v1942
        %v2045 = vadd.f32 %v1739, %v1947
        %v2046 = vadd.f32 %v1740, %v1952
        %v2047 = vadd.f32 %v1741, %v1957
        %v2048 = vadd.f32 %v1742, %v1962
        %v2049 = vadd.f32 %v1743, %v1967
        %v2050 = vadd.f32 %v1744, %v1972
        %v2051 = vadd.f32 %v1745, %v1977
        %v2052 = vadd.f32 %v1746, %v1982
        %v2053 = vadd.f32 %v1747, %v1987
        %v2054 = vadd.f32 %v1748, %v1992
        %v2055 = vadd.f32 %v1749, %v1997
        %v2056 = vadd.f32 %v1750, %v2002
        %v2057 = vadd.f32 %v1751, %v2007
        %v2058 = vadd.f32 %v1752, %v2012
        %v2059 = vadd.f32 %v1753, %v2017
        %v2060 = vadd.f32 %v1754, %v2022
        %v2061 = vadd.f32 %v1755, %v2027
        %v2062 = vld [vmem:[%s564 + $0x2] sm:$0xff]
        %v2063 = vld [vmem:[%s564 + $0xa] sm:$0xff]
        %v2064 = vld [vmem:[%s564 + $0x1a] sm:$0xff]
        %v2065 = vld [vmem:[%s564 + $0x22] sm:$0xff]
        %v2066 = vld [vmem:[%s564 + $0x32] sm:$0xff]
        %v2067 = vld [vmem:[%s564 + $0x3a] sm:$0xff]
        %v2068 = vld [vmem:[%s564 + $0x4a] sm:$0xff]
        %v2069 = vld [vmem:[%s564 + $0x52] sm:$0xff]
        %v2070 = vld [vmem:[%s564 + $0x62] sm:$0xff]
        %v2071 = vld [vmem:[%s564 + $0x6a] sm:$0xff]
        %v2072 = vld [vmem:[%s564 + $0x7a] sm:$0xff]
        %v2073 = vld [vmem:[%s564 + $0x82] sm:$0xff]
        %v2074 = vld [vmem:[%s564 + $0x92] sm:$0xff]
        %v2075 = vld [vmem:[%s564 + $0x9a] sm:$0xff]
        %v2076 = vld [vmem:[%s564 + $0xaa] sm:$0xff]
        %v2077 = vld [vmem:[%s564 + $0xb2] sm:$0xff]
        %v2078 = vld [vmem:[%s564 + $0xc2] sm:$0xff]
        %v2079 = vld [vmem:[%s564 + $0xca] sm:$0xff]
        %v2080 = vld [vmem:[%s564 + $0xda] sm:$0xff]
        %v2081 = vld [vmem:[%s564 + $0xe2] sm:$0xff]
        %v2082 = vld [vmem:[%s564 + $0xf2] sm:$0xff]
        %v2083 = vld [vmem:[%s564 + $0xfa] sm:$0xff]
        %v2084 = vld [vmem:[%s564 + $0x10a] sm:$0xff]
        %v2085 = vld [vmem:[%s564 + $0x112] sm:$0xff]
        %v2086 = vld [vmem:[%s564 + $0x122] sm:$0xff]
        %v2087 = vld [vmem:[%s564 + $0x12a] sm:$0xff]
        %v2088 = vld [vmem:[%s564 + $0x13a] sm:$0xff]
        %v2089 = vld [vmem:[%s564 + $0x142] sm:$0xff]
        %v2090 = vld [vmem:[%s564 + $0x152] sm:$0xff]
        %v2091 = vld [vmem:[%s564 + $0x15a] sm:$0xff]
        %v2092 = vld [vmem:[%s564 + $0x16a] sm:$0xff]
        %v2093 = vld [vmem:[%s564 + $0x172] sm:$0xff]
        %s2094 = scalar_lea.vmem [#allocation7], 640
        %v2095 = vld [vmem:[%s2094] sm:$0xff]
        %v2096 = vld [vmem:[%s2094 + $0x8] sm:$0xff]
        %v2097 = vld [vmem:[%s2094 + $0x10] sm:$0xff]
        %v2098 = vld [vmem:[%s2094 + $0x18] sm:$0xff]
        %v2099 = vld [vmem:[%s2094 + $0x20] sm:$0xff]
        %v2100 = vld [vmem:[%s2094 + $0x28] sm:$0xff]
        %v2101 = vld [vmem:[%s2094 + $0x30] sm:$0xff]
        %v2102 = vld [vmem:[%s2094 + $0x38] sm:$0xff]
        %v2103 = vld [vmem:[%s2094 + $0x40] sm:$0xff]
        %v2104 = vld [vmem:[%s2094 + $0x48] sm:$0xff]
        %v2105 = vld [vmem:[%s2094 + $0x50] sm:$0xff]
        %v2106 = vld [vmem:[%s2094 + $0x58] sm:$0xff]
        %v2107 = vld [vmem:[%s2094 + $0x60] sm:$0xff]
        %v2108 = vld [vmem:[%s2094 + $0x68] sm:$0xff]
        %v2109 = vld [vmem:[%s2094 + $0x70] sm:$0xff]
        %v2110 = vld [vmem:[%s2094 + $0x78] sm:$0xff]
        %2111 = vmatprep.subr.mxu0 0.0
        %2112 = vmatpush1.msra.mxu0 %v2110
        %2113 = vmatprep.subr.mxu0 0.0
        %2114 = vmatpush1.msra.mxu0 %v2109
        %2115 = vmatprep.subr.mxu0 0.0
        %2116 = vmatpush1.msra.mxu0 %v2108
        %2117 = vmatprep.subr.mxu0 0.0
        %2118 = vmatpush1.msra.mxu0 %v2107
        %2119 = vmatprep.subr.mxu0 0.0
        %2120 = vmatpush1.msra.mxu0 %v2106
        %2121 = vmatprep.subr.mxu0 0.0
        %2122 = vmatpush1.msra.mxu0 %v2105
        %2123 = vmatprep.subr.mxu0 0.0
        %2124 = vmatpush1.msra.mxu0 %v2104
        %2125 = vmatprep.subr.mxu0 0.0
        %2126 = vmatpush1.msra.mxu0 %v2103
        %2127 = vmatprep.subr.mxu0 0.0
        %2128 = vmatpush1.msra.mxu0 %v2102
        %2129 = vmatprep.subr.mxu0 0.0
        %2130 = vmatpush1.msra.mxu0 %v2101
        %2131 = vmatprep.subr.mxu0 0.0
        %2132 = vmatpush1.msra.mxu0 %v2100
        %2133 = vmatprep.subr.mxu0 0.0
        %2134 = vmatpush1.msra.mxu0 %v2099
        %2135 = vmatprep.subr.mxu0 0.0
        %2136 = vmatpush1.msra.mxu0 %v2098
        %2137 = vmatprep.subr.mxu0 0.0
        %2138 = vmatpush1.msra.mxu0 %v2097
        %2139 = vmatprep.subr.mxu0 0.0
        %2140 = vmatpush1.msra.mxu0 %v2096
        %2141 = vmatprep.subr.mxu0 0.0
        %2142 = vmatpush1.msra.mxu0 %v2095
        %2143 = vmatprep.subr.mxu0 0.0
        %2144 = vmatpush2.msra.mxu0 0.0
        %2145 = vmatprep.subr.mxu0 0.0
        %2146 = vmatpush2.msra.mxu0 0.0
        %2147 = vmatprep.subr.mxu0 0.0
        %2148 = vmatpush2.msra.mxu0 0.0
        %2149 = vmatprep.subr.mxu0 0.0
        %2150 = vmatpush2.msra.mxu0 0.0
        %2151 = vmatprep.subr.mxu0 0.0
        %2152 = vmatpush2.msra.mxu0 0.0
        %2153 = vmatprep.subr.mxu0 0.0
        %2154 = vmatpush2.msra.mxu0 0.0
        %2155 = vmatprep.subr.mxu0 0.0
        %2156 = vmatpush2.msra.mxu0 0.0
        %2157 = vmatprep.subr.mxu0 0.0
        %2158 = vmatpush2.msra.mxu0 0.0
        %2159 = vmatprep.subr.mxu0 0.0
        %2160 = vmatpush2.msra.mxu0 0.0
        %2161 = vmatprep.subr.mxu0 0.0
        %2162 = vmatpush2.msra.mxu0 0.0
        %2163 = vmatprep.subr.mxu0 0.0
        %2164 = vmatpush2.msra.mxu0 0.0
        %2165 = vmatprep.subr.mxu0 0.0
        %2166 = vmatpush2.msra.mxu0 0.0
        %2167 = vmatprep.subr.mxu0 0.0
        %2168 = vmatpush2.msra.mxu0 0.0
        %2169 = vmatprep.subr.mxu0 0.0
        %2170 = vmatpush2.msra.mxu0 0.0
        %2171 = vmatprep.subr.mxu0 0.0
        %2172 = vmatpush2.msra.mxu0 0.0
        %2173 = vmatprep.subr.mxu0 0.0
        %2174 = vmatpush2.msra.mxu0 0.0
        %2175 = vmatprep.mubr.f32.mxu0 0.0
        %2176 = vmatmul.mubr.f32.gmra.mxu0 %v2062
        %v2177 = vpop.f32.mrf.mxu0
        %v2178 = vadd.f32 0.0, %v2177
        %v2179 = vpop.f32.mrf.mxu0
        %2180 = vmatprep.mubr.f32.mxu0 0.0
        %2181 = vmatmul.mubr.f32.gmra.mxu0 %v2063
        %v2182 = vpop.f32.mrf.mxu0
        %v2183 = vadd.f32 0.0, %v2182
        %v2184 = vpop.f32.mrf.mxu0
        %2185 = vmatprep.mubr.f32.mxu0 0.0
        %2186 = vmatmul.mubr.f32.gmra.mxu0 %v2064
        %v2187 = vpop.f32.mrf.mxu0
        %v2188 = vadd.f32 0.0, %v2187
        %v2189 = vpop.f32.mrf.mxu0
        %2190 = vmatprep.mubr.f32.mxu0 0.0
        %2191 = vmatmul.mubr.f32.gmra.mxu0 %v2065
        %v2192 = vpop.f32.mrf.mxu0
        %v2193 = vadd.f32 0.0, %v2192
        %v2194 = vpop.f32.mrf.mxu0
        %2195 = vmatprep.mubr.f32.mxu0 0.0
        %2196 = vmatmul.mubr.f32.gmra.mxu0 %v2066
        %v2197 = vpop.f32.mrf.mxu0
        %v2198 = vadd.f32 0.0, %v2197
        %v2199 = vpop.f32.mrf.mxu0
        %2200 = vmatprep.mubr.f32.mxu0 0.0
        %2201 = vmatmul.mubr.f32.gmra.mxu0 %v2067
        %v2202 = vpop.f32.mrf.mxu0
        %v2203 = vadd.f32 0.0, %v2202
        %v2204 = vpop.f32.mrf.mxu0
        %2205 = vmatprep.mubr.f32.mxu0 0.0
        %2206 = vmatmul.mubr.f32.gmra.mxu0 %v2068
        %v2207 = vpop.f32.mrf.mxu0
        %v2208 = vadd.f32 0.0, %v2207
        %v2209 = vpop.f32.mrf.mxu0
        %2210 = vmatprep.mubr.f32.mxu0 0.0
        %2211 = vmatmul.mubr.f32.gmra.mxu0 %v2069
        %v2212 = vpop.f32.mrf.mxu0
        %v2213 = vadd.f32 0.0, %v2212
        %v2214 = vpop.f32.mrf.mxu0
        %2215 = vmatprep.mubr.f32.mxu0 0.0
        %2216 = vmatmul.mubr.f32.gmra.mxu0 %v2070
        %v2217 = vpop.f32.mrf.mxu0
        %v2218 = vadd.f32 0.0, %v2217
        %v2219 = vpop.f32.mrf.mxu0
        %2220 = vmatprep.mubr.f32.mxu0 0.0
        %2221 = vmatmul.mubr.f32.gmra.mxu0 %v2071
        %v2222 = vpop.f32.mrf.mxu0
        %v2223 = vadd.f32 0.0, %v2222
        %v2224 = vpop.f32.mrf.mxu0
        %2225 = vmatprep.mubr.f32.mxu0 0.0
        %2226 = vmatmul.mubr.f32.gmra.mxu0 %v2072
        %v2227 = vpop.f32.mrf.mxu0
        %v2228 = vadd.f32 0.0, %v2227
        %v2229 = vpop.f32.mrf.mxu0
        %2230 = vmatprep.mubr.f32.mxu0 0.0
        %2231 = vmatmul.mubr.f32.gmra.mxu0 %v2073
        %v2232 = vpop.f32.mrf.mxu0
        %v2233 = vadd.f32 0.0, %v2232
        %v2234 = vpop.f32.mrf.mxu0
        %2235 = vmatprep.mubr.f32.mxu0 0.0
        %2236 = vmatmul.mubr.f32.gmra.mxu0 %v2074
        %v2237 = vpop.f32.mrf.mxu0
        %v2238 = vadd.f32 0.0, %v2237
        %v2239 = vpop.f32.mrf.mxu0
        %2240 = vmatprep.mubr.f32.mxu0 0.0
        %2241 = vmatmul.mubr.f32.gmra.mxu0 %v2075
        %v2242 = vpop.f32.mrf.mxu0
        %v2243 = vadd.f32 0.0, %v2242
        %v2244 = vpop.f32.mrf.mxu0
        %2245 = vmatprep.mubr.f32.mxu0 0.0
        %2246 = vmatmul.mubr.f32.gmra.mxu0 %v2076
        %v2247 = vpop.f32.mrf.mxu0
        %v2248 = vadd.f32 0.0, %v2247
        %v2249 = vpop.f32.mrf.mxu0
        %2250 = vmatprep.mubr.f32.mxu0 0.0
        %2251 = vmatmul.mubr.f32.gmra.mxu0 %v2077
        %v2252 = vpop.f32.mrf.mxu0
        %v2253 = vadd.f32 0.0, %v2252
        %v2254 = vpop.f32.mrf.mxu0
        %2255 = vmatprep.mubr.f32.mxu0 0.0
        %2256 = vmatmul.mubr.f32.gmra.mxu0 %v2078
        %v2257 = vpop.f32.mrf.mxu0
        %v2258 = vadd.f32 0.0, %v2257
        %v2259 = vpop.f32.mrf.mxu0
        %2260 = vmatprep.mubr.f32.mxu0 0.0
        %2261 = vmatmul.mubr.f32.gmra.mxu0 %v2079
        %v2262 = vpop.f32.mrf.mxu0
        %v2263 = vadd.f32 0.0, %v2262
        %v2264 = vpop.f32.mrf.mxu0
        %2265 = vmatprep.mubr.f32.mxu0 0.0
        %2266 = vmatmul.mubr.f32.gmra.mxu0 %v2080
        %v2267 = vpop.f32.mrf.mxu0
        %v2268 = vadd.f32 0.0, %v2267
        %v2269 = vpop.f32.mrf.mxu0
        %2270 = vmatprep.mubr.f32.mxu0 0.0
        %2271 = vmatmul.mubr.f32.gmra.mxu0 %v2081
        %v2272 = vpop.f32.mrf.mxu0
        %v2273 = vadd.f32 0.0, %v2272
        %v2274 = vpop.f32.mrf.mxu0
        %2275 = vmatprep.mubr.f32.mxu0 0.0
        %2276 = vmatmul.mubr.f32.gmra.mxu0 %v2082
        %v2277 = vpop.f32.mrf.mxu0
        %v2278 = vadd.f32 0.0, %v2277
        %v2279 = vpop.f32.mrf.mxu0
        %2280 = vmatprep.mubr.f32.mxu0 0.0
        %2281 = vmatmul.mubr.f32.gmra.mxu0 %v2083
        %v2282 = vpop.f32.mrf.mxu0
        %v2283 = vadd.f32 0.0, %v2282
        %v2284 = vpop.f32.mrf.mxu0
        %2285 = vmatprep.mubr.f32.mxu0 0.0
        %2286 = vmatmul.mubr.f32.gmra.mxu0 %v2084
        %v2287 = vpop.f32.mrf.mxu0
        %v2288 = vadd.f32 0.0, %v2287
        %v2289 = vpop.f32.mrf.mxu0
        %2290 = vmatprep.mubr.f32.mxu0 0.0
        %2291 = vmatmul.mubr.f32.gmra.mxu0 %v2085
        %v2292 = vpop.f32.mrf.mxu0
        %v2293 = vadd.f32 0.0, %v2292
        %v2294 = vpop.f32.mrf.mxu0
        %2295 = vmatprep.mubr.f32.mxu0 0.0
        %2296 = vmatmul.mubr.f32.gmra.mxu0 %v2086
        %v2297 = vpop.f32.mrf.mxu0
        %v2298 = vadd.f32 0.0, %v2297
        %v2299 = vpop.f32.mrf.mxu0
        %2300 = vmatprep.mubr.f32.mxu0 0.0
        %2301 = vmatmul.mubr.f32.gmra.mxu0 %v2087
        %v2302 = vpop.f32.mrf.mxu0
        %v2303 = vadd.f32 0.0, %v2302
        %v2304 = vpop.f32.mrf.mxu0
        %2305 = vmatprep.mubr.f32.mxu0 0.0
        %2306 = vmatmul.mubr.f32.gmra.mxu0 %v2088
        %v2307 = vpop.f32.mrf.mxu0
        %v2308 = vadd.f32 0.0, %v2307
        %v2309 = vpop.f32.mrf.mxu0
        %2310 = vmatprep.mubr.f32.mxu0 0.0
        %2311 = vmatmul.mubr.f32.gmra.mxu0 %v2089
        %v2312 = vpop.f32.mrf.mxu0
        %v2313 = vadd.f32 0.0, %v2312
        %v2314 = vpop.f32.mrf.mxu0
        %2315 = vmatprep.mubr.f32.mxu0 0.0
        %2316 = vmatmul.mubr.f32.gmra.mxu0 %v2090
        %v2317 = vpop.f32.mrf.mxu0
        %v2318 = vadd.f32 0.0, %v2317
        %v2319 = vpop.f32.mrf.mxu0
        %2320 = vmatprep.mubr.f32.mxu0 0.0
        %2321 = vmatmul.mubr.f32.gmra.mxu0 %v2091
        %v2322 = vpop.f32.mrf.mxu0
        %v2323 = vadd.f32 0.0, %v2322
        %v2324 = vpop.f32.mrf.mxu0
        %2325 = vmatprep.mubr.f32.mxu0 0.0
        %2326 = vmatmul.mubr.f32.gmra.mxu0 %v2092
        %v2327 = vpop.f32.mrf.mxu0
        %v2328 = vadd.f32 0.0, %v2327
        %v2329 = vpop.f32.mrf.mxu0
        %2330 = vmatprep.mubr.f32.mxu0 0.0
        %2331 = vmatmul.mubr.f32.gmra.mxu0 %v2093
        %v2332 = vpop.f32.mrf.mxu0
        %v2333 = vadd.f32 0.0, %v2332
        %v2334 = vpop.f32.mrf.mxu0
        %2335 = vdwg.mxu0
        %v2336 = vadd.f32 %v2030, %v2178
        %v2337 = vadd.f32 %v2031, %v2183
        %v2338 = vadd.f32 %v2032, %v2188
        %v2339 = vadd.f32 %v2033, %v2193
        %v2340 = vadd.f32 %v2034, %v2198
        %v2341 = vadd.f32 %v2035, %v2203
        %v2342 = vadd.f32 %v2036, %v2208
        %v2343 = vadd.f32 %v2037, %v2213
        %v2344 = vadd.f32 %v2038, %v2218
        %v2345 = vadd.f32 %v2039, %v2223
        %v2346 = vadd.f32 %v2040, %v2228
        %v2347 = vadd.f32 %v2041, %v2233
        %v2348 = vadd.f32 %v2042, %v2238
        %v2349 = vadd.f32 %v2043, %v2243
        %v2350 = vadd.f32 %v2044, %v2248
        %v2351 = vadd.f32 %v2045, %v2253
        %v2352 = vadd.f32 %v2046, %v2258
        %v2353 = vadd.f32 %v2047, %v2263
        %v2354 = vadd.f32 %v2048, %v2268
        %v2355 = vadd.f32 %v2049, %v2273
        %v2356 = vadd.f32 %v2050, %v2278
        %v2357 = vadd.f32 %v2051, %v2283
        %v2358 = vadd.f32 %v2052, %v2288
        %v2359 = vadd.f32 %v2053, %v2293
        %v2360 = vadd.f32 %v2054, %v2298
        %v2361 = vadd.f32 %v2055, %v2303
        %v2362 = vadd.f32 %v2056, %v2308
        %v2363 = vadd.f32 %v2057, %v2313
        %v2364 = vadd.f32 %v2058, %v2318
        %v2365 = vadd.f32 %v2059, %v2323
        %v2366 = vadd.f32 %v2060, %v2328
        %v2367 = vadd.f32 %v2061, %v2333
        %s2368 = scalar_lea.vmem [#allocation2], 48
        %v2369 = vld [vmem:[%s2368] sm:$0xff]
        %v2370 = vld [vmem:[%s2368 + $0x8] sm:$0xff]
        %v2371 = vld [vmem:[%s2368 + $0x18] sm:$0xff]
        %v2372 = vld [vmem:[%s2368 + $0x20] sm:$0xff]
        %v2373 = vld [vmem:[%s2368 + $0x30] sm:$0xff]
        %v2374 = vld [vmem:[%s2368 + $0x38] sm:$0xff]
        %v2375 = vld [vmem:[%s2368 + $0x48] sm:$0xff]
        %v2376 = vld [vmem:[%s2368 + $0x50] sm:$0xff]
        %v2377 = vld [vmem:[%s2368 + $0x60] sm:$0xff]
        %v2378 = vld [vmem:[%s2368 + $0x68] sm:$0xff]
        %v2379 = vld [vmem:[%s2368 + $0x78] sm:$0xff]
        %v2380 = vld [vmem:[%s2368 + $0x80] sm:$0xff]
        %v2381 = vld [vmem:[%s2368 + $0x90] sm:$0xff]
        %v2382 = vld [vmem:[%s2368 + $0x98] sm:$0xff]
        %v2383 = vld [vmem:[%s2368 + $0xa8] sm:$0xff]
        %v2384 = vld [vmem:[%s2368 + $0xb0] sm:$0xff]
        %v2385 = vld [vmem:[%s2368 + $0xc0] sm:$0xff]
        %v2386 = vld [vmem:[%s2368 + $0xc8] sm:$0xff]
        %v2387 = vld [vmem:[%s2368 + $0xd8] sm:$0xff]
        %v2388 = vld [vmem:[%s2368 + $0xe0] sm:$0xff]
        %v2389 = vld [vmem:[%s2368 + $0xf0] sm:$0xff]
        %v2390 = vld [vmem:[%s2368 + $0xf8] sm:$0xff]
        %v2391 = vld [vmem:[%s2368 + $0x108] sm:$0xff]
        %v2392 = vld [vmem:[%s2368 + $0x110] sm:$0xff]
        %v2393 = vld [vmem:[%s2368 + $0x120] sm:$0xff]
        %v2394 = vld [vmem:[%s2368 + $0x128] sm:$0xff]
        %v2395 = vld [vmem:[%s2368 + $0x138] sm:$0xff]
        %v2396 = vld [vmem:[%s2368 + $0x140] sm:$0xff]
        %v2397 = vld [vmem:[%s2368 + $0x150] sm:$0xff]
        %v2398 = vld [vmem:[%s2368 + $0x158] sm:$0xff]
        %v2399 = vld [vmem:[%s2368 + $0x168] sm:$0xff]
        %v2400 = vld [vmem:[%s2368 + $0x170] sm:$0xff]
        %s2401 = scalar_lea.vmem [#allocation7], 768
        %v2402 = vld [vmem:[%s2401] sm:$0xff]
        %v2403 = vld [vmem:[%s2401 + $0x8] sm:$0xff]
        %v2404 = vld [vmem:[%s2401 + $0x10] sm:$0xff]
        %v2405 = vld [vmem:[%s2401 + $0x18] sm:$0xff]
        %v2406 = vld [vmem:[%s2401 + $0x20] sm:$0xff]
        %v2407 = vld [vmem:[%s2401 + $0x28] sm:$0xff]
        %v2408 = vld [vmem:[%s2401 + $0x30] sm:$0xff]
        %v2409 = vld [vmem:[%s2401 + $0x38] sm:$0xff]
        %v2410 = vld [vmem:[%s2401 + $0x40] sm:$0xff]
        %v2411 = vld [vmem:[%s2401 + $0x48] sm:$0xff]
        %v2412 = vld [vmem:[%s2401 + $0x50] sm:$0xff]
        %v2413 = vld [vmem:[%s2401 + $0x58] sm:$0xff]
        %v2414 = vld [vmem:[%s2401 + $0x60] sm:$0xff]
        %v2415 = vld [vmem:[%s2401 + $0x68] sm:$0xff]
        %v2416 = vld [vmem:[%s2401 + $0x70] sm:$0xff]
        %v2417 = vld [vmem:[%s2401 + $0x78] sm:$0xff]
        %2418 = vmatprep.subr.mxu0 0.0
        %2419 = vmatpush1.msra.mxu0 %v2417
        %2420 = vmatprep.subr.mxu0 0.0
        %2421 = vmatpush1.msra.mxu0 %v2416
        %2422 = vmatprep.subr.mxu0 0.0
        %2423 = vmatpush1.msra.mxu0 %v2415
        %2424 = vmatprep.subr.mxu0 0.0
        %2425 = vmatpush1.msra.mxu0 %v2414
        %2426 = vmatprep.subr.mxu0 0.0
        %2427 = vmatpush1.msra.mxu0 %v2413
        %2428 = vmatprep.subr.mxu0 0.0
        %2429 = vmatpush1.msra.mxu0 %v2412
        %2430 = vmatprep.subr.mxu0 0.0
        %2431 = vmatpush1.msra.mxu0 %v2411
        %2432 = vmatprep.subr.mxu0 0.0
        %2433 = vmatpush1.msra.mxu0 %v2410
        %2434 = vmatprep.subr.mxu0 0.0
        %2435 = vmatpush1.msra.mxu0 %v2409
        %2436 = vmatprep.subr.mxu0 0.0
        %2437 = vmatpush1.msra.mxu0 %v2408
        %2438 = vmatprep.subr.mxu0 0.0
        %2439 = vmatpush1.msra.mxu0 %v2407
        %2440 = vmatprep.subr.mxu0 0.0
        %2441 = vmatpush1.msra.mxu0 %v2406
        %2442 = vmatprep.subr.mxu0 0.0
        %2443 = vmatpush1.msra.mxu0 %v2405
        %2444 = vmatprep.subr.mxu0 0.0
        %2445 = vmatpush1.msra.mxu0 %v2404
        %2446 = vmatprep.subr.mxu0 0.0
        %2447 = vmatpush1.msra.mxu0 %v2403
        %2448 = vmatprep.subr.mxu0 0.0
        %2449 = vmatpush1.msra.mxu0 %v2402
        %2450 = vmatprep.subr.mxu0 0.0
        %2451 = vmatpush2.msra.mxu0 0.0
        %2452 = vmatprep.subr.mxu0 0.0
        %2453 = vmatpush2.msra.mxu0 0.0
        %2454 = vmatprep.subr.mxu0 0.0
        %2455 = vmatpush2.msra.mxu0 0.0
        %2456 = vmatprep.subr.mxu0 0.0
        %2457 = vmatpush2.msra.mxu0 0.0
        %2458 = vmatprep.subr.mxu0 0.0
        %2459 = vmatpush2.msra.mxu0 0.0
        %2460 = vmatprep.subr.mxu0 0.0
        %2461 = vmatpush2.msra.mxu0 0.0
        %2462 = vmatprep.subr.mxu0 0.0
        %2463 = vmatpush2.msra.mxu0 0.0
        %2464 = vmatprep.subr.mxu0 0.0
        %2465 = vmatpush2.msra.mxu0 0.0
        %2466 = vmatprep.subr.mxu0 0.0
        %2467 = vmatpush2.msra.mxu0 0.0
        %2468 = vmatprep.subr.mxu0 0.0
        %2469 = vmatpush2.msra.mxu0 0.0
        %2470 = vmatprep.subr.mxu0 0.0
        %2471 = vmatpush2.msra.mxu0 0.0
        %2472 = vmatprep.subr.mxu0 0.0
        %2473 = vmatpush2.msra.mxu0 0.0
        %2474 = vmatprep.subr.mxu0 0.0
        %2475 = vmatpush2.msra.mxu0 0.0
        %2476 = vmatprep.subr.mxu0 0.0
        %2477 = vmatpush2.msra.mxu0 0.0
        %2478 = vmatprep.subr.mxu0 0.0
        %2479 = vmatpush2.msra.mxu0 0.0
        %2480 = vmatprep.subr.mxu0 0.0
        %2481 = vmatpush2.msra.mxu0 0.0
        %2482 = vmatprep.mubr.f32.mxu0 0.0
        %2483 = vmatmul.mubr.f32.gmra.mxu0 %v2369
        %v2484 = vpop.f32.mrf.mxu0
        %v2485 = vadd.f32 0.0, %v2484
        %v2486 = vpop.f32.mrf.mxu0
        %2487 = vmatprep.mubr.f32.mxu0 0.0
        %2488 = vmatmul.mubr.f32.gmra.mxu0 %v2370
        %v2489 = vpop.f32.mrf.mxu0
        %v2490 = vadd.f32 0.0, %v2489
        %v2491 = vpop.f32.mrf.mxu0
        %2492 = vmatprep.mubr.f32.mxu0 0.0
        %2493 = vmatmul.mubr.f32.gmra.mxu0 %v2371
        %v2494 = vpop.f32.mrf.mxu0
        %v2495 = vadd.f32 0.0, %v2494
        %v2496 = vpop.f32.mrf.mxu0
        %2497 = vmatprep.mubr.f32.mxu0 0.0
        %2498 = vmatmul.mubr.f32.gmra.mxu0 %v2372
        %v2499 = vpop.f32.mrf.mxu0
        %v2500 = vadd.f32 0.0, %v2499
        %v2501 = vpop.f32.mrf.mxu0
        %2502 = vmatprep.mubr.f32.mxu0 0.0
        %2503 = vmatmul.mubr.f32.gmra.mxu0 %v2373
        %v2504 = vpop.f32.mrf.mxu0
        %v2505 = vadd.f32 0.0, %v2504
        %v2506 = vpop.f32.mrf.mxu0
        %2507 = vmatprep.mubr.f32.mxu0 0.0
        %2508 = vmatmul.mubr.f32.gmra.mxu0 %v2374
        %v2509 = vpop.f32.mrf.mxu0
        %v2510 = vadd.f32 0.0, %v2509
        %v2511 = vpop.f32.mrf.mxu0
        %2512 = vmatprep.mubr.f32.mxu0 0.0
        %2513 = vmatmul.mubr.f32.gmra.mxu0 %v2375
        %v2514 = vpop.f32.mrf.mxu0
        %v2515 = vadd.f32 0.0, %v2514
        %v2516 = vpop.f32.mrf.mxu0
        %2517 = vmatprep.mubr.f32.mxu0 0.0
        %2518 = vmatmul.mubr.f32.gmra.mxu0 %v2376
        %v2519 = vpop.f32.mrf.mxu0
        %v2520 = vadd.f32 0.0, %v2519
        %v2521 = vpop.f32.mrf.mxu0
        %2522 = vmatprep.mubr.f32.mxu0 0.0
        %2523 = vmatmul.mubr.f32.gmra.mxu0 %v2377
        %v2524 = vpop.f32.mrf.mxu0
        %v2525 = vadd.f32 0.0, %v2524
        %v2526 = vpop.f32.mrf.mxu0
        %2527 = vmatprep.mubr.f32.mxu0 0.0
        %2528 = vmatmul.mubr.f32.gmra.mxu0 %v2378
        %v2529 = vpop.f32.mrf.mxu0
        %v2530 = vadd.f32 0.0, %v2529
        %v2531 = vpop.f32.mrf.mxu0
        %2532 = vmatprep.mubr.f32.mxu0 0.0
        %2533 = vmatmul.mubr.f32.gmra.mxu0 %v2379
        %v2534 = vpop.f32.mrf.mxu0
        %v2535 = vadd.f32 0.0, %v2534
        %v2536 = vpop.f32.mrf.mxu0
        %2537 = vmatprep.mubr.f32.mxu0 0.0
        %2538 = vmatmul.mubr.f32.gmra.mxu0 %v2380
        %v2539 = vpop.f32.mrf.mxu0
        %v2540 = vadd.f32 0.0, %v2539
        %v2541 = vpop.f32.mrf.mxu0
        %2542 = vmatprep.mubr.f32.mxu0 0.0
        %2543 = vmatmul.mubr.f32.gmra.mxu0 %v2381
        %v2544 = vpop.f32.mrf.mxu0
        %v2545 = vadd.f32 0.0, %v2544
        %v2546 = vpop.f32.mrf.mxu0
        %2547 = vmatprep.mubr.f32.mxu0 0.0
        %2548 = vmatmul.mubr.f32.gmra.mxu0 %v2382
        %v2549 = vpop.f32.mrf.mxu0
        %v2550 = vadd.f32 0.0, %v2549
        %v2551 = vpop.f32.mrf.mxu0
        %2552 = vmatprep.mubr.f32.mxu0 0.0
        %2553 = vmatmul.mubr.f32.gmra.mxu0 %v2383
        %v2554 = vpop.f32.mrf.mxu0
        %v2555 = vadd.f32 0.0, %v2554
        %v2556 = vpop.f32.mrf.mxu0
        %2557 = vmatprep.mubr.f32.mxu0 0.0
        %2558 = vmatmul.mubr.f32.gmra.mxu0 %v2384
        %v2559 = vpop.f32.mrf.mxu0
        %v2560 = vadd.f32 0.0, %v2559
        %v2561 = vpop.f32.mrf.mxu0
        %2562 = vmatprep.mubr.f32.mxu0 0.0
        %2563 = vmatmul.mubr.f32.gmra.mxu0 %v2385
        %v2564 = vpop.f32.mrf.mxu0
        %v2565 = vadd.f32 0.0, %v2564
        %v2566 = vpop.f32.mrf.mxu0
        %2567 = vmatprep.mubr.f32.mxu0 0.0
        %2568 = vmatmul.mubr.f32.gmra.mxu0 %v2386
        %v2569 = vpop.f32.mrf.mxu0
        %v2570 = vadd.f32 0.0, %v2569
        %v2571 = vpop.f32.mrf.mxu0
        %2572 = vmatprep.mubr.f32.mxu0 0.0
        %2573 = vmatmul.mubr.f32.gmra.mxu0 %v2387
        %v2574 = vpop.f32.mrf.mxu0
        %v2575 = vadd.f32 0.0, %v2574
        %v2576 = vpop.f32.mrf.mxu0
        %2577 = vmatprep.mubr.f32.mxu0 0.0
        %2578 = vmatmul.mubr.f32.gmra.mxu0 %v2388
        %v2579 = vpop.f32.mrf.mxu0
        %v2580 = vadd.f32 0.0, %v2579
        %v2581 = vpop.f32.mrf.mxu0
        %2582 = vmatprep.mubr.f32.mxu0 0.0
        %2583 = vmatmul.mubr.f32.gmra.mxu0 %v2389
        %v2584 = vpop.f32.mrf.mxu0
        %v2585 = vadd.f32 0.0, %v2584
        %v2586 = vpop.f32.mrf.mxu0
        %2587 = vmatprep.mubr.f32.mxu0 0.0
        %2588 = vmatmul.mubr.f32.gmra.mxu0 %v2390
        %v2589 = vpop.f32.mrf.mxu0
        %v2590 = vadd.f32 0.0, %v2589
        %v2591 = vpop.f32.mrf.mxu0
        %2592 = vmatprep.mubr.f32.mxu0 0.0
        %2593 = vmatmul.mubr.f32.gmra.mxu0 %v2391
        %v2594 = vpop.f32.mrf.mxu0
        %v2595 = vadd.f32 0.0, %v2594
        %v2596 = vpop.f32.mrf.mxu0
        %2597 = vmatprep.mubr.f32.mxu0 0.0
        %2598 = vmatmul.mubr.f32.gmra.mxu0 %v2392
        %v2599 = vpop.f32.mrf.mxu0
        %v2600 = vadd.f32 0.0, %v2599
        %v2601 = vpop.f32.mrf.mxu0
        %2602 = vmatprep.mubr.f32.mxu0 0.0
        %2603 = vmatmul.mubr.f32.gmra.mxu0 %v2393
        %v2604 = vpop.f32.mrf.mxu0
        %v2605 = vadd.f32 0.0, %v2604
        %v2606 = vpop.f32.mrf.mxu0
        %2607 = vmatprep.mubr.f32.mxu0 0.0
        %2608 = vmatmul.mubr.f32.gmra.mxu0 %v2394
        %v2609 = vpop.f32.mrf.mxu0
        %v2610 = vadd.f32 0.0, %v2609
        %v2611 = vpop.f32.mrf.mxu0
        %2612 = vmatprep.mubr.f32.mxu0 0.0
        %2613 = vmatmul.mubr.f32.gmra.mxu0 %v2395
        %v2614 = vpop.f32.mrf.mxu0
        %v2615 = vadd.f32 0.0, %v2614
        %v2616 = vpop.f32.mrf.mxu0
        %2617 = vmatprep.mubr.f32.mxu0 0.0
        %2618 = vmatmul.mubr.f32.gmra.mxu0 %v2396
        %v2619 = vpop.f32.mrf.mxu0
        %v2620 = vadd.f32 0.0, %v2619
        %v2621 = vpop.f32.mrf.mxu0
        %2622 = vmatprep.mubr.f32.mxu0 0.0
        %2623 = vmatmul.mubr.f32.gmra.mxu0 %v2397
        %v2624 = vpop.f32.mrf.mxu0
        %v2625 = vadd.f32 0.0, %v2624
        %v2626 = vpop.f32.mrf.mxu0
        %2627 = vmatprep.mubr.f32.mxu0 0.0
        %2628 = vmatmul.mubr.f32.gmra.mxu0 %v2398
        %v2629 = vpop.f32.mrf.mxu0
        %v2630 = vadd.f32 0.0, %v2629
        %v2631 = vpop.f32.mrf.mxu0
        %2632 = vmatprep.mubr.f32.mxu0 0.0
        %2633 = vmatmul.mubr.f32.gmra.mxu0 %v2399
        %v2634 = vpop.f32.mrf.mxu0
        %v2635 = vadd.f32 0.0, %v2634
        %v2636 = vpop.f32.mrf.mxu0
        %2637 = vmatprep.mubr.f32.mxu0 0.0
        %2638 = vmatmul.mubr.f32.gmra.mxu0 %v2400
        %v2639 = vpop.f32.mrf.mxu0
        %v2640 = vadd.f32 0.0, %v2639
        %v2641 = vpop.f32.mrf.mxu0
        %2642 = vdwg.mxu0
        %v2643 = vadd.f32 %v2336, %v2485
        %v2644 = vadd.f32 %v2337, %v2490
        %v2645 = vadd.f32 %v2338, %v2495
        %v2646 = vadd.f32 %v2339, %v2500
        %v2647 = vadd.f32 %v2340, %v2505
        %v2648 = vadd.f32 %v2341, %v2510
        %v2649 = vadd.f32 %v2342, %v2515
        %v2650 = vadd.f32 %v2343, %v2520
        %v2651 = vadd.f32 %v2344, %v2525
        %v2652 = vadd.f32 %v2345, %v2530
        %v2653 = vadd.f32 %v2346, %v2535
        %v2654 = vadd.f32 %v2347, %v2540
        %v2655 = vadd.f32 %v2348, %v2545
        %v2656 = vadd.f32 %v2349, %v2550
        %v2657 = vadd.f32 %v2350, %v2555
        %v2658 = vadd.f32 %v2351, %v2560
        %v2659 = vadd.f32 %v2352, %v2565
        %v2660 = vadd.f32 %v2353, %v2570
        %v2661 = vadd.f32 %v2354, %v2575
        %v2662 = vadd.f32 %v2355, %v2580
        %v2663 = vadd.f32 %v2356, %v2585
        %v2664 = vadd.f32 %v2357, %v2590
        %v2665 = vadd.f32 %v2358, %v2595
        %v2666 = vadd.f32 %v2359, %v2600
        %v2667 = vadd.f32 %v2360, %v2605
        %v2668 = vadd.f32 %v2361, %v2610
        %v2669 = vadd.f32 %v2362, %v2615
        %v2670 = vadd.f32 %v2363, %v2620
        %v2671 = vadd.f32 %v2364, %v2625
        %v2672 = vadd.f32 %v2365, %v2630
        %v2673 = vadd.f32 %v2366, %v2635
        %v2674 = vadd.f32 %v2367, %v2640
        %v2675 = vld [vmem:[%s2368 + $0x1] sm:$0xff]
        %v2676 = vld [vmem:[%s2368 + $0x9] sm:$0xff]
        %v2677 = vld [vmem:[%s2368 + $0x19] sm:$0xff]
        %v2678 = vld [vmem:[%s2368 + $0x21] sm:$0xff]
        %v2679 = vld [vmem:[%s2368 + $0x31] sm:$0xff]
        %v2680 = vld [vmem:[%s2368 + $0x39] sm:$0xff]
        %v2681 = vld [vmem:[%s2368 + $0x49] sm:$0xff]
        %v2682 = vld [vmem:[%s2368 + $0x51] sm:$0xff]
        %v2683 = vld [vmem:[%s2368 + $0x61] sm:$0xff]
        %v2684 = vld [vmem:[%s2368 + $0x69] sm:$0xff]
        %v2685 = vld [vmem:[%s2368 + $0x79] sm:$0xff]
        %v2686 = vld [vmem:[%s2368 + $0x81] sm:$0xff]
        %v2687 = vld [vmem:[%s2368 + $0x91] sm:$0xff]
        %v2688 = vld [vmem:[%s2368 + $0x99] sm:$0xff]
        %v2689 = vld [vmem:[%s2368 + $0xa9] sm:$0xff]
        %v2690 = vld [vmem:[%s2368 + $0xb1] sm:$0xff]
        %v2691 = vld [vmem:[%s2368 + $0xc1] sm:$0xff]
        %v2692 = vld [vmem:[%s2368 + $0xc9] sm:$0xff]
        %v2693 = vld [vmem:[%s2368 + $0xd9] sm:$0xff]
        %v2694 = vld [vmem:[%s2368 + $0xe1] sm:$0xff]
        %v2695 = vld [vmem:[%s2368 + $0xf1] sm:$0xff]
        %v2696 = vld [vmem:[%s2368 + $0xf9] sm:$0xff]
        %v2697 = vld [vmem:[%s2368 + $0x109] sm:$0xff]
        %v2698 = vld [vmem:[%s2368 + $0x111] sm:$0xff]
        %v2699 = vld [vmem:[%s2368 + $0x121] sm:$0xff]
        %v2700 = vld [vmem:[%s2368 + $0x129] sm:$0xff]
        %v2701 = vld [vmem:[%s2368 + $0x139] sm:$0xff]
        %v2702 = vld [vmem:[%s2368 + $0x141] sm:$0xff]
        %v2703 = vld [vmem:[%s2368 + $0x151] sm:$0xff]
        %v2704 = vld [vmem:[%s2368 + $0x159] sm:$0xff]
        %v2705 = vld [vmem:[%s2368 + $0x169] sm:$0xff]
        %v2706 = vld [vmem:[%s2368 + $0x171] sm:$0xff]
        %s2707 = scalar_lea.vmem [#allocation7], 896
        %v2708 = vld [vmem:[%s2707] sm:$0xff]
        %v2709 = vld [vmem:[%s2707 + $0x8] sm:$0xff]
        %v2710 = vld [vmem:[%s2707 + $0x10] sm:$0xff]
        %v2711 = vld [vmem:[%s2707 + $0x18] sm:$0xff]
        %v2712 = vld [vmem:[%s2707 + $0x20] sm:$0xff]
        %v2713 = vld [vmem:[%s2707 + $0x28] sm:$0xff]
        %v2714 = vld [vmem:[%s2707 + $0x30] sm:$0xff]
        %v2715 = vld [vmem:[%s2707 + $0x38] sm:$0xff]
        %v2716 = vld [vmem:[%s2707 + $0x40] sm:$0xff]
        %v2717 = vld [vmem:[%s2707 + $0x48] sm:$0xff]
        %v2718 = vld [vmem:[%s2707 + $0x50] sm:$0xff]
        %v2719 = vld [vmem:[%s2707 + $0x58] sm:$0xff]
        %v2720 = vld [vmem:[%s2707 + $0x60] sm:$0xff]
        %v2721 = vld [vmem:[%s2707 + $0x68] sm:$0xff]
        %v2722 = vld [vmem:[%s2707 + $0x70] sm:$0xff]
        %v2723 = vld [vmem:[%s2707 + $0x78] sm:$0xff]
        %2724 = vmatprep.subr.mxu0 0.0
        %2725 = vmatpush1.msra.mxu0 %v2723
        %2726 = vmatprep.subr.mxu0 0.0
        %2727 = vmatpush1.msra.mxu0 %v2722
        %2728 = vmatprep.subr.mxu0 0.0
        %2729 = vmatpush1.msra.mxu0 %v2721
        %2730 = vmatprep.subr.mxu0 0.0
        %2731 = vmatpush1.msra.mxu0 %v2720
        %2732 = vmatprep.subr.mxu0 0.0
        %2733 = vmatpush1.msra.mxu0 %v2719
        %2734 = vmatprep.subr.mxu0 0.0
        %2735 = vmatpush1.msra.mxu0 %v2718
        %2736 = vmatprep.subr.mxu0 0.0
        %2737 = vmatpush1.msra.mxu0 %v2717
        %2738 = vmatprep.subr.mxu0 0.0
        %2739 = vmatpush1.msra.mxu0 %v2716
        %2740 = vmatprep.subr.mxu0 0.0
        %2741 = vmatpush1.msra.mxu0 %v2715
        %2742 = vmatprep.subr.mxu0 0.0
        %2743 = vmatpush1.msra.mxu0 %v2714
        %2744 = vmatprep.subr.mxu0 0.0
        %2745 = vmatpush1.msra.mxu0 %v2713
        %2746 = vmatprep.subr.mxu0 0.0
        %2747 = vmatpush1.msra.mxu0 %v2712
        %2748 = vmatprep.subr.mxu0 0.0
        %2749 = vmatpush1.msra.mxu0 %v2711
        %2750 = vmatprep.subr.mxu0 0.0
        %2751 = vmatpush1.msra.mxu0 %v2710
        %2752 = vmatprep.subr.mxu0 0.0
        %2753 = vmatpush1.msra.mxu0 %v2709
        %2754 = vmatprep.subr.mxu0 0.0
        %2755 = vmatpush1.msra.mxu0 %v2708
        %2756 = vmatprep.subr.mxu0 0.0
        %2757 = vmatpush2.msra.mxu0 0.0
        %2758 = vmatprep.subr.mxu0 0.0
        %2759 = vmatpush2.msra.mxu0 0.0
        %2760 = vmatprep.subr.mxu0 0.0
        %2761 = vmatpush2.msra.mxu0 0.0
        %2762 = vmatprep.subr.mxu0 0.0
        %2763 = vmatpush2.msra.mxu0 0.0
        %2764 = vmatprep.subr.mxu0 0.0
        %2765 = vmatpush2.msra.mxu0 0.0
        %2766 = vmatprep.subr.mxu0 0.0
        %2767 = vmatpush2.msra.mxu0 0.0
        %2768 = vmatprep.subr.mxu0 0.0
        %2769 = vmatpush2.msra.mxu0 0.0
        %2770 = vmatprep.subr.mxu0 0.0
        %2771 = vmatpush2.msra.mxu0 0.0
        %2772 = vmatprep.subr.mxu0 0.0
        %2773 = vmatpush2.msra.mxu0 0.0
        %2774 = vmatprep.subr.mxu0 0.0
        %2775 = vmatpush2.msra.mxu0 0.0
        %2776 = vmatprep.subr.mxu0 0.0
        %2777 = vmatpush2.msra.mxu0 0.0
        %2778 = vmatprep.subr.mxu0 0.0
        %2779 = vmatpush2.msra.mxu0 0.0
        %2780 = vmatprep.subr.mxu0 0.0
        %2781 = vmatpush2.msra.mxu0 0.0
        %2782 = vmatprep.subr.mxu0 0.0
        %2783 = vmatpush2.msra.mxu0 0.0
        %2784 = vmatprep.subr.mxu0 0.0
        %2785 = vmatpush2.msra.mxu0 0.0
        %2786 = vmatprep.subr.mxu0 0.0
        %2787 = vmatpush2.msra.mxu0 0.0
        %2788 = vmatprep.mubr.f32.mxu0 0.0
        %2789 = vmatmul.mubr.f32.gmra.mxu0 %v2675
        %v2790 = vpop.f32.mrf.mxu0
        %v2791 = vadd.f32 0.0, %v2790
        %v2792 = vpop.f32.mrf.mxu0
        %2793 = vmatprep.mubr.f32.mxu0 0.0
        %2794 = vmatmul.mubr.f32.gmra.mxu0 %v2676
        %v2795 = vpop.f32.mrf.mxu0
        %v2796 = vadd.f32 0.0, %v2795
        %v2797 = vpop.f32.mrf.mxu0
        %2798 = vmatprep.mubr.f32.mxu0 0.0
        %2799 = vmatmul.mubr.f32.gmra.mxu0 %v2677
        %v2800 = vpop.f32.mrf.mxu0
        %v2801 = vadd.f32 0.0, %v2800
        %v2802 = vpop.f32.mrf.mxu0
        %2803 = vmatprep.mubr.f32.mxu0 0.0
        %2804 = vmatmul.mubr.f32.gmra.mxu0 %v2678
        %v2805 = vpop.f32.mrf.mxu0
        %v2806 = vadd.f32 0.0, %v2805
        %v2807 = vpop.f32.mrf.mxu0
        %2808 = vmatprep.mubr.f32.mxu0 0.0
        %2809 = vmatmul.mubr.f32.gmra.mxu0 %v2679
        %v2810 = vpop.f32.mrf.mxu0
        %v2811 = vadd.f32 0.0, %v2810
        %v2812 = vpop.f32.mrf.mxu0
        %2813 = vmatprep.mubr.f32.mxu0 0.0
        %2814 = vmatmul.mubr.f32.gmra.mxu0 %v2680
        %v2815 = vpop.f32.mrf.mxu0
        %v2816 = vadd.f32 0.0, %v2815
        %v2817 = vpop.f32.mrf.mxu0
        %2818 = vmatprep.mubr.f32.mxu0 0.0
        %2819 = vmatmul.mubr.f32.gmra.mxu0 %v2681
        %v2820 = vpop.f32.mrf.mxu0
        %v2821 = vadd.f32 0.0, %v2820
        %v2822 = vpop.f32.mrf.mxu0
        %2823 = vmatprep.mubr.f32.mxu0 0.0
        %2824 = vmatmul.mubr.f32.gmra.mxu0 %v2682
        %v2825 = vpop.f32.mrf.mxu0
        %v2826 = vadd.f32 0.0, %v2825
        %v2827 = vpop.f32.mrf.mxu0
        %2828 = vmatprep.mubr.f32.mxu0 0.0
        %2829 = vmatmul.mubr.f32.gmra.mxu0 %v2683
        %v2830 = vpop.f32.mrf.mxu0
        %v2831 = vadd.f32 0.0, %v2830
        %v2832 = vpop.f32.mrf.mxu0
        %2833 = vmatprep.mubr.f32.mxu0 0.0
        %2834 = vmatmul.mubr.f32.gmra.mxu0 %v2684
        %v2835 = vpop.f32.mrf.mxu0
        %v2836 = vadd.f32 0.0, %v2835
        %v2837 = vpop.f32.mrf.mxu0
        %2838 = vmatprep.mubr.f32.mxu0 0.0
        %2839 = vmatmul.mubr.f32.gmra.mxu0 %v2685
        %v2840 = vpop.f32.mrf.mxu0
        %v2841 = vadd.f32 0.0, %v2840
        %v2842 = vpop.f32.mrf.mxu0
        %2843 = vmatprep.mubr.f32.mxu0 0.0
        %2844 = vmatmul.mubr.f32.gmra.mxu0 %v2686
        %v2845 = vpop.f32.mrf.mxu0
        %v2846 = vadd.f32 0.0, %v2845
        %v2847 = vpop.f32.mrf.mxu0
        %2848 = vmatprep.mubr.f32.mxu0 0.0
        %2849 = vmatmul.mubr.f32.gmra.mxu0 %v2687
        %v2850 = vpop.f32.mrf.mxu0
        %v2851 = vadd.f32 0.0, %v2850
        %v2852 = vpop.f32.mrf.mxu0
        %2853 = vmatprep.mubr.f32.mxu0 0.0
        %2854 = vmatmul.mubr.f32.gmra.mxu0 %v2688
        %v2855 = vpop.f32.mrf.mxu0
        %v2856 = vadd.f32 0.0, %v2855
        %v2857 = vpop.f32.mrf.mxu0
        %2858 = vmatprep.mubr.f32.mxu0 0.0
        %2859 = vmatmul.mubr.f32.gmra.mxu0 %v2689
        %v2860 = vpop.f32.mrf.mxu0
        %v2861 = vadd.f32 0.0, %v2860
        %v2862 = vpop.f32.mrf.mxu0
        %2863 = vmatprep.mubr.f32.mxu0 0.0
        %2864 = vmatmul.mubr.f32.gmra.mxu0 %v2690
        %v2865 = vpop.f32.mrf.mxu0
        %v2866 = vadd.f32 0.0, %v2865
        %v2867 = vpop.f32.mrf.mxu0
        %2868 = vmatprep.mubr.f32.mxu0 0.0
        %2869 = vmatmul.mubr.f32.gmra.mxu0 %v2691
        %v2870 = vpop.f32.mrf.mxu0
        %v2871 = vadd.f32 0.0, %v2870
        %v2872 = vpop.f32.mrf.mxu0
        %2873 = vmatprep.mubr.f32.mxu0 0.0
        %2874 = vmatmul.mubr.f32.gmra.mxu0 %v2692
        %v2875 = vpop.f32.mrf.mxu0
        %v2876 = vadd.f32 0.0, %v2875
        %v2877 = vpop.f32.mrf.mxu0
        %2878 = vmatprep.mubr.f32.mxu0 0.0
        %2879 = vmatmul.mubr.f32.gmra.mxu0 %v2693
        %v2880 = vpop.f32.mrf.mxu0
        %v2881 = vadd.f32 0.0, %v2880
        %v2882 = vpop.f32.mrf.mxu0
        %2883 = vmatprep.mubr.f32.mxu0 0.0
        %2884 = vmatmul.mubr.f32.gmra.mxu0 %v2694
        %v2885 = vpop.f32.mrf.mxu0
        %v2886 = vadd.f32 0.0, %v2885
        %v2887 = vpop.f32.mrf.mxu0
        %2888 = vmatprep.mubr.f32.mxu0 0.0
        %2889 = vmatmul.mubr.f32.gmra.mxu0 %v2695
        %v2890 = vpop.f32.mrf.mxu0
        %v2891 = vadd.f32 0.0, %v2890
        %v2892 = vpop.f32.mrf.mxu0
        %2893 = vmatprep.mubr.f32.mxu0 0.0
        %2894 = vmatmul.mubr.f32.gmra.mxu0 %v2696
        %v2895 = vpop.f32.mrf.mxu0
        %v2896 = vadd.f32 0.0, %v2895
        %v2897 = vpop.f32.mrf.mxu0
        %2898 = vmatprep.mubr.f32.mxu0 0.0
        %2899 = vmatmul.mubr.f32.gmra.mxu0 %v2697
        %v2900 = vpop.f32.mrf.mxu0
        %v2901 = vadd.f32 0.0, %v2900
        %v2902 = vpop.f32.mrf.mxu0
        %2903 = vmatprep.mubr.f32.mxu0 0.0
        %2904 = vmatmul.mubr.f32.gmra.mxu0 %v2698
        %v2905 = vpop.f32.mrf.mxu0
        %v2906 = vadd.f32 0.0, %v2905
        %v2907 = vpop.f32.mrf.mxu0
        %2908 = vmatprep.mubr.f32.mxu0 0.0
        %2909 = vmatmul.mubr.f32.gmra.mxu0 %v2699
        %v2910 = vpop.f32.mrf.mxu0
        %v2911 = vadd.f32 0.0, %v2910
        %v2912 = vpop.f32.mrf.mxu0
        %2913 = vmatprep.mubr.f32.mxu0 0.0
        %2914 = vmatmul.mubr.f32.gmra.mxu0 %v2700
        %v2915 = vpop.f32.mrf.mxu0
        %v2916 = vadd.f32 0.0, %v2915
        %v2917 = vpop.f32.mrf.mxu0
        %2918 = vmatprep.mubr.f32.mxu0 0.0
        %2919 = vmatmul.mubr.f32.gmra.mxu0 %v2701
        %v2920 = vpop.f32.mrf.mxu0
        %v2921 = vadd.f32 0.0, %v2920
        %v2922 = vpop.f32.mrf.mxu0
        %2923 = vmatprep.mubr.f32.mxu0 0.0
        %2924 = vmatmul.mubr.f32.gmra.mxu0 %v2702
        %v2925 = vpop.f32.mrf.mxu0
        %v2926 = vadd.f32 0.0, %v2925
        %v2927 = vpop.f32.mrf.mxu0
        %2928 = vmatprep.mubr.f32.mxu0 0.0
        %2929 = vmatmul.mubr.f32.gmra.mxu0 %v2703
        %v2930 = vpop.f32.mrf.mxu0
        %v2931 = vadd.f32 0.0, %v2930
        %v2932 = vpop.f32.mrf.mxu0
        %2933 = vmatprep.mubr.f32.mxu0 0.0
        %2934 = vmatmul.mubr.f32.gmra.mxu0 %v2704
        %v2935 = vpop.f32.mrf.mxu0
        %v2936 = vadd.f32 0.0, %v2935
        %v2937 = vpop.f32.mrf.mxu0
        %2938 = vmatprep.mubr.f32.mxu0 0.0
        %2939 = vmatmul.mubr.f32.gmra.mxu0 %v2705
        %v2940 = vpop.f32.mrf.mxu0
        %v2941 = vadd.f32 0.0, %v2940
        %v2942 = vpop.f32.mrf.mxu0
        %2943 = vmatprep.mubr.f32.mxu0 0.0
        %2944 = vmatmul.mubr.f32.gmra.mxu0 %v2706
        %v2945 = vpop.f32.mrf.mxu0
        %v2946 = vadd.f32 0.0, %v2945
        %v2947 = vpop.f32.mrf.mxu0
        %2948 = vdwg.mxu0
        %v2949 = vadd.f32 %v2643, %v2791
        %v2950 = vadd.f32 %v2644, %v2796
        %v2951 = vadd.f32 %v2645, %v2801
        %v2952 = vadd.f32 %v2646, %v2806
        %v2953 = vadd.f32 %v2647, %v2811
        %v2954 = vadd.f32 %v2648, %v2816
        %v2955 = vadd.f32 %v2649, %v2821
        %v2956 = vadd.f32 %v2650, %v2826
        %v2957 = vadd.f32 %v2651, %v2831
        %v2958 = vadd.f32 %v2652, %v2836
        %v2959 = vadd.f32 %v2653, %v2841
        %v2960 = vadd.f32 %v2654, %v2846
        %v2961 = vadd.f32 %v2655, %v2851
        %v2962 = vadd.f32 %v2656, %v2856
        %v2963 = vadd.f32 %v2657, %v2861
        %v2964 = vadd.f32 %v2658, %v2866
        %v2965 = vadd.f32 %v2659, %v2871
        %v2966 = vadd.f32 %v2660, %v2876
        %v2967 = vadd.f32 %v2661, %v2881
        %v2968 = vadd.f32 %v2662, %v2886
        %v2969 = vadd.f32 %v2663, %v2891
        %v2970 = vadd.f32 %v2664, %v2896
        %v2971 = vadd.f32 %v2665, %v2901
        %v2972 = vadd.f32 %v2666, %v2906
        %v2973 = vadd.f32 %v2667, %v2911
        %v2974 = vadd.f32 %v2668, %v2916
        %v2975 = vadd.f32 %v2669, %v2921
        %v2976 = vadd.f32 %v2670, %v2926
        %v2977 = vadd.f32 %v2671, %v2931
        %v2978 = vadd.f32 %v2672, %v2936
        %v2979 = vadd.f32 %v2673, %v2941
        %v2980 = vadd.f32 %v2674, %v2946
        %v2981 = vld [vmem:[%s2368 + $0x2] sm:$0xff]
        %v2982 = vld [vmem:[%s2368 + $0xa] sm:$0xff]
        %v2983 = vld [vmem:[%s2368 + $0x1a] sm:$0xff]
        %v2984 = vld [vmem:[%s2368 + $0x22] sm:$0xff]
        %v2985 = vld [vmem:[%s2368 + $0x32] sm:$0xff]
        %v2986 = vld [vmem:[%s2368 + $0x3a] sm:$0xff]
        %v2987 = vld [vmem:[%s2368 + $0x4a] sm:$0xff]
        %v2988 = vld [vmem:[%s2368 + $0x52] sm:$0xff]
        %v2989 = vld [vmem:[%s2368 + $0x62] sm:$0xff]
        %v2990 = vld [vmem:[%s2368 + $0x6a] sm:$0xff]
        %v2991 = vld [vmem:[%s2368 + $0x7a] sm:$0xff]
        %v2992 = vld [vmem:[%s2368 + $0x82] sm:$0xff]
        %v2993 = vld [vmem:[%s2368 + $0x92] sm:$0xff]
        %v2994 = vld [vmem:[%s2368 + $0x9a] sm:$0xff]
        %v2995 = vld [vmem:[%s2368 + $0xaa] sm:$0xff]
        %v2996 = vld [vmem:[%s2368 + $0xb2] sm:$0xff]
        %v2997 = vld [vmem:[%s2368 + $0xc2] sm:$0xff]
        %v2998 = vld [vmem:[%s2368 + $0xca] sm:$0xff]
        %v2999 = vld [vmem:[%s2368 + $0xda] sm:$0xff]
        %v3000 = vld [vmem:[%s2368 + $0xe2] sm:$0xff]
        %v3001 = vld [vmem:[%s2368 + $0xf2] sm:$0xff]
        %v3002 = vld [vmem:[%s2368 + $0xfa] sm:$0xff]
        %v3003 = vld [vmem:[%s2368 + $0x10a] sm:$0xff]
        %v3004 = vld [vmem:[%s2368 + $0x112] sm:$0xff]
        %v3005 = vld [vmem:[%s2368 + $0x122] sm:$0xff]
        %v3006 = vld [vmem:[%s2368 + $0x12a] sm:$0xff]
        %v3007 = vld [vmem:[%s2368 + $0x13a] sm:$0xff]
        %v3008 = vld [vmem:[%s2368 + $0x142] sm:$0xff]
        %v3009 = vld [vmem:[%s2368 + $0x152] sm:$0xff]
        %v3010 = vld [vmem:[%s2368 + $0x15a] sm:$0xff]
        %v3011 = vld [vmem:[%s2368 + $0x16a] sm:$0xff]
        %v3012 = vld [vmem:[%s2368 + $0x172] sm:$0xff]
        %s3013 = scalar_lea.vmem [#allocation7], 1024
        %v3014 = vld [vmem:[%s3013] sm:$0xff]
        %v3015 = vld [vmem:[%s3013 + $0x8] sm:$0xff]
        %v3016 = vld [vmem:[%s3013 + $0x10] sm:$0xff]
        %v3017 = vld [vmem:[%s3013 + $0x18] sm:$0xff]
        %v3018 = vld [vmem:[%s3013 + $0x20] sm:$0xff]
        %v3019 = vld [vmem:[%s3013 + $0x28] sm:$0xff]
        %v3020 = vld [vmem:[%s3013 + $0x30] sm:$0xff]
        %v3021 = vld [vmem:[%s3013 + $0x38] sm:$0xff]
        %v3022 = vld [vmem:[%s3013 + $0x40] sm:$0xff]
        %v3023 = vld [vmem:[%s3013 + $0x48] sm:$0xff]
        %v3024 = vld [vmem:[%s3013 + $0x50] sm:$0xff]
        %v3025 = vld [vmem:[%s3013 + $0x58] sm:$0xff]
        %v3026 = vld [vmem:[%s3013 + $0x60] sm:$0xff]
        %v3027 = vld [vmem:[%s3013 + $0x68] sm:$0xff]
        %v3028 = vld [vmem:[%s3013 + $0x70] sm:$0xff]
        %v3029 = vld [vmem:[%s3013 + $0x78] sm:$0xff]
        %3030 = vmatprep.subr.mxu0 0.0
        %3031 = vmatpush1.msra.mxu0 %v3029
        %3032 = vmatprep.subr.mxu0 0.0
        %3033 = vmatpush1.msra.mxu0 %v3028
        %3034 = vmatprep.subr.mxu0 0.0
        %3035 = vmatpush1.msra.mxu0 %v3027
        %3036 = vmatprep.subr.mxu0 0.0
        %3037 = vmatpush1.msra.mxu0 %v3026
        %3038 = vmatprep.subr.mxu0 0.0
        %3039 = vmatpush1.msra.mxu0 %v3025
        %3040 = vmatprep.subr.mxu0 0.0
        %3041 = vmatpush1.msra.mxu0 %v3024
        %3042 = vmatprep.subr.mxu0 0.0
        %3043 = vmatpush1.msra.mxu0 %v3023
        %3044 = vmatprep.subr.mxu0 0.0
        %3045 = vmatpush1.msra.mxu0 %v3022
        %3046 = vmatprep.subr.mxu0 0.0
        %3047 = vmatpush1.msra.mxu0 %v3021
        %3048 = vmatprep.subr.mxu0 0.0
        %3049 = vmatpush1.msra.mxu0 %v3020
        %3050 = vmatprep.subr.mxu0 0.0
        %3051 = vmatpush1.msra.mxu0 %v3019
        %3052 = vmatprep.subr.mxu0 0.0
        %3053 = vmatpush1.msra.mxu0 %v3018
        %3054 = vmatprep.subr.mxu0 0.0
        %3055 = vmatpush1.msra.mxu0 %v3017
        %3056 = vmatprep.subr.mxu0 0.0
        %3057 = vmatpush1.msra.mxu0 %v3016
        %3058 = vmatprep.subr.mxu0 0.0
        %3059 = vmatpush1.msra.mxu0 %v3015
        %3060 = vmatprep.subr.mxu0 0.0
        %3061 = vmatpush1.msra.mxu0 %v3014
        %3062 = vmatprep.subr.mxu0 0.0
        %3063 = vmatpush2.msra.mxu0 0.0
        %3064 = vmatprep.subr.mxu0 0.0
        %3065 = vmatpush2.msra.mxu0 0.0
        %3066 = vmatprep.subr.mxu0 0.0
        %3067 = vmatpush2.msra.mxu0 0.0
        %3068 = vmatprep.subr.mxu0 0.0
        %3069 = vmatpush2.msra.mxu0 0.0
        %3070 = vmatprep.subr.mxu0 0.0
        %3071 = vmatpush2.msra.mxu0 0.0
        %3072 = vmatprep.subr.mxu0 0.0
        %3073 = vmatpush2.msra.mxu0 0.0
        %3074 = vmatprep.subr.mxu0 0.0
        %3075 = vmatpush2.msra.mxu0 0.0
        %3076 = vmatprep.subr.mxu0 0.0
        %3077 = vmatpush2.msra.mxu0 0.0
        %3078 = vmatprep.subr.mxu0 0.0
        %3079 = vmatpush2.msra.mxu0 0.0
        %3080 = vmatprep.subr.mxu0 0.0
        %3081 = vmatpush2.msra.mxu0 0.0
        %3082 = vmatprep.subr.mxu0 0.0
        %3083 = vmatpush2.msra.mxu0 0.0
        %3084 = vmatprep.subr.mxu0 0.0
        %3085 = vmatpush2.msra.mxu0 0.0
        %3086 = vmatprep.subr.mxu0 0.0
        %3087 = vmatpush2.msra.mxu0 0.0
        %3088 = vmatprep.subr.mxu0 0.0
        %3089 = vmatpush2.msra.mxu0 0.0
        %3090 = vmatprep.subr.mxu0 0.0
        %3091 = vmatpush2.msra.mxu0 0.0
        %3092 = vmatprep.subr.mxu0 0.0
        %3093 = vmatpush2.msra.mxu0 0.0
        %3094 = vmatprep.mubr.f32.mxu0 0.0
        %3095 = vmatmul.mubr.f32.gmra.mxu0 %v2981
        %v3096 = vpop.f32.mrf.mxu0
        %v3097 = vadd.f32 0.0, %v3096
        %v3098 = vpop.f32.mrf.mxu0
        %3099 = vmatprep.mubr.f32.mxu0 0.0
        %3100 = vmatmul.mubr.f32.gmra.mxu0 %v2982
        %v3101 = vpop.f32.mrf.mxu0
        %v3102 = vadd.f32 0.0, %v3101
        %v3103 = vpop.f32.mrf.mxu0
        %3104 = vmatprep.mubr.f32.mxu0 0.0
        %3105 = vmatmul.mubr.f32.gmra.mxu0 %v2983
        %v3106 = vpop.f32.mrf.mxu0
        %v3107 = vadd.f32 0.0, %v3106
        %v3108 = vpop.f32.mrf.mxu0
        %3109 = vmatprep.mubr.f32.mxu0 0.0
        %3110 = vmatmul.mubr.f32.gmra.mxu0 %v2984
        %v3111 = vpop.f32.mrf.mxu0
        %v3112 = vadd.f32 0.0, %v3111
        %v3113 = vpop.f32.mrf.mxu0
        %3114 = vmatprep.mubr.f32.mxu0 0.0
        %3115 = vmatmul.mubr.f32.gmra.mxu0 %v2985
        %v3116 = vpop.f32.mrf.mxu0
        %v3117 = vadd.f32 0.0, %v3116
        %v3118 = vpop.f32.mrf.mxu0
        %3119 = vmatprep.mubr.f32.mxu0 0.0
        %3120 = vmatmul.mubr.f32.gmra.mxu0 %v2986
        %v3121 = vpop.f32.mrf.mxu0
        %v3122 = vadd.f32 0.0, %v3121
        %v3123 = vpop.f32.mrf.mxu0
        %3124 = vmatprep.mubr.f32.mxu0 0.0
        %3125 = vmatmul.mubr.f32.gmra.mxu0 %v2987
        %v3126 = vpop.f32.mrf.mxu0
        %v3127 = vadd.f32 0.0, %v3126
        %v3128 = vpop.f32.mrf.mxu0
        %3129 = vmatprep.mubr.f32.mxu0 0.0
        %3130 = vmatmul.mubr.f32.gmra.mxu0 %v2988
        %v3131 = vpop.f32.mrf.mxu0
        %v3132 = vadd.f32 0.0, %v3131
        %v3133 = vpop.f32.mrf.mxu0
        %3134 = vmatprep.mubr.f32.mxu0 0.0
        %3135 = vmatmul.mubr.f32.gmra.mxu0 %v2989
        %v3136 = vpop.f32.mrf.mxu0
        %v3137 = vadd.f32 0.0, %v3136
        %v3138 = vpop.f32.mrf.mxu0
        %3139 = vmatprep.mubr.f32.mxu0 0.0
        %3140 = vmatmul.mubr.f32.gmra.mxu0 %v2990
        %v3141 = vpop.f32.mrf.mxu0
        %v3142 = vadd.f32 0.0, %v3141
        %v3143 = vpop.f32.mrf.mxu0
        %3144 = vmatprep.mubr.f32.mxu0 0.0
        %3145 = vmatmul.mubr.f32.gmra.mxu0 %v2991
        %v3146 = vpop.f32.mrf.mxu0
        %v3147 = vadd.f32 0.0, %v3146
        %v3148 = vpop.f32.mrf.mxu0
        %3149 = vmatprep.mubr.f32.mxu0 0.0
        %3150 = vmatmul.mubr.f32.gmra.mxu0 %v2992
        %v3151 = vpop.f32.mrf.mxu0
        %v3152 = vadd.f32 0.0, %v3151
        %v3153 = vpop.f32.mrf.mxu0
        %3154 = vmatprep.mubr.f32.mxu0 0.0
        %3155 = vmatmul.mubr.f32.gmra.mxu0 %v2993
        %v3156 = vpop.f32.mrf.mxu0
        %v3157 = vadd.f32 0.0, %v3156
        %v3158 = vpop.f32.mrf.mxu0
        %3159 = vmatprep.mubr.f32.mxu0 0.0
        %3160 = vmatmul.mubr.f32.gmra.mxu0 %v2994
        %v3161 = vpop.f32.mrf.mxu0
        %v3162 = vadd.f32 0.0, %v3161
        %v3163 = vpop.f32.mrf.mxu0
        %3164 = vmatprep.mubr.f32.mxu0 0.0
        %3165 = vmatmul.mubr.f32.gmra.mxu0 %v2995
        %v3166 = vpop.f32.mrf.mxu0
        %v3167 = vadd.f32 0.0, %v3166
        %v3168 = vpop.f32.mrf.mxu0
        %3169 = vmatprep.mubr.f32.mxu0 0.0
        %3170 = vmatmul.mubr.f32.gmra.mxu0 %v2996
        %v3171 = vpop.f32.mrf.mxu0
        %v3172 = vadd.f32 0.0, %v3171
        %v3173 = vpop.f32.mrf.mxu0
        %3174 = vmatprep.mubr.f32.mxu0 0.0
        %3175 = vmatmul.mubr.f32.gmra.mxu0 %v2997
        %v3176 = vpop.f32.mrf.mxu0
        %v3177 = vadd.f32 0.0, %v3176
        %v3178 = vpop.f32.mrf.mxu0
        %3179 = vmatprep.mubr.f32.mxu0 0.0
        %3180 = vmatmul.mubr.f32.gmra.mxu0 %v2998
        %v3181 = vpop.f32.mrf.mxu0
        %v3182 = vadd.f32 0.0, %v3181
        %v3183 = vpop.f32.mrf.mxu0
        %3184 = vmatprep.mubr.f32.mxu0 0.0
        %3185 = vmatmul.mubr.f32.gmra.mxu0 %v2999
        %v3186 = vpop.f32.mrf.mxu0
        %v3187 = vadd.f32 0.0, %v3186
        %v3188 = vpop.f32.mrf.mxu0
        %3189 = vmatprep.mubr.f32.mxu0 0.0
        %3190 = vmatmul.mubr.f32.gmra.mxu0 %v3000
        %v3191 = vpop.f32.mrf.mxu0
        %v3192 = vadd.f32 0.0, %v3191
        %v3193 = vpop.f32.mrf.mxu0
        %3194 = vmatprep.mubr.f32.mxu0 0.0
        %3195 = vmatmul.mubr.f32.gmra.mxu0 %v3001
        %v3196 = vpop.f32.mrf.mxu0
        %v3197 = vadd.f32 0.0, %v3196
        %v3198 = vpop.f32.mrf.mxu0
        %3199 = vmatprep.mubr.f32.mxu0 0.0
        %3200 = vmatmul.mubr.f32.gmra.mxu0 %v3002
        %v3201 = vpop.f32.mrf.mxu0
        %v3202 = vadd.f32 0.0, %v3201
        %v3203 = vpop.f32.mrf.mxu0
        %3204 = vmatprep.mubr.f32.mxu0 0.0
        %3205 = vmatmul.mubr.f32.gmra.mxu0 %v3003
        %v3206 = vpop.f32.mrf.mxu0
        %v3207 = vadd.f32 0.0, %v3206
        %v3208 = vpop.f32.mrf.mxu0
        %3209 = vmatprep.mubr.f32.mxu0 0.0
        %3210 = vmatmul.mubr.f32.gmra.mxu0 %v3004
        %v3211 = vpop.f32.mrf.mxu0
        %v3212 = vadd.f32 0.0, %v3211
        %v3213 = vpop.f32.mrf.mxu0
        %3214 = vmatprep.mubr.f32.mxu0 0.0
        %3215 = vmatmul.mubr.f32.gmra.mxu0 %v3005
        %v3216 = vpop.f32.mrf.mxu0
        %v3217 = vadd.f32 0.0, %v3216
        %v3218 = vpop.f32.mrf.mxu0
        %3219 = vmatprep.mubr.f32.mxu0 0.0
        %3220 = vmatmul.mubr.f32.gmra.mxu0 %v3006
        %v3221 = vpop.f32.mrf.mxu0
        %v3222 = vadd.f32 0.0, %v3221
        %v3223 = vpop.f32.mrf.mxu0
        %3224 = vmatprep.mubr.f32.mxu0 0.0
        %3225 = vmatmul.mubr.f32.gmra.mxu0 %v3007
        %v3226 = vpop.f32.mrf.mxu0
        %v3227 = vadd.f32 0.0, %v3226
        %v3228 = vpop.f32.mrf.mxu0
        %3229 = vmatprep.mubr.f32.mxu0 0.0
        %3230 = vmatmul.mubr.f32.gmra.mxu0 %v3008
        %v3231 = vpop.f32.mrf.mxu0
        %v3232 = vadd.f32 0.0, %v3231
        %v3233 = vpop.f32.mrf.mxu0
        %3234 = vmatprep.mubr.f32.mxu0 0.0
        %3235 = vmatmul.mubr.f32.gmra.mxu0 %v3009
        %v3236 = vpop.f32.mrf.mxu0
        %v3237 = vadd.f32 0.0, %v3236
        %v3238 = vpop.f32.mrf.mxu0
        %3239 = vmatprep.mubr.f32.mxu0 0.0
        %3240 = vmatmul.mubr.f32.gmra.mxu0 %v3010
        %v3241 = vpop.f32.mrf.mxu0
        %v3242 = vadd.f32 0.0, %v3241
        %v3243 = vpop.f32.mrf.mxu0
        %3244 = vmatprep.mubr.f32.mxu0 0.0
        %3245 = vmatmul.mubr.f32.gmra.mxu0 %v3011
        %v3246 = vpop.f32.mrf.mxu0
        %v3247 = vadd.f32 0.0, %v3246
        %v3248 = vpop.f32.mrf.mxu0
        %3249 = vmatprep.mubr.f32.mxu0 0.0
        %3250 = vmatmul.mubr.f32.gmra.mxu0 %v3012
        %v3251 = vpop.f32.mrf.mxu0
        %v3252 = vadd.f32 0.0, %v3251
        %v3253 = vpop.f32.mrf.mxu0
        %3254 = vdwg.mxu0
        %v3255 = vadd.f32 %v2949, %v3097
        %v3256 = vadd.f32 %v2950, %v3102
        %v3257 = vadd.f32 %v2951, %v3107
        %v3258 = vadd.f32 %v2952, %v3112
        %v3259 = vadd.f32 %v2953, %v3117
        %v3260 = vadd.f32 %v2954, %v3122
        %v3261 = vadd.f32 %v2955, %v3127
        %v3262 = vadd.f32 %v2956, %v3132
        %v3263 = vadd.f32 %v2957, %v3137
        %v3264 = vadd.f32 %v2958, %v3142
        %v3265 = vadd.f32 %v2959, %v3147
        %v3266 = vadd.f32 %v2960, %v3152
        %v3267 = vadd.f32 %v2961, %v3157
        %v3268 = vadd.f32 %v2962, %v3162
        %v3269 = vadd.f32 %v2963, %v3167
        %v3270 = vadd.f32 %v2964, %v3172
        %v3271 = vadd.f32 %v2965, %v3177
        %v3272 = vadd.f32 %v2966, %v3182
        %v3273 = vadd.f32 %v2967, %v3187
        %v3274 = vadd.f32 %v2968, %v3192
        %v3275 = vadd.f32 %v2969, %v3197
        %v3276 = vadd.f32 %v2970, %v3202
        %v3277 = vadd.f32 %v2971, %v3207
        %v3278 = vadd.f32 %v2972, %v3212
        %v3279 = vadd.f32 %v2973, %v3217
        %v3280 = vadd.f32 %v2974, %v3222
        %v3281 = vadd.f32 %v2975, %v3227
        %v3282 = vadd.f32 %v2976, %v3232
        %v3283 = vadd.f32 %v2977, %v3237
        %v3284 = vadd.f32 %v2978, %v3242
        %v3285 = vadd.f32 %v2979, %v3247
        %v3286 = vadd.f32 %v2980, %v3252
        %v3287 = vld [vmem:[%s4] sm:$0x1]
        %v3289 = vlaneseq
        %v3290 = vshrl.u32 %v3289, 7
        %v3291 = vsub.s32 0, %v3290
        %v3292 = vrot.slane %v3287, %v3291
        %v3294 = vmul.f32 %v3255, %v3292
        %v3295 = vmul.f32 %v3256, %v3292
        %v3296 = vmul.f32 %v3257, %v3292
        %v3297 = vmul.f32 %v3258, %v3292
        %v3298 = vmul.f32 %v3259, %v3292
        %v3299 = vmul.f32 %v3260, %v3292
        %v3300 = vmul.f32 %v3261, %v3292
        %v3301 = vmul.f32 %v3262, %v3292
        %v3302 = vmul.f32 %v3263, %v3292
        %v3303 = vmul.f32 %v3264, %v3292
        %v3304 = vmul.f32 %v3265, %v3292
        %v3305 = vmul.f32 %v3266, %v3292
        %v3306 = vmul.f32 %v3267, %v3292
        %v3307 = vmul.f32 %v3268, %v3292
        %v3308 = vmul.f32 %v3269, %v3292
        %v3309 = vmul.f32 %v3270, %v3292
        %v3310 = vmul.f32 %v3271, %v3292
        %v3311 = vmul.f32 %v3272, %v3292
        %v3312 = vmul.f32 %v3273, %v3292
        %v3313 = vmul.f32 %v3274, %v3292
        %v3314 = vmul.f32 %v3275, %v3292
        %v3315 = vmul.f32 %v3276, %v3292
        %v3316 = vmul.f32 %v3277, %v3292
        %v3317 = vmul.f32 %v3278, %v3292
        %v3318 = vmul.f32 %v3279, %v3292
        %v3319 = vmul.f32 %v3280, %v3292
        %v3320 = vmul.f32 %v3281, %v3292
        %v3321 = vmul.f32 %v3282, %v3292
        %v3322 = vmul.f32 %v3283, %v3292
        %v3323 = vmul.f32 %v3284, %v3292
        %v3324 = vmul.f32 %v3285, %v3292
        %v3325 = vmul.f32 %v3286, %v3292
        %v3326 = vld [vmem:[%s5] sm:$0x1]
        %v3328 = vlaneseq
        %v3329 = vshrl.u32 %v3328, 7
        %v3330 = vsub.s32 0, %v3329
        %v3331 = vrot.slane %v3326, %v3330
        %v3333 = vadd.f32 %v3294, %v3331
        %v3334 = vadd.f32 %v3295, %v3331
        %v3335 = vadd.f32 %v3296, %v3331
        %v3336 = vadd.f32 %v3297, %v3331
        %v3337 = vadd.f32 %v3298, %v3331
        %v3338 = vadd.f32 %v3299, %v3331
        %v3339 = vadd.f32 %v3300, %v3331
        %v3340 = vadd.f32 %v3301, %v3331
        %v3341 = vadd.f32 %v3302, %v3331
        %v3342 = vadd.f32 %v3303, %v3331
        %v3343 = vadd.f32 %v3304, %v3331
        %v3344 = vadd.f32 %v3305, %v3331
        %v3345 = vadd.f32 %v3306, %v3331
        %v3346 = vadd.f32 %v3307, %v3331
        %v3347 = vadd.f32 %v3308, %v3331
        %v3348 = vadd.f32 %v3309, %v3331
        %v3349 = vadd.f32 %v3310, %v3331
        %v3350 = vadd.f32 %v3311, %v3331
        %v3351 = vadd.f32 %v3312, %v3331
        %v3352 = vadd.f32 %v3313, %v3331
        %v3353 = vadd.f32 %v3314, %v3331
        %v3354 = vadd.f32 %v3315, %v3331
        %v3355 = vadd.f32 %v3316, %v3331
        %v3356 = vadd.f32 %v3317, %v3331
        %v3357 = vadd.f32 %v3318, %v3331
        %v3358 = vadd.f32 %v3319, %v3331
        %v3359 = vadd.f32 %v3320, %v3331
        %v3360 = vadd.f32 %v3321, %v3331
        %v3361 = vadd.f32 %v3322, %v3331
        %v3362 = vadd.f32 %v3323, %v3331
        %v3363 = vadd.f32 %v3324, %v3331
        %v3364 = vadd.f32 %v3325, %v3331
        %v3365 = vmax.f32 %v3333, 0.0
        %v3366 = vmax.f32 %v3334, 0.0
        %v3367 = vmax.f32 %v3335, 0.0
        %v3368 = vmax.f32 %v3336, 0.0
        %v3369 = vmax.f32 %v3337, 0.0
        %v3370 = vmax.f32 %v3338, 0.0
        %v3371 = vmax.f32 %v3339, 0.0
        %v3372 = vmax.f32 %v3340, 0.0
        %v3373 = vmax.f32 %v3341, 0.0
        %v3374 = vmax.f32 %v3342, 0.0
        %v3375 = vmax.f32 %v3343, 0.0
        %v3376 = vmax.f32 %v3344, 0.0
        %v3377 = vmax.f32 %v3345, 0.0
        %v3378 = vmax.f32 %v3346, 0.0
        %v3379 = vmax.f32 %v3347, 0.0
        %v3380 = vmax.f32 %v3348, 0.0
        %v3381 = vmax.f32 %v3349, 0.0
        %v3382 = vmax.f32 %v3350, 0.0
        %v3383 = vmax.f32 %v3351, 0.0
        %v3384 = vmax.f32 %v3352, 0.0
        %v3385 = vmax.f32 %v3353, 0.0
        %v3386 = vmax.f32 %v3354, 0.0
        %v3387 = vmax.f32 %v3355, 0.0
        %v3388 = vmax.f32 %v3356, 0.0
        %v3389 = vmax.f32 %v3357, 0.0
        %v3390 = vmax.f32 %v3358, 0.0
        %v3391 = vmax.f32 %v3359, 0.0
        %v3392 = vmax.f32 %v3360, 0.0
        %v3393 = vmax.f32 %v3361, 0.0
        %v3394 = vmax.f32 %v3362, 0.0
        %v3395 = vmax.f32 %v3363, 0.0
        %v3396 = vmax.f32 %v3364, 0.0
        %3397 = vst [vmem:[#allocation3] sm:$0xff] 0.0
        %3398 = vst [vmem:[#allocation3 + $0x8] sm:$0xff] 0.0
        %3399 = vst [vmem:[#allocation3 + $0x10] sm:$0x3] 0.0
        %3400 = vst [vmem:[#allocation3 + $0x18] sm:$0xff] 0.0
        %3401 = vst [vmem:[#allocation3 + $0x20] sm:$0xff] 0.0
        %3402 = vst [vmem:[#allocation3 + $0x28] sm:$0x3] 0.0
        %3403 = vst [vmem:[#allocation3 + $0x30] sm:$0xff] 0.0
        %3404 = vst [vmem:[#allocation3 + $0x38] sm:$0xff] 0.0
        %3405 = vst [vmem:[#allocation3 + $0x40] sm:$0x3] 0.0
        %3406 = vst [vmem:[#allocation3 + $0x48] sm:$0xff] 0.0
        %3407 = vst [vmem:[#allocation3 + $0x50] sm:$0xff] 0.0
        %3408 = vst [vmem:[#allocation3 + $0x58] sm:$0x3] 0.0
        %3409 = vst [vmem:[#allocation3 + $0x60] sm:$0xff] 0.0
        %3410 = vst [vmem:[#allocation3 + $0x68] sm:$0xff] 0.0
        %3411 = vst [vmem:[#allocation3 + $0x70] sm:$0x3] 0.0
        %3412 = vst [vmem:[#allocation3 + $0x78] sm:$0xff] 0.0
        %3413 = vst [vmem:[#allocation3 + $0x80] sm:$0xff] 0.0
        %3414 = vst [vmem:[#allocation3 + $0x88] sm:$0x3] 0.0
        %3415 = vst [vmem:[#allocation3 + $0x90] sm:$0xff] 0.0
        %3416 = vst [vmem:[#allocation3 + $0x98] sm:$0xff] 0.0
        %3417 = vst [vmem:[#allocation3 + $0xa0] sm:$0x3] 0.0
        %3418 = vst [vmem:[#allocation3 + $0xa8] sm:$0xff] 0.0
        %3419 = vst [vmem:[#allocation3 + $0xb0] sm:$0xff] 0.0
        %3420 = vst [vmem:[#allocation3 + $0xb8] sm:$0x3] 0.0
        %3421 = vst [vmem:[#allocation3 + $0xc0] sm:$0xff] 0.0
        %3422 = vst [vmem:[#allocation3 + $0xc8] sm:$0xff] 0.0
        %3423 = vst [vmem:[#allocation3 + $0xd0] sm:$0x3] 0.0
        %3424 = vst [vmem:[#allocation3 + $0xd8] sm:$0xff] 0.0
        %3425 = vst [vmem:[#allocation3 + $0xe0] sm:$0xff] 0.0
        %3426 = vst [vmem:[#allocation3 + $0xe8] sm:$0x3] 0.0
        %3427 = vst [vmem:[#allocation3 + $0xf0] sm:$0xff] 0.0
        %3428 = vst [vmem:[#allocation3 + $0xf8] sm:$0xff] 0.0
        %3429 = vst [vmem:[#allocation3 + $0x100] sm:$0x3] 0.0
        %3430 = vst [vmem:[#allocation3 + $0x108] sm:$0xff] 0.0
        %3431 = vst [vmem:[#allocation3 + $0x110] sm:$0xff] 0.0
        %3432 = vst [vmem:[#allocation3 + $0x118] sm:$0x3] 0.0
        %3433 = vst [vmem:[#allocation3 + $0x120] sm:$0xff] 0.0
        %3434 = vst [vmem:[#allocation3 + $0x128] sm:$0xff] 0.0
        %3435 = vst [vmem:[#allocation3 + $0x130] sm:$0x3] 0.0
        %3436 = vst [vmem:[#allocation3 + $0x138] sm:$0xff] 0.0
        %3437 = vst [vmem:[#allocation3 + $0x140] sm:$0xff] 0.0
        %3438 = vst [vmem:[#allocation3 + $0x148] sm:$0x3] 0.0
        %3439 = vst [vmem:[#allocation3 + $0x150] sm:$0xff] 0.0
        %3440 = vst [vmem:[#allocation3 + $0x158] sm:$0xff] 0.0
        %3441 = vst [vmem:[#allocation3 + $0x160] sm:$0x3] 0.0
        %3442 = vst [vmem:[#allocation3 + $0x168] sm:$0xff] 0.0
        %3443 = vst [vmem:[#allocation3 + $0x170] sm:$0xff] 0.0
        %3444 = vst [vmem:[#allocation3 + $0x178] sm:$0x3] 0.0
        %3445 = vst [vmem:[#allocation3 + $0x180] sm:$0xff] 0.0
        %3446 = vst [vmem:[#allocation3 + $0x188] sm:$0xff] 0.0
        %3447 = vst [vmem:[#allocation3 + $0x190] sm:$0x3] 0.0
        %3448 = vst [vmem:[#allocation3 + $0x198] sm:$0xff] 0.0
        %3449 = vst [vmem:[#allocation3 + $0x1a0] sm:$0xff] 0.0
        %3450 = vst [vmem:[#allocation3 + $0x1a8] sm:$0x3] 0.0
        %s3451 = scalar_lea.vmem [#allocation3], 24
        %3452 = vst [vmem:[%s3451 + $0x1] sm:$0xff] %v3365
        %3453 = vst [vmem:[%s3451 + $0x9] sm:$0xff] %v3366
        %3454 = vst [vmem:[%s3451 + $0x19] sm:$0xff] %v3367
        %3455 = vst [vmem:[%s3451 + $0x21] sm:$0xff] %v3368
        %3456 = vst [vmem:[%s3451 + $0x31] sm:$0xff] %v3369
        %3457 = vst [vmem:[%s3451 + $0x39] sm:$0xff] %v3370
        %3458 = vst [vmem:[%s3451 + $0x49] sm:$0xff] %v3371
        %3459 = vst [vmem:[%s3451 + $0x51] sm:$0xff] %v3372
        %3460 = vst [vmem:[%s3451 + $0x61] sm:$0xff] %v3373
        %3461 = vst [vmem:[%s3451 + $0x69] sm:$0xff] %v3374
        %3462 = vst [vmem:[%s3451 + $0x79] sm:$0xff] %v3375
        %3463 = vst [vmem:[%s3451 + $0x81] sm:$0xff] %v3376
        %3464 = vst [vmem:[%s3451 + $0x91] sm:$0xff] %v3377
        %3465 = vst [vmem:[%s3451 + $0x99] sm:$0xff] %v3378
        %3466 = vst [vmem:[%s3451 + $0xa9] sm:$0xff] %v3379
        %3467 = vst [vmem:[%s3451 + $0xb1] sm:$0xff] %v3380
        %3468 = vst [vmem:[%s3451 + $0xc1] sm:$0xff] %v3381
        %3469 = vst [vmem:[%s3451 + $0xc9] sm:$0xff] %v3382
        %3470 = vst [vmem:[%s3451 + $0xd9] sm:$0xff] %v3383
        %3471 = vst [vmem:[%s3451 + $0xe1] sm:$0xff] %v3384
        %3472 = vst [vmem:[%s3451 + $0xf1] sm:$0xff] %v3385
        %3473 = vst [vmem:[%s3451 + $0xf9] sm:$0xff] %v3386
        %3474 = vst [vmem:[%s3451 + $0x109] sm:$0xff] %v3387
        %3475 = vst [vmem:[%s3451 + $0x111] sm:$0xff] %v3388
        %3476 = vst [vmem:[%s3451 + $0x121] sm:$0xff] %v3389
        %3477 = vst [vmem:[%s3451 + $0x129] sm:$0xff] %v3390
        %3478 = vst [vmem:[%s3451 + $0x139] sm:$0xff] %v3391
        %3479 = vst [vmem:[%s3451 + $0x141] sm:$0xff] %v3392
        %3480 = vst [vmem:[%s3451 + $0x151] sm:$0xff] %v3393
        %3481 = vst [vmem:[%s3451 + $0x159] sm:$0xff] %v3394
        %3482 = vst [vmem:[%s3451 + $0x169] sm:$0xff] %v3395
        %3483 = vst [vmem:[%s3451 + $0x171] sm:$0xff] %v3396
        %v3484 = vld [vmem:[#allocation3] sm:$0xff]
        %v3485 = vld [vmem:[#allocation3 + $0x8] sm:$0xff]
        %v3486 = vld [vmem:[#allocation3 + $0x18] sm:$0xff]
        %v3487 = vld [vmem:[#allocation3 + $0x20] sm:$0xff]
        %v3488 = vld [vmem:[#allocation3 + $0x30] sm:$0xff]
        %v3489 = vld [vmem:[#allocation3 + $0x38] sm:$0xff]
        %v3490 = vld [vmem:[#allocation3 + $0x48] sm:$0xff]
        %v3491 = vld [vmem:[#allocation3 + $0x50] sm:$0xff]
        %v3492 = vld [vmem:[#allocation3 + $0x60] sm:$0xff]
        %v3493 = vld [vmem:[#allocation3 + $0x68] sm:$0xff]
        %v3494 = vld [vmem:[#allocation3 + $0x78] sm:$0xff]
        %v3495 = vld [vmem:[#allocation3 + $0x80] sm:$0xff]
        %v3496 = vld [vmem:[#allocation3 + $0x90] sm:$0xff]
        %v3497 = vld [vmem:[#allocation3 + $0x98] sm:$0xff]
        %v3498 = vld [vmem:[#allocation3 + $0xa8] sm:$0xff]
        %v3499 = vld [vmem:[#allocation3 + $0xb0] sm:$0xff]
        %v3500 = vld [vmem:[#allocation3 + $0xc0] sm:$0xff]
        %v3501 = vld [vmem:[#allocation3 + $0xc8] sm:$0xff]
        %v3502 = vld [vmem:[#allocation3 + $0xd8] sm:$0xff]
        %v3503 = vld [vmem:[#allocation3 + $0xe0] sm:$0xff]
        %v3504 = vld [vmem:[#allocation3 + $0xf0] sm:$0xff]
        %v3505 = vld [vmem:[#allocation3 + $0xf8] sm:$0xff]
        %v3506 = vld [vmem:[#allocation3 + $0x108] sm:$0xff]
        %v3507 = vld [vmem:[#allocation3 + $0x110] sm:$0xff]
        %v3508 = vld [vmem:[#allocation3 + $0x120] sm:$0xff]
        %v3509 = vld [vmem:[#allocation3 + $0x128] sm:$0xff]
        %v3510 = vld [vmem:[#allocation3 + $0x138] sm:$0xff]
        %v3511 = vld [vmem:[#allocation3 + $0x140] sm:$0xff]
        %v3512 = vld [vmem:[#allocation3 + $0x150] sm:$0xff]
        %v3513 = vld [vmem:[#allocation3 + $0x158] sm:$0xff]
        %v3514 = vld [vmem:[#allocation3 + $0x168] sm:$0xff]
        %v3515 = vld [vmem:[#allocation3 + $0x170] sm:$0xff]
        %v3516 = vld [vmem:[#allocation9] sm:$0xff]
        %v3517 = vld [vmem:[#allocation9 + $0x8] sm:$0xff]
        %v3518 = vld [vmem:[#allocation9 + $0x10] sm:$0xff]
        %v3519 = vld [vmem:[#allocation9 + $0x18] sm:$0xff]
        %v3520 = vld [vmem:[#allocation9 + $0x20] sm:$0xff]
        %v3521 = vld [vmem:[#allocation9 + $0x28] sm:$0xff]
        %v3522 = vld [vmem:[#allocation9 + $0x30] sm:$0xff]
        %v3523 = vld [vmem:[#allocation9 + $0x38] sm:$0xff]
        %v3524 = vld [vmem:[#allocation9 + $0x40] sm:$0xff]
        %v3525 = vld [vmem:[#allocation9 + $0x48] sm:$0xff]
        %v3526 = vld [vmem:[#allocation9 + $0x50] sm:$0xff]
        %v3527 = vld [vmem:[#allocation9 + $0x58] sm:$0xff]
        %v3528 = vld [vmem:[#allocation9 + $0x60] sm:$0xff]
        %v3529 = vld [vmem:[#allocation9 + $0x68] sm:$0xff]
        %v3530 = vld [vmem:[#allocation9 + $0x70] sm:$0xff]
        %v3531 = vld [vmem:[#allocation9 + $0x78] sm:$0xff]
        %v3532 = vld [vmem:[#allocation3 + $0x1] sm:$0xff]
        %v3533 = vld [vmem:[#allocation3 + $0x9] sm:$0xff]
        %v3534 = vld [vmem:[#allocation3 + $0x19] sm:$0xff]
        %v3535 = vld [vmem:[#allocation3 + $0x21] sm:$0xff]
        %v3536 = vld [vmem:[#allocation3 + $0x31] sm:$0xff]
        %v3537 = vld [vmem:[#allocation3 + $0x39] sm:$0xff]
        %v3538 = vld [vmem:[#allocation3 + $0x49] sm:$0xff]
        %v3539 = vld [vmem:[#allocation3 + $0x51] sm:$0xff]
        %v3540 = vld [vmem:[#allocation3 + $0x61] sm:$0xff]
        %v3541 = vld [vmem:[#allocation3 + $0x69] sm:$0xff]
        %v3542 = vld [vmem:[#allocation3 + $0x79] sm:$0xff]
        %v3543 = vld [vmem:[#allocation3 + $0x81] sm:$0xff]
        %v3544 = vld [vmem:[#allocation3 + $0x91] sm:$0xff]
        %v3545 = vld [vmem:[#allocation3 + $0x99] sm:$0xff]
        %v3546 = vld [vmem:[#allocation3 + $0xa9] sm:$0xff]
        %v3547 = vld [vmem:[#allocation3 + $0xb1] sm:$0xff]
        %v3548 = vld [vmem:[#allocation3 + $0xc1] sm:$0xff]
        %v3549 = vld [vmem:[#allocation3 + $0xc9] sm:$0xff]
        %v3550 = vld [vmem:[#allocation3 + $0xd9] sm:$0xff]
        %v3551 = vld [vmem:[#allocation3 + $0xe1] sm:$0xff]
        %v3552 = vld [vmem:[#allocation3 + $0xf1] sm:$0xff]
        %v3553 = vld [vmem:[#allocation3 + $0xf9] sm:$0xff]
        %v3554 = vld [vmem:[#allocation3 + $0x109] sm:$0xff]
        %v3555 = vld [vmem:[#allocation3 + $0x111] sm:$0xff]
        %v3556 = vld [vmem:[#allocation3 + $0x121] sm:$0xff]
        %v3557 = vld [vmem:[#allocation3 + $0x129] sm:$0xff]
        %v3558 = vld [vmem:[#allocation3 + $0x139] sm:$0xff]
        %v3559 = vld [vmem:[#allocation3 + $0x141] sm:$0xff]
        %v3560 = vld [vmem:[#allocation3 + $0x151] sm:$0xff]
        %v3561 = vld [vmem:[#allocation3 + $0x159] sm:$0xff]
        %v3562 = vld [vmem:[#allocation3 + $0x169] sm:$0xff]
        %v3563 = vld [vmem:[#allocation3 + $0x171] sm:$0xff]
        %s3564 = scalar_lea.vmem [#allocation9], 128
        %v3565 = vld [vmem:[%s3564] sm:$0xff]
        %v3566 = vld [vmem:[%s3564 + $0x8] sm:$0xff]
        %v3567 = vld [vmem:[%s3564 + $0x10] sm:$0xff]
        %v3568 = vld [vmem:[%s3564 + $0x18] sm:$0xff]
        %v3569 = vld [vmem:[%s3564 + $0x20] sm:$0xff]
        %v3570 = vld [vmem:[%s3564 + $0x28] sm:$0xff]
        %v3571 = vld [vmem:[%s3564 + $0x30] sm:$0xff]
        %v3572 = vld [vmem:[%s3564 + $0x38] sm:$0xff]
        %v3573 = vld [vmem:[%s3564 + $0x40] sm:$0xff]
        %v3574 = vld [vmem:[%s3564 + $0x48] sm:$0xff]
        %v3575 = vld [vmem:[%s3564 + $0x50] sm:$0xff]
        %v3576 = vld [vmem:[%s3564 + $0x58] sm:$0xff]
        %v3577 = vld [vmem:[%s3564 + $0x60] sm:$0xff]
        %v3578 = vld [vmem:[%s3564 + $0x68] sm:$0xff]
        %v3579 = vld [vmem:[%s3564 + $0x70] sm:$0xff]
        %v3580 = vld [vmem:[%s3564 + $0x78] sm:$0xff]
        %3581 = vmatprep.subr.mxu0 0.0
        %3582 = vmatpush1.msra.mxu0 %v3580
        %3583 = vmatprep.subr.mxu0 0.0
        %3584 = vmatpush1.msra.mxu0 %v3579
        %3585 = vmatprep.subr.mxu0 0.0
        %3586 = vmatpush1.msra.mxu0 %v3578
        %3587 = vmatprep.subr.mxu0 0.0
        %3588 = vmatpush1.msra.mxu0 %v3577
        %3589 = vmatprep.subr.mxu0 0.0
        %3590 = vmatpush1.msra.mxu0 %v3576
        %3591 = vmatprep.subr.mxu0 0.0
        %3592 = vmatpush1.msra.mxu0 %v3575
        %3593 = vmatprep.subr.mxu0 0.0
        %3594 = vmatpush1.msra.mxu0 %v3574
        %3595 = vmatprep.subr.mxu0 0.0
        %3596 = vmatpush1.msra.mxu0 %v3573
        %3597 = vmatprep.subr.mxu0 0.0
        %3598 = vmatpush1.msra.mxu0 %v3572
        %3599 = vmatprep.subr.mxu0 0.0
        %3600 = vmatpush1.msra.mxu0 %v3571
        %3601 = vmatprep.subr.mxu0 0.0
        %3602 = vmatpush1.msra.mxu0 %v3570
        %3603 = vmatprep.subr.mxu0 0.0
        %3604 = vmatpush1.msra.mxu0 %v3569
        %3605 = vmatprep.subr.mxu0 0.0
        %3606 = vmatpush1.msra.mxu0 %v3568
        %3607 = vmatprep.subr.mxu0 0.0
        %3608 = vmatpush1.msra.mxu0 %v3567
        %3609 = vmatprep.subr.mxu0 0.0
        %3610 = vmatpush1.msra.mxu0 %v3566
        %3611 = vmatprep.subr.mxu0 0.0
        %3612 = vmatpush1.msra.mxu0 %v3565
        %3613 = vmatprep.subr.mxu0 0.0
        %3614 = vmatpush2.msra.mxu0 0.0
        %3615 = vmatprep.subr.mxu0 0.0
        %3616 = vmatpush2.msra.mxu0 0.0
        %3617 = vmatprep.subr.mxu0 0.0
        %3618 = vmatpush2.msra.mxu0 0.0
        %3619 = vmatprep.subr.mxu0 0.0
        %3620 = vmatpush2.msra.mxu0 0.0
        %3621 = vmatprep.subr.mxu0 0.0
        %3622 = vmatpush2.msra.mxu0 0.0
        %3623 = vmatprep.subr.mxu0 0.0
        %3624 = vmatpush2.msra.mxu0 0.0
        %3625 = vmatprep.subr.mxu0 0.0
        %3626 = vmatpush2.msra.mxu0 0.0
        %3627 = vmatprep.subr.mxu0 0.0
        %3628 = vmatpush2.msra.mxu0 0.0
        %3629 = vmatprep.subr.mxu0 0.0
        %3630 = vmatpush2.msra.mxu0 0.0
        %3631 = vmatprep.subr.mxu0 0.0
        %3632 = vmatpush2.msra.mxu0 0.0
        %3633 = vmatprep.subr.mxu0 0.0
        %3634 = vmatpush2.msra.mxu0 0.0
        %3635 = vmatprep.subr.mxu0 0.0
        %3636 = vmatpush2.msra.mxu0 0.0
        %3637 = vmatprep.subr.mxu0 0.0
        %3638 = vmatpush2.msra.mxu0 0.0
        %3639 = vmatprep.subr.mxu0 0.0
        %3640 = vmatpush2.msra.mxu0 0.0
        %3641 = vmatprep.subr.mxu0 0.0
        %3642 = vmatpush2.msra.mxu0 0.0
        %3643 = vmatprep.subr.mxu0 0.0
        %3644 = vmatpush2.msra.mxu0 0.0
        %3645 = vmatprep.mubr.f32.mxu0 0.0
        %3646 = vmatmul.mubr.f32.gmra.mxu0 %v3532
        %v3647 = vpop.f32.mrf.mxu0
        %v3648 = vadd.f32 0.0, %v3647
        %v3649 = vpop.f32.mrf.mxu0
        %3650 = vmatprep.mubr.f32.mxu0 0.0
        %3651 = vmatmul.mubr.f32.gmra.mxu0 %v3533
        %v3652 = vpop.f32.mrf.mxu0
        %v3653 = vadd.f32 0.0, %v3652
        %v3654 = vpop.f32.mrf.mxu0
        %3655 = vmatprep.mubr.f32.mxu0 0.0
        %3656 = vmatmul.mubr.f32.gmra.mxu0 %v3534
        %v3657 = vpop.f32.mrf.mxu0
        %v3658 = vadd.f32 0.0, %v3657
        %v3659 = vpop.f32.mrf.mxu0
        %3660 = vmatprep.mubr.f32.mxu0 0.0
        %3661 = vmatmul.mubr.f32.gmra.mxu0 %v3535
        %v3662 = vpop.f32.mrf.mxu0
        %v3663 = vadd.f32 0.0, %v3662
        %v3664 = vpop.f32.mrf.mxu0
        %3665 = vmatprep.mubr.f32.mxu0 0.0
        %3666 = vmatmul.mubr.f32.gmra.mxu0 %v3536
        %v3667 = vpop.f32.mrf.mxu0
        %v3668 = vadd.f32 0.0, %v3667
        %v3669 = vpop.f32.mrf.mxu0
        %3670 = vmatprep.mubr.f32.mxu0 0.0
        %3671 = vmatmul.mubr.f32.gmra.mxu0 %v3537
        %v3672 = vpop.f32.mrf.mxu0
        %v3673 = vadd.f32 0.0, %v3672
        %v3674 = vpop.f32.mrf.mxu0
        %3675 = vmatprep.mubr.f32.mxu0 0.0
        %3676 = vmatmul.mubr.f32.gmra.mxu0 %v3538
        %v3677 = vpop.f32.mrf.mxu0
        %v3678 = vadd.f32 0.0, %v3677
        %v3679 = vpop.f32.mrf.mxu0
        %3680 = vmatprep.mubr.f32.mxu0 0.0
        %3681 = vmatmul.mubr.f32.gmra.mxu0 %v3539
        %v3682 = vpop.f32.mrf.mxu0
        %v3683 = vadd.f32 0.0, %v3682
        %v3684 = vpop.f32.mrf.mxu0
        %3685 = vmatprep.mubr.f32.mxu0 0.0
        %3686 = vmatmul.mubr.f32.gmra.mxu0 %v3540
        %v3687 = vpop.f32.mrf.mxu0
        %v3688 = vadd.f32 0.0, %v3687
        %v3689 = vpop.f32.mrf.mxu0
        %3690 = vmatprep.mubr.f32.mxu0 0.0
        %3691 = vmatmul.mubr.f32.gmra.mxu0 %v3541
        %v3692 = vpop.f32.mrf.mxu0
        %v3693 = vadd.f32 0.0, %v3692
        %v3694 = vpop.f32.mrf.mxu0
        %3695 = vmatprep.mubr.f32.mxu0 0.0
        %3696 = vmatmul.mubr.f32.gmra.mxu0 %v3542
        %v3697 = vpop.f32.mrf.mxu0
        %v3698 = vadd.f32 0.0, %v3697
        %v3699 = vpop.f32.mrf.mxu0
        %3700 = vmatprep.mubr.f32.mxu0 0.0
        %3701 = vmatmul.mubr.f32.gmra.mxu0 %v3543
        %v3702 = vpop.f32.mrf.mxu0
        %v3703 = vadd.f32 0.0, %v3702
        %v3704 = vpop.f32.mrf.mxu0
        %3705 = vmatprep.mubr.f32.mxu0 0.0
        %3706 = vmatmul.mubr.f32.gmra.mxu0 %v3544
        %v3707 = vpop.f32.mrf.mxu0
        %v3708 = vadd.f32 0.0, %v3707
        %v3709 = vpop.f32.mrf.mxu0
        %3710 = vmatprep.mubr.f32.mxu0 0.0
        %3711 = vmatmul.mubr.f32.gmra.mxu0 %v3545
        %v3712 = vpop.f32.mrf.mxu0
        %v3713 = vadd.f32 0.0, %v3712
        %v3714 = vpop.f32.mrf.mxu0
        %3715 = vmatprep.mubr.f32.mxu0 0.0
        %3716 = vmatmul.mubr.f32.gmra.mxu0 %v3546
        %v3717 = vpop.f32.mrf.mxu0
        %v3718 = vadd.f32 0.0, %v3717
        %v3719 = vpop.f32.mrf.mxu0
        %3720 = vmatprep.mubr.f32.mxu0 0.0
        %3721 = vmatmul.mubr.f32.gmra.mxu0 %v3547
        %v3722 = vpop.f32.mrf.mxu0
        %v3723 = vadd.f32 0.0, %v3722
        %v3724 = vpop.f32.mrf.mxu0
        %3725 = vmatprep.mubr.f32.mxu0 0.0
        %3726 = vmatmul.mubr.f32.gmra.mxu0 %v3548
        %v3727 = vpop.f32.mrf.mxu0
        %v3728 = vadd.f32 0.0, %v3727
        %v3729 = vpop.f32.mrf.mxu0
        %3730 = vmatprep.mubr.f32.mxu0 0.0
        %3731 = vmatmul.mubr.f32.gmra.mxu0 %v3549
        %v3732 = vpop.f32.mrf.mxu0
        %v3733 = vadd.f32 0.0, %v3732
        %v3734 = vpop.f32.mrf.mxu0
        %3735 = vmatprep.mubr.f32.mxu0 0.0
        %3736 = vmatmul.mubr.f32.gmra.mxu0 %v3550
        %v3737 = vpop.f32.mrf.mxu0
        %v3738 = vadd.f32 0.0, %v3737
        %v3739 = vpop.f32.mrf.mxu0
        %3740 = vmatprep.mubr.f32.mxu0 0.0
        %3741 = vmatmul.mubr.f32.gmra.mxu0 %v3551
        %v3742 = vpop.f32.mrf.mxu0
        %v3743 = vadd.f32 0.0, %v3742
        %v3744 = vpop.f32.mrf.mxu0
        %3745 = vmatprep.mubr.f32.mxu0 0.0
        %3746 = vmatmul.mubr.f32.gmra.mxu0 %v3552
        %v3747 = vpop.f32.mrf.mxu0
        %v3748 = vadd.f32 0.0, %v3747
        %v3749 = vpop.f32.mrf.mxu0
        %3750 = vmatprep.mubr.f32.mxu0 0.0
        %3751 = vmatmul.mubr.f32.gmra.mxu0 %v3553
        %v3752 = vpop.f32.mrf.mxu0
        %v3753 = vadd.f32 0.0, %v3752
        %v3754 = vpop.f32.mrf.mxu0
        %3755 = vmatprep.mubr.f32.mxu0 0.0
        %3756 = vmatmul.mubr.f32.gmra.mxu0 %v3554
        %v3757 = vpop.f32.mrf.mxu0
        %v3758 = vadd.f32 0.0, %v3757
        %v3759 = vpop.f32.mrf.mxu0
        %3760 = vmatprep.mubr.f32.mxu0 0.0
        %3761 = vmatmul.mubr.f32.gmra.mxu0 %v3555
        %v3762 = vpop.f32.mrf.mxu0
        %v3763 = vadd.f32 0.0, %v3762
        %v3764 = vpop.f32.mrf.mxu0
        %3765 = vmatprep.mubr.f32.mxu0 0.0
        %3766 = vmatmul.mubr.f32.gmra.mxu0 %v3556
        %v3767 = vpop.f32.mrf.mxu0
        %v3768 = vadd.f32 0.0, %v3767
        %v3769 = vpop.f32.mrf.mxu0
        %3770 = vmatprep.mubr.f32.mxu0 0.0
        %3771 = vmatmul.mubr.f32.gmra.mxu0 %v3557
        %v3772 = vpop.f32.mrf.mxu0
        %v3773 = vadd.f32 0.0, %v3772
        %v3774 = vpop.f32.mrf.mxu0
        %3775 = vmatprep.mubr.f32.mxu0 0.0
        %3776 = vmatmul.mubr.f32.gmra.mxu0 %v3558
        %v3777 = vpop.f32.mrf.mxu0
        %v3778 = vadd.f32 0.0, %v3777
        %v3779 = vpop.f32.mrf.mxu0
        %3780 = vmatprep.mubr.f32.mxu0 0.0
        %3781 = vmatmul.mubr.f32.gmra.mxu0 %v3559
        %v3782 = vpop.f32.mrf.mxu0
        %v3783 = vadd.f32 0.0, %v3782
        %v3784 = vpop.f32.mrf.mxu0
        %3785 = vmatprep.mubr.f32.mxu0 0.0
        %3786 = vmatmul.mubr.f32.gmra.mxu0 %v3560
        %v3787 = vpop.f32.mrf.mxu0
        %v3788 = vadd.f32 0.0, %v3787
        %v3789 = vpop.f32.mrf.mxu0
        %3790 = vmatprep.mubr.f32.mxu0 0.0
        %3791 = vmatmul.mubr.f32.gmra.mxu0 %v3561
        %v3792 = vpop.f32.mrf.mxu0
        %v3793 = vadd.f32 0.0, %v3792
        %v3794 = vpop.f32.mrf.mxu0
        %3795 = vmatprep.mubr.f32.mxu0 0.0
        %3796 = vmatmul.mubr.f32.gmra.mxu0 %v3562
        %v3797 = vpop.f32.mrf.mxu0
        %v3798 = vadd.f32 0.0, %v3797
        %v3799 = vpop.f32.mrf.mxu0
        %3800 = vmatprep.mubr.f32.mxu0 0.0
        %3801 = vmatmul.mubr.f32.gmra.mxu0 %v3563
        %v3802 = vpop.f32.mrf.mxu0
        %v3803 = vadd.f32 0.0, %v3802
        %v3804 = vpop.f32.mrf.mxu0
        %3805 = vdwg.mxu0
        %3806 = vmatprep.subr.mxu0 0.0
        %3807 = vmatpush1.msra.mxu0 %v3531
        %3808 = vmatprep.subr.mxu0 0.0
        %3809 = vmatpush1.msra.mxu0 %v3530
        %3810 = vmatprep.subr.mxu0 0.0
        %3811 = vmatpush1.msra.mxu0 %v3529
        %3812 = vmatprep.subr.mxu0 0.0
        %3813 = vmatpush1.msra.mxu0 %v3528
        %3814 = vmatprep.subr.mxu0 0.0
        %3815 = vmatpush1.msra.mxu0 %v3527
        %3816 = vmatprep.subr.mxu0 0.0
        %3817 = vmatpush1.msra.mxu0 %v3526
        %3818 = vmatprep.subr.mxu0 0.0
        %3819 = vmatpush1.msra.mxu0 %v3525
        %3820 = vmatprep.subr.mxu0 0.0
        %3821 = vmatpush1.msra.mxu0 %v3524
        %3822 = vmatprep.subr.mxu0 0.0
        %3823 = vmatpush1.msra.mxu0 %v3523
        %3824 = vmatprep.subr.mxu0 0.0
        %3825 = vmatpush1.msra.mxu0 %v3522
        %3826 = vmatprep.subr.mxu0 0.0
        %3827 = vmatpush1.msra.mxu0 %v3521
        %3828 = vmatprep.subr.mxu0 0.0
        %3829 = vmatpush1.msra.mxu0 %v3520
        %3830 = vmatprep.subr.mxu0 0.0
        %3831 = vmatpush1.msra.mxu0 %v3519
        %3832 = vmatprep.subr.mxu0 0.0
        %3833 = vmatpush1.msra.mxu0 %v3518
        %3834 = vmatprep.subr.mxu0 0.0
        %3835 = vmatpush1.msra.mxu0 %v3517
        %3836 = vmatprep.subr.mxu0 0.0
        %3837 = vmatpush1.msra.mxu0 %v3516
        %3838 = vmatprep.subr.mxu0 0.0
        %3839 = vmatpush2.msra.mxu0 0.0
        %3840 = vmatprep.subr.mxu0 0.0
        %3841 = vmatpush2.msra.mxu0 0.0
        %3842 = vmatprep.subr.mxu0 0.0
        %3843 = vmatpush2.msra.mxu0 0.0
        %3844 = vmatprep.subr.mxu0 0.0
        %3845 = vmatpush2.msra.mxu0 0.0
        %3846 = vmatprep.subr.mxu0 0.0
        %3847 = vmatpush2.msra.mxu0 0.0
        %3848 = vmatprep.subr.mxu0 0.0
        %3849 = vmatpush2.msra.mxu0 0.0
        %3850 = vmatprep.subr.mxu0 0.0
        %3851 = vmatpush2.msra.mxu0 0.0
        %3852 = vmatprep.subr.mxu0 0.0
        %3853 = vmatpush2.msra.mxu0 0.0
        %3854 = vmatprep.subr.mxu0 0.0
        %3855 = vmatpush2.msra.mxu0 0.0
        %3856 = vmatprep.subr.mxu0 0.0
        %3857 = vmatpush2.msra.mxu0 0.0
        %3858 = vmatprep.subr.mxu0 0.0
        %3859 = vmatpush2.msra.mxu0 0.0
        %3860 = vmatprep.subr.mxu0 0.0
        %3861 = vmatpush2.msra.mxu0 0.0
        %3862 = vmatprep.subr.mxu0 0.0
        %3863 = vmatpush2.msra.mxu0 0.0
        %3864 = vmatprep.subr.mxu0 0.0
        %3865 = vmatpush2.msra.mxu0 0.0
        %3866 = vmatprep.subr.mxu0 0.0
        %3867 = vmatpush2.msra.mxu0 0.0
        %3868 = vmatprep.subr.mxu0 0.0
        %3869 = vmatpush2.msra.mxu0 0.0
        %3870 = vmatprep.mubr.f32.mxu0 0.0
        %3871 = vmatmul.mubr.f32.gmra.mxu0 %v3484
        %v3872 = vpop.f32.mrf.mxu0
        %v3873 = vadd.f32 %v3648, %v3872
        %v3874 = vpop.f32.mrf.mxu0
        %3875 = vmatprep.mubr.f32.mxu0 0.0
        %3876 = vmatmul.mubr.f32.gmra.mxu0 %v3485
        %v3877 = vpop.f32.mrf.mxu0
        %v3878 = vadd.f32 %v3653, %v3877
        %v3879 = vpop.f32.mrf.mxu0
        %3880 = vmatprep.mubr.f32.mxu0 0.0
        %3881 = vmatmul.mubr.f32.gmra.mxu0 %v3486
        %v3882 = vpop.f32.mrf.mxu0
        %v3883 = vadd.f32 %v3658, %v3882
        %v3884 = vpop.f32.mrf.mxu0
        %3885 = vmatprep.mubr.f32.mxu0 0.0
        %3886 = vmatmul.mubr.f32.gmra.mxu0 %v3487
        %v3887 = vpop.f32.mrf.mxu0
        %v3888 = vadd.f32 %v3663, %v3887
        %v3889 = vpop.f32.mrf.mxu0
        %3890 = vmatprep.mubr.f32.mxu0 0.0
        %3891 = vmatmul.mubr.f32.gmra.mxu0 %v3488
        %v3892 = vpop.f32.mrf.mxu0
        %v3893 = vadd.f32 %v3668, %v3892
        %v3894 = vpop.f32.mrf.mxu0
        %3895 = vmatprep.mubr.f32.mxu0 0.0
        %3896 = vmatmul.mubr.f32.gmra.mxu0 %v3489
        %v3897 = vpop.f32.mrf.mxu0
        %v3898 = vadd.f32 %v3673, %v3897
        %v3899 = vpop.f32.mrf.mxu0
        %3900 = vmatprep.mubr.f32.mxu0 0.0
        %3901 = vmatmul.mubr.f32.gmra.mxu0 %v3490
        %v3902 = vpop.f32.mrf.mxu0
        %v3903 = vadd.f32 %v3678, %v3902
        %v3904 = vpop.f32.mrf.mxu0
        %3905 = vmatprep.mubr.f32.mxu0 0.0
        %3906 = vmatmul.mubr.f32.gmra.mxu0 %v3491
        %v3907 = vpop.f32.mrf.mxu0
        %v3908 = vadd.f32 %v3683, %v3907
        %v3909 = vpop.f32.mrf.mxu0
        %3910 = vmatprep.mubr.f32.mxu0 0.0
        %3911 = vmatmul.mubr.f32.gmra.mxu0 %v3492
        %v3912 = vpop.f32.mrf.mxu0
        %v3913 = vadd.f32 %v3688, %v3912
        %v3914 = vpop.f32.mrf.mxu0
        %3915 = vmatprep.mubr.f32.mxu0 0.0
        %3916 = vmatmul.mubr.f32.gmra.mxu0 %v3493
        %v3917 = vpop.f32.mrf.mxu0
        %v3918 = vadd.f32 %v3693, %v3917
        %v3919 = vpop.f32.mrf.mxu0
        %3920 = vmatprep.mubr.f32.mxu0 0.0
        %3921 = vmatmul.mubr.f32.gmra.mxu0 %v3494
        %v3922 = vpop.f32.mrf.mxu0
        %v3923 = vadd.f32 %v3698, %v3922
        %v3924 = vpop.f32.mrf.mxu0
        %3925 = vmatprep.mubr.f32.mxu0 0.0
        %3926 = vmatmul.mubr.f32.gmra.mxu0 %v3495
        %v3927 = vpop.f32.mrf.mxu0
        %v3928 = vadd.f32 %v3703, %v3927
        %v3929 = vpop.f32.mrf.mxu0
        %3930 = vmatprep.mubr.f32.mxu0 0.0
        %3931 = vmatmul.mubr.f32.gmra.mxu0 %v3496
        %v3932 = vpop.f32.mrf.mxu0
        %v3933 = vadd.f32 %v3708, %v3932
        %v3934 = vpop.f32.mrf.mxu0
        %3935 = vmatprep.mubr.f32.mxu0 0.0
        %3936 = vmatmul.mubr.f32.gmra.mxu0 %v3497
        %v3937 = vpop.f32.mrf.mxu0
        %v3938 = vadd.f32 %v3713, %v3937
        %v3939 = vpop.f32.mrf.mxu0
        %3940 = vmatprep.mubr.f32.mxu0 0.0
        %3941 = vmatmul.mubr.f32.gmra.mxu0 %v3498
        %v3942 = vpop.f32.mrf.mxu0
        %v3943 = vadd.f32 %v3718, %v3942
        %v3944 = vpop.f32.mrf.mxu0
        %3945 = vmatprep.mubr.f32.mxu0 0.0
        %3946 = vmatmul.mubr.f32.gmra.mxu0 %v3499
        %v3947 = vpop.f32.mrf.mxu0
        %v3948 = vadd.f32 %v3723, %v3947
        %v3949 = vpop.f32.mrf.mxu0
        %3950 = vmatprep.mubr.f32.mxu0 0.0
        %3951 = vmatmul.mubr.f32.gmra.mxu0 %v3500
        %v3952 = vpop.f32.mrf.mxu0
        %v3953 = vadd.f32 %v3728, %v3952
        %v3954 = vpop.f32.mrf.mxu0
        %3955 = vmatprep.mubr.f32.mxu0 0.0
        %3956 = vmatmul.mubr.f32.gmra.mxu0 %v3501
        %v3957 = vpop.f32.mrf.mxu0
        %v3958 = vadd.f32 %v3733, %v3957
        %v3959 = vpop.f32.mrf.mxu0
        %3960 = vmatprep.mubr.f32.mxu0 0.0
        %3961 = vmatmul.mubr.f32.gmra.mxu0 %v3502
        %v3962 = vpop.f32.mrf.mxu0
        %v3963 = vadd.f32 %v3738, %v3962
        %v3964 = vpop.f32.mrf.mxu0
        %3965 = vmatprep.mubr.f32.mxu0 0.0
        %3966 = vmatmul.mubr.f32.gmra.mxu0 %v3503
        %v3967 = vpop.f32.mrf.mxu0
        %v3968 = vadd.f32 %v3743, %v3967
        %v3969 = vpop.f32.mrf.mxu0
        %3970 = vmatprep.mubr.f32.mxu0 0.0
        %3971 = vmatmul.mubr.f32.gmra.mxu0 %v3504
        %v3972 = vpop.f32.mrf.mxu0
        %v3973 = vadd.f32 %v3748, %v3972
        %v3974 = vpop.f32.mrf.mxu0
        %3975 = vmatprep.mubr.f32.mxu0 0.0
        %3976 = vmatmul.mubr.f32.gmra.mxu0 %v3505
        %v3977 = vpop.f32.mrf.mxu0
        %v3978 = vadd.f32 %v3753, %v3977
        %v3979 = vpop.f32.mrf.mxu0
        %3980 = vmatprep.mubr.f32.mxu0 0.0
        %3981 = vmatmul.mubr.f32.gmra.mxu0 %v3506
        %v3982 = vpop.f32.mrf.mxu0
        %v3983 = vadd.f32 %v3758, %v3982
        %v3984 = vpop.f32.mrf.mxu0
        %3985 = vmatprep.mubr.f32.mxu0 0.0
        %3986 = vmatmul.mubr.f32.gmra.mxu0 %v3507
        %v3987 = vpop.f32.mrf.mxu0
        %v3988 = vadd.f32 %v3763, %v3987
        %v3989 = vpop.f32.mrf.mxu0
        %3990 = vmatprep.mubr.f32.mxu0 0.0
        %3991 = vmatmul.mubr.f32.gmra.mxu0 %v3508
        %v3992 = vpop.f32.mrf.mxu0
        %v3993 = vadd.f32 %v3768, %v3992
        %v3994 = vpop.f32.mrf.mxu0
        %3995 = vmatprep.mubr.f32.mxu0 0.0
        %3996 = vmatmul.mubr.f32.gmra.mxu0 %v3509
        %v3997 = vpop.f32.mrf.mxu0
        %v3998 = vadd.f32 %v3773, %v3997
        %v3999 = vpop.f32.mrf.mxu0
        %4000 = vmatprep.mubr.f32.mxu0 0.0
        %4001 = vmatmul.mubr.f32.gmra.mxu0 %v3510
        %v4002 = vpop.f32.mrf.mxu0
        %v4003 = vadd.f32 %v3778, %v4002
        %v4004 = vpop.f32.mrf.mxu0
        %4005 = vmatprep.mubr.f32.mxu0 0.0
        %4006 = vmatmul.mubr.f32.gmra.mxu0 %v3511
        %v4007 = vpop.f32.mrf.mxu0
        %v4008 = vadd.f32 %v3783, %v4007
        %v4009 = vpop.f32.mrf.mxu0
        %4010 = vmatprep.mubr.f32.mxu0 0.0
        %4011 = vmatmul.mubr.f32.gmra.mxu0 %v3512
        %v4012 = vpop.f32.mrf.mxu0
        %v4013 = vadd.f32 %v3788, %v4012
        %v4014 = vpop.f32.mrf.mxu0
        %4015 = vmatprep.mubr.f32.mxu0 0.0
        %4016 = vmatmul.mubr.f32.gmra.mxu0 %v3513
        %v4017 = vpop.f32.mrf.mxu0
        %v4018 = vadd.f32 %v3793, %v4017
        %v4019 = vpop.f32.mrf.mxu0
        %4020 = vmatprep.mubr.f32.mxu0 0.0
        %4021 = vmatmul.mubr.f32.gmra.mxu0 %v3514
        %v4022 = vpop.f32.mrf.mxu0
        %v4023 = vadd.f32 %v3798, %v4022
        %v4024 = vpop.f32.mrf.mxu0
        %4025 = vmatprep.mubr.f32.mxu0 0.0
        %4026 = vmatmul.mubr.f32.gmra.mxu0 %v3515
        %v4027 = vpop.f32.mrf.mxu0
        %v4028 = vadd.f32 %v3803, %v4027
        %v4029 = vpop.f32.mrf.mxu0
        %4030 = vdwg.mxu0
        %v4031 = vld [vmem:[#allocation3 + $0x2] sm:$0xff]
        %v4032 = vld [vmem:[#allocation3 + $0xa] sm:$0xff]
        %v4033 = vld [vmem:[#allocation3 + $0x1a] sm:$0xff]
        %v4034 = vld [vmem:[#allocation3 + $0x22] sm:$0xff]
        %v4035 = vld [vmem:[#allocation3 + $0x32] sm:$0xff]
        %v4036 = vld [vmem:[#allocation3 + $0x3a] sm:$0xff]
        %v4037 = vld [vmem:[#allocation3 + $0x4a] sm:$0xff]
        %v4038 = vld [vmem:[#allocation3 + $0x52] sm:$0xff]
        %v4039 = vld [vmem:[#allocation3 + $0x62] sm:$0xff]
        %v4040 = vld [vmem:[#allocation3 + $0x6a] sm:$0xff]
        %v4041 = vld [vmem:[#allocation3 + $0x7a] sm:$0xff]
        %v4042 = vld [vmem:[#allocation3 + $0x82] sm:$0xff]
        %v4043 = vld [vmem:[#allocation3 + $0x92] sm:$0xff]
        %v4044 = vld [vmem:[#allocation3 + $0x9a] sm:$0xff]
        %v4045 = vld [vmem:[#allocation3 + $0xaa] sm:$0xff]
        %v4046 = vld [vmem:[#allocation3 + $0xb2] sm:$0xff]
        %v4047 = vld [vmem:[#allocation3 + $0xc2] sm:$0xff]
        %v4048 = vld [vmem:[#allocation3 + $0xca] sm:$0xff]
        %v4049 = vld [vmem:[#allocation3 + $0xda] sm:$0xff]
        %v4050 = vld [vmem:[#allocation3 + $0xe2] sm:$0xff]
        %v4051 = vld [vmem:[#allocation3 + $0xf2] sm:$0xff]
        %v4052 = vld [vmem:[#allocation3 + $0xfa] sm:$0xff]
        %v4053 = vld [vmem:[#allocation3 + $0x10a] sm:$0xff]
        %v4054 = vld [vmem:[#allocation3 + $0x112] sm:$0xff]
        %v4055 = vld [vmem:[#allocation3 + $0x122] sm:$0xff]
        %v4056 = vld [vmem:[#allocation3 + $0x12a] sm:$0xff]
        %v4057 = vld [vmem:[#allocation3 + $0x13a] sm:$0xff]
        %v4058 = vld [vmem:[#allocation3 + $0x142] sm:$0xff]
        %v4059 = vld [vmem:[#allocation3 + $0x152] sm:$0xff]
        %v4060 = vld [vmem:[#allocation3 + $0x15a] sm:$0xff]
        %v4061 = vld [vmem:[#allocation3 + $0x16a] sm:$0xff]
        %v4062 = vld [vmem:[#allocation3 + $0x172] sm:$0xff]
        %s4063 = scalar_lea.vmem [#allocation9], 256
        %v4064 = vld [vmem:[%s4063] sm:$0xff]
        %v4065 = vld [vmem:[%s4063 + $0x8] sm:$0xff]
        %v4066 = vld [vmem:[%s4063 + $0x10] sm:$0xff]
        %v4067 = vld [vmem:[%s4063 + $0x18] sm:$0xff]
        %v4068 = vld [vmem:[%s4063 + $0x20] sm:$0xff]
        %v4069 = vld [vmem:[%s4063 + $0x28] sm:$0xff]
        %v4070 = vld [vmem:[%s4063 + $0x30] sm:$0xff]
        %v4071 = vld [vmem:[%s4063 + $0x38] sm:$0xff]
        %v4072 = vld [vmem:[%s4063 + $0x40] sm:$0xff]
        %v4073 = vld [vmem:[%s4063 + $0x48] sm:$0xff]
        %v4074 = vld [vmem:[%s4063 + $0x50] sm:$0xff]
        %v4075 = vld [vmem:[%s4063 + $0x58] sm:$0xff]
        %v4076 = vld [vmem:[%s4063 + $0x60] sm:$0xff]
        %v4077 = vld [vmem:[%s4063 + $0x68] sm:$0xff]
        %v4078 = vld [vmem:[%s4063 + $0x70] sm:$0xff]
        %v4079 = vld [vmem:[%s4063 + $0x78] sm:$0xff]
        %4080 = vmatprep.subr.mxu0 0.0
        %4081 = vmatpush1.msra.mxu0 %v4079
        %4082 = vmatprep.subr.mxu0 0.0
        %4083 = vmatpush1.msra.mxu0 %v4078
        %4084 = vmatprep.subr.mxu0 0.0
        %4085 = vmatpush1.msra.mxu0 %v4077
        %4086 = vmatprep.subr.mxu0 0.0
        %4087 = vmatpush1.msra.mxu0 %v4076
        %4088 = vmatprep.subr.mxu0 0.0
        %4089 = vmatpush1.msra.mxu0 %v4075
        %4090 = vmatprep.subr.mxu0 0.0
        %4091 = vmatpush1.msra.mxu0 %v4074
        %4092 = vmatprep.subr.mxu0 0.0
        %4093 = vmatpush1.msra.mxu0 %v4073
        %4094 = vmatprep.subr.mxu0 0.0
        %4095 = vmatpush1.msra.mxu0 %v4072
        %4096 = vmatprep.subr.mxu0 0.0
        %4097 = vmatpush1.msra.mxu0 %v4071
        %4098 = vmatprep.subr.mxu0 0.0
        %4099 = vmatpush1.msra.mxu0 %v4070
        %4100 = vmatprep.subr.mxu0 0.0
        %4101 = vmatpush1.msra.mxu0 %v4069
        %4102 = vmatprep.subr.mxu0 0.0
        %4103 = vmatpush1.msra.mxu0 %v4068
        %4104 = vmatprep.subr.mxu0 0.0
        %4105 = vmatpush1.msra.mxu0 %v4067
        %4106 = vmatprep.subr.mxu0 0.0
        %4107 = vmatpush1.msra.mxu0 %v4066
        %4108 = vmatprep.subr.mxu0 0.0
        %4109 = vmatpush1.msra.mxu0 %v4065
        %4110 = vmatprep.subr.mxu0 0.0
        %4111 = vmatpush1.msra.mxu0 %v4064
        %4112 = vmatprep.subr.mxu0 0.0
        %4113 = vmatpush2.msra.mxu0 0.0
        %4114 = vmatprep.subr.mxu0 0.0
        %4115 = vmatpush2.msra.mxu0 0.0
        %4116 = vmatprep.subr.mxu0 0.0
        %4117 = vmatpush2.msra.mxu0 0.0
        %4118 = vmatprep.subr.mxu0 0.0
        %4119 = vmatpush2.msra.mxu0 0.0
        %4120 = vmatprep.subr.mxu0 0.0
        %4121 = vmatpush2.msra.mxu0 0.0
        %4122 = vmatprep.subr.mxu0 0.0
        %4123 = vmatpush2.msra.mxu0 0.0
        %4124 = vmatprep.subr.mxu0 0.0
        %4125 = vmatpush2.msra.mxu0 0.0
        %4126 = vmatprep.subr.mxu0 0.0
        %4127 = vmatpush2.msra.mxu0 0.0
        %4128 = vmatprep.subr.mxu0 0.0
        %4129 = vmatpush2.msra.mxu0 0.0
        %4130 = vmatprep.subr.mxu0 0.0
        %4131 = vmatpush2.msra.mxu0 0.0
        %4132 = vmatprep.subr.mxu0 0.0
        %4133 = vmatpush2.msra.mxu0 0.0
        %4134 = vmatprep.subr.mxu0 0.0
        %4135 = vmatpush2.msra.mxu0 0.0
        %4136 = vmatprep.subr.mxu0 0.0
        %4137 = vmatpush2.msra.mxu0 0.0
        %4138 = vmatprep.subr.mxu0 0.0
        %4139 = vmatpush2.msra.mxu0 0.0
        %4140 = vmatprep.subr.mxu0 0.0
        %4141 = vmatpush2.msra.mxu0 0.0
        %4142 = vmatprep.subr.mxu0 0.0
        %4143 = vmatpush2.msra.mxu0 0.0
        %4144 = vmatprep.mubr.f32.mxu0 0.0
        %4145 = vmatmul.mubr.f32.gmra.mxu0 %v4031
        %v4146 = vpop.f32.mrf.mxu0
        %v4147 = vadd.f32 0.0, %v4146
        %v4148 = vpop.f32.mrf.mxu0
        %4149 = vmatprep.mubr.f32.mxu0 0.0
        %4150 = vmatmul.mubr.f32.gmra.mxu0 %v4032
        %v4151 = vpop.f32.mrf.mxu0
        %v4152 = vadd.f32 0.0, %v4151
        %v4153 = vpop.f32.mrf.mxu0
        %4154 = vmatprep.mubr.f32.mxu0 0.0
        %4155 = vmatmul.mubr.f32.gmra.mxu0 %v4033
        %v4156 = vpop.f32.mrf.mxu0
        %v4157 = vadd.f32 0.0, %v4156
        %v4158 = vpop.f32.mrf.mxu0
        %4159 = vmatprep.mubr.f32.mxu0 0.0
        %4160 = vmatmul.mubr.f32.gmra.mxu0 %v4034
        %v4161 = vpop.f32.mrf.mxu0
        %v4162 = vadd.f32 0.0, %v4161
        %v4163 = vpop.f32.mrf.mxu0
        %4164 = vmatprep.mubr.f32.mxu0 0.0
        %4165 = vmatmul.mubr.f32.gmra.mxu0 %v4035
        %v4166 = vpop.f32.mrf.mxu0
        %v4167 = vadd.f32 0.0, %v4166
        %v4168 = vpop.f32.mrf.mxu0
        %4169 = vmatprep.mubr.f32.mxu0 0.0
        %4170 = vmatmul.mubr.f32.gmra.mxu0 %v4036
        %v4171 = vpop.f32.mrf.mxu0
        %v4172 = vadd.f32 0.0, %v4171
        %v4173 = vpop.f32.mrf.mxu0
        %4174 = vmatprep.mubr.f32.mxu0 0.0
        %4175 = vmatmul.mubr.f32.gmra.mxu0 %v4037
        %v4176 = vpop.f32.mrf.mxu0
        %v4177 = vadd.f32 0.0, %v4176
        %v4178 = vpop.f32.mrf.mxu0
        %4179 = vmatprep.mubr.f32.mxu0 0.0
        %4180 = vmatmul.mubr.f32.gmra.mxu0 %v4038
        %v4181 = vpop.f32.mrf.mxu0
        %v4182 = vadd.f32 0.0, %v4181
        %v4183 = vpop.f32.mrf.mxu0
        %4184 = vmatprep.mubr.f32.mxu0 0.0
        %4185 = vmatmul.mubr.f32.gmra.mxu0 %v4039
        %v4186 = vpop.f32.mrf.mxu0
        %v4187 = vadd.f32 0.0, %v4186
        %v4188 = vpop.f32.mrf.mxu0
        %4189 = vmatprep.mubr.f32.mxu0 0.0
        %4190 = vmatmul.mubr.f32.gmra.mxu0 %v4040
        %v4191 = vpop.f32.mrf.mxu0
        %v4192 = vadd.f32 0.0, %v4191
        %v4193 = vpop.f32.mrf.mxu0
        %4194 = vmatprep.mubr.f32.mxu0 0.0
        %4195 = vmatmul.mubr.f32.gmra.mxu0 %v4041
        %v4196 = vpop.f32.mrf.mxu0
        %v4197 = vadd.f32 0.0, %v4196
        %v4198 = vpop.f32.mrf.mxu0
        %4199 = vmatprep.mubr.f32.mxu0 0.0
        %4200 = vmatmul.mubr.f32.gmra.mxu0 %v4042
        %v4201 = vpop.f32.mrf.mxu0
        %v4202 = vadd.f32 0.0, %v4201
        %v4203 = vpop.f32.mrf.mxu0
        %4204 = vmatprep.mubr.f32.mxu0 0.0
        %4205 = vmatmul.mubr.f32.gmra.mxu0 %v4043
        %v4206 = vpop.f32.mrf.mxu0
        %v4207 = vadd.f32 0.0, %v4206
        %v4208 = vpop.f32.mrf.mxu0
        %4209 = vmatprep.mubr.f32.mxu0 0.0
        %4210 = vmatmul.mubr.f32.gmra.mxu0 %v4044
        %v4211 = vpop.f32.mrf.mxu0
        %v4212 = vadd.f32 0.0, %v4211
        %v4213 = vpop.f32.mrf.mxu0
        %4214 = vmatprep.mubr.f32.mxu0 0.0
        %4215 = vmatmul.mubr.f32.gmra.mxu0 %v4045
        %v4216 = vpop.f32.mrf.mxu0
        %v4217 = vadd.f32 0.0, %v4216
        %v4218 = vpop.f32.mrf.mxu0
        %4219 = vmatprep.mubr.f32.mxu0 0.0
        %4220 = vmatmul.mubr.f32.gmra.mxu0 %v4046
        %v4221 = vpop.f32.mrf.mxu0
        %v4222 = vadd.f32 0.0, %v4221
        %v4223 = vpop.f32.mrf.mxu0
        %4224 = vmatprep.mubr.f32.mxu0 0.0
        %4225 = vmatmul.mubr.f32.gmra.mxu0 %v4047
        %v4226 = vpop.f32.mrf.mxu0
        %v4227 = vadd.f32 0.0, %v4226
        %v4228 = vpop.f32.mrf.mxu0
        %4229 = vmatprep.mubr.f32.mxu0 0.0
        %4230 = vmatmul.mubr.f32.gmra.mxu0 %v4048
        %v4231 = vpop.f32.mrf.mxu0
        %v4232 = vadd.f32 0.0, %v4231
        %v4233 = vpop.f32.mrf.mxu0
        %4234 = vmatprep.mubr.f32.mxu0 0.0
        %4235 = vmatmul.mubr.f32.gmra.mxu0 %v4049
        %v4236 = vpop.f32.mrf.mxu0
        %v4237 = vadd.f32 0.0, %v4236
        %v4238 = vpop.f32.mrf.mxu0
        %4239 = vmatprep.mubr.f32.mxu0 0.0
        %4240 = vmatmul.mubr.f32.gmra.mxu0 %v4050
        %v4241 = vpop.f32.mrf.mxu0
        %v4242 = vadd.f32 0.0, %v4241
        %v4243 = vpop.f32.mrf.mxu0
        %4244 = vmatprep.mubr.f32.mxu0 0.0
        %4245 = vmatmul.mubr.f32.gmra.mxu0 %v4051
        %v4246 = vpop.f32.mrf.mxu0
        %v4247 = vadd.f32 0.0, %v4246
        %v4248 = vpop.f32.mrf.mxu0
        %4249 = vmatprep.mubr.f32.mxu0 0.0
        %4250 = vmatmul.mubr.f32.gmra.mxu0 %v4052
        %v4251 = vpop.f32.mrf.mxu0
        %v4252 = vadd.f32 0.0, %v4251
        %v4253 = vpop.f32.mrf.mxu0
        %4254 = vmatprep.mubr.f32.mxu0 0.0
        %4255 = vmatmul.mubr.f32.gmra.mxu0 %v4053
        %v4256 = vpop.f32.mrf.mxu0
        %v4257 = vadd.f32 0.0, %v4256
        %v4258 = vpop.f32.mrf.mxu0
        %4259 = vmatprep.mubr.f32.mxu0 0.0
        %4260 = vmatmul.mubr.f32.gmra.mxu0 %v4054
        %v4261 = vpop.f32.mrf.mxu0
        %v4262 = vadd.f32 0.0, %v4261
        %v4263 = vpop.f32.mrf.mxu0
        %4264 = vmatprep.mubr.f32.mxu0 0.0
        %4265 = vmatmul.mubr.f32.gmra.mxu0 %v4055
        %v4266 = vpop.f32.mrf.mxu0
        %v4267 = vadd.f32 0.0, %v4266
        %v4268 = vpop.f32.mrf.mxu0
        %4269 = vmatprep.mubr.f32.mxu0 0.0
        %4270 = vmatmul.mubr.f32.gmra.mxu0 %v4056
        %v4271 = vpop.f32.mrf.mxu0
        %v4272 = vadd.f32 0.0, %v4271
        %v4273 = vpop.f32.mrf.mxu0
        %4274 = vmatprep.mubr.f32.mxu0 0.0
        %4275 = vmatmul.mubr.f32.gmra.mxu0 %v4057
        %v4276 = vpop.f32.mrf.mxu0
        %v4277 = vadd.f32 0.0, %v4276
        %v4278 = vpop.f32.mrf.mxu0
        %4279 = vmatprep.mubr.f32.mxu0 0.0
        %4280 = vmatmul.mubr.f32.gmra.mxu0 %v4058
        %v4281 = vpop.f32.mrf.mxu0
        %v4282 = vadd.f32 0.0, %v4281
        %v4283 = vpop.f32.mrf.mxu0
        %4284 = vmatprep.mubr.f32.mxu0 0.0
        %4285 = vmatmul.mubr.f32.gmra.mxu0 %v4059
        %v4286 = vpop.f32.mrf.mxu0
        %v4287 = vadd.f32 0.0, %v4286
        %v4288 = vpop.f32.mrf.mxu0
        %4289 = vmatprep.mubr.f32.mxu0 0.0
        %4290 = vmatmul.mubr.f32.gmra.mxu0 %v4060
        %v4291 = vpop.f32.mrf.mxu0
        %v4292 = vadd.f32 0.0, %v4291
        %v4293 = vpop.f32.mrf.mxu0
        %4294 = vmatprep.mubr.f32.mxu0 0.0
        %4295 = vmatmul.mubr.f32.gmra.mxu0 %v4061
        %v4296 = vpop.f32.mrf.mxu0
        %v4297 = vadd.f32 0.0, %v4296
        %v4298 = vpop.f32.mrf.mxu0
        %4299 = vmatprep.mubr.f32.mxu0 0.0
        %4300 = vmatmul.mubr.f32.gmra.mxu0 %v4062
        %v4301 = vpop.f32.mrf.mxu0
        %v4302 = vadd.f32 0.0, %v4301
        %v4303 = vpop.f32.mrf.mxu0
        %4304 = vdwg.mxu0
        %v4305 = vadd.f32 %v3873, %v4147
        %v4306 = vadd.f32 %v3878, %v4152
        %v4307 = vadd.f32 %v3883, %v4157
        %v4308 = vadd.f32 %v3888, %v4162
        %v4309 = vadd.f32 %v3893, %v4167
        %v4310 = vadd.f32 %v3898, %v4172
        %v4311 = vadd.f32 %v3903, %v4177
        %v4312 = vadd.f32 %v3908, %v4182
        %v4313 = vadd.f32 %v3913, %v4187
        %v4314 = vadd.f32 %v3918, %v4192
        %v4315 = vadd.f32 %v3923, %v4197
        %v4316 = vadd.f32 %v3928, %v4202
        %v4317 = vadd.f32 %v3933, %v4207
        %v4318 = vadd.f32 %v3938, %v4212
        %v4319 = vadd.f32 %v3943, %v4217
        %v4320 = vadd.f32 %v3948, %v4222
        %v4321 = vadd.f32 %v3953, %v4227
        %v4322 = vadd.f32 %v3958, %v4232
        %v4323 = vadd.f32 %v3963, %v4237
        %v4324 = vadd.f32 %v3968, %v4242
        %v4325 = vadd.f32 %v3973, %v4247
        %v4326 = vadd.f32 %v3978, %v4252
        %v4327 = vadd.f32 %v3983, %v4257
        %v4328 = vadd.f32 %v3988, %v4262
        %v4329 = vadd.f32 %v3993, %v4267
        %v4330 = vadd.f32 %v3998, %v4272
        %v4331 = vadd.f32 %v4003, %v4277
        %v4332 = vadd.f32 %v4008, %v4282
        %v4333 = vadd.f32 %v4013, %v4287
        %v4334 = vadd.f32 %v4018, %v4292
        %v4335 = vadd.f32 %v4023, %v4297
        %v4336 = vadd.f32 %v4028, %v4302
        %v4337 = vld [vmem:[%s3451] sm:$0xff]
        %v4338 = vld [vmem:[%s3451 + $0x8] sm:$0xff]
        %v4339 = vld [vmem:[%s3451 + $0x18] sm:$0xff]
        %v4340 = vld [vmem:[%s3451 + $0x20] sm:$0xff]
        %v4341 = vld [vmem:[%s3451 + $0x30] sm:$0xff]
        %v4342 = vld [vmem:[%s3451 + $0x38] sm:$0xff]
        %v4343 = vld [vmem:[%s3451 + $0x48] sm:$0xff]
        %v4344 = vld [vmem:[%s3451 + $0x50] sm:$0xff]
        %v4345 = vld [vmem:[%s3451 + $0x60] sm:$0xff]
        %v4346 = vld [vmem:[%s3451 + $0x68] sm:$0xff]
        %v4347 = vld [vmem:[%s3451 + $0x78] sm:$0xff]
        %v4348 = vld [vmem:[%s3451 + $0x80] sm:$0xff]
        %v4349 = vld [vmem:[%s3451 + $0x90] sm:$0xff]
        %v4350 = vld [vmem:[%s3451 + $0x98] sm:$0xff]
        %v4351 = vld [vmem:[%s3451 + $0xa8] sm:$0xff]
        %v4352 = vld [vmem:[%s3451 + $0xb0] sm:$0xff]
        %v4353 = vld [vmem:[%s3451 + $0xc0] sm:$0xff]
        %v4354 = vld [vmem:[%s3451 + $0xc8] sm:$0xff]
        %v4355 = vld [vmem:[%s3451 + $0xd8] sm:$0xff]
        %v4356 = vld [vmem:[%s3451 + $0xe0] sm:$0xff]
        %v4357 = vld [vmem:[%s3451 + $0xf0] sm:$0xff]
        %v4358 = vld [vmem:[%s3451 + $0xf8] sm:$0xff]
        %v4359 = vld [vmem:[%s3451 + $0x108] sm:$0xff]
        %v4360 = vld [vmem:[%s3451 + $0x110] sm:$0xff]
        %v4361 = vld [vmem:[%s3451 + $0x120] sm:$0xff]
        %v4362 = vld [vmem:[%s3451 + $0x128] sm:$0xff]
        %v4363 = vld [vmem:[%s3451 + $0x138] sm:$0xff]
        %v4364 = vld [vmem:[%s3451 + $0x140] sm:$0xff]
        %v4365 = vld [vmem:[%s3451 + $0x150] sm:$0xff]
        %v4366 = vld [vmem:[%s3451 + $0x158] sm:$0xff]
        %v4367 = vld [vmem:[%s3451 + $0x168] sm:$0xff]
        %v4368 = vld [vmem:[%s3451 + $0x170] sm:$0xff]
        %s4369 = scalar_lea.vmem [#allocation9], 384
        %v4370 = vld [vmem:[%s4369] sm:$0xff]
        %v4371 = vld [vmem:[%s4369 + $0x8] sm:$0xff]
        %v4372 = vld [vmem:[%s4369 + $0x10] sm:$0xff]
        %v4373 = vld [vmem:[%s4369 + $0x18] sm:$0xff]
        %v4374 = vld [vmem:[%s4369 + $0x20] sm:$0xff]
        %v4375 = vld [vmem:[%s4369 + $0x28] sm:$0xff]
        %v4376 = vld [vmem:[%s4369 + $0x30] sm:$0xff]
        %v4377 = vld [vmem:[%s4369 + $0x38] sm:$0xff]
        %v4378 = vld [vmem:[%s4369 + $0x40] sm:$0xff]
        %v4379 = vld [vmem:[%s4369 + $0x48] sm:$0xff]
        %v4380 = vld [vmem:[%s4369 + $0x50] sm:$0xff]
        %v4381 = vld [vmem:[%s4369 + $0x58] sm:$0xff]
        %v4382 = vld [vmem:[%s4369 + $0x60] sm:$0xff]
        %v4383 = vld [vmem:[%s4369 + $0x68] sm:$0xff]
        %v4384 = vld [vmem:[%s4369 + $0x70] sm:$0xff]
        %v4385 = vld [vmem:[%s4369 + $0x78] sm:$0xff]
        %4386 = vmatprep.subr.mxu0 0.0
        %4387 = vmatpush1.msra.mxu0 %v4385
        %4388 = vmatprep.subr.mxu0 0.0
        %4389 = vmatpush1.msra.mxu0 %v4384
        %4390 = vmatprep.subr.mxu0 0.0
        %4391 = vmatpush1.msra.mxu0 %v4383
        %4392 = vmatprep.subr.mxu0 0.0
        %4393 = vmatpush1.msra.mxu0 %v4382
        %4394 = vmatprep.subr.mxu0 0.0
        %4395 = vmatpush1.msra.mxu0 %v4381
        %4396 = vmatprep.subr.mxu0 0.0
        %4397 = vmatpush1.msra.mxu0 %v4380
        %4398 = vmatprep.subr.mxu0 0.0
        %4399 = vmatpush1.msra.mxu0 %v4379
        %4400 = vmatprep.subr.mxu0 0.0
        %4401 = vmatpush1.msra.mxu0 %v4378
        %4402 = vmatprep.subr.mxu0 0.0
        %4403 = vmatpush1.msra.mxu0 %v4377
        %4404 = vmatprep.subr.mxu0 0.0
        %4405 = vmatpush1.msra.mxu0 %v4376
        %4406 = vmatprep.subr.mxu0 0.0
        %4407 = vmatpush1.msra.mxu0 %v4375
        %4408 = vmatprep.subr.mxu0 0.0
        %4409 = vmatpush1.msra.mxu0 %v4374
        %4410 = vmatprep.subr.mxu0 0.0
        %4411 = vmatpush1.msra.mxu0 %v4373
        %4412 = vmatprep.subr.mxu0 0.0
        %4413 = vmatpush1.msra.mxu0 %v4372
        %4414 = vmatprep.subr.mxu0 0.0
        %4415 = vmatpush1.msra.mxu0 %v4371
        %4416 = vmatprep.subr.mxu0 0.0
        %4417 = vmatpush1.msra.mxu0 %v4370
        %4418 = vmatprep.subr.mxu0 0.0
        %4419 = vmatpush2.msra.mxu0 0.0
        %4420 = vmatprep.subr.mxu0 0.0
        %4421 = vmatpush2.msra.mxu0 0.0
        %4422 = vmatprep.subr.mxu0 0.0
        %4423 = vmatpush2.msra.mxu0 0.0
        %4424 = vmatprep.subr.mxu0 0.0
        %4425 = vmatpush2.msra.mxu0 0.0
        %4426 = vmatprep.subr.mxu0 0.0
        %4427 = vmatpush2.msra.mxu0 0.0
        %4428 = vmatprep.subr.mxu0 0.0
        %4429 = vmatpush2.msra.mxu0 0.0
        %4430 = vmatprep.subr.mxu0 0.0
        %4431 = vmatpush2.msra.mxu0 0.0
        %4432 = vmatprep.subr.mxu0 0.0
        %4433 = vmatpush2.msra.mxu0 0.0
        %4434 = vmatprep.subr.mxu0 0.0
        %4435 = vmatpush2.msra.mxu0 0.0
        %4436 = vmatprep.subr.mxu0 0.0
        %4437 = vmatpush2.msra.mxu0 0.0
        %4438 = vmatprep.subr.mxu0 0.0
        %4439 = vmatpush2.msra.mxu0 0.0
        %4440 = vmatprep.subr.mxu0 0.0
        %4441 = vmatpush2.msra.mxu0 0.0
        %4442 = vmatprep.subr.mxu0 0.0
        %4443 = vmatpush2.msra.mxu0 0.0
        %4444 = vmatprep.subr.mxu0 0.0
        %4445 = vmatpush2.msra.mxu0 0.0
        %4446 = vmatprep.subr.mxu0 0.0
        %4447 = vmatpush2.msra.mxu0 0.0
        %4448 = vmatprep.subr.mxu0 0.0
        %4449 = vmatpush2.msra.mxu0 0.0
        %4450 = vmatprep.mubr.f32.mxu0 0.0
        %4451 = vmatmul.mubr.f32.gmra.mxu0 %v4337
        %v4452 = vpop.f32.mrf.mxu0
        %v4453 = vadd.f32 0.0, %v4452
        %v4454 = vpop.f32.mrf.mxu0
        %4455 = vmatprep.mubr.f32.mxu0 0.0
        %4456 = vmatmul.mubr.f32.gmra.mxu0 %v4338
        %v4457 = vpop.f32.mrf.mxu0
        %v4458 = vadd.f32 0.0, %v4457
        %v4459 = vpop.f32.mrf.mxu0
        %4460 = vmatprep.mubr.f32.mxu0 0.0
        %4461 = vmatmul.mubr.f32.gmra.mxu0 %v4339
        %v4462 = vpop.f32.mrf.mxu0
        %v4463 = vadd.f32 0.0, %v4462
        %v4464 = vpop.f32.mrf.mxu0
        %4465 = vmatprep.mubr.f32.mxu0 0.0
        %4466 = vmatmul.mubr.f32.gmra.mxu0 %v4340
        %v4467 = vpop.f32.mrf.mxu0
        %v4468 = vadd.f32 0.0, %v4467
        %v4469 = vpop.f32.mrf.mxu0
        %4470 = vmatprep.mubr.f32.mxu0 0.0
        %4471 = vmatmul.mubr.f32.gmra.mxu0 %v4341
        %v4472 = vpop.f32.mrf.mxu0
        %v4473 = vadd.f32 0.0, %v4472
        %v4474 = vpop.f32.mrf.mxu0
        %4475 = vmatprep.mubr.f32.mxu0 0.0
        %4476 = vmatmul.mubr.f32.gmra.mxu0 %v4342
        %v4477 = vpop.f32.mrf.mxu0
        %v4478 = vadd.f32 0.0, %v4477
        %v4479 = vpop.f32.mrf.mxu0
        %4480 = vmatprep.mubr.f32.mxu0 0.0
        %4481 = vmatmul.mubr.f32.gmra.mxu0 %v4343
        %v4482 = vpop.f32.mrf.mxu0
        %v4483 = vadd.f32 0.0, %v4482
        %v4484 = vpop.f32.mrf.mxu0
        %4485 = vmatprep.mubr.f32.mxu0 0.0
        %4486 = vmatmul.mubr.f32.gmra.mxu0 %v4344
        %v4487 = vpop.f32.mrf.mxu0
        %v4488 = vadd.f32 0.0, %v4487
        %v4489 = vpop.f32.mrf.mxu0
        %4490 = vmatprep.mubr.f32.mxu0 0.0
        %4491 = vmatmul.mubr.f32.gmra.mxu0 %v4345
        %v4492 = vpop.f32.mrf.mxu0
        %v4493 = vadd.f32 0.0, %v4492
        %v4494 = vpop.f32.mrf.mxu0
        %4495 = vmatprep.mubr.f32.mxu0 0.0
        %4496 = vmatmul.mubr.f32.gmra.mxu0 %v4346
        %v4497 = vpop.f32.mrf.mxu0
        %v4498 = vadd.f32 0.0, %v4497
        %v4499 = vpop.f32.mrf.mxu0
        %4500 = vmatprep.mubr.f32.mxu0 0.0
        %4501 = vmatmul.mubr.f32.gmra.mxu0 %v4347
        %v4502 = vpop.f32.mrf.mxu0
        %v4503 = vadd.f32 0.0, %v4502
        %v4504 = vpop.f32.mrf.mxu0
        %4505 = vmatprep.mubr.f32.mxu0 0.0
        %4506 = vmatmul.mubr.f32.gmra.mxu0 %v4348
        %v4507 = vpop.f32.mrf.mxu0
        %v4508 = vadd.f32 0.0, %v4507
        %v4509 = vpop.f32.mrf.mxu0
        %4510 = vmatprep.mubr.f32.mxu0 0.0
        %4511 = vmatmul.mubr.f32.gmra.mxu0 %v4349
        %v4512 = vpop.f32.mrf.mxu0
        %v4513 = vadd.f32 0.0, %v4512
        %v4514 = vpop.f32.mrf.mxu0
        %4515 = vmatprep.mubr.f32.mxu0 0.0
        %4516 = vmatmul.mubr.f32.gmra.mxu0 %v4350
        %v4517 = vpop.f32.mrf.mxu0
        %v4518 = vadd.f32 0.0, %v4517
        %v4519 = vpop.f32.mrf.mxu0
        %4520 = vmatprep.mubr.f32.mxu0 0.0
        %4521 = vmatmul.mubr.f32.gmra.mxu0 %v4351
        %v4522 = vpop.f32.mrf.mxu0
        %v4523 = vadd.f32 0.0, %v4522
        %v4524 = vpop.f32.mrf.mxu0
        %4525 = vmatprep.mubr.f32.mxu0 0.0
        %4526 = vmatmul.mubr.f32.gmra.mxu0 %v4352
        %v4527 = vpop.f32.mrf.mxu0
        %v4528 = vadd.f32 0.0, %v4527
        %v4529 = vpop.f32.mrf.mxu0
        %4530 = vmatprep.mubr.f32.mxu0 0.0
        %4531 = vmatmul.mubr.f32.gmra.mxu0 %v4353
        %v4532 = vpop.f32.mrf.mxu0
        %v4533 = vadd.f32 0.0, %v4532
        %v4534 = vpop.f32.mrf.mxu0
        %4535 = vmatprep.mubr.f32.mxu0 0.0
        %4536 = vmatmul.mubr.f32.gmra.mxu0 %v4354
        %v4537 = vpop.f32.mrf.mxu0
        %v4538 = vadd.f32 0.0, %v4537
        %v4539 = vpop.f32.mrf.mxu0
        %4540 = vmatprep.mubr.f32.mxu0 0.0
        %4541 = vmatmul.mubr.f32.gmra.mxu0 %v4355
        %v4542 = vpop.f32.mrf.mxu0
        %v4543 = vadd.f32 0.0, %v4542
        %v4544 = vpop.f32.mrf.mxu0
        %4545 = vmatprep.mubr.f32.mxu0 0.0
        %4546 = vmatmul.mubr.f32.gmra.mxu0 %v4356
        %v4547 = vpop.f32.mrf.mxu0
        %v4548 = vadd.f32 0.0, %v4547
        %v4549 = vpop.f32.mrf.mxu0
        %4550 = vmatprep.mubr.f32.mxu0 0.0
        %4551 = vmatmul.mubr.f32.gmra.mxu0 %v4357
        %v4552 = vpop.f32.mrf.mxu0
        %v4553 = vadd.f32 0.0, %v4552
        %v4554 = vpop.f32.mrf.mxu0
        %4555 = vmatprep.mubr.f32.mxu0 0.0
        %4556 = vmatmul.mubr.f32.gmra.mxu0 %v4358
        %v4557 = vpop.f32.mrf.mxu0
        %v4558 = vadd.f32 0.0, %v4557
        %v4559 = vpop.f32.mrf.mxu0
        %4560 = vmatprep.mubr.f32.mxu0 0.0
        %4561 = vmatmul.mubr.f32.gmra.mxu0 %v4359
        %v4562 = vpop.f32.mrf.mxu0
        %v4563 = vadd.f32 0.0, %v4562
        %v4564 = vpop.f32.mrf.mxu0
        %4565 = vmatprep.mubr.f32.mxu0 0.0
        %4566 = vmatmul.mubr.f32.gmra.mxu0 %v4360
        %v4567 = vpop.f32.mrf.mxu0
        %v4568 = vadd.f32 0.0, %v4567
        %v4569 = vpop.f32.mrf.mxu0
        %4570 = vmatprep.mubr.f32.mxu0 0.0
        %4571 = vmatmul.mubr.f32.gmra.mxu0 %v4361
        %v4572 = vpop.f32.mrf.mxu0
        %v4573 = vadd.f32 0.0, %v4572
        %v4574 = vpop.f32.mrf.mxu0
        %4575 = vmatprep.mubr.f32.mxu0 0.0
        %4576 = vmatmul.mubr.f32.gmra.mxu0 %v4362
        %v4577 = vpop.f32.mrf.mxu0
        %v4578 = vadd.f32 0.0, %v4577
        %v4579 = vpop.f32.mrf.mxu0
        %4580 = vmatprep.mubr.f32.mxu0 0.0
        %4581 = vmatmul.mubr.f32.gmra.mxu0 %v4363
        %v4582 = vpop.f32.mrf.mxu0
        %v4583 = vadd.f32 0.0, %v4582
        %v4584 = vpop.f32.mrf.mxu0
        %4585 = vmatprep.mubr.f32.mxu0 0.0
        %4586 = vmatmul.mubr.f32.gmra.mxu0 %v4364
        %v4587 = vpop.f32.mrf.mxu0
        %v4588 = vadd.f32 0.0, %v4587
        %v4589 = vpop.f32.mrf.mxu0
        %4590 = vmatprep.mubr.f32.mxu0 0.0
        %4591 = vmatmul.mubr.f32.gmra.mxu0 %v4365
        %v4592 = vpop.f32.mrf.mxu0
        %v4593 = vadd.f32 0.0, %v4592
        %v4594 = vpop.f32.mrf.mxu0
        %4595 = vmatprep.mubr.f32.mxu0 0.0
        %4596 = vmatmul.mubr.f32.gmra.mxu0 %v4366
        %v4597 = vpop.f32.mrf.mxu0
        %v4598 = vadd.f32 0.0, %v4597
        %v4599 = vpop.f32.mrf.mxu0
        %4600 = vmatprep.mubr.f32.mxu0 0.0
        %4601 = vmatmul.mubr.f32.gmra.mxu0 %v4367
        %v4602 = vpop.f32.mrf.mxu0
        %v4603 = vadd.f32 0.0, %v4602
        %v4604 = vpop.f32.mrf.mxu0
        %4605 = vmatprep.mubr.f32.mxu0 0.0
        %4606 = vmatmul.mubr.f32.gmra.mxu0 %v4368
        %v4607 = vpop.f32.mrf.mxu0
        %v4608 = vadd.f32 0.0, %v4607
        %v4609 = vpop.f32.mrf.mxu0
        %4610 = vdwg.mxu0
        %v4611 = vadd.f32 %v4305, %v4453
        %v4612 = vadd.f32 %v4306, %v4458
        %v4613 = vadd.f32 %v4307, %v4463
        %v4614 = vadd.f32 %v4308, %v4468
        %v4615 = vadd.f32 %v4309, %v4473
        %v4616 = vadd.f32 %v4310, %v4478
        %v4617 = vadd.f32 %v4311, %v4483
        %v4618 = vadd.f32 %v4312, %v4488
        %v4619 = vadd.f32 %v4313, %v4493
        %v4620 = vadd.f32 %v4314, %v4498
        %v4621 = vadd.f32 %v4315, %v4503
        %v4622 = vadd.f32 %v4316, %v4508
        %v4623 = vadd.f32 %v4317, %v4513
        %v4624 = vadd.f32 %v4318, %v4518
        %v4625 = vadd.f32 %v4319, %v4523
        %v4626 = vadd.f32 %v4320, %v4528
        %v4627 = vadd.f32 %v4321, %v4533
        %v4628 = vadd.f32 %v4322, %v4538
        %v4629 = vadd.f32 %v4323, %v4543
        %v4630 = vadd.f32 %v4324, %v4548
        %v4631 = vadd.f32 %v4325, %v4553
        %v4632 = vadd.f32 %v4326, %v4558
        %v4633 = vadd.f32 %v4327, %v4563
        %v4634 = vadd.f32 %v4328, %v4568
        %v4635 = vadd.f32 %v4329, %v4573
        %v4636 = vadd.f32 %v4330, %v4578
        %v4637 = vadd.f32 %v4331, %v4583
        %v4638 = vadd.f32 %v4332, %v4588
        %v4639 = vadd.f32 %v4333, %v4593
        %v4640 = vadd.f32 %v4334, %v4598
        %v4641 = vadd.f32 %v4335, %v4603
        %v4642 = vadd.f32 %v4336, %v4608
        %v4643 = vld [vmem:[%s3451 + $0x1] sm:$0xff]
        %v4644 = vld [vmem:[%s3451 + $0x9] sm:$0xff]
        %v4645 = vld [vmem:[%s3451 + $0x19] sm:$0xff]
        %v4646 = vld [vmem:[%s3451 + $0x21] sm:$0xff]
        %v4647 = vld [vmem:[%s3451 + $0x31] sm:$0xff]
        %v4648 = vld [vmem:[%s3451 + $0x39] sm:$0xff]
        %v4649 = vld [vmem:[%s3451 + $0x49] sm:$0xff]
        %v4650 = vld [vmem:[%s3451 + $0x51] sm:$0xff]
        %v4651 = vld [vmem:[%s3451 + $0x61] sm:$0xff]
        %v4652 = vld [vmem:[%s3451 + $0x69] sm:$0xff]
        %v4653 = vld [vmem:[%s3451 + $0x79] sm:$0xff]
        %v4654 = vld [vmem:[%s3451 + $0x81] sm:$0xff]
        %v4655 = vld [vmem:[%s3451 + $0x91] sm:$0xff]
        %v4656 = vld [vmem:[%s3451 + $0x99] sm:$0xff]
        %v4657 = vld [vmem:[%s3451 + $0xa9] sm:$0xff]
        %v4658 = vld [vmem:[%s3451 + $0xb1] sm:$0xff]
        %v4659 = vld [vmem:[%s3451 + $0xc1] sm:$0xff]
        %v4660 = vld [vmem:[%s3451 + $0xc9] sm:$0xff]
        %v4661 = vld [vmem:[%s3451 + $0xd9] sm:$0xff]
        %v4662 = vld [vmem:[%s3451 + $0xe1] sm:$0xff]
        %v4663 = vld [vmem:[%s3451 + $0xf1] sm:$0xff]
        %v4664 = vld [vmem:[%s3451 + $0xf9] sm:$0xff]
        %v4665 = vld [vmem:[%s3451 + $0x109] sm:$0xff]
        %v4666 = vld [vmem:[%s3451 + $0x111] sm:$0xff]
        %v4667 = vld [vmem:[%s3451 + $0x121] sm:$0xff]
        %v4668 = vld [vmem:[%s3451 + $0x129] sm:$0xff]
        %v4669 = vld [vmem:[%s3451 + $0x139] sm:$0xff]
        %v4670 = vld [vmem:[%s3451 + $0x141] sm:$0xff]
        %v4671 = vld [vmem:[%s3451 + $0x151] sm:$0xff]
        %v4672 = vld [vmem:[%s3451 + $0x159] sm:$0xff]
        %v4673 = vld [vmem:[%s3451 + $0x169] sm:$0xff]
        %v4674 = vld [vmem:[%s3451 + $0x171] sm:$0xff]
        %s4675 = scalar_lea.vmem [#allocation9], 512
        %v4676 = vld [vmem:[%s4675] sm:$0xff]
        %v4677 = vld [vmem:[%s4675 + $0x8] sm:$0xff]
        %v4678 = vld [vmem:[%s4675 + $0x10] sm:$0xff]
        %v4679 = vld [vmem:[%s4675 + $0x18] sm:$0xff]
        %v4680 = vld [vmem:[%s4675 + $0x20] sm:$0xff]
        %v4681 = vld [vmem:[%s4675 + $0x28] sm:$0xff]
        %v4682 = vld [vmem:[%s4675 + $0x30] sm:$0xff]
        %v4683 = vld [vmem:[%s4675 + $0x38] sm:$0xff]
        %v4684 = vld [vmem:[%s4675 + $0x40] sm:$0xff]
        %v4685 = vld [vmem:[%s4675 + $0x48] sm:$0xff]
        %v4686 = vld [vmem:[%s4675 + $0x50] sm:$0xff]
        %v4687 = vld [vmem:[%s4675 + $0x58] sm:$0xff]
        %v4688 = vld [vmem:[%s4675 + $0x60] sm:$0xff]
        %v4689 = vld [vmem:[%s4675 + $0x68] sm:$0xff]
        %v4690 = vld [vmem:[%s4675 + $0x70] sm:$0xff]
        %v4691 = vld [vmem:[%s4675 + $0x78] sm:$0xff]
        %4692 = vmatprep.subr.mxu0 0.0
        %4693 = vmatpush1.msra.mxu0 %v4691
        %4694 = vmatprep.subr.mxu0 0.0
        %4695 = vmatpush1.msra.mxu0 %v4690
        %4696 = vmatprep.subr.mxu0 0.0
        %4697 = vmatpush1.msra.mxu0 %v4689
        %4698 = vmatprep.subr.mxu0 0.0
        %4699 = vmatpush1.msra.mxu0 %v4688
        %4700 = vmatprep.subr.mxu0 0.0
        %4701 = vmatpush1.msra.mxu0 %v4687
        %4702 = vmatprep.subr.mxu0 0.0
        %4703 = vmatpush1.msra.mxu0 %v4686
        %4704 = vmatprep.subr.mxu0 0.0
        %4705 = vmatpush1.msra.mxu0 %v4685
        %4706 = vmatprep.subr.mxu0 0.0
        %4707 = vmatpush1.msra.mxu0 %v4684
        %4708 = vmatprep.subr.mxu0 0.0
        %4709 = vmatpush1.msra.mxu0 %v4683
        %4710 = vmatprep.subr.mxu0 0.0
        %4711 = vmatpush1.msra.mxu0 %v4682
        %4712 = vmatprep.subr.mxu0 0.0
        %4713 = vmatpush1.msra.mxu0 %v4681
        %4714 = vmatprep.subr.mxu0 0.0
        %4715 = vmatpush1.msra.mxu0 %v4680
        %4716 = vmatprep.subr.mxu0 0.0
        %4717 = vmatpush1.msra.mxu0 %v4679
        %4718 = vmatprep.subr.mxu0 0.0
        %4719 = vmatpush1.msra.mxu0 %v4678
        %4720 = vmatprep.subr.mxu0 0.0
        %4721 = vmatpush1.msra.mxu0 %v4677
        %4722 = vmatprep.subr.mxu0 0.0
        %4723 = vmatpush1.msra.mxu0 %v4676
        %4724 = vmatprep.subr.mxu0 0.0
        %4725 = vmatpush2.msra.mxu0 0.0
        %4726 = vmatprep.subr.mxu0 0.0
        %4727 = vmatpush2.msra.mxu0 0.0
        %4728 = vmatprep.subr.mxu0 0.0
        %4729 = vmatpush2.msra.mxu0 0.0
        %4730 = vmatprep.subr.mxu0 0.0
        %4731 = vmatpush2.msra.mxu0 0.0
        %4732 = vmatprep.subr.mxu0 0.0
        %4733 = vmatpush2.msra.mxu0 0.0
        %4734 = vmatprep.subr.mxu0 0.0
        %4735 = vmatpush2.msra.mxu0 0.0
        %4736 = vmatprep.subr.mxu0 0.0
        %4737 = vmatpush2.msra.mxu0 0.0
        %4738 = vmatprep.subr.mxu0 0.0
        %4739 = vmatpush2.msra.mxu0 0.0
        %4740 = vmatprep.subr.mxu0 0.0
        %4741 = vmatpush2.msra.mxu0 0.0
        %4742 = vmatprep.subr.mxu0 0.0
        %4743 = vmatpush2.msra.mxu0 0.0
        %4744 = vmatprep.subr.mxu0 0.0
        %4745 = vmatpush2.msra.mxu0 0.0
        %4746 = vmatprep.subr.mxu0 0.0
        %4747 = vmatpush2.msra.mxu0 0.0
        %4748 = vmatprep.subr.mxu0 0.0
        %4749 = vmatpush2.msra.mxu0 0.0
        %4750 = vmatprep.subr.mxu0 0.0
        %4751 = vmatpush2.msra.mxu0 0.0
        %4752 = vmatprep.subr.mxu0 0.0
        %4753 = vmatpush2.msra.mxu0 0.0
        %4754 = vmatprep.subr.mxu0 0.0
        %4755 = vmatpush2.msra.mxu0 0.0
        %4756 = vmatprep.mubr.f32.mxu0 0.0
        %4757 = vmatmul.mubr.f32.gmra.mxu0 %v4643
        %v4758 = vpop.f32.mrf.mxu0
        %v4759 = vadd.f32 0.0, %v4758
        %v4760 = vpop.f32.mrf.mxu0
        %4761 = vmatprep.mubr.f32.mxu0 0.0
        %4762 = vmatmul.mubr.f32.gmra.mxu0 %v4644
        %v4763 = vpop.f32.mrf.mxu0
        %v4764 = vadd.f32 0.0, %v4763
        %v4765 = vpop.f32.mrf.mxu0
        %4766 = vmatprep.mubr.f32.mxu0 0.0
        %4767 = vmatmul.mubr.f32.gmra.mxu0 %v4645
        %v4768 = vpop.f32.mrf.mxu0
        %v4769 = vadd.f32 0.0, %v4768
        %v4770 = vpop.f32.mrf.mxu0
        %4771 = vmatprep.mubr.f32.mxu0 0.0
        %4772 = vmatmul.mubr.f32.gmra.mxu0 %v4646
        %v4773 = vpop.f32.mrf.mxu0
        %v4774 = vadd.f32 0.0, %v4773
        %v4775 = vpop.f32.mrf.mxu0
        %4776 = vmatprep.mubr.f32.mxu0 0.0
        %4777 = vmatmul.mubr.f32.gmra.mxu0 %v4647
        %v4778 = vpop.f32.mrf.mxu0
        %v4779 = vadd.f32 0.0, %v4778
        %v4780 = vpop.f32.mrf.mxu0
        %4781 = vmatprep.mubr.f32.mxu0 0.0
        %4782 = vmatmul.mubr.f32.gmra.mxu0 %v4648
        %v4783 = vpop.f32.mrf.mxu0
        %v4784 = vadd.f32 0.0, %v4783
        %v4785 = vpop.f32.mrf.mxu0
        %4786 = vmatprep.mubr.f32.mxu0 0.0
        %4787 = vmatmul.mubr.f32.gmra.mxu0 %v4649
        %v4788 = vpop.f32.mrf.mxu0
        %v4789 = vadd.f32 0.0, %v4788
        %v4790 = vpop.f32.mrf.mxu0
        %4791 = vmatprep.mubr.f32.mxu0 0.0
        %4792 = vmatmul.mubr.f32.gmra.mxu0 %v4650
        %v4793 = vpop.f32.mrf.mxu0
        %v4794 = vadd.f32 0.0, %v4793
        %v4795 = vpop.f32.mrf.mxu0
        %4796 = vmatprep.mubr.f32.mxu0 0.0
        %4797 = vmatmul.mubr.f32.gmra.mxu0 %v4651
        %v4798 = vpop.f32.mrf.mxu0
        %v4799 = vadd.f32 0.0, %v4798
        %v4800 = vpop.f32.mrf.mxu0
        %4801 = vmatprep.mubr.f32.mxu0 0.0
        %4802 = vmatmul.mubr.f32.gmra.mxu0 %v4652
        %v4803 = vpop.f32.mrf.mxu0
        %v4804 = vadd.f32 0.0, %v4803
        %v4805 = vpop.f32.mrf.mxu0
        %4806 = vmatprep.mubr.f32.mxu0 0.0
        %4807 = vmatmul.mubr.f32.gmra.mxu0 %v4653
        %v4808 = vpop.f32.mrf.mxu0
        %v4809 = vadd.f32 0.0, %v4808
        %v4810 = vpop.f32.mrf.mxu0
        %4811 = vmatprep.mubr.f32.mxu0 0.0
        %4812 = vmatmul.mubr.f32.gmra.mxu0 %v4654
        %v4813 = vpop.f32.mrf.mxu0
        %v4814 = vadd.f32 0.0, %v4813
        %v4815 = vpop.f32.mrf.mxu0
        %4816 = vmatprep.mubr.f32.mxu0 0.0
        %4817 = vmatmul.mubr.f32.gmra.mxu0 %v4655
        %v4818 = vpop.f32.mrf.mxu0
        %v4819 = vadd.f32 0.0, %v4818
        %v4820 = vpop.f32.mrf.mxu0
        %4821 = vmatprep.mubr.f32.mxu0 0.0
        %4822 = vmatmul.mubr.f32.gmra.mxu0 %v4656
        %v4823 = vpop.f32.mrf.mxu0
        %v4824 = vadd.f32 0.0, %v4823
        %v4825 = vpop.f32.mrf.mxu0
        %4826 = vmatprep.mubr.f32.mxu0 0.0
        %4827 = vmatmul.mubr.f32.gmra.mxu0 %v4657
        %v4828 = vpop.f32.mrf.mxu0
        %v4829 = vadd.f32 0.0, %v4828
        %v4830 = vpop.f32.mrf.mxu0
        %4831 = vmatprep.mubr.f32.mxu0 0.0
        %4832 = vmatmul.mubr.f32.gmra.mxu0 %v4658
        %v4833 = vpop.f32.mrf.mxu0
        %v4834 = vadd.f32 0.0, %v4833
        %v4835 = vpop.f32.mrf.mxu0
        %4836 = vmatprep.mubr.f32.mxu0 0.0
        %4837 = vmatmul.mubr.f32.gmra.mxu0 %v4659
        %v4838 = vpop.f32.mrf.mxu0
        %v4839 = vadd.f32 0.0, %v4838
        %v4840 = vpop.f32.mrf.mxu0
        %4841 = vmatprep.mubr.f32.mxu0 0.0
        %4842 = vmatmul.mubr.f32.gmra.mxu0 %v4660
        %v4843 = vpop.f32.mrf.mxu0
        %v4844 = vadd.f32 0.0, %v4843
        %v4845 = vpop.f32.mrf.mxu0
        %4846 = vmatprep.mubr.f32.mxu0 0.0
        %4847 = vmatmul.mubr.f32.gmra.mxu0 %v4661
        %v4848 = vpop.f32.mrf.mxu0
        %v4849 = vadd.f32 0.0, %v4848
        %v4850 = vpop.f32.mrf.mxu0
        %4851 = vmatprep.mubr.f32.mxu0 0.0
        %4852 = vmatmul.mubr.f32.gmra.mxu0 %v4662
        %v4853 = vpop.f32.mrf.mxu0
        %v4854 = vadd.f32 0.0, %v4853
        %v4855 = vpop.f32.mrf.mxu0
        %4856 = vmatprep.mubr.f32.mxu0 0.0
        %4857 = vmatmul.mubr.f32.gmra.mxu0 %v4663
        %v4858 = vpop.f32.mrf.mxu0
        %v4859 = vadd.f32 0.0, %v4858
        %v4860 = vpop.f32.mrf.mxu0
        %4861 = vmatprep.mubr.f32.mxu0 0.0
        %4862 = vmatmul.mubr.f32.gmra.mxu0 %v4664
        %v4863 = vpop.f32.mrf.mxu0
        %v4864 = vadd.f32 0.0, %v4863
        %v4865 = vpop.f32.mrf.mxu0
        %4866 = vmatprep.mubr.f32.mxu0 0.0
        %4867 = vmatmul.mubr.f32.gmra.mxu0 %v4665
        %v4868 = vpop.f32.mrf.mxu0
        %v4869 = vadd.f32 0.0, %v4868
        %v4870 = vpop.f32.mrf.mxu0
        %4871 = vmatprep.mubr.f32.mxu0 0.0
        %4872 = vmatmul.mubr.f32.gmra.mxu0 %v4666
        %v4873 = vpop.f32.mrf.mxu0
        %v4874 = vadd.f32 0.0, %v4873
        %v4875 = vpop.f32.mrf.mxu0
        %4876 = vmatprep.mubr.f32.mxu0 0.0
        %4877 = vmatmul.mubr.f32.gmra.mxu0 %v4667
        %v4878 = vpop.f32.mrf.mxu0
        %v4879 = vadd.f32 0.0, %v4878
        %v4880 = vpop.f32.mrf.mxu0
        %4881 = vmatprep.mubr.f32.mxu0 0.0
        %4882 = vmatmul.mubr.f32.gmra.mxu0 %v4668
        %v4883 = vpop.f32.mrf.mxu0
        %v4884 = vadd.f32 0.0, %v4883
        %v4885 = vpop.f32.mrf.mxu0
        %4886 = vmatprep.mubr.f32.mxu0 0.0
        %4887 = vmatmul.mubr.f32.gmra.mxu0 %v4669
        %v4888 = vpop.f32.mrf.mxu0
        %v4889 = vadd.f32 0.0, %v4888
        %v4890 = vpop.f32.mrf.mxu0
        %4891 = vmatprep.mubr.f32.mxu0 0.0
        %4892 = vmatmul.mubr.f32.gmra.mxu0 %v4670
        %v4893 = vpop.f32.mrf.mxu0
        %v4894 = vadd.f32 0.0, %v4893
        %v4895 = vpop.f32.mrf.mxu0
        %4896 = vmatprep.mubr.f32.mxu0 0.0
        %4897 = vmatmul.mubr.f32.gmra.mxu0 %v4671
        %v4898 = vpop.f32.mrf.mxu0
        %v4899 = vadd.f32 0.0, %v4898
        %v4900 = vpop.f32.mrf.mxu0
        %4901 = vmatprep.mubr.f32.mxu0 0.0
        %4902 = vmatmul.mubr.f32.gmra.mxu0 %v4672
        %v4903 = vpop.f32.mrf.mxu0
        %v4904 = vadd.f32 0.0, %v4903
        %v4905 = vpop.f32.mrf.mxu0
        %4906 = vmatprep.mubr.f32.mxu0 0.0
        %4907 = vmatmul.mubr.f32.gmra.mxu0 %v4673
        %v4908 = vpop.f32.mrf.mxu0
        %v4909 = vadd.f32 0.0, %v4908
        %v4910 = vpop.f32.mrf.mxu0
        %4911 = vmatprep.mubr.f32.mxu0 0.0
        %4912 = vmatmul.mubr.f32.gmra.mxu0 %v4674
        %v4913 = vpop.f32.mrf.mxu0
        %v4914 = vadd.f32 0.0, %v4913
        %v4915 = vpop.f32.mrf.mxu0
        %4916 = vdwg.mxu0
        %v4917 = vadd.f32 %v4611, %v4759
        %v4918 = vadd.f32 %v4612, %v4764
        %v4919 = vadd.f32 %v4613, %v4769
        %v4920 = vadd.f32 %v4614, %v4774
        %v4921 = vadd.f32 %v4615, %v4779
        %v4922 = vadd.f32 %v4616, %v4784
        %v4923 = vadd.f32 %v4617, %v4789
        %v4924 = vadd.f32 %v4618, %v4794
        %v4925 = vadd.f32 %v4619, %v4799
        %v4926 = vadd.f32 %v4620, %v4804
        %v4927 = vadd.f32 %v4621, %v4809
        %v4928 = vadd.f32 %v4622, %v4814
        %v4929 = vadd.f32 %v4623, %v4819
        %v4930 = vadd.f32 %v4624, %v4824
        %v4931 = vadd.f32 %v4625, %v4829
        %v4932 = vadd.f32 %v4626, %v4834
        %v4933 = vadd.f32 %v4627, %v4839
        %v4934 = vadd.f32 %v4628, %v4844
        %v4935 = vadd.f32 %v4629, %v4849
        %v4936 = vadd.f32 %v4630, %v4854
        %v4937 = vadd.f32 %v4631, %v4859
        %v4938 = vadd.f32 %v4632, %v4864
        %v4939 = vadd.f32 %v4633, %v4869
        %v4940 = vadd.f32 %v4634, %v4874
        %v4941 = vadd.f32 %v4635, %v4879
        %v4942 = vadd.f32 %v4636, %v4884
        %v4943 = vadd.f32 %v4637, %v4889
        %v4944 = vadd.f32 %v4638, %v4894
        %v4945 = vadd.f32 %v4639, %v4899
        %v4946 = vadd.f32 %v4640, %v4904
        %v4947 = vadd.f32 %v4641, %v4909
        %v4948 = vadd.f32 %v4642, %v4914
        %v4949 = vld [vmem:[%s3451 + $0x2] sm:$0xff]
        %v4950 = vld [vmem:[%s3451 + $0xa] sm:$0xff]
        %v4951 = vld [vmem:[%s3451 + $0x1a] sm:$0xff]
        %v4952 = vld [vmem:[%s3451 + $0x22] sm:$0xff]
        %v4953 = vld [vmem:[%s3451 + $0x32] sm:$0xff]
        %v4954 = vld [vmem:[%s3451 + $0x3a] sm:$0xff]
        %v4955 = vld [vmem:[%s3451 + $0x4a] sm:$0xff]
        %v4956 = vld [vmem:[%s3451 + $0x52] sm:$0xff]
        %v4957 = vld [vmem:[%s3451 + $0x62] sm:$0xff]
        %v4958 = vld [vmem:[%s3451 + $0x6a] sm:$0xff]
        %v4959 = vld [vmem:[%s3451 + $0x7a] sm:$0xff]
        %v4960 = vld [vmem:[%s3451 + $0x82] sm:$0xff]
        %v4961 = vld [vmem:[%s3451 + $0x92] sm:$0xff]
        %v4962 = vld [vmem:[%s3451 + $0x9a] sm:$0xff]
        %v4963 = vld [vmem:[%s3451 + $0xaa] sm:$0xff]
        %v4964 = vld [vmem:[%s3451 + $0xb2] sm:$0xff]
        %v4965 = vld [vmem:[%s3451 + $0xc2] sm:$0xff]
        %v4966 = vld [vmem:[%s3451 + $0xca] sm:$0xff]
        %v4967 = vld [vmem:[%s3451 + $0xda] sm:$0xff]
        %v4968 = vld [vmem:[%s3451 + $0xe2] sm:$0xff]
        %v4969 = vld [vmem:[%s3451 + $0xf2] sm:$0xff]
        %v4970 = vld [vmem:[%s3451 + $0xfa] sm:$0xff]
        %v4971 = vld [vmem:[%s3451 + $0x10a] sm:$0xff]
        %v4972 = vld [vmem:[%s3451 + $0x112] sm:$0xff]
        %v4973 = vld [vmem:[%s3451 + $0x122] sm:$0xff]
        %v4974 = vld [vmem:[%s3451 + $0x12a] sm:$0xff]
        %v4975 = vld [vmem:[%s3451 + $0x13a] sm:$0xff]
        %v4976 = vld [vmem:[%s3451 + $0x142] sm:$0xff]
        %v4977 = vld [vmem:[%s3451 + $0x152] sm:$0xff]
        %v4978 = vld [vmem:[%s3451 + $0x15a] sm:$0xff]
        %v4979 = vld [vmem:[%s3451 + $0x16a] sm:$0xff]
        %v4980 = vld [vmem:[%s3451 + $0x172] sm:$0xff]
        %s4981 = scalar_lea.vmem [#allocation9], 640
        %v4982 = vld [vmem:[%s4981] sm:$0xff]
        %v4983 = vld [vmem:[%s4981 + $0x8] sm:$0xff]
        %v4984 = vld [vmem:[%s4981 + $0x10] sm:$0xff]
        %v4985 = vld [vmem:[%s4981 + $0x18] sm:$0xff]
        %v4986 = vld [vmem:[%s4981 + $0x20] sm:$0xff]
        %v4987 = vld [vmem:[%s4981 + $0x28] sm:$0xff]
        %v4988 = vld [vmem:[%s4981 + $0x30] sm:$0xff]
        %v4989 = vld [vmem:[%s4981 + $0x38] sm:$0xff]
        %v4990 = vld [vmem:[%s4981 + $0x40] sm:$0xff]
        %v4991 = vld [vmem:[%s4981 + $0x48] sm:$0xff]
        %v4992 = vld [vmem:[%s4981 + $0x50] sm:$0xff]
        %v4993 = vld [vmem:[%s4981 + $0x58] sm:$0xff]
        %v4994 = vld [vmem:[%s4981 + $0x60] sm:$0xff]
        %v4995 = vld [vmem:[%s4981 + $0x68] sm:$0xff]
        %v4996 = vld [vmem:[%s4981 + $0x70] sm:$0xff]
        %v4997 = vld [vmem:[%s4981 + $0x78] sm:$0xff]
        %4998 = vmatprep.subr.mxu0 0.0
        %4999 = vmatpush1.msra.mxu0 %v4997
        %5000 = vmatprep.subr.mxu0 0.0
        %5001 = vmatpush1.msra.mxu0 %v4996
        %5002 = vmatprep.subr.mxu0 0.0
        %5003 = vmatpush1.msra.mxu0 %v4995
        %5004 = vmatprep.subr.mxu0 0.0
        %5005 = vmatpush1.msra.mxu0 %v4994
        %5006 = vmatprep.subr.mxu0 0.0
        %5007 = vmatpush1.msra.mxu0 %v4993
        %5008 = vmatprep.subr.mxu0 0.0
        %5009 = vmatpush1.msra.mxu0 %v4992
        %5010 = vmatprep.subr.mxu0 0.0
        %5011 = vmatpush1.msra.mxu0 %v4991
        %5012 = vmatprep.subr.mxu0 0.0
        %5013 = vmatpush1.msra.mxu0 %v4990
        %5014 = vmatprep.subr.mxu0 0.0
        %5015 = vmatpush1.msra.mxu0 %v4989
        %5016 = vmatprep.subr.mxu0 0.0
        %5017 = vmatpush1.msra.mxu0 %v4988
        %5018 = vmatprep.subr.mxu0 0.0
        %5019 = vmatpush1.msra.mxu0 %v4987
        %5020 = vmatprep.subr.mxu0 0.0
        %5021 = vmatpush1.msra.mxu0 %v4986
        %5022 = vmatprep.subr.mxu0 0.0
        %5023 = vmatpush1.msra.mxu0 %v4985
        %5024 = vmatprep.subr.mxu0 0.0
        %5025 = vmatpush1.msra.mxu0 %v4984
        %5026 = vmatprep.subr.mxu0 0.0
        %5027 = vmatpush1.msra.mxu0 %v4983
        %5028 = vmatprep.subr.mxu0 0.0
        %5029 = vmatpush1.msra.mxu0 %v4982
        %5030 = vmatprep.subr.mxu0 0.0
        %5031 = vmatpush2.msra.mxu0 0.0
        %5032 = vmatprep.subr.mxu0 0.0
        %5033 = vmatpush2.msra.mxu0 0.0
        %5034 = vmatprep.subr.mxu0 0.0
        %5035 = vmatpush2.msra.mxu0 0.0
        %5036 = vmatprep.subr.mxu0 0.0
        %5037 = vmatpush2.msra.mxu0 0.0
        %5038 = vmatprep.subr.mxu0 0.0
        %5039 = vmatpush2.msra.mxu0 0.0
        %5040 = vmatprep.subr.mxu0 0.0
        %5041 = vmatpush2.msra.mxu0 0.0
        %5042 = vmatprep.subr.mxu0 0.0
        %5043 = vmatpush2.msra.mxu0 0.0
        %5044 = vmatprep.subr.mxu0 0.0
        %5045 = vmatpush2.msra.mxu0 0.0
        %5046 = vmatprep.subr.mxu0 0.0
        %5047 = vmatpush2.msra.mxu0 0.0
        %5048 = vmatprep.subr.mxu0 0.0
        %5049 = vmatpush2.msra.mxu0 0.0
        %5050 = vmatprep.subr.mxu0 0.0
        %5051 = vmatpush2.msra.mxu0 0.0
        %5052 = vmatprep.subr.mxu0 0.0
        %5053 = vmatpush2.msra.mxu0 0.0
        %5054 = vmatprep.subr.mxu0 0.0
        %5055 = vmatpush2.msra.mxu0 0.0
        %5056 = vmatprep.subr.mxu0 0.0
        %5057 = vmatpush2.msra.mxu0 0.0
        %5058 = vmatprep.subr.mxu0 0.0
        %5059 = vmatpush2.msra.mxu0 0.0
        %5060 = vmatprep.subr.mxu0 0.0
        %5061 = vmatpush2.msra.mxu0 0.0
        %5062 = vmatprep.mubr.f32.mxu0 0.0
        %5063 = vmatmul.mubr.f32.gmra.mxu0 %v4949
        %v5064 = vpop.f32.mrf.mxu0
        %v5065 = vadd.f32 0.0, %v5064
        %v5066 = vpop.f32.mrf.mxu0
        %5067 = vmatprep.mubr.f32.mxu0 0.0
        %5068 = vmatmul.mubr.f32.gmra.mxu0 %v4950
        %v5069 = vpop.f32.mrf.mxu0
        %v5070 = vadd.f32 0.0, %v5069
        %v5071 = vpop.f32.mrf.mxu0
        %5072 = vmatprep.mubr.f32.mxu0 0.0
        %5073 = vmatmul.mubr.f32.gmra.mxu0 %v4951
        %v5074 = vpop.f32.mrf.mxu0
        %v5075 = vadd.f32 0.0, %v5074
        %v5076 = vpop.f32.mrf.mxu0
        %5077 = vmatprep.mubr.f32.mxu0 0.0
        %5078 = vmatmul.mubr.f32.gmra.mxu0 %v4952
        %v5079 = vpop.f32.mrf.mxu0
        %v5080 = vadd.f32 0.0, %v5079
        %v5081 = vpop.f32.mrf.mxu0
        %5082 = vmatprep.mubr.f32.mxu0 0.0
        %5083 = vmatmul.mubr.f32.gmra.mxu0 %v4953
        %v5084 = vpop.f32.mrf.mxu0
        %v5085 = vadd.f32 0.0, %v5084
        %v5086 = vpop.f32.mrf.mxu0
        %5087 = vmatprep.mubr.f32.mxu0 0.0
        %5088 = vmatmul.mubr.f32.gmra.mxu0 %v4954
        %v5089 = vpop.f32.mrf.mxu0
        %v5090 = vadd.f32 0.0, %v5089
        %v5091 = vpop.f32.mrf.mxu0
        %5092 = vmatprep.mubr.f32.mxu0 0.0
        %5093 = vmatmul.mubr.f32.gmra.mxu0 %v4955
        %v5094 = vpop.f32.mrf.mxu0
        %v5095 = vadd.f32 0.0, %v5094
        %v5096 = vpop.f32.mrf.mxu0
        %5097 = vmatprep.mubr.f32.mxu0 0.0
        %5098 = vmatmul.mubr.f32.gmra.mxu0 %v4956
        %v5099 = vpop.f32.mrf.mxu0
        %v5100 = vadd.f32 0.0, %v5099
        %v5101 = vpop.f32.mrf.mxu0
        %5102 = vmatprep.mubr.f32.mxu0 0.0
        %5103 = vmatmul.mubr.f32.gmra.mxu0 %v4957
        %v5104 = vpop.f32.mrf.mxu0
        %v5105 = vadd.f32 0.0, %v5104
        %v5106 = vpop.f32.mrf.mxu0
        %5107 = vmatprep.mubr.f32.mxu0 0.0
        %5108 = vmatmul.mubr.f32.gmra.mxu0 %v4958
        %v5109 = vpop.f32.mrf.mxu0
        %v5110 = vadd.f32 0.0, %v5109
        %v5111 = vpop.f32.mrf.mxu0
        %5112 = vmatprep.mubr.f32.mxu0 0.0
        %5113 = vmatmul.mubr.f32.gmra.mxu0 %v4959
        %v5114 = vpop.f32.mrf.mxu0
        %v5115 = vadd.f32 0.0, %v5114
        %v5116 = vpop.f32.mrf.mxu0
        %5117 = vmatprep.mubr.f32.mxu0 0.0
        %5118 = vmatmul.mubr.f32.gmra.mxu0 %v4960
        %v5119 = vpop.f32.mrf.mxu0
        %v5120 = vadd.f32 0.0, %v5119
        %v5121 = vpop.f32.mrf.mxu0
        %5122 = vmatprep.mubr.f32.mxu0 0.0
        %5123 = vmatmul.mubr.f32.gmra.mxu0 %v4961
        %v5124 = vpop.f32.mrf.mxu0
        %v5125 = vadd.f32 0.0, %v5124
        %v5126 = vpop.f32.mrf.mxu0
        %5127 = vmatprep.mubr.f32.mxu0 0.0
        %5128 = vmatmul.mubr.f32.gmra.mxu0 %v4962
        %v5129 = vpop.f32.mrf.mxu0
        %v5130 = vadd.f32 0.0, %v5129
        %v5131 = vpop.f32.mrf.mxu0
        %5132 = vmatprep.mubr.f32.mxu0 0.0
        %5133 = vmatmul.mubr.f32.gmra.mxu0 %v4963
        %v5134 = vpop.f32.mrf.mxu0
        %v5135 = vadd.f32 0.0, %v5134
        %v5136 = vpop.f32.mrf.mxu0
        %5137 = vmatprep.mubr.f32.mxu0 0.0
        %5138 = vmatmul.mubr.f32.gmra.mxu0 %v4964
        %v5139 = vpop.f32.mrf.mxu0
        %v5140 = vadd.f32 0.0, %v5139
        %v5141 = vpop.f32.mrf.mxu0
        %5142 = vmatprep.mubr.f32.mxu0 0.0
        %5143 = vmatmul.mubr.f32.gmra.mxu0 %v4965
        %v5144 = vpop.f32.mrf.mxu0
        %v5145 = vadd.f32 0.0, %v5144
        %v5146 = vpop.f32.mrf.mxu0
        %5147 = vmatprep.mubr.f32.mxu0 0.0
        %5148 = vmatmul.mubr.f32.gmra.mxu0 %v4966
        %v5149 = vpop.f32.mrf.mxu0
        %v5150 = vadd.f32 0.0, %v5149
        %v5151 = vpop.f32.mrf.mxu0
        %5152 = vmatprep.mubr.f32.mxu0 0.0
        %5153 = vmatmul.mubr.f32.gmra.mxu0 %v4967
        %v5154 = vpop.f32.mrf.mxu0
        %v5155 = vadd.f32 0.0, %v5154
        %v5156 = vpop.f32.mrf.mxu0
        %5157 = vmatprep.mubr.f32.mxu0 0.0
        %5158 = vmatmul.mubr.f32.gmra.mxu0 %v4968
        %v5159 = vpop.f32.mrf.mxu0
        %v5160 = vadd.f32 0.0, %v5159
        %v5161 = vpop.f32.mrf.mxu0
        %5162 = vmatprep.mubr.f32.mxu0 0.0
        %5163 = vmatmul.mubr.f32.gmra.mxu0 %v4969
        %v5164 = vpop.f32.mrf.mxu0
        %v5165 = vadd.f32 0.0, %v5164
        %v5166 = vpop.f32.mrf.mxu0
        %5167 = vmatprep.mubr.f32.mxu0 0.0
        %5168 = vmatmul.mubr.f32.gmra.mxu0 %v4970
        %v5169 = vpop.f32.mrf.mxu0
        %v5170 = vadd.f32 0.0, %v5169
        %v5171 = vpop.f32.mrf.mxu0
        %5172 = vmatprep.mubr.f32.mxu0 0.0
        %5173 = vmatmul.mubr.f32.gmra.mxu0 %v4971
        %v5174 = vpop.f32.mrf.mxu0
        %v5175 = vadd.f32 0.0, %v5174
        %v5176 = vpop.f32.mrf.mxu0
        %5177 = vmatprep.mubr.f32.mxu0 0.0
        %5178 = vmatmul.mubr.f32.gmra.mxu0 %v4972
        %v5179 = vpop.f32.mrf.mxu0
        %v5180 = vadd.f32 0.0, %v5179
        %v5181 = vpop.f32.mrf.mxu0
        %5182 = vmatprep.mubr.f32.mxu0 0.0
        %5183 = vmatmul.mubr.f32.gmra.mxu0 %v4973
        %v5184 = vpop.f32.mrf.mxu0
        %v5185 = vadd.f32 0.0, %v5184
        %v5186 = vpop.f32.mrf.mxu0
        %5187 = vmatprep.mubr.f32.mxu0 0.0
        %5188 = vmatmul.mubr.f32.gmra.mxu0 %v4974
        %v5189 = vpop.f32.mrf.mxu0
        %v5190 = vadd.f32 0.0, %v5189
        %v5191 = vpop.f32.mrf.mxu0
        %5192 = vmatprep.mubr.f32.mxu0 0.0
        %5193 = vmatmul.mubr.f32.gmra.mxu0 %v4975
        %v5194 = vpop.f32.mrf.mxu0
        %v5195 = vadd.f32 0.0, %v5194
        %v5196 = vpop.f32.mrf.mxu0
        %5197 = vmatprep.mubr.f32.mxu0 0.0
        %5198 = vmatmul.mubr.f32.gmra.mxu0 %v4976
        %v5199 = vpop.f32.mrf.mxu0
        %v5200 = vadd.f32 0.0, %v5199
        %v5201 = vpop.f32.mrf.mxu0
        %5202 = vmatprep.mubr.f32.mxu0 0.0
        %5203 = vmatmul.mubr.f32.gmra.mxu0 %v4977
        %v5204 = vpop.f32.mrf.mxu0
        %v5205 = vadd.f32 0.0, %v5204
        %v5206 = vpop.f32.mrf.mxu0
        %5207 = vmatprep.mubr.f32.mxu0 0.0
        %5208 = vmatmul.mubr.f32.gmra.mxu0 %v4978
        %v5209 = vpop.f32.mrf.mxu0
        %v5210 = vadd.f32 0.0, %v5209
        %v5211 = vpop.f32.mrf.mxu0
        %5212 = vmatprep.mubr.f32.mxu0 0.0
        %5213 = vmatmul.mubr.f32.gmra.mxu0 %v4979
        %v5214 = vpop.f32.mrf.mxu0
        %v5215 = vadd.f32 0.0, %v5214
        %v5216 = vpop.f32.mrf.mxu0
        %5217 = vmatprep.mubr.f32.mxu0 0.0
        %5218 = vmatmul.mubr.f32.gmra.mxu0 %v4980
        %v5219 = vpop.f32.mrf.mxu0
        %v5220 = vadd.f32 0.0, %v5219
        %v5221 = vpop.f32.mrf.mxu0
        %5222 = vdwg.mxu0
        %v5223 = vadd.f32 %v4917, %v5065
        %v5224 = vadd.f32 %v4918, %v5070
        %v5225 = vadd.f32 %v4919, %v5075
        %v5226 = vadd.f32 %v4920, %v5080
        %v5227 = vadd.f32 %v4921, %v5085
        %v5228 = vadd.f32 %v4922, %v5090
        %v5229 = vadd.f32 %v4923, %v5095
        %v5230 = vadd.f32 %v4924, %v5100
        %v5231 = vadd.f32 %v4925, %v5105
        %v5232 = vadd.f32 %v4926, %v5110
        %v5233 = vadd.f32 %v4927, %v5115
        %v5234 = vadd.f32 %v4928, %v5120
        %v5235 = vadd.f32 %v4929, %v5125
        %v5236 = vadd.f32 %v4930, %v5130
        %v5237 = vadd.f32 %v4931, %v5135
        %v5238 = vadd.f32 %v4932, %v5140
        %v5239 = vadd.f32 %v4933, %v5145
        %v5240 = vadd.f32 %v4934, %v5150
        %v5241 = vadd.f32 %v4935, %v5155
        %v5242 = vadd.f32 %v4936, %v5160
        %v5243 = vadd.f32 %v4937, %v5165
        %v5244 = vadd.f32 %v4938, %v5170
        %v5245 = vadd.f32 %v4939, %v5175
        %v5246 = vadd.f32 %v4940, %v5180
        %v5247 = vadd.f32 %v4941, %v5185
        %v5248 = vadd.f32 %v4942, %v5190
        %v5249 = vadd.f32 %v4943, %v5195
        %v5250 = vadd.f32 %v4944, %v5200
        %v5251 = vadd.f32 %v4945, %v5205
        %v5252 = vadd.f32 %v4946, %v5210
        %v5253 = vadd.f32 %v4947, %v5215
        %v5254 = vadd.f32 %v4948, %v5220
        %s5255 = scalar_lea.vmem [#allocation3], 48
        %v5256 = vld [vmem:[%s5255] sm:$0xff]
        %v5257 = vld [vmem:[%s5255 + $0x8] sm:$0xff]
        %v5258 = vld [vmem:[%s5255 + $0x18] sm:$0xff]
        %v5259 = vld [vmem:[%s5255 + $0x20] sm:$0xff]
        %v5260 = vld [vmem:[%s5255 + $0x30] sm:$0xff]
        %v5261 = vld [vmem:[%s5255 + $0x38] sm:$0xff]
        %v5262 = vld [vmem:[%s5255 + $0x48] sm:$0xff]
        %v5263 = vld [vmem:[%s5255 + $0x50] sm:$0xff]
        %v5264 = vld [vmem:[%s5255 + $0x60] sm:$0xff]
        %v5265 = vld [vmem:[%s5255 + $0x68] sm:$0xff]
        %v5266 = vld [vmem:[%s5255 + $0x78] sm:$0xff]
        %v5267 = vld [vmem:[%s5255 + $0x80] sm:$0xff]
        %v5268 = vld [vmem:[%s5255 + $0x90] sm:$0xff]
        %v5269 = vld [vmem:[%s5255 + $0x98] sm:$0xff]
        %v5270 = vld [vmem:[%s5255 + $0xa8] sm:$0xff]
        %v5271 = vld [vmem:[%s5255 + $0xb0] sm:$0xff]
        %v5272 = vld [vmem:[%s5255 + $0xc0] sm:$0xff]
        %v5273 = vld [vmem:[%s5255 + $0xc8] sm:$0xff]
        %v5274 = vld [vmem:[%s5255 + $0xd8] sm:$0xff]
        %v5275 = vld [vmem:[%s5255 + $0xe0] sm:$0xff]
        %v5276 = vld [vmem:[%s5255 + $0xf0] sm:$0xff]
        %v5277 = vld [vmem:[%s5255 + $0xf8] sm:$0xff]
        %v5278 = vld [vmem:[%s5255 + $0x108] sm:$0xff]
        %v5279 = vld [vmem:[%s5255 + $0x110] sm:$0xff]
        %v5280 = vld [vmem:[%s5255 + $0x120] sm:$0xff]
        %v5281 = vld [vmem:[%s5255 + $0x128] sm:$0xff]
        %v5282 = vld [vmem:[%s5255 + $0x138] sm:$0xff]
        %v5283 = vld [vmem:[%s5255 + $0x140] sm:$0xff]
        %v5284 = vld [vmem:[%s5255 + $0x150] sm:$0xff]
        %v5285 = vld [vmem:[%s5255 + $0x158] sm:$0xff]
        %v5286 = vld [vmem:[%s5255 + $0x168] sm:$0xff]
        %v5287 = vld [vmem:[%s5255 + $0x170] sm:$0xff]
        %s5288 = scalar_lea.vmem [#allocation9], 768
        %v5289 = vld [vmem:[%s5288] sm:$0xff]
        %v5290 = vld [vmem:[%s5288 + $0x8] sm:$0xff]
        %v5291 = vld [vmem:[%s5288 + $0x10] sm:$0xff]
        %v5292 = vld [vmem:[%s5288 + $0x18] sm:$0xff]
        %v5293 = vld [vmem:[%s5288 + $0x20] sm:$0xff]
        %v5294 = vld [vmem:[%s5288 + $0x28] sm:$0xff]
        %v5295 = vld [vmem:[%s5288 + $0x30] sm:$0xff]
        %v5296 = vld [vmem:[%s5288 + $0x38] sm:$0xff]
        %v5297 = vld [vmem:[%s5288 + $0x40] sm:$0xff]
        %v5298 = vld [vmem:[%s5288 + $0x48] sm:$0xff]
        %v5299 = vld [vmem:[%s5288 + $0x50] sm:$0xff]
        %v5300 = vld [vmem:[%s5288 + $0x58] sm:$0xff]
        %v5301 = vld [vmem:[%s5288 + $0x60] sm:$0xff]
        %v5302 = vld [vmem:[%s5288 + $0x68] sm:$0xff]
        %v5303 = vld [vmem:[%s5288 + $0x70] sm:$0xff]
        %v5304 = vld [vmem:[%s5288 + $0x78] sm:$0xff]
        %5305 = vmatprep.subr.mxu0 0.0
        %5306 = vmatpush1.msra.mxu0 %v5304
        %5307 = vmatprep.subr.mxu0 0.0
        %5308 = vmatpush1.msra.mxu0 %v5303
        %5309 = vmatprep.subr.mxu0 0.0
        %5310 = vmatpush1.msra.mxu0 %v5302
        %5311 = vmatprep.subr.mxu0 0.0
        %5312 = vmatpush1.msra.mxu0 %v5301
        %5313 = vmatprep.subr.mxu0 0.0
        %5314 = vmatpush1.msra.mxu0 %v5300
        %5315 = vmatprep.subr.mxu0 0.0
        %5316 = vmatpush1.msra.mxu0 %v5299
        %5317 = vmatprep.subr.mxu0 0.0
        %5318 = vmatpush1.msra.mxu0 %v5298
        %5319 = vmatprep.subr.mxu0 0.0
        %5320 = vmatpush1.msra.mxu0 %v5297
        %5321 = vmatprep.subr.mxu0 0.0
        %5322 = vmatpush1.msra.mxu0 %v5296
        %5323 = vmatprep.subr.mxu0 0.0
        %5324 = vmatpush1.msra.mxu0 %v5295
        %5325 = vmatprep.subr.mxu0 0.0
        %5326 = vmatpush1.msra.mxu0 %v5294
        %5327 = vmatprep.subr.mxu0 0.0
        %5328 = vmatpush1.msra.mxu0 %v5293
        %5329 = vmatprep.subr.mxu0 0.0
        %5330 = vmatpush1.msra.mxu0 %v5292
        %5331 = vmatprep.subr.mxu0 0.0
        %5332 = vmatpush1.msra.mxu0 %v5291
        %5333 = vmatprep.subr.mxu0 0.0
        %5334 = vmatpush1.msra.mxu0 %v5290
        %5335 = vmatprep.subr.mxu0 0.0
        %5336 = vmatpush1.msra.mxu0 %v5289
        %5337 = vmatprep.subr.mxu0 0.0
        %5338 = vmatpush2.msra.mxu0 0.0
        %5339 = vmatprep.subr.mxu0 0.0
        %5340 = vmatpush2.msra.mxu0 0.0
        %5341 = vmatprep.subr.mxu0 0.0
        %5342 = vmatpush2.msra.mxu0 0.0
        %5343 = vmatprep.subr.mxu0 0.0
        %5344 = vmatpush2.msra.mxu0 0.0
        %5345 = vmatprep.subr.mxu0 0.0
        %5346 = vmatpush2.msra.mxu0 0.0
        %5347 = vmatprep.subr.mxu0 0.0
        %5348 = vmatpush2.msra.mxu0 0.0
        %5349 = vmatprep.subr.mxu0 0.0
        %5350 = vmatpush2.msra.mxu0 0.0
        %5351 = vmatprep.subr.mxu0 0.0
        %5352 = vmatpush2.msra.mxu0 0.0
        %5353 = vmatprep.subr.mxu0 0.0
        %5354 = vmatpush2.msra.mxu0 0.0
        %5355 = vmatprep.subr.mxu0 0.0
        %5356 = vmatpush2.msra.mxu0 0.0
        %5357 = vmatprep.subr.mxu0 0.0
        %5358 = vmatpush2.msra.mxu0 0.0
        %5359 = vmatprep.subr.mxu0 0.0
        %5360 = vmatpush2.msra.mxu0 0.0
        %5361 = vmatprep.subr.mxu0 0.0
        %5362 = vmatpush2.msra.mxu0 0.0
        %5363 = vmatprep.subr.mxu0 0.0
        %5364 = vmatpush2.msra.mxu0 0.0
        %5365 = vmatprep.subr.mxu0 0.0
        %5366 = vmatpush2.msra.mxu0 0.0
        %5367 = vmatprep.subr.mxu0 0.0
        %5368 = vmatpush2.msra.mxu0 0.0
        %5369 = vmatprep.mubr.f32.mxu0 0.0
        %5370 = vmatmul.mubr.f32.gmra.mxu0 %v5256
        %v5371 = vpop.f32.mrf.mxu0
        %v5372 = vadd.f32 0.0, %v5371
        %v5373 = vpop.f32.mrf.mxu0
        %5374 = vmatprep.mubr.f32.mxu0 0.0
        %5375 = vmatmul.mubr.f32.gmra.mxu0 %v5257
        %v5376 = vpop.f32.mrf.mxu0
        %v5377 = vadd.f32 0.0, %v5376
        %v5378 = vpop.f32.mrf.mxu0
        %5379 = vmatprep.mubr.f32.mxu0 0.0
        %5380 = vmatmul.mubr.f32.gmra.mxu0 %v5258
        %v5381 = vpop.f32.mrf.mxu0
        %v5382 = vadd.f32 0.0, %v5381
        %v5383 = vpop.f32.mrf.mxu0
        %5384 = vmatprep.mubr.f32.mxu0 0.0
        %5385 = vmatmul.mubr.f32.gmra.mxu0 %v5259
        %v5386 = vpop.f32.mrf.mxu0
        %v5387 = vadd.f32 0.0, %v5386
        %v5388 = vpop.f32.mrf.mxu0
        %5389 = vmatprep.mubr.f32.mxu0 0.0
        %5390 = vmatmul.mubr.f32.gmra.mxu0 %v5260
        %v5391 = vpop.f32.mrf.mxu0
        %v5392 = vadd.f32 0.0, %v5391
        %v5393 = vpop.f32.mrf.mxu0
        %5394 = vmatprep.mubr.f32.mxu0 0.0
        %5395 = vmatmul.mubr.f32.gmra.mxu0 %v5261
        %v5396 = vpop.f32.mrf.mxu0
        %v5397 = vadd.f32 0.0, %v5396
        %v5398 = vpop.f32.mrf.mxu0
        %5399 = vmatprep.mubr.f32.mxu0 0.0
        %5400 = vmatmul.mubr.f32.gmra.mxu0 %v5262
        %v5401 = vpop.f32.mrf.mxu0
        %v5402 = vadd.f32 0.0, %v5401
        %v5403 = vpop.f32.mrf.mxu0
        %5404 = vmatprep.mubr.f32.mxu0 0.0
        %5405 = vmatmul.mubr.f32.gmra.mxu0 %v5263
        %v5406 = vpop.f32.mrf.mxu0
        %v5407 = vadd.f32 0.0, %v5406
        %v5408 = vpop.f32.mrf.mxu0
        %5409 = vmatprep.mubr.f32.mxu0 0.0
        %5410 = vmatmul.mubr.f32.gmra.mxu0 %v5264
        %v5411 = vpop.f32.mrf.mxu0
        %v5412 = vadd.f32 0.0, %v5411
        %v5413 = vpop.f32.mrf.mxu0
        %5414 = vmatprep.mubr.f32.mxu0 0.0
        %5415 = vmatmul.mubr.f32.gmra.mxu0 %v5265
        %v5416 = vpop.f32.mrf.mxu0
        %v5417 = vadd.f32 0.0, %v5416
        %v5418 = vpop.f32.mrf.mxu0
        %5419 = vmatprep.mubr.f32.mxu0 0.0
        %5420 = vmatmul.mubr.f32.gmra.mxu0 %v5266
        %v5421 = vpop.f32.mrf.mxu0
        %v5422 = vadd.f32 0.0, %v5421
        %v5423 = vpop.f32.mrf.mxu0
        %5424 = vmatprep.mubr.f32.mxu0 0.0
        %5425 = vmatmul.mubr.f32.gmra.mxu0 %v5267
        %v5426 = vpop.f32.mrf.mxu0
        %v5427 = vadd.f32 0.0, %v5426
        %v5428 = vpop.f32.mrf.mxu0
        %5429 = vmatprep.mubr.f32.mxu0 0.0
        %5430 = vmatmul.mubr.f32.gmra.mxu0 %v5268
        %v5431 = vpop.f32.mrf.mxu0
        %v5432 = vadd.f32 0.0, %v5431
        %v5433 = vpop.f32.mrf.mxu0
        %5434 = vmatprep.mubr.f32.mxu0 0.0
        %5435 = vmatmul.mubr.f32.gmra.mxu0 %v5269
        %v5436 = vpop.f32.mrf.mxu0
        %v5437 = vadd.f32 0.0, %v5436
        %v5438 = vpop.f32.mrf.mxu0
        %5439 = vmatprep.mubr.f32.mxu0 0.0
        %5440 = vmatmul.mubr.f32.gmra.mxu0 %v5270
        %v5441 = vpop.f32.mrf.mxu0
        %v5442 = vadd.f32 0.0, %v5441
        %v5443 = vpop.f32.mrf.mxu0
        %5444 = vmatprep.mubr.f32.mxu0 0.0
        %5445 = vmatmul.mubr.f32.gmra.mxu0 %v5271
        %v5446 = vpop.f32.mrf.mxu0
        %v5447 = vadd.f32 0.0, %v5446
        %v5448 = vpop.f32.mrf.mxu0
        %5449 = vmatprep.mubr.f32.mxu0 0.0
        %5450 = vmatmul.mubr.f32.gmra.mxu0 %v5272
        %v5451 = vpop.f32.mrf.mxu0
        %v5452 = vadd.f32 0.0, %v5451
        %v5453 = vpop.f32.mrf.mxu0
        %5454 = vmatprep.mubr.f32.mxu0 0.0
        %5455 = vmatmul.mubr.f32.gmra.mxu0 %v5273
        %v5456 = vpop.f32.mrf.mxu0
        %v5457 = vadd.f32 0.0, %v5456
        %v5458 = vpop.f32.mrf.mxu0
        %5459 = vmatprep.mubr.f32.mxu0 0.0
        %5460 = vmatmul.mubr.f32.gmra.mxu0 %v5274
        %v5461 = vpop.f32.mrf.mxu0
        %v5462 = vadd.f32 0.0, %v5461
        %v5463 = vpop.f32.mrf.mxu0
        %5464 = vmatprep.mubr.f32.mxu0 0.0
        %5465 = vmatmul.mubr.f32.gmra.mxu0 %v5275
        %v5466 = vpop.f32.mrf.mxu0
        %v5467 = vadd.f32 0.0, %v5466
        %v5468 = vpop.f32.mrf.mxu0
        %5469 = vmatprep.mubr.f32.mxu0 0.0
        %5470 = vmatmul.mubr.f32.gmra.mxu0 %v5276
        %v5471 = vpop.f32.mrf.mxu0
        %v5472 = vadd.f32 0.0, %v5471
        %v5473 = vpop.f32.mrf.mxu0
        %5474 = vmatprep.mubr.f32.mxu0 0.0
        %5475 = vmatmul.mubr.f32.gmra.mxu0 %v5277
        %v5476 = vpop.f32.mrf.mxu0
        %v5477 = vadd.f32 0.0, %v5476
        %v5478 = vpop.f32.mrf.mxu0
        %5479 = vmatprep.mubr.f32.mxu0 0.0
        %5480 = vmatmul.mubr.f32.gmra.mxu0 %v5278
        %v5481 = vpop.f32.mrf.mxu0
        %v5482 = vadd.f32 0.0, %v5481
        %v5483 = vpop.f32.mrf.mxu0
        %5484 = vmatprep.mubr.f32.mxu0 0.0
        %5485 = vmatmul.mubr.f32.gmra.mxu0 %v5279
        %v5486 = vpop.f32.mrf.mxu0
        %v5487 = vadd.f32 0.0, %v5486
        %v5488 = vpop.f32.mrf.mxu0
        %5489 = vmatprep.mubr.f32.mxu0 0.0
        %5490 = vmatmul.mubr.f32.gmra.mxu0 %v5280
        %v5491 = vpop.f32.mrf.mxu0
        %v5492 = vadd.f32 0.0, %v5491
        %v5493 = vpop.f32.mrf.mxu0
        %5494 = vmatprep.mubr.f32.mxu0 0.0
        %5495 = vmatmul.mubr.f32.gmra.mxu0 %v5281
        %v5496 = vpop.f32.mrf.mxu0
        %v5497 = vadd.f32 0.0, %v5496
        %v5498 = vpop.f32.mrf.mxu0
        %5499 = vmatprep.mubr.f32.mxu0 0.0
        %5500 = vmatmul.mubr.f32.gmra.mxu0 %v5282
        %v5501 = vpop.f32.mrf.mxu0
        %v5502 = vadd.f32 0.0, %v5501
        %v5503 = vpop.f32.mrf.mxu0
        %5504 = vmatprep.mubr.f32.mxu0 0.0
        %5505 = vmatmul.mubr.f32.gmra.mxu0 %v5283
        %v5506 = vpop.f32.mrf.mxu0
        %v5507 = vadd.f32 0.0, %v5506
        %v5508 = vpop.f32.mrf.mxu0
        %5509 = vmatprep.mubr.f32.mxu0 0.0
        %5510 = vmatmul.mubr.f32.gmra.mxu0 %v5284
        %v5511 = vpop.f32.mrf.mxu0
        %v5512 = vadd.f32 0.0, %v5511
        %v5513 = vpop.f32.mrf.mxu0
        %5514 = vmatprep.mubr.f32.mxu0 0.0
        %5515 = vmatmul.mubr.f32.gmra.mxu0 %v5285
        %v5516 = vpop.f32.mrf.mxu0
        %v5517 = vadd.f32 0.0, %v5516
        %v5518 = vpop.f32.mrf.mxu0
        %5519 = vmatprep.mubr.f32.mxu0 0.0
        %5520 = vmatmul.mubr.f32.gmra.mxu0 %v5286
        %v5521 = vpop.f32.mrf.mxu0
        %v5522 = vadd.f32 0.0, %v5521
        %v5523 = vpop.f32.mrf.mxu0
        %5524 = vmatprep.mubr.f32.mxu0 0.0
        %5525 = vmatmul.mubr.f32.gmra.mxu0 %v5287
        %v5526 = vpop.f32.mrf.mxu0
        %v5527 = vadd.f32 0.0, %v5526
        %v5528 = vpop.f32.mrf.mxu0
        %5529 = vdwg.mxu0
        %v5530 = vadd.f32 %v5223, %v5372
        %v5531 = vadd.f32 %v5224, %v5377
        %v5532 = vadd.f32 %v5225, %v5382
        %v5533 = vadd.f32 %v5226, %v5387
        %v5534 = vadd.f32 %v5227, %v5392
        %v5535 = vadd.f32 %v5228, %v5397
        %v5536 = vadd.f32 %v5229, %v5402
        %v5537 = vadd.f32 %v5230, %v5407
        %v5538 = vadd.f32 %v5231, %v5412
        %v5539 = vadd.f32 %v5232, %v5417
        %v5540 = vadd.f32 %v5233, %v5422
        %v5541 = vadd.f32 %v5234, %v5427
        %v5542 = vadd.f32 %v5235, %v5432
        %v5543 = vadd.f32 %v5236, %v5437
        %v5544 = vadd.f32 %v5237, %v5442
        %v5545 = vadd.f32 %v5238, %v5447
        %v5546 = vadd.f32 %v5239, %v5452
        %v5547 = vadd.f32 %v5240, %v5457
        %v5548 = vadd.f32 %v5241, %v5462
        %v5549 = vadd.f32 %v5242, %v5467
        %v5550 = vadd.f32 %v5243, %v5472
        %v5551 = vadd.f32 %v5244, %v5477
        %v5552 = vadd.f32 %v5245, %v5482
        %v5553 = vadd.f32 %v5246, %v5487
        %v5554 = vadd.f32 %v5247, %v5492
        %v5555 = vadd.f32 %v5248, %v5497
        %v5556 = vadd.f32 %v5249, %v5502
        %v5557 = vadd.f32 %v5250, %v5507
        %v5558 = vadd.f32 %v5251, %v5512
        %v5559 = vadd.f32 %v5252, %v5517
        %v5560 = vadd.f32 %v5253, %v5522
        %v5561 = vadd.f32 %v5254, %v5527
        %v5562 = vld [vmem:[%s5255 + $0x1] sm:$0xff]
        %v5563 = vld [vmem:[%s5255 + $0x9] sm:$0xff]
        %v5564 = vld [vmem:[%s5255 + $0x19] sm:$0xff]
        %v5565 = vld [vmem:[%s5255 + $0x21] sm:$0xff]
        %v5566 = vld [vmem:[%s5255 + $0x31] sm:$0xff]
        %v5567 = vld [vmem:[%s5255 + $0x39] sm:$0xff]
        %v5568 = vld [vmem:[%s5255 + $0x49] sm:$0xff]
        %v5569 = vld [vmem:[%s5255 + $0x51] sm:$0xff]
        %v5570 = vld [vmem:[%s5255 + $0x61] sm:$0xff]
        %v5571 = vld [vmem:[%s5255 + $0x69] sm:$0xff]
        %v5572 = vld [vmem:[%s5255 + $0x79] sm:$0xff]
        %v5573 = vld [vmem:[%s5255 + $0x81] sm:$0xff]
        %v5574 = vld [vmem:[%s5255 + $0x91] sm:$0xff]
        %v5575 = vld [vmem:[%s5255 + $0x99] sm:$0xff]
        %v5576 = vld [vmem:[%s5255 + $0xa9] sm:$0xff]
        %v5577 = vld [vmem:[%s5255 + $0xb1] sm:$0xff]
        %v5578 = vld [vmem:[%s5255 + $0xc1] sm:$0xff]
        %v5579 = vld [vmem:[%s5255 + $0xc9] sm:$0xff]
        %v5580 = vld [vmem:[%s5255 + $0xd9] sm:$0xff]
        %v5581 = vld [vmem:[%s5255 + $0xe1] sm:$0xff]
        %v5582 = vld [vmem:[%s5255 + $0xf1] sm:$0xff]
        %v5583 = vld [vmem:[%s5255 + $0xf9] sm:$0xff]
        %v5584 = vld [vmem:[%s5255 + $0x109] sm:$0xff]
        %v5585 = vld [vmem:[%s5255 + $0x111] sm:$0xff]
        %v5586 = vld [vmem:[%s5255 + $0x121] sm:$0xff]
        %v5587 = vld [vmem:[%s5255 + $0x129] sm:$0xff]
        %v5588 = vld [vmem:[%s5255 + $0x139] sm:$0xff]
        %v5589 = vld [vmem:[%s5255 + $0x141] sm:$0xff]
        %v5590 = vld [vmem:[%s5255 + $0x151] sm:$0xff]
        %v5591 = vld [vmem:[%s5255 + $0x159] sm:$0xff]
        %v5592 = vld [vmem:[%s5255 + $0x169] sm:$0xff]
        %v5593 = vld [vmem:[%s5255 + $0x171] sm:$0xff]
        %s5594 = scalar_lea.vmem [#allocation9], 896
        %v5595 = vld [vmem:[%s5594] sm:$0xff]
        %v5596 = vld [vmem:[%s5594 + $0x8] sm:$0xff]
        %v5597 = vld [vmem:[%s5594 + $0x10] sm:$0xff]
        %v5598 = vld [vmem:[%s5594 + $0x18] sm:$0xff]
        %v5599 = vld [vmem:[%s5594 + $0x20] sm:$0xff]
        %v5600 = vld [vmem:[%s5594 + $0x28] sm:$0xff]
        %v5601 = vld [vmem:[%s5594 + $0x30] sm:$0xff]
        %v5602 = vld [vmem:[%s5594 + $0x38] sm:$0xff]
        %v5603 = vld [vmem:[%s5594 + $0x40] sm:$0xff]
        %v5604 = vld [vmem:[%s5594 + $0x48] sm:$0xff]
        %v5605 = vld [vmem:[%s5594 + $0x50] sm:$0xff]
        %v5606 = vld [vmem:[%s5594 + $0x58] sm:$0xff]
        %v5607 = vld [vmem:[%s5594 + $0x60] sm:$0xff]
        %v5608 = vld [vmem:[%s5594 + $0x68] sm:$0xff]
        %v5609 = vld [vmem:[%s5594 + $0x70] sm:$0xff]
        %v5610 = vld [vmem:[%s5594 + $0x78] sm:$0xff]
        %5611 = vmatprep.subr.mxu0 0.0
        %5612 = vmatpush1.msra.mxu0 %v5610
        %5613 = vmatprep.subr.mxu0 0.0
        %5614 = vmatpush1.msra.mxu0 %v5609
        %5615 = vmatprep.subr.mxu0 0.0
        %5616 = vmatpush1.msra.mxu0 %v5608
        %5617 = vmatprep.subr.mxu0 0.0
        %5618 = vmatpush1.msra.mxu0 %v5607
        %5619 = vmatprep.subr.mxu0 0.0
        %5620 = vmatpush1.msra.mxu0 %v5606
        %5621 = vmatprep.subr.mxu0 0.0
        %5622 = vmatpush1.msra.mxu0 %v5605
        %5623 = vmatprep.subr.mxu0 0.0
        %5624 = vmatpush1.msra.mxu0 %v5604
        %5625 = vmatprep.subr.mxu0 0.0
        %5626 = vmatpush1.msra.mxu0 %v5603
        %5627 = vmatprep.subr.mxu0 0.0
        %5628 = vmatpush1.msra.mxu0 %v5602
        %5629 = vmatprep.subr.mxu0 0.0
        %5630 = vmatpush1.msra.mxu0 %v5601
        %5631 = vmatprep.subr.mxu0 0.0
        %5632 = vmatpush1.msra.mxu0 %v5600
        %5633 = vmatprep.subr.mxu0 0.0
        %5634 = vmatpush1.msra.mxu0 %v5599
        %5635 = vmatprep.subr.mxu0 0.0
        %5636 = vmatpush1.msra.mxu0 %v5598
        %5637 = vmatprep.subr.mxu0 0.0
        %5638 = vmatpush1.msra.mxu0 %v5597
        %5639 = vmatprep.subr.mxu0 0.0
        %5640 = vmatpush1.msra.mxu0 %v5596
        %5641 = vmatprep.subr.mxu0 0.0
        %5642 = vmatpush1.msra.mxu0 %v5595
        %5643 = vmatprep.subr.mxu0 0.0
        %5644 = vmatpush2.msra.mxu0 0.0
        %5645 = vmatprep.subr.mxu0 0.0
        %5646 = vmatpush2.msra.mxu0 0.0
        %5647 = vmatprep.subr.mxu0 0.0
        %5648 = vmatpush2.msra.mxu0 0.0
        %5649 = vmatprep.subr.mxu0 0.0
        %5650 = vmatpush2.msra.mxu0 0.0
        %5651 = vmatprep.subr.mxu0 0.0
        %5652 = vmatpush2.msra.mxu0 0.0
        %5653 = vmatprep.subr.mxu0 0.0
        %5654 = vmatpush2.msra.mxu0 0.0
        %5655 = vmatprep.subr.mxu0 0.0
        %5656 = vmatpush2.msra.mxu0 0.0
        %5657 = vmatprep.subr.mxu0 0.0
        %5658 = vmatpush2.msra.mxu0 0.0
        %5659 = vmatprep.subr.mxu0 0.0
        %5660 = vmatpush2.msra.mxu0 0.0
        %5661 = vmatprep.subr.mxu0 0.0
        %5662 = vmatpush2.msra.mxu0 0.0
        %5663 = vmatprep.subr.mxu0 0.0
        %5664 = vmatpush2.msra.mxu0 0.0
        %5665 = vmatprep.subr.mxu0 0.0
        %5666 = vmatpush2.msra.mxu0 0.0
        %5667 = vmatprep.subr.mxu0 0.0
        %5668 = vmatpush2.msra.mxu0 0.0
        %5669 = vmatprep.subr.mxu0 0.0
        %5670 = vmatpush2.msra.mxu0 0.0
        %5671 = vmatprep.subr.mxu0 0.0
        %5672 = vmatpush2.msra.mxu0 0.0
        %5673 = vmatprep.subr.mxu0 0.0
        %5674 = vmatpush2.msra.mxu0 0.0
        %5675 = vmatprep.mubr.f32.mxu0 0.0
        %5676 = vmatmul.mubr.f32.gmra.mxu0 %v5562
        %v5677 = vpop.f32.mrf.mxu0
        %v5678 = vadd.f32 0.0, %v5677
        %v5679 = vpop.f32.mrf.mxu0
        %5680 = vmatprep.mubr.f32.mxu0 0.0
        %5681 = vmatmul.mubr.f32.gmra.mxu0 %v5563
        %v5682 = vpop.f32.mrf.mxu0
        %v5683 = vadd.f32 0.0, %v5682
        %v5684 = vpop.f32.mrf.mxu0
        %5685 = vmatprep.mubr.f32.mxu0 0.0
        %5686 = vmatmul.mubr.f32.gmra.mxu0 %v5564
        %v5687 = vpop.f32.mrf.mxu0
        %v5688 = vadd.f32 0.0, %v5687
        %v5689 = vpop.f32.mrf.mxu0
        %5690 = vmatprep.mubr.f32.mxu0 0.0
        %5691 = vmatmul.mubr.f32.gmra.mxu0 %v5565
        %v5692 = vpop.f32.mrf.mxu0
        %v5693 = vadd.f32 0.0, %v5692
        %v5694 = vpop.f32.mrf.mxu0
        %5695 = vmatprep.mubr.f32.mxu0 0.0
        %5696 = vmatmul.mubr.f32.gmra.mxu0 %v5566
        %v5697 = vpop.f32.mrf.mxu0
        %v5698 = vadd.f32 0.0, %v5697
        %v5699 = vpop.f32.mrf.mxu0
        %5700 = vmatprep.mubr.f32.mxu0 0.0
        %5701 = vmatmul.mubr.f32.gmra.mxu0 %v5567
        %v5702 = vpop.f32.mrf.mxu0
        %v5703 = vadd.f32 0.0, %v5702
        %v5704 = vpop.f32.mrf.mxu0
        %5705 = vmatprep.mubr.f32.mxu0 0.0
        %5706 = vmatmul.mubr.f32.gmra.mxu0 %v5568
        %v5707 = vpop.f32.mrf.mxu0
        %v5708 = vadd.f32 0.0, %v5707
        %v5709 = vpop.f32.mrf.mxu0
        %5710 = vmatprep.mubr.f32.mxu0 0.0
        %5711 = vmatmul.mubr.f32.gmra.mxu0 %v5569
        %v5712 = vpop.f32.mrf.mxu0
        %v5713 = vadd.f32 0.0, %v5712
        %v5714 = vpop.f32.mrf.mxu0
        %5715 = vmatprep.mubr.f32.mxu0 0.0
        %5716 = vmatmul.mubr.f32.gmra.mxu0 %v5570
        %v5717 = vpop.f32.mrf.mxu0
        %v5718 = vadd.f32 0.0, %v5717
        %v5719 = vpop.f32.mrf.mxu0
        %5720 = vmatprep.mubr.f32.mxu0 0.0
        %5721 = vmatmul.mubr.f32.gmra.mxu0 %v5571
        %v5722 = vpop.f32.mrf.mxu0
        %v5723 = vadd.f32 0.0, %v5722
        %v5724 = vpop.f32.mrf.mxu0
        %5725 = vmatprep.mubr.f32.mxu0 0.0
        %5726 = vmatmul.mubr.f32.gmra.mxu0 %v5572
        %v5727 = vpop.f32.mrf.mxu0
        %v5728 = vadd.f32 0.0, %v5727
        %v5729 = vpop.f32.mrf.mxu0
        %5730 = vmatprep.mubr.f32.mxu0 0.0
        %5731 = vmatmul.mubr.f32.gmra.mxu0 %v5573
        %v5732 = vpop.f32.mrf.mxu0
        %v5733 = vadd.f32 0.0, %v5732
        %v5734 = vpop.f32.mrf.mxu0
        %5735 = vmatprep.mubr.f32.mxu0 0.0
        %5736 = vmatmul.mubr.f32.gmra.mxu0 %v5574
        %v5737 = vpop.f32.mrf.mxu0
        %v5738 = vadd.f32 0.0, %v5737
        %v5739 = vpop.f32.mrf.mxu0
        %5740 = vmatprep.mubr.f32.mxu0 0.0
        %5741 = vmatmul.mubr.f32.gmra.mxu0 %v5575
        %v5742 = vpop.f32.mrf.mxu0
        %v5743 = vadd.f32 0.0, %v5742
        %v5744 = vpop.f32.mrf.mxu0
        %5745 = vmatprep.mubr.f32.mxu0 0.0
        %5746 = vmatmul.mubr.f32.gmra.mxu0 %v5576
        %v5747 = vpop.f32.mrf.mxu0
        %v5748 = vadd.f32 0.0, %v5747
        %v5749 = vpop.f32.mrf.mxu0
        %5750 = vmatprep.mubr.f32.mxu0 0.0
        %5751 = vmatmul.mubr.f32.gmra.mxu0 %v5577
        %v5752 = vpop.f32.mrf.mxu0
        %v5753 = vadd.f32 0.0, %v5752
        %v5754 = vpop.f32.mrf.mxu0
        %5755 = vmatprep.mubr.f32.mxu0 0.0
        %5756 = vmatmul.mubr.f32.gmra.mxu0 %v5578
        %v5757 = vpop.f32.mrf.mxu0
        %v5758 = vadd.f32 0.0, %v5757
        %v5759 = vpop.f32.mrf.mxu0
        %5760 = vmatprep.mubr.f32.mxu0 0.0
        %5761 = vmatmul.mubr.f32.gmra.mxu0 %v5579
        %v5762 = vpop.f32.mrf.mxu0
        %v5763 = vadd.f32 0.0, %v5762
        %v5764 = vpop.f32.mrf.mxu0
        %5765 = vmatprep.mubr.f32.mxu0 0.0
        %5766 = vmatmul.mubr.f32.gmra.mxu0 %v5580
        %v5767 = vpop.f32.mrf.mxu0
        %v5768 = vadd.f32 0.0, %v5767
        %v5769 = vpop.f32.mrf.mxu0
        %5770 = vmatprep.mubr.f32.mxu0 0.0
        %5771 = vmatmul.mubr.f32.gmra.mxu0 %v5581
        %v5772 = vpop.f32.mrf.mxu0
        %v5773 = vadd.f32 0.0, %v5772
        %v5774 = vpop.f32.mrf.mxu0
        %5775 = vmatprep.mubr.f32.mxu0 0.0
        %5776 = vmatmul.mubr.f32.gmra.mxu0 %v5582
        %v5777 = vpop.f32.mrf.mxu0
        %v5778 = vadd.f32 0.0, %v5777
        %v5779 = vpop.f32.mrf.mxu0
        %5780 = vmatprep.mubr.f32.mxu0 0.0
        %5781 = vmatmul.mubr.f32.gmra.mxu0 %v5583
        %v5782 = vpop.f32.mrf.mxu0
        %v5783 = vadd.f32 0.0, %v5782
        %v5784 = vpop.f32.mrf.mxu0
        %5785 = vmatprep.mubr.f32.mxu0 0.0
        %5786 = vmatmul.mubr.f32.gmra.mxu0 %v5584
        %v5787 = vpop.f32.mrf.mxu0
        %v5788 = vadd.f32 0.0, %v5787
        %v5789 = vpop.f32.mrf.mxu0
        %5790 = vmatprep.mubr.f32.mxu0 0.0
        %5791 = vmatmul.mubr.f32.gmra.mxu0 %v5585
        %v5792 = vpop.f32.mrf.mxu0
        %v5793 = vadd.f32 0.0, %v5792
        %v5794 = vpop.f32.mrf.mxu0
        %5795 = vmatprep.mubr.f32.mxu0 0.0
        %5796 = vmatmul.mubr.f32.gmra.mxu0 %v5586
        %v5797 = vpop.f32.mrf.mxu0
        %v5798 = vadd.f32 0.0, %v5797
        %v5799 = vpop.f32.mrf.mxu0
        %5800 = vmatprep.mubr.f32.mxu0 0.0
        %5801 = vmatmul.mubr.f32.gmra.mxu0 %v5587
        %v5802 = vpop.f32.mrf.mxu0
        %v5803 = vadd.f32 0.0, %v5802
        %v5804 = vpop.f32.mrf.mxu0
        %5805 = vmatprep.mubr.f32.mxu0 0.0
        %5806 = vmatmul.mubr.f32.gmra.mxu0 %v5588
        %v5807 = vpop.f32.mrf.mxu0
        %v5808 = vadd.f32 0.0, %v5807
        %v5809 = vpop.f32.mrf.mxu0
        %5810 = vmatprep.mubr.f32.mxu0 0.0
        %5811 = vmatmul.mubr.f32.gmra.mxu0 %v5589
        %v5812 = vpop.f32.mrf.mxu0
        %v5813 = vadd.f32 0.0, %v5812
        %v5814 = vpop.f32.mrf.mxu0
        %5815 = vmatprep.mubr.f32.mxu0 0.0
        %5816 = vmatmul.mubr.f32.gmra.mxu0 %v5590
        %v5817 = vpop.f32.mrf.mxu0
        %v5818 = vadd.f32 0.0, %v5817
        %v5819 = vpop.f32.mrf.mxu0
        %5820 = vmatprep.mubr.f32.mxu0 0.0
        %5821 = vmatmul.mubr.f32.gmra.mxu0 %v5591
        %v5822 = vpop.f32.mrf.mxu0
        %v5823 = vadd.f32 0.0, %v5822
        %v5824 = vpop.f32.mrf.mxu0
        %5825 = vmatprep.mubr.f32.mxu0 0.0
        %5826 = vmatmul.mubr.f32.gmra.mxu0 %v5592
        %v5827 = vpop.f32.mrf.mxu0
        %v5828 = vadd.f32 0.0, %v5827
        %v5829 = vpop.f32.mrf.mxu0
        %5830 = vmatprep.mubr.f32.mxu0 0.0
        %5831 = vmatmul.mubr.f32.gmra.mxu0 %v5593
        %v5832 = vpop.f32.mrf.mxu0
        %v5833 = vadd.f32 0.0, %v5832
        %v5834 = vpop.f32.mrf.mxu0
        %5835 = vdwg.mxu0
        %v5836 = vadd.f32 %v5530, %v5678
        %v5837 = vadd.f32 %v5531, %v5683
        %v5838 = vadd.f32 %v5532, %v5688
        %v5839 = vadd.f32 %v5533, %v5693
        %v5840 = vadd.f32 %v5534, %v5698
        %v5841 = vadd.f32 %v5535, %v5703
        %v5842 = vadd.f32 %v5536, %v5708
        %v5843 = vadd.f32 %v5537, %v5713
        %v5844 = vadd.f32 %v5538, %v5718
        %v5845 = vadd.f32 %v5539, %v5723
        %v5846 = vadd.f32 %v5540, %v5728
        %v5847 = vadd.f32 %v5541, %v5733
        %v5848 = vadd.f32 %v5542, %v5738
        %v5849 = vadd.f32 %v5543, %v5743
        %v5850 = vadd.f32 %v5544, %v5748
        %v5851 = vadd.f32 %v5545, %v5753
        %v5852 = vadd.f32 %v5546, %v5758
        %v5853 = vadd.f32 %v5547, %v5763
        %v5854 = vadd.f32 %v5548, %v5768
        %v5855 = vadd.f32 %v5549, %v5773
        %v5856 = vadd.f32 %v5550, %v5778
        %v5857 = vadd.f32 %v5551, %v5783
        %v5858 = vadd.f32 %v5552, %v5788
        %v5859 = vadd.f32 %v5553, %v5793
        %v5860 = vadd.f32 %v5554, %v5798
        %v5861 = vadd.f32 %v5555, %v5803
        %v5862 = vadd.f32 %v5556, %v5808
        %v5863 = vadd.f32 %v5557, %v5813
        %v5864 = vadd.f32 %v5558, %v5818
        %v5865 = vadd.f32 %v5559, %v5823
        %v5866 = vadd.f32 %v5560, %v5828
        %v5867 = vadd.f32 %v5561, %v5833
        %v5868 = vld [vmem:[%s5255 + $0x2] sm:$0xff]
        %v5869 = vld [vmem:[%s5255 + $0xa] sm:$0xff]
        %v5870 = vld [vmem:[%s5255 + $0x1a] sm:$0xff]
        %v5871 = vld [vmem:[%s5255 + $0x22] sm:$0xff]
        %v5872 = vld [vmem:[%s5255 + $0x32] sm:$0xff]
        %v5873 = vld [vmem:[%s5255 + $0x3a] sm:$0xff]
        %v5874 = vld [vmem:[%s5255 + $0x4a] sm:$0xff]
        %v5875 = vld [vmem:[%s5255 + $0x52] sm:$0xff]
        %v5876 = vld [vmem:[%s5255 + $0x62] sm:$0xff]
        %v5877 = vld [vmem:[%s5255 + $0x6a] sm:$0xff]
        %v5878 = vld [vmem:[%s5255 + $0x7a] sm:$0xff]
        %v5879 = vld [vmem:[%s5255 + $0x82] sm:$0xff]
        %v5880 = vld [vmem:[%s5255 + $0x92] sm:$0xff]
        %v5881 = vld [vmem:[%s5255 + $0x9a] sm:$0xff]
        %v5882 = vld [vmem:[%s5255 + $0xaa] sm:$0xff]
        %v5883 = vld [vmem:[%s5255 + $0xb2] sm:$0xff]
        %v5884 = vld [vmem:[%s5255 + $0xc2] sm:$0xff]
        %v5885 = vld [vmem:[%s5255 + $0xca] sm:$0xff]
        %v5886 = vld [vmem:[%s5255 + $0xda] sm:$0xff]
        %v5887 = vld [vmem:[%s5255 + $0xe2] sm:$0xff]
        %v5888 = vld [vmem:[%s5255 + $0xf2] sm:$0xff]
        %v5889 = vld [vmem:[%s5255 + $0xfa] sm:$0xff]
        %v5890 = vld [vmem:[%s5255 + $0x10a] sm:$0xff]
        %v5891 = vld [vmem:[%s5255 + $0x112] sm:$0xff]
        %v5892 = vld [vmem:[%s5255 + $0x122] sm:$0xff]
        %v5893 = vld [vmem:[%s5255 + $0x12a] sm:$0xff]
        %v5894 = vld [vmem:[%s5255 + $0x13a] sm:$0xff]
        %v5895 = vld [vmem:[%s5255 + $0x142] sm:$0xff]
        %v5896 = vld [vmem:[%s5255 + $0x152] sm:$0xff]
        %v5897 = vld [vmem:[%s5255 + $0x15a] sm:$0xff]
        %v5898 = vld [vmem:[%s5255 + $0x16a] sm:$0xff]
        %v5899 = vld [vmem:[%s5255 + $0x172] sm:$0xff]
        %s5900 = scalar_lea.vmem [#allocation9], 1024
        %v5901 = vld [vmem:[%s5900] sm:$0xff]
        %v5902 = vld [vmem:[%s5900 + $0x8] sm:$0xff]
        %v5903 = vld [vmem:[%s5900 + $0x10] sm:$0xff]
        %v5904 = vld [vmem:[%s5900 + $0x18] sm:$0xff]
        %v5905 = vld [vmem:[%s5900 + $0x20] sm:$0xff]
        %v5906 = vld [vmem:[%s5900 + $0x28] sm:$0xff]
        %v5907 = vld [vmem:[%s5900 + $0x30] sm:$0xff]
        %v5908 = vld [vmem:[%s5900 + $0x38] sm:$0xff]
        %v5909 = vld [vmem:[%s5900 + $0x40] sm:$0xff]
        %v5910 = vld [vmem:[%s5900 + $0x48] sm:$0xff]
        %v5911 = vld [vmem:[%s5900 + $0x50] sm:$0xff]
        %v5912 = vld [vmem:[%s5900 + $0x58] sm:$0xff]
        %v5913 = vld [vmem:[%s5900 + $0x60] sm:$0xff]
        %v5914 = vld [vmem:[%s5900 + $0x68] sm:$0xff]
        %v5915 = vld [vmem:[%s5900 + $0x70] sm:$0xff]
        %v5916 = vld [vmem:[%s5900 + $0x78] sm:$0xff]
        %5917 = vmatprep.subr.mxu0 0.0
        %5918 = vmatpush1.msra.mxu0 %v5916
        %5919 = vmatprep.subr.mxu0 0.0
        %5920 = vmatpush1.msra.mxu0 %v5915
        %5921 = vmatprep.subr.mxu0 0.0
        %5922 = vmatpush1.msra.mxu0 %v5914
        %5923 = vmatprep.subr.mxu0 0.0
        %5924 = vmatpush1.msra.mxu0 %v5913
        %5925 = vmatprep.subr.mxu0 0.0
        %5926 = vmatpush1.msra.mxu0 %v5912
        %5927 = vmatprep.subr.mxu0 0.0
        %5928 = vmatpush1.msra.mxu0 %v5911
        %5929 = vmatprep.subr.mxu0 0.0
        %5930 = vmatpush1.msra.mxu0 %v5910
        %5931 = vmatprep.subr.mxu0 0.0
        %5932 = vmatpush1.msra.mxu0 %v5909
        %5933 = vmatprep.subr.mxu0 0.0
        %5934 = vmatpush1.msra.mxu0 %v5908
        %5935 = vmatprep.subr.mxu0 0.0
        %5936 = vmatpush1.msra.mxu0 %v5907
        %5937 = vmatprep.subr.mxu0 0.0
        %5938 = vmatpush1.msra.mxu0 %v5906
        %5939 = vmatprep.subr.mxu0 0.0
        %5940 = vmatpush1.msra.mxu0 %v5905
        %5941 = vmatprep.subr.mxu0 0.0
        %5942 = vmatpush1.msra.mxu0 %v5904
        %5943 = vmatprep.subr.mxu0 0.0
        %5944 = vmatpush1.msra.mxu0 %v5903
        %5945 = vmatprep.subr.mxu0 0.0
        %5946 = vmatpush1.msra.mxu0 %v5902
        %5947 = vmatprep.subr.mxu0 0.0
        %5948 = vmatpush1.msra.mxu0 %v5901
        %5949 = vmatprep.subr.mxu0 0.0
        %5950 = vmatpush2.msra.mxu0 0.0
        %5951 = vmatprep.subr.mxu0 0.0
        %5952 = vmatpush2.msra.mxu0 0.0
        %5953 = vmatprep.subr.mxu0 0.0
        %5954 = vmatpush2.msra.mxu0 0.0
        %5955 = vmatprep.subr.mxu0 0.0
        %5956 = vmatpush2.msra.mxu0 0.0
        %5957 = vmatprep.subr.mxu0 0.0
        %5958 = vmatpush2.msra.mxu0 0.0
        %5959 = vmatprep.subr.mxu0 0.0
        %5960 = vmatpush2.msra.mxu0 0.0
        %5961 = vmatprep.subr.mxu0 0.0
        %5962 = vmatpush2.msra.mxu0 0.0
        %5963 = vmatprep.subr.mxu0 0.0
        %5964 = vmatpush2.msra.mxu0 0.0
        %5965 = vmatprep.subr.mxu0 0.0
        %5966 = vmatpush2.msra.mxu0 0.0
        %5967 = vmatprep.subr.mxu0 0.0
        %5968 = vmatpush2.msra.mxu0 0.0
        %5969 = vmatprep.subr.mxu0 0.0
        %5970 = vmatpush2.msra.mxu0 0.0
        %5971 = vmatprep.subr.mxu0 0.0
        %5972 = vmatpush2.msra.mxu0 0.0
        %5973 = vmatprep.subr.mxu0 0.0
        %5974 = vmatpush2.msra.mxu0 0.0
        %5975 = vmatprep.subr.mxu0 0.0
        %5976 = vmatpush2.msra.mxu0 0.0
        %5977 = vmatprep.subr.mxu0 0.0
        %5978 = vmatpush2.msra.mxu0 0.0
        %5979 = vmatprep.subr.mxu0 0.0
        %5980 = vmatpush2.msra.mxu0 0.0
        %5981 = vmatprep.mubr.f32.mxu0 0.0
        %5982 = vmatmul.mubr.f32.gmra.mxu0 %v5868
        %v5983 = vpop.f32.mrf.mxu0
        %v5984 = vadd.f32 0.0, %v5983
        %v5985 = vpop.f32.mrf.mxu0
        %5986 = vmatprep.mubr.f32.mxu0 0.0
        %5987 = vmatmul.mubr.f32.gmra.mxu0 %v5869
        %v5988 = vpop.f32.mrf.mxu0
        %v5989 = vadd.f32 0.0, %v5988
        %v5990 = vpop.f32.mrf.mxu0
        %5991 = vmatprep.mubr.f32.mxu0 0.0
        %5992 = vmatmul.mubr.f32.gmra.mxu0 %v5870
        %v5993 = vpop.f32.mrf.mxu0
        %v5994 = vadd.f32 0.0, %v5993
        %v5995 = vpop.f32.mrf.mxu0
        %5996 = vmatprep.mubr.f32.mxu0 0.0
        %5997 = vmatmul.mubr.f32.gmra.mxu0 %v5871
        %v5998 = vpop.f32.mrf.mxu0
        %v5999 = vadd.f32 0.0, %v5998
        %v6000 = vpop.f32.mrf.mxu0
        %6001 = vmatprep.mubr.f32.mxu0 0.0
        %6002 = vmatmul.mubr.f32.gmra.mxu0 %v5872
        %v6003 = vpop.f32.mrf.mxu0
        %v6004 = vadd.f32 0.0, %v6003
        %v6005 = vpop.f32.mrf.mxu0
        %6006 = vmatprep.mubr.f32.mxu0 0.0
        %6007 = vmatmul.mubr.f32.gmra.mxu0 %v5873
        %v6008 = vpop.f32.mrf.mxu0
        %v6009 = vadd.f32 0.0, %v6008
        %v6010 = vpop.f32.mrf.mxu0
        %6011 = vmatprep.mubr.f32.mxu0 0.0
        %6012 = vmatmul.mubr.f32.gmra.mxu0 %v5874
        %v6013 = vpop.f32.mrf.mxu0
        %v6014 = vadd.f32 0.0, %v6013
        %v6015 = vpop.f32.mrf.mxu0
        %6016 = vmatprep.mubr.f32.mxu0 0.0
        %6017 = vmatmul.mubr.f32.gmra.mxu0 %v5875
        %v6018 = vpop.f32.mrf.mxu0
        %v6019 = vadd.f32 0.0, %v6018
        %v6020 = vpop.f32.mrf.mxu0
        %6021 = vmatprep.mubr.f32.mxu0 0.0
        %6022 = vmatmul.mubr.f32.gmra.mxu0 %v5876
        %v6023 = vpop.f32.mrf.mxu0
        %v6024 = vadd.f32 0.0, %v6023
        %v6025 = vpop.f32.mrf.mxu0
        %6026 = vmatprep.mubr.f32.mxu0 0.0
        %6027 = vmatmul.mubr.f32.gmra.mxu0 %v5877
        %v6028 = vpop.f32.mrf.mxu0
        %v6029 = vadd.f32 0.0, %v6028
        %v6030 = vpop.f32.mrf.mxu0
        %6031 = vmatprep.mubr.f32.mxu0 0.0
        %6032 = vmatmul.mubr.f32.gmra.mxu0 %v5878
        %v6033 = vpop.f32.mrf.mxu0
        %v6034 = vadd.f32 0.0, %v6033
        %v6035 = vpop.f32.mrf.mxu0
        %6036 = vmatprep.mubr.f32.mxu0 0.0
        %6037 = vmatmul.mubr.f32.gmra.mxu0 %v5879
        %v6038 = vpop.f32.mrf.mxu0
        %v6039 = vadd.f32 0.0, %v6038
        %v6040 = vpop.f32.mrf.mxu0
        %6041 = vmatprep.mubr.f32.mxu0 0.0
        %6042 = vmatmul.mubr.f32.gmra.mxu0 %v5880
        %v6043 = vpop.f32.mrf.mxu0
        %v6044 = vadd.f32 0.0, %v6043
        %v6045 = vpop.f32.mrf.mxu0
        %6046 = vmatprep.mubr.f32.mxu0 0.0
        %6047 = vmatmul.mubr.f32.gmra.mxu0 %v5881
        %v6048 = vpop.f32.mrf.mxu0
        %v6049 = vadd.f32 0.0, %v6048
        %v6050 = vpop.f32.mrf.mxu0
        %6051 = vmatprep.mubr.f32.mxu0 0.0
        %6052 = vmatmul.mubr.f32.gmra.mxu0 %v5882
        %v6053 = vpop.f32.mrf.mxu0
        %v6054 = vadd.f32 0.0, %v6053
        %v6055 = vpop.f32.mrf.mxu0
        %6056 = vmatprep.mubr.f32.mxu0 0.0
        %6057 = vmatmul.mubr.f32.gmra.mxu0 %v5883
        %v6058 = vpop.f32.mrf.mxu0
        %v6059 = vadd.f32 0.0, %v6058
        %v6060 = vpop.f32.mrf.mxu0
        %6061 = vmatprep.mubr.f32.mxu0 0.0
        %6062 = vmatmul.mubr.f32.gmra.mxu0 %v5884
        %v6063 = vpop.f32.mrf.mxu0
        %v6064 = vadd.f32 0.0, %v6063
        %v6065 = vpop.f32.mrf.mxu0
        %6066 = vmatprep.mubr.f32.mxu0 0.0
        %6067 = vmatmul.mubr.f32.gmra.mxu0 %v5885
        %v6068 = vpop.f32.mrf.mxu0
        %v6069 = vadd.f32 0.0, %v6068
        %v6070 = vpop.f32.mrf.mxu0
        %6071 = vmatprep.mubr.f32.mxu0 0.0
        %6072 = vmatmul.mubr.f32.gmra.mxu0 %v5886
        %v6073 = vpop.f32.mrf.mxu0
        %v6074 = vadd.f32 0.0, %v6073
        %v6075 = vpop.f32.mrf.mxu0
        %6076 = vmatprep.mubr.f32.mxu0 0.0
        %6077 = vmatmul.mubr.f32.gmra.mxu0 %v5887
        %v6078 = vpop.f32.mrf.mxu0
        %v6079 = vadd.f32 0.0, %v6078
        %v6080 = vpop.f32.mrf.mxu0
        %6081 = vmatprep.mubr.f32.mxu0 0.0
        %6082 = vmatmul.mubr.f32.gmra.mxu0 %v5888
        %v6083 = vpop.f32.mrf.mxu0
        %v6084 = vadd.f32 0.0, %v6083
        %v6085 = vpop.f32.mrf.mxu0
        %6086 = vmatprep.mubr.f32.mxu0 0.0
        %6087 = vmatmul.mubr.f32.gmra.mxu0 %v5889
        %v6088 = vpop.f32.mrf.mxu0
        %v6089 = vadd.f32 0.0, %v6088
        %v6090 = vpop.f32.mrf.mxu0
        %6091 = vmatprep.mubr.f32.mxu0 0.0
        %6092 = vmatmul.mubr.f32.gmra.mxu0 %v5890
        %v6093 = vpop.f32.mrf.mxu0
        %v6094 = vadd.f32 0.0, %v6093
        %v6095 = vpop.f32.mrf.mxu0
        %6096 = vmatprep.mubr.f32.mxu0 0.0
        %6097 = vmatmul.mubr.f32.gmra.mxu0 %v5891
        %v6098 = vpop.f32.mrf.mxu0
        %v6099 = vadd.f32 0.0, %v6098
        %v6100 = vpop.f32.mrf.mxu0
        %6101 = vmatprep.mubr.f32.mxu0 0.0
        %6102 = vmatmul.mubr.f32.gmra.mxu0 %v5892
        %v6103 = vpop.f32.mrf.mxu0
        %v6104 = vadd.f32 0.0, %v6103
        %v6105 = vpop.f32.mrf.mxu0
        %6106 = vmatprep.mubr.f32.mxu0 0.0
        %6107 = vmatmul.mubr.f32.gmra.mxu0 %v5893
        %v6108 = vpop.f32.mrf.mxu0
        %v6109 = vadd.f32 0.0, %v6108
        %v6110 = vpop.f32.mrf.mxu0
        %6111 = vmatprep.mubr.f32.mxu0 0.0
        %6112 = vmatmul.mubr.f32.gmra.mxu0 %v5894
        %v6113 = vpop.f32.mrf.mxu0
        %v6114 = vadd.f32 0.0, %v6113
        %v6115 = vpop.f32.mrf.mxu0
        %6116 = vmatprep.mubr.f32.mxu0 0.0
        %6117 = vmatmul.mubr.f32.gmra.mxu0 %v5895
        %v6118 = vpop.f32.mrf.mxu0
        %v6119 = vadd.f32 0.0, %v6118
        %v6120 = vpop.f32.mrf.mxu0
        %6121 = vmatprep.mubr.f32.mxu0 0.0
        %6122 = vmatmul.mubr.f32.gmra.mxu0 %v5896
        %v6123 = vpop.f32.mrf.mxu0
        %v6124 = vadd.f32 0.0, %v6123
        %v6125 = vpop.f32.mrf.mxu0
        %6126 = vmatprep.mubr.f32.mxu0 0.0
        %6127 = vmatmul.mubr.f32.gmra.mxu0 %v5897
        %v6128 = vpop.f32.mrf.mxu0
        %v6129 = vadd.f32 0.0, %v6128
        %v6130 = vpop.f32.mrf.mxu0
        %6131 = vmatprep.mubr.f32.mxu0 0.0
        %6132 = vmatmul.mubr.f32.gmra.mxu0 %v5898
        %v6133 = vpop.f32.mrf.mxu0
        %v6134 = vadd.f32 0.0, %v6133
        %v6135 = vpop.f32.mrf.mxu0
        %6136 = vmatprep.mubr.f32.mxu0 0.0
        %6137 = vmatmul.mubr.f32.gmra.mxu0 %v5899
        %v6138 = vpop.f32.mrf.mxu0
        %v6139 = vadd.f32 0.0, %v6138
        %v6140 = vpop.f32.mrf.mxu0
        %6141 = vdwg.mxu0
        %v6142 = vadd.f32 %v5836, %v5984
        %v6143 = vadd.f32 %v5837, %v5989
        %v6144 = vadd.f32 %v5838, %v5994
        %v6145 = vadd.f32 %v5839, %v5999
        %v6146 = vadd.f32 %v5840, %v6004
        %v6147 = vadd.f32 %v5841, %v6009
        %v6148 = vadd.f32 %v5842, %v6014
        %v6149 = vadd.f32 %v5843, %v6019
        %v6150 = vadd.f32 %v5844, %v6024
        %v6151 = vadd.f32 %v5845, %v6029
        %v6152 = vadd.f32 %v5846, %v6034
        %v6153 = vadd.f32 %v5847, %v6039
        %v6154 = vadd.f32 %v5848, %v6044
        %v6155 = vadd.f32 %v5849, %v6049
        %v6156 = vadd.f32 %v5850, %v6054
        %v6157 = vadd.f32 %v5851, %v6059
        %v6158 = vadd.f32 %v5852, %v6064
        %v6159 = vadd.f32 %v5853, %v6069
        %v6160 = vadd.f32 %v5854, %v6074
        %v6161 = vadd.f32 %v5855, %v6079
        %v6162 = vadd.f32 %v5856, %v6084
        %v6163 = vadd.f32 %v5857, %v6089
        %v6164 = vadd.f32 %v5858, %v6094
        %v6165 = vadd.f32 %v5859, %v6099
        %v6166 = vadd.f32 %v5860, %v6104
        %v6167 = vadd.f32 %v5861, %v6109
        %v6168 = vadd.f32 %v5862, %v6114
        %v6169 = vadd.f32 %v5863, %v6119
        %v6170 = vadd.f32 %v5864, %v6124
        %v6171 = vadd.f32 %v5865, %v6129
        %v6172 = vadd.f32 %v5866, %v6134
        %v6173 = vadd.f32 %v5867, %v6139
        %v6174 = vld [vmem:[#allocation10] sm:$0xff]
        %v6175 = vld [vmem:[#allocation10 + $0x8] sm:$0xff]
        %v6176 = vld [vmem:[#allocation10 + $0x10] sm:$0xff]
        %v6177 = vld [vmem:[#allocation10 + $0x18] sm:$0xff]
        %v6178 = vld [vmem:[#allocation10 + $0x20] sm:$0xff]
        %v6179 = vld [vmem:[#allocation10 + $0x28] sm:$0xff]
        %v6180 = vld [vmem:[#allocation10 + $0x30] sm:$0xff]
        %v6181 = vld [vmem:[#allocation10 + $0x38] sm:$0xff]
        %v6182 = vld [vmem:[#allocation10 + $0x40] sm:$0xff]
        %v6183 = vld [vmem:[#allocation10 + $0x48] sm:$0xff]
        %v6184 = vld [vmem:[#allocation10 + $0x50] sm:$0xff]
        %v6185 = vld [vmem:[#allocation10 + $0x58] sm:$0xff]
        %v6186 = vld [vmem:[#allocation10 + $0x60] sm:$0xff]
        %v6187 = vld [vmem:[#allocation10 + $0x68] sm:$0xff]
        %v6188 = vld [vmem:[#allocation10 + $0x70] sm:$0xff]
        %v6189 = vld [vmem:[#allocation10 + $0x78] sm:$0xff]
        %6190 = vmatprep.subr.mxu0 0.0
        %6191 = vmatpush1.msra.mxu0 %v6189
        %6192 = vmatprep.subr.mxu0 0.0
        %6193 = vmatpush1.msra.mxu0 %v6188
        %6194 = vmatprep.subr.mxu0 0.0
        %6195 = vmatpush1.msra.mxu0 %v6187
        %6196 = vmatprep.subr.mxu0 0.0
        %6197 = vmatpush1.msra.mxu0 %v6186
        %6198 = vmatprep.subr.mxu0 0.0
        %6199 = vmatpush1.msra.mxu0 %v6185
        %6200 = vmatprep.subr.mxu0 0.0
        %6201 = vmatpush1.msra.mxu0 %v6184
        %6202 = vmatprep.subr.mxu0 0.0
        %6203 = vmatpush1.msra.mxu0 %v6183
        %6204 = vmatprep.subr.mxu0 0.0
        %6205 = vmatpush1.msra.mxu0 %v6182
        %6206 = vmatprep.subr.mxu0 0.0
        %6207 = vmatpush1.msra.mxu0 %v6181
        %6208 = vmatprep.subr.mxu0 0.0
        %6209 = vmatpush1.msra.mxu0 %v6180
        %6210 = vmatprep.subr.mxu0 0.0
        %6211 = vmatpush1.msra.mxu0 %v6179
        %6212 = vmatprep.subr.mxu0 0.0
        %6213 = vmatpush1.msra.mxu0 %v6178
        %6214 = vmatprep.subr.mxu0 0.0
        %6215 = vmatpush1.msra.mxu0 %v6177
        %6216 = vmatprep.subr.mxu0 0.0
        %6217 = vmatpush1.msra.mxu0 %v6176
        %6218 = vmatprep.subr.mxu0 0.0
        %6219 = vmatpush1.msra.mxu0 %v6175
        %6220 = vmatprep.subr.mxu0 0.0
        %6221 = vmatpush1.msra.mxu0 %v6174
        %6222 = vmatprep.subr.mxu0 0.0
        %6223 = vmatpush2.msra.mxu0 0.0
        %6224 = vmatprep.subr.mxu0 0.0
        %6225 = vmatpush2.msra.mxu0 0.0
        %6226 = vmatprep.subr.mxu0 0.0
        %6227 = vmatpush2.msra.mxu0 0.0
        %6228 = vmatprep.subr.mxu0 0.0
        %6229 = vmatpush2.msra.mxu0 0.0
        %6230 = vmatprep.subr.mxu0 0.0
        %6231 = vmatpush2.msra.mxu0 0.0
        %6232 = vmatprep.subr.mxu0 0.0
        %6233 = vmatpush2.msra.mxu0 0.0
        %6234 = vmatprep.subr.mxu0 0.0
        %6235 = vmatpush2.msra.mxu0 0.0
        %6236 = vmatprep.subr.mxu0 0.0
        %6237 = vmatpush2.msra.mxu0 0.0
        %6238 = vmatprep.subr.mxu0 0.0
        %6239 = vmatpush2.msra.mxu0 0.0
        %6240 = vmatprep.subr.mxu0 0.0
        %6241 = vmatpush2.msra.mxu0 0.0
        %6242 = vmatprep.subr.mxu0 0.0
        %6243 = vmatpush2.msra.mxu0 0.0
        %6244 = vmatprep.subr.mxu0 0.0
        %6245 = vmatpush2.msra.mxu0 0.0
        %6246 = vmatprep.subr.mxu0 0.0
        %6247 = vmatpush2.msra.mxu0 0.0
        %6248 = vmatprep.subr.mxu0 0.0
        %6249 = vmatpush2.msra.mxu0 0.0
        %6250 = vmatprep.subr.mxu0 0.0
        %6251 = vmatpush2.msra.mxu0 0.0
        %6252 = vmatprep.subr.mxu0 0.0
        %6253 = vmatpush2.msra.mxu0 0.0
        %6254 = vmatprep.mubr.f32.mxu0 0.0
        %6255 = vmatmul.mubr.f32.gmra.mxu0 %v478
        %v6256 = vpop.f32.mrf.mxu0
        %v6257 = vadd.f32 0.0, %v6256
        %v6258 = vpop.f32.mrf.mxu0
        %6259 = vmatprep.mubr.f32.mxu0 0.0
        %6260 = vmatmul.mubr.f32.gmra.mxu0 %v479
        %v6261 = vpop.f32.mrf.mxu0
        %v6262 = vadd.f32 0.0, %v6261
        %v6263 = vpop.f32.mrf.mxu0
        %6264 = vmatprep.mubr.f32.mxu0 0.0
        %6265 = vmatmul.mubr.f32.gmra.mxu0 %v480
        %v6266 = vpop.f32.mrf.mxu0
        %v6267 = vadd.f32 0.0, %v6266
        %v6268 = vpop.f32.mrf.mxu0
        %6269 = vmatprep.mubr.f32.mxu0 0.0
        %6270 = vmatmul.mubr.f32.gmra.mxu0 %v481
        %v6271 = vpop.f32.mrf.mxu0
        %v6272 = vadd.f32 0.0, %v6271
        %v6273 = vpop.f32.mrf.mxu0
        %6274 = vmatprep.mubr.f32.mxu0 0.0
        %6275 = vmatmul.mubr.f32.gmra.mxu0 %v482
        %v6276 = vpop.f32.mrf.mxu0
        %v6277 = vadd.f32 0.0, %v6276
        %v6278 = vpop.f32.mrf.mxu0
        %6279 = vmatprep.mubr.f32.mxu0 0.0
        %6280 = vmatmul.mubr.f32.gmra.mxu0 %v483
        %v6281 = vpop.f32.mrf.mxu0
        %v6282 = vadd.f32 0.0, %v6281
        %v6283 = vpop.f32.mrf.mxu0
        %6284 = vmatprep.mubr.f32.mxu0 0.0
        %6285 = vmatmul.mubr.f32.gmra.mxu0 %v484
        %v6286 = vpop.f32.mrf.mxu0
        %v6287 = vadd.f32 0.0, %v6286
        %v6288 = vpop.f32.mrf.mxu0
        %6289 = vmatprep.mubr.f32.mxu0 0.0
        %6290 = vmatmul.mubr.f32.gmra.mxu0 %v485
        %v6291 = vpop.f32.mrf.mxu0
        %v6292 = vadd.f32 0.0, %v6291
        %v6293 = vpop.f32.mrf.mxu0
        %6294 = vmatprep.mubr.f32.mxu0 0.0
        %6295 = vmatmul.mubr.f32.gmra.mxu0 %v486
        %v6296 = vpop.f32.mrf.mxu0
        %v6297 = vadd.f32 0.0, %v6296
        %v6298 = vpop.f32.mrf.mxu0
        %6299 = vmatprep.mubr.f32.mxu0 0.0
        %6300 = vmatmul.mubr.f32.gmra.mxu0 %v487
        %v6301 = vpop.f32.mrf.mxu0
        %v6302 = vadd.f32 0.0, %v6301
        %v6303 = vpop.f32.mrf.mxu0
        %6304 = vmatprep.mubr.f32.mxu0 0.0
        %6305 = vmatmul.mubr.f32.gmra.mxu0 %v488
        %v6306 = vpop.f32.mrf.mxu0
        %v6307 = vadd.f32 0.0, %v6306
        %v6308 = vpop.f32.mrf.mxu0
        %6309 = vmatprep.mubr.f32.mxu0 0.0
        %6310 = vmatmul.mubr.f32.gmra.mxu0 %v489
        %v6311 = vpop.f32.mrf.mxu0
        %v6312 = vadd.f32 0.0, %v6311
        %v6313 = vpop.f32.mrf.mxu0
        %6314 = vmatprep.mubr.f32.mxu0 0.0
        %6315 = vmatmul.mubr.f32.gmra.mxu0 %v490
        %v6316 = vpop.f32.mrf.mxu0
        %v6317 = vadd.f32 0.0, %v6316
        %v6318 = vpop.f32.mrf.mxu0
        %6319 = vmatprep.mubr.f32.mxu0 0.0
        %6320 = vmatmul.mubr.f32.gmra.mxu0 %v491
        %v6321 = vpop.f32.mrf.mxu0
        %v6322 = vadd.f32 0.0, %v6321
        %v6323 = vpop.f32.mrf.mxu0
        %6324 = vmatprep.mubr.f32.mxu0 0.0
        %6325 = vmatmul.mubr.f32.gmra.mxu0 %v492
        %v6326 = vpop.f32.mrf.mxu0
        %v6327 = vadd.f32 0.0, %v6326
        %v6328 = vpop.f32.mrf.mxu0
        %6329 = vmatprep.mubr.f32.mxu0 0.0
        %6330 = vmatmul.mubr.f32.gmra.mxu0 %v493
        %v6331 = vpop.f32.mrf.mxu0
        %v6332 = vadd.f32 0.0, %v6331
        %v6333 = vpop.f32.mrf.mxu0
        %6334 = vmatprep.mubr.f32.mxu0 0.0
        %6335 = vmatmul.mubr.f32.gmra.mxu0 %v494
        %v6336 = vpop.f32.mrf.mxu0
        %v6337 = vadd.f32 0.0, %v6336
        %v6338 = vpop.f32.mrf.mxu0
        %6339 = vmatprep.mubr.f32.mxu0 0.0
        %6340 = vmatmul.mubr.f32.gmra.mxu0 %v495
        %v6341 = vpop.f32.mrf.mxu0
        %v6342 = vadd.f32 0.0, %v6341
        %v6343 = vpop.f32.mrf.mxu0
        %6344 = vmatprep.mubr.f32.mxu0 0.0
        %6345 = vmatmul.mubr.f32.gmra.mxu0 %v496
        %v6346 = vpop.f32.mrf.mxu0
        %v6347 = vadd.f32 0.0, %v6346
        %v6348 = vpop.f32.mrf.mxu0
        %6349 = vmatprep.mubr.f32.mxu0 0.0
        %6350 = vmatmul.mubr.f32.gmra.mxu0 %v497
        %v6351 = vpop.f32.mrf.mxu0
        %v6352 = vadd.f32 0.0, %v6351
        %v6353 = vpop.f32.mrf.mxu0
        %6354 = vmatprep.mubr.f32.mxu0 0.0
        %6355 = vmatmul.mubr.f32.gmra.mxu0 %v498
        %v6356 = vpop.f32.mrf.mxu0
        %v6357 = vadd.f32 0.0, %v6356
        %v6358 = vpop.f32.mrf.mxu0
        %6359 = vmatprep.mubr.f32.mxu0 0.0
        %6360 = vmatmul.mubr.f32.gmra.mxu0 %v499
        %v6361 = vpop.f32.mrf.mxu0
        %v6362 = vadd.f32 0.0, %v6361
        %v6363 = vpop.f32.mrf.mxu0
        %6364 = vmatprep.mubr.f32.mxu0 0.0
        %6365 = vmatmul.mubr.f32.gmra.mxu0 %v500
        %v6366 = vpop.f32.mrf.mxu0
        %v6367 = vadd.f32 0.0, %v6366
        %v6368 = vpop.f32.mrf.mxu0
        %6369 = vmatprep.mubr.f32.mxu0 0.0
        %6370 = vmatmul.mubr.f32.gmra.mxu0 %v501
        %v6371 = vpop.f32.mrf.mxu0
        %v6372 = vadd.f32 0.0, %v6371
        %v6373 = vpop.f32.mrf.mxu0
        %6374 = vmatprep.mubr.f32.mxu0 0.0
        %6375 = vmatmul.mubr.f32.gmra.mxu0 %v502
        %v6376 = vpop.f32.mrf.mxu0
        %v6377 = vadd.f32 0.0, %v6376
        %v6378 = vpop.f32.mrf.mxu0
        %6379 = vmatprep.mubr.f32.mxu0 0.0
        %6380 = vmatmul.mubr.f32.gmra.mxu0 %v503
        %v6381 = vpop.f32.mrf.mxu0
        %v6382 = vadd.f32 0.0, %v6381
        %v6383 = vpop.f32.mrf.mxu0
        %6384 = vmatprep.mubr.f32.mxu0 0.0
        %6385 = vmatmul.mubr.f32.gmra.mxu0 %v504
        %v6386 = vpop.f32.mrf.mxu0
        %v6387 = vadd.f32 0.0, %v6386
        %v6388 = vpop.f32.mrf.mxu0
        %6389 = vmatprep.mubr.f32.mxu0 0.0
        %6390 = vmatmul.mubr.f32.gmra.mxu0 %v505
        %v6391 = vpop.f32.mrf.mxu0
        %v6392 = vadd.f32 0.0, %v6391
        %v6393 = vpop.f32.mrf.mxu0
        %6394 = vmatprep.mubr.f32.mxu0 0.0
        %6395 = vmatmul.mubr.f32.gmra.mxu0 %v506
        %v6396 = vpop.f32.mrf.mxu0
        %v6397 = vadd.f32 0.0, %v6396
        %v6398 = vpop.f32.mrf.mxu0
        %6399 = vmatprep.mubr.f32.mxu0 0.0
        %6400 = vmatmul.mubr.f32.gmra.mxu0 %v507
        %v6401 = vpop.f32.mrf.mxu0
        %v6402 = vadd.f32 0.0, %v6401
        %v6403 = vpop.f32.mrf.mxu0
        %6404 = vmatprep.mubr.f32.mxu0 0.0
        %6405 = vmatmul.mubr.f32.gmra.mxu0 %v508
        %v6406 = vpop.f32.mrf.mxu0
        %v6407 = vadd.f32 0.0, %v6406
        %v6408 = vpop.f32.mrf.mxu0
        %6409 = vmatprep.mubr.f32.mxu0 0.0
        %6410 = vmatmul.mubr.f32.gmra.mxu0 %v509
        %v6411 = vpop.f32.mrf.mxu0
        %v6412 = vadd.f32 0.0, %v6411
        %v6413 = vpop.f32.mrf.mxu0
        %6414 = vdwg.mxu0
        %v6415 = vadd.f32 %v6142, %v6257
        %v6416 = vadd.f32 %v6143, %v6262
        %v6417 = vadd.f32 %v6144, %v6267
        %v6418 = vadd.f32 %v6145, %v6272
        %v6419 = vadd.f32 %v6146, %v6277
        %v6420 = vadd.f32 %v6147, %v6282
        %v6421 = vadd.f32 %v6148, %v6287
        %v6422 = vadd.f32 %v6149, %v6292
        %v6423 = vadd.f32 %v6150, %v6297
        %v6424 = vadd.f32 %v6151, %v6302
        %v6425 = vadd.f32 %v6152, %v6307
        %v6426 = vadd.f32 %v6153, %v6312
        %v6427 = vadd.f32 %v6154, %v6317
        %v6428 = vadd.f32 %v6155, %v6322
        %v6429 = vadd.f32 %v6156, %v6327
        %v6430 = vadd.f32 %v6157, %v6332
        %v6431 = vadd.f32 %v6158, %v6337
        %v6432 = vadd.f32 %v6159, %v6342
        %v6433 = vadd.f32 %v6160, %v6347
        %v6434 = vadd.f32 %v6161, %v6352
        %v6435 = vadd.f32 %v6162, %v6357
        %v6436 = vadd.f32 %v6163, %v6362
        %v6437 = vadd.f32 %v6164, %v6367
        %v6438 = vadd.f32 %v6165, %v6372
        %v6439 = vadd.f32 %v6166, %v6377
        %v6440 = vadd.f32 %v6167, %v6382
        %v6441 = vadd.f32 %v6168, %v6387
        %v6442 = vadd.f32 %v6169, %v6392
        %v6443 = vadd.f32 %v6170, %v6397
        %v6444 = vadd.f32 %v6171, %v6402
        %v6445 = vadd.f32 %v6172, %v6407
        %v6446 = vadd.f32 %v6173, %v6412
        %6447 = vst [vmem:[%s367] sm:$0xff] %v6415
        %6448 = vst [vmem:[%s367 + $0x8] sm:$0xff] %v6416
        %6449 = vst [vmem:[%s367 + $0x10] sm:$0xff] %v6417
        %6450 = vst [vmem:[%s367 + $0x18] sm:$0xff] %v6418
        %6451 = vst [vmem:[%s367 + $0x20] sm:$0xff] %v6419
        %6452 = vst [vmem:[%s367 + $0x28] sm:$0xff] %v6420
        %6453 = vst [vmem:[%s367 + $0x30] sm:$0xff] %v6421
        %6454 = vst [vmem:[%s367 + $0x38] sm:$0xff] %v6422
        %6455 = vst [vmem:[%s367 + $0x40] sm:$0xff] %v6423
        %6456 = vst [vmem:[%s367 + $0x48] sm:$0xff] %v6424
        %6457 = vst [vmem:[%s367 + $0x50] sm:$0xff] %v6425
        %6458 = vst [vmem:[%s367 + $0x58] sm:$0xff] %v6426
        %6459 = vst [vmem:[%s367 + $0x60] sm:$0xff] %v6427
        %6460 = vst [vmem:[%s367 + $0x68] sm:$0xff] %v6428
        %6461 = vst [vmem:[%s367 + $0x70] sm:$0xff] %v6429
        %6462 = vst [vmem:[%s367 + $0x78] sm:$0xff] %v6430
        %6463 = vst [vmem:[%s367 + $0x80] sm:$0xff] %v6431
        %6464 = vst [vmem:[%s367 + $0x88] sm:$0xff] %v6432
        %6465 = vst [vmem:[%s367 + $0x90] sm:$0xff] %v6433
        %6466 = vst [vmem:[%s367 + $0x98] sm:$0xff] %v6434
        %6467 = vst [vmem:[%s367 + $0xa0] sm:$0xff] %v6435
        %6468 = vst [vmem:[%s367 + $0xa8] sm:$0xff] %v6436
        %6469 = vst [vmem:[%s367 + $0xb0] sm:$0xff] %v6437
        %6470 = vst [vmem:[%s367 + $0xb8] sm:$0xff] %v6438
        %6471 = vst [vmem:[%s367 + $0xc0] sm:$0xff] %v6439
        %6472 = vst [vmem:[%s367 + $0xc8] sm:$0xff] %v6440
        %6473 = vst [vmem:[%s367 + $0xd0] sm:$0xff] %v6441
        %6474 = vst [vmem:[%s367 + $0xd8] sm:$0xff] %v6442
        %6475 = vst [vmem:[%s367 + $0xe0] sm:$0xff] %v6443
        %6476 = vst [vmem:[%s367 + $0xe8] sm:$0xff] %v6444
        %6477 = vst [vmem:[%s367 + $0xf0] sm:$0xff] %v6445
        %6478 = vst [vmem:[%s367 + $0xf8] sm:$0xff] %v6446
        %s6479 = sand.u32 %s208, 1
        %s6480 = scalar_lea.sflag [#allocation6], %s6479
        %s6481 = sand.u32 %s208, 1
        %s6482 = smul.addr %s6481, 256
        %s6483 = scalar_lea.vmem [#allocation12], %s6482
        // Predicated region
        $region69: #{tpu_custom_call.1} parent=51 // pred_check
          %p6484 = pneg %p218
        $region70: #{tpu_custom_call.1} parent=51 // pred_check_branch
          %6486 = sbr.rel (%p6484) target = $region72
        $region71: #{tpu_custom_call.1} parent=51 // pred_region
          %s6488 = ssub.s32 4096, 4096
          %6489 = vsyncadd %s6480, %s6488
          %s6490 = smul.addr %s27, 32
          %s6491 = smul.addr %s6490, 128
          %s6492 = scalar_lea.hbm %s8, %s6491
          %s6493 = sshll.u32 %s6483, 4
          %s6494 = int_to_ptr.vmem [resolvable:$true] %s6493
          %6499 = dma.vmem_to_hbm [thread:$0]  %s6494, 4096, %s6492, %s6480, 128, 128, 8
        $region72: #{tpu_custom_call.1} parent=51 // pred_fallthru
          _
      $region52: #{tpu_custom_call.1} parent=5 // pred_fallthru
        _
      %p6500 = scmp.le.s32.totalorder 2, %s22
      // Predicated region
      $region73: #{tpu_custom_call.1} parent=5 // pred_check
        %p6501 = pneg %p6500
      $region74: #{tpu_custom_call.1} parent=5 // pred_check_branch
        %6503 = sbr.rel (%p6501) target = $region76
      $region75: #{tpu_custom_call.1} parent=5 // pred_region
        %s6504 = ssub.s32 %s22, 2
        // Predicated region
        $region77: #{tpu_custom_call.1} parent=75 // pred_check
          %p6505 = pneg %p224
        $region78: #{tpu_custom_call.1} parent=75 // pred_check_branch
          %6507 = sbr.rel (%p6505) target = $region80
        $region79: #{tpu_custom_call.1} parent=75 // pred_region
          %s6508 = sand.u32 %s209, 1
          %s6509 = scalar_lea.sflag [#allocation6], %s6508
          %s6510 = sand.u32 %s209, 1
          %s6511 = smul.addr %s6510, 256
          %s6512 = scalar_lea.vmem [#allocation12], %s6511
          %6513 = dma.done %s6509, 4096
        $region80: #{tpu_custom_call.1} parent=75 // pred_fallthru
          _
      $region76: #{tpu_custom_call.1} parent=5 // pred_fallthru
        _
    $region6: #{tpu_custom_call.1} parent=1 // loop_footer
      %s26 = sadd.s32 1, %s22
    $region7: #{tpu_custom_call.1} parent=1 // loop_footer_branch
      %21 = sbr.rel target = $region3
    $region8: #{tpu_custom_call.1} parent=1 // loop_exit
      _
    %6514 = vsyncpa [#allocation5], 1
    %s6515 = scalar_lea.sflag [#allocation5], 1
    %6516 = vsyncpa %s6515, 1
    %6517 = vsyncpa [#allocation8], 1
    %6518 = vsyncpa [#allocation11], 1
    %6519 = vsyncpa [#allocation6], 1
    %s6520 = scalar_lea.sflag [#allocation6], 1
    %6521 = vsyncpa %s6520, 1

</llo_original>
